<compile_context>
chip_gen: v5e
topology: v5e:2x2
jax: 0.10.0
libtpu: 0.0.40
codegen_flags: <defaults>
</compile_context>

<pallas_src>
import functools

import jax
import jax.numpy as jnp
from jax.experimental import pallas as pl
from jax.experimental.pallas import tpu as pltpu


def _round_up(x, m):
    return ((x + m - 1) // m) * m


# ---------------- Pallas kernels ----------------

def _conv_bn_lrelu_kernel(xt_ref, wt_ref, gamma_ref, beta_ref, o_ref, *,
                          m_true, eps=1e-5, slope=0.2):
    """Fused (Cout,K)@(K,Mp) matmul + training-mode BatchNorm + LeakyReLU.

    Padded lanes (m >= m_true) of X^T are exactly zero, so y is 0 there and
    the per-channel sum already equals the sum over real lanes.  The centered
    variance is corrected analytically for the (Mp - m_true) padded lanes
    (each contributes mean^2) instead of building a full-tile mask.
    All statistics / elementwise math in f32; output stored as bf16.
    """
    y = jnp.dot(wt_ref[...], xt_ref[...],
                preferred_element_type=jnp.float32)            # (Cout, Mp) f32
    n_pad = y.shape[1] - m_true                                # static int
    inv_m = 1.0 / m_true
    mean = jnp.sum(y, axis=1, keepdims=True) * inv_m           # (Cout, 1)
    cen = y - mean
    var = (jnp.sum(cen * cen, axis=1, keepdims=True)
           - n_pad * mean * mean) * inv_m                      # biased, 2-pass
    scale = gamma_ref[...] * jax.lax.rsqrt(var + eps)
    shift = beta_ref[...] - mean * scale
    z = y * scale + shift
    o_ref[...] = jnp.maximum(z, slope * z).astype(o_ref.dtype)


def _conv_linear_head_kernel(xt_ref, wt_ref, wlin_ref, bias_ref, o_ref):
    """Fused last conv (Cout=1, with bias) + flatten + Linear(36, 1).

    y = W3(8,K) @ X^T(K,Mp)          -> (8, Mp)  (only row 0 is real)
    o = y @ Wlin_mat(Mp,Bp) + bias   -> (8, Bp)  (logits are o[0, :B])
    Wlin_mat is zero on padded rows/cols, so zero-padded lanes contribute
    nothing; the conv bias is folded (together with the linear bias) into
    `bias_ref` on the host side.
    """
    y = jnp.dot(wt_ref[...], xt_ref[...],
                preferred_element_type=jnp.float32)
    o_ref[...] = jnp.dot(y.astype(jnp.bfloat16), wlin_ref[...],
                         preferred_element_type=jnp.float32) + bias_ref[...]


# ---------------- im2col glue (channel-major, transposed) ----------------

def _im2col_t(xc):
    """xc: (Cin, B, H, W) channel-major -> X^T: (Cin*16, B*Ho*Wo) for a
    4x4 / stride-2 / valid conv.  K index = cin*16 + kh*4 + kw,
    M index = b*Ho*Wo + i*Wo + j (matches PyTorch NCHW flatten for Cout=1)."""
    Cin, B, H, W = xc.shape
    Ho, Wo = (H - 4) // 2 + 1, (W - 4) // 2 + 1
    pats = [xc[:, :, kh:kh + 2 * Ho - 1:2, kw:kw + 2 * Wo - 1:2]
            for kh in range(4) for kw in range(4)]
    X = jnp.stack(pats, axis=1).reshape(Cin * 16, B * Ho * Wo)
    return X, Ho, Wo


_VMEM_SPEC = pl.BlockSpec(memory_space=pltpu.MemorySpace.VMEM)


# ---------------- Layer wrappers ----------------

def conv_bn_lrelu(xc, w, gamma, beta):
    """disc_block with activation.  xc: (Cin,B,H,W) -> (Cout,B,Ho,Wo) bf16."""
    Cin, B, H, W = xc.shape
    Cout = w.shape[0]
    X, Ho, Wo = _im2col_t(xc)
    K, M = X.shape
    Mp = _round_up(M, 128)
    Xp = jnp.pad(X, ((0, 0), (0, Mp - M))).astype(jnp.bfloat16)
    Wt = w.reshape(Cout, K).astype(jnp.bfloat16)
    g = gamma.reshape(Cout, 1).astype(jnp.float32)
    b = beta.reshape(Cout, 1).astype(jnp.float32)
    out = pl.pallas_call(
        functools.partial(_conv_bn_lrelu_kernel, m_true=M),
        out_shape=jax.ShapeDtypeStruct((Cout, Mp), jnp.bfloat16),
        in_specs=[_VMEM_SPEC, _VMEM_SPEC, _VMEM_SPEC, _VMEM_SPEC],
        out_specs=_VMEM_SPEC,
    )(Xp, Wt, g, b)
    return out[:, :M].reshape(Cout, B, Ho, Wo)


def conv_linear_head(xc, w_conv, b_conv, w_lin, b_lin):
    """Final disc_block (no BN/activation, Cout=1) fused with flatten +
    Linear(36, 1).  Returns (B, 1) logits (f32)."""
    Cin, B, H, W = xc.shape
    Cout = w_conv.shape[0]
    assert Cout == 1  # flatten ordering below relies on a single output channel
    X, Ho, Wo = _im2col_t(xc)
    K, M = X.shape                       # M = B * Ho * Wo
    feat = Cout * Ho * Wo                # 36 = Linear in_features
    Mp = _round_up(M, 128)
    Bp = _round_up(B, 128)
    Xp = jnp.pad(X, ((0, 0), (0, Mp - M))).astype(jnp.bfloat16)
    Wt = jnp.pad(w_conv.reshape(Cout, K),
                 ((0, 8 - Cout), (0, 0))).astype(jnp.bfloat16)      # (8, K)
    wlin = w_lin.reshape(feat).astype(jnp.float32)
    # Block-diagonal placement (one kron, no per-batch scatter loop):
    # column b selects batch-b's 36 conv outputs.
    wmat = jnp.kron(jnp.eye(B, dtype=jnp.float32),
                    wlin.reshape(feat, 1))                           # (M, B)
    wmat = jnp.pad(wmat, ((0, Mp - M), (0, Bp - B))).astype(jnp.bfloat16)
    # conv bias contributes b_conv * sum(wlin) to every logit; fold with b_lin.
    bias_row = jnp.zeros((1, Bp), jnp.float32).at[0, :B].set(
        b_conv[0] * jnp.sum(wlin) + b_lin[0])
    out = pl.pallas_call(
        _conv_linear_head_kernel,
        out_shape=jax.ShapeDtypeStruct((8, Bp), jnp.float32),
        in_specs=[_VMEM_SPEC, _VMEM_SPEC, _VMEM_SPEC, _VMEM_SPEC],
        out_specs=_VMEM_SPEC,
    )(Xp, Wt, wmat, bias_row)
    return out[0, :B].reshape(B, 1)


# ---------------- Parameters & forward ----------------

def init_discriminator_params(key, channels=1, hidden_dim=64):
    # TODO(synk): utils.init_weights_normal approximated by N(0, 0.02) init;
    # spectral_norm is the module's default False, so it is omitted.
    ks = jax.random.split(key, 8)
    std = 0.02
    p = {}
    dims = [(channels, hidden_dim), (hidden_dim, 2 * hidden_dim),
            (2 * hidden_dim, 1)]
    for i, (cin, cout) in enumerate(dims):
        p[f"conv{i}_w"] = std * jax.random.normal(
            ks[2 * i], (cout, cin, 4, 4), jnp.float32)
        if i < 2:
            # conv bias omitted: exactly cancelled by batch-stat BatchNorm.
            p[f"bn{i}_gamma"] = 1.0 + std * jax.random.normal(
                ks[2 * i + 1], (cout,), jnp.float32)
            p[f"bn{i}_beta"] = jnp.zeros((cout,), jnp.float32)
        else:
            p[f"conv{i}_b"] = std * jax.random.normal(
                ks[2 * i + 1], (cout,), jnp.float32)
    p["lin_w"] = std * jax.random.normal(ks[6], (1, 36), jnp.float32)
    p["lin_b"] = std * jax.random.normal(ks[7], (1,), jnp.float32)
    return p


def discriminator_forward(params, x):
    """x: (B, channels, H, W) NCHW -> (B, 1) logits (no output activation)."""
    xc = jnp.transpose(x, (1, 0, 2, 3))   # channel-major; kept for all layers
    a = conv_bn_lrelu(xc, params["conv0_w"], params["bn0_gamma"],
                      params["bn0_beta"])
    a = conv_bn_lrelu(a, params["conv1_w"], params["bn1_gamma"],
                      params["bn1_beta"])
    return conv_linear_head(a, params["conv2_w"], params["conv2_b"],
                            params["lin_w"], params["lin_b"])


# ---------------- Pure-JAX reference (for self-check) ----------------

def reference_forward(params, x):
    """lax.conv reference with the same bf16-operand / f32-accumulate numerics
    and PyTorch training-mode BatchNorm (biased batch stats, eps=1e-5)."""
    def conv(h, w):
        return jax.lax.conv_general_dilated(
            h.astype(jnp.bfloat16), w.astype(jnp.bfloat16),
            window_strides=(2, 2), padding="VALID",
            dimension_numbers=("NCHW", "OIHW", "NCHW"),
            preferred_element_type=jnp.float32)

    def bn_lrelu(y, gamma, beta):
        mean = jnp.mean(y, axis=(0, 2, 3), keepdims=True)
        var = jnp.mean(jnp.square(y - mean), axis=(0, 2, 3), keepdims=True)
        z = gamma.reshape(1, -1, 1, 1) * (y - mean) * jax.lax.rsqrt(var + 1e-5)
        z = z + beta.reshape(1, -1, 1, 1)
        return jnp.where(z >= 0.0, z, 0.2 * z)

    h = bn_lrelu(conv(x, params["conv0_w"]),
                 params["bn0_gamma"], params["bn0_beta"])
    h = bn_lrelu(conv(h, params["conv1_w"]),
                 params["bn1_gamma"], params["bn1_beta"])
    h = conv(h, params["conv2_w"]) + params["conv2_b"].reshape(1, -1, 1, 1)
    flat = h.reshape(h.shape[0], -1)
    return jnp.dot(flat.astype(jnp.bfloat16),
                   params["lin_w"].T.astype(jnp.bfloat16),
                   preferred_element_type=jnp.float32) + params["lin_b"]


if __name__ == "__main__":
    # Linear(36, 1) implies a 64x64 input (64 -> 31 -> 14 -> 6, 6*6*1 = 36).
    channels, hidden_dim, batch, size = 1, 64, 2, 64
    key = jax.random.PRNGKey(0)
    kp, kx = jax.random.split(key)
    params = init_discriminator_params(kp, channels, hidden_dim)
    x = jax.random.normal(kx, (batch, channels, size, size), jnp.float32)

    fwd = jax.jit(discriminator_forward)
    out = jax.block_until_ready(fwd(params, x))

    assert out.shape == (batch, 1), out.shape
    assert bool(jnp.all(jnp.isfinite(out)))

    ref = jax.block_until_ready(jax.jit(reference_forward)(params, x))
    err = float(jnp.max(jnp.abs(out - ref)))
    assert err < 1e-2, f"max abs err vs reference: {err}"
    print("KERNEL_OK")
</pallas_src>

<mosaic_0001>
module attributes {stable_mosaic.version = 11 : i64} {
  func.func @_conv_bn_lrelu_kernel(%arg0: memref<16x2048xbf16, #tpu.memory_space<vmem>>, %arg1: memref<64x16xbf16, #tpu.memory_space<vmem>>, %arg2: memref<64x1xf32, #tpu.memory_space<vmem>>, %arg3: memref<64x1xf32, #tpu.memory_space<vmem>>, %arg4: memref<64x2048xbf16, #tpu.memory_space<vmem>>) attributes {dimension_semantics = [], scalar_prefetch = 0 : i64, scratch_operands = 0 : i64, tpu.core_type = #tpu.core_type<tc>} {
    %c0 = arith.constant 0 : index
    %c0_0 = arith.constant 0 : index
    %0 = vector.load %arg1[%c0, %c0_0] : memref<64x16xbf16, #tpu.memory_space<vmem>>, vector<64x16xbf16>
    %c0_1 = arith.constant 0 : index
    %c0_2 = arith.constant 0 : index
    %1 = vector.load %arg0[%c0_1, %c0_2] : memref<16x2048xbf16, #tpu.memory_space<vmem>>, vector<16x2048xbf16>
    %cst = arith.constant dense<0.000000e+00> : vector<64x2048xf32>
    %2 = tpu.matmul %0, %1, %cst {dimension_numbers = #tpu.dot_dimension_numbers<[1], [0], [0], [1], [0, 0, 1, 1], [], []>} : vector<64x16xbf16>, vector<16x2048xbf16>, vector<64x2048xf32> -> vector<64x2048xf32>
    %cst_3 = arith.constant dense<0.000000e+00> : vector<64xf32>
    %3 = vector.multi_reduction <add>, %2, %cst_3 [1] : vector<64x2048xf32> to vector<64xf32>
    %4 = vector.shape_cast %3 : vector<64xf32> to vector<64x1xf32>
    %cst_4 = arith.constant 5.20291389E-4 : f32
    %5 = vector.broadcast %cst_4 : f32 to vector<64x1xf32>
    %6 = arith.mulf %4, %5 : vector<64x1xf32>
    %7 = vector.broadcast %6 : vector<64x1xf32> to vector<64x2048xf32>
    %8 = arith.subf %2, %7 : vector<64x2048xf32>
    %9 = arith.mulf %8, %8 : vector<64x2048xf32>
    %cst_5 = arith.constant dense<0.000000e+00> : vector<64xf32>
    %10 = vector.multi_reduction <add>, %9, %cst_5 [1] : vector<64x2048xf32> to vector<64xf32>
    %11 = vector.shape_cast %10 : vector<64xf32> to vector<64x1xf32>
    %cst_6 = arith.constant 1.260000e+02 : f32
    %12 = vector.broadcast %cst_6 : f32 to vector<64x1xf32>
    %13 = arith.mulf %12, %6 : vector<64x1xf32>
    %14 = arith.mulf %13, %6 : vector<64x1xf32>
    %15 = arith.subf %11, %14 : vector<64x1xf32>
    %cst_7 = arith.constant 5.20291389E-4 : f32
    %16 = vector.broadcast %cst_7 : f32 to vector<64x1xf32>
    %17 = arith.mulf %15, %16 : vector<64x1xf32>
    %c0_8 = arith.constant 0 : index
    %c0_9 = arith.constant 0 : index
    %18 = vector.load %arg2[%c0_8, %c0_9] : memref<64x1xf32, #tpu.memory_space<vmem>>, vector<64x1xf32>
    %cst_10 = arith.constant 9.99999974E-6 : f32
    %19 = vector.broadcast %cst_10 : f32 to vector<64x1xf32>
    %20 = arith.addf %17, %19 : vector<64x1xf32>
    %21 = math.rsqrt %20 : vector<64x1xf32>
    %22 = arith.mulf %18, %21 : vector<64x1xf32>
    %c0_11 = arith.constant 0 : index
    %c0_12 = arith.constant 0 : index
    %23 = vector.load %arg3[%c0_11, %c0_12] : memref<64x1xf32, #tpu.memory_space<vmem>>, vector<64x1xf32>
    %24 = arith.mulf %6, %22 : vector<64x1xf32>
    %25 = arith.subf %23, %24 : vector<64x1xf32>
    %26 = vector.broadcast %22 : vector<64x1xf32> to vector<64x2048xf32>
    %27 = arith.mulf %2, %26 : vector<64x2048xf32>
    %28 = vector.broadcast %25 : vector<64x1xf32> to vector<64x2048xf32>
    %29 = arith.addf %27, %28 : vector<64x2048xf32>
    %cst_13 = arith.constant 2.000000e-01 : f32
    %30 = vector.broadcast %cst_13 : f32 to vector<64x2048xf32>
    %31 = arith.mulf %30, %29 : vector<64x2048xf32>
    %32 = arith.maximumf %29, %31 : vector<64x2048xf32>
    %33 = arith.truncf %32 : vector<64x2048xf32> to vector<64x2048xbf16>
    %c0_14 = arith.constant 0 : index
    %c0_15 = arith.constant 0 : index
    %34 = vector.load %arg4[%c0_14, %c0_15] : memref<64x2048xbf16, #tpu.memory_space<vmem>>, vector<64x2048xbf16>
    tpu.vector_store %arg4[%c0_14, %c0_15], %33 {strides = array<i32>} : memref<64x2048xbf16, #tpu.memory_space<vmem>>, vector<64x2048xbf16>,
    return
  }
}

module attributes {stable_mosaic.version = 11 : i64} {
  func.func @_conv_bn_lrelu_kernel(%arg0: memref<1024x512xbf16, #tpu.memory_space<vmem>>, %arg1: memref<128x1024xbf16, #tpu.memory_space<vmem>>, %arg2: memref<128x1xf32, #tpu.memory_space<vmem>>, %arg3: memref<128x1xf32, #tpu.memory_space<vmem>>, %arg4: memref<128x512xbf16, #tpu.memory_space<vmem>>) attributes {dimension_semantics = [], scalar_prefetch = 0 : i64, scratch_operands = 0 : i64, tpu.core_type = #tpu.core_type<tc>} {
    %c0 = arith.constant 0 : index
    %c0_0 = arith.constant 0 : index
    %0 = vector.load %arg1[%c0, %c0_0] : memref<128x1024xbf16, #tpu.memory_space<vmem>>, vector<128x1024xbf16>
    %c0_1 = arith.constant 0 : index
    %c0_2 = arith.constant 0 : index
    %1 = vector.load %arg0[%c0_1, %c0_2] : memref<1024x512xbf16, #tpu.memory_space<vmem>>, vector<1024x512xbf16>
    %cst = arith.constant dense<0.000000e+00> : vector<128x512xf32>
    %2 = tpu.matmul %0, %1, %cst {dimension_numbers = #tpu.dot_dimension_numbers<[1], [0], [0], [1], [0, 0, 1, 1], [], []>} : vector<128x1024xbf16>, vector<1024x512xbf16>, vector<128x512xf32> -> vector<128x512xf32>
    %cst_3 = arith.constant dense<0.000000e+00> : vector<128xf32>
    %3 = vector.multi_reduction <add>, %2, %cst_3 [1] : vector<128x512xf32> to vector<128xf32>
    %4 = vector.shape_cast %3 : vector<128xf32> to vector<128x1xf32>
    %cst_4 = arith.constant 0.00255102036 : f32
    %5 = vector.broadcast %cst_4 : f32 to vector<128x1xf32>
    %6 = arith.mulf %4, %5 : vector<128x1xf32>
    %7 = vector.broadcast %6 : vector<128x1xf32> to vector<128x512xf32>
    %8 = arith.subf %2, %7 : vector<128x512xf32>
    %9 = arith.mulf %8, %8 : vector<128x512xf32>
    %cst_5 = arith.constant dense<0.000000e+00> : vector<128xf32>
    %10 = vector.multi_reduction <add>, %9, %cst_5 [1] : vector<128x512xf32> to vector<128xf32>
    %11 = vector.shape_cast %10 : vector<128xf32> to vector<128x1xf32>
    %cst_6 = arith.constant 1.200000e+02 : f32
    %12 = vector.broadcast %cst_6 : f32 to vector<128x1xf32>
    %13 = arith.mulf %12, %6 : vector<128x1xf32>
    %14 = arith.mulf %13, %6 : vector<128x1xf32>
    %15 = arith.subf %11, %14 : vector<128x1xf32>
    %cst_7 = arith.constant 0.00255102036 : f32
    %16 = vector.broadcast %cst_7 : f32 to vector<128x1xf32>
    %17 = arith.mulf %15, %16 : vector<128x1xf32>
    %c0_8 = arith.constant 0 : index
    %c0_9 = arith.constant 0 : index
    %18 = vector.load %arg2[%c0_8, %c0_9] : memref<128x1xf32, #tpu.memory_space<vmem>>, vector<128x1xf32>
    %cst_10 = arith.constant 9.99999974E-6 : f32
    %19 = vector.broadcast %cst_10 : f32 to vector<128x1xf32>
    %20 = arith.addf %17, %19 : vector<128x1xf32>
    %21 = math.rsqrt %20 : vector<128x1xf32>
    %22 = arith.mulf %18, %21 : vector<128x1xf32>
    %c0_11 = arith.constant 0 : index
    %c0_12 = arith.constant 0 : index
    %23 = vector.load %arg3[%c0_11, %c0_12] : memref<128x1xf32, #tpu.memory_space<vmem>>, vector<128x1xf32>
    %24 = arith.mulf %6, %22 : vector<128x1xf32>
    %25 = arith.subf %23, %24 : vector<128x1xf32>
    %26 = vector.broadcast %22 : vector<128x1xf32> to vector<128x512xf32>
    %27 = arith.mulf %2, %26 : vector<128x512xf32>
    %28 = vector.broadcast %25 : vector<128x1xf32> to vector<128x512xf32>
    %29 = arith.addf %27, %28 : vector<128x512xf32>
    %cst_13 = arith.constant 2.000000e-01 : f32
    %30 = vector.broadcast %cst_13 : f32 to vector<128x512xf32>
    %31 = arith.mulf %30, %29 : vector<128x512xf32>
    %32 = arith.maximumf %29, %31 : vector<128x512xf32>
    %33 = arith.truncf %32 : vector<128x512xf32> to vector<128x512xbf16>
    %c0_14 = arith.constant 0 : index
    %c0_15 = arith.constant 0 : index
    %34 = vector.load %arg4[%c0_14, %c0_15] : memref<128x512xbf16, #tpu.memory_space<vmem>>, vector<128x512xbf16>
    tpu.vector_store %arg4[%c0_14, %c0_15], %33 {strides = array<i32>} : memref<128x512xbf16, #tpu.memory_space<vmem>>, vector<128x512xbf16>,
    return
  }
}

module attributes {stable_mosaic.version = 11 : i64} {
  func.func @_conv_linear_head_kernel(%arg0: memref<2048x128xbf16, #tpu.memory_space<vmem>>, %arg1: memref<8x2048xbf16, #tpu.memory_space<vmem>>, %arg2: memref<128x128xbf16, #tpu.memory_space<vmem>>, %arg3: memref<1x128xf32, #tpu.memory_space<vmem>>, %arg4: memref<8x128xf32, #tpu.memory_space<vmem>>) attributes {dimension_semantics = [], scalar_prefetch = 0 : i64, scratch_operands = 0 : i64, tpu.core_type = #tpu.core_type<tc>} {
    %c0 = arith.constant 0 : index
    %c0_0 = arith.constant 0 : index
    %0 = vector.load %arg1[%c0, %c0_0] : memref<8x2048xbf16, #tpu.memory_space<vmem>>, vector<8x2048xbf16>
    %c0_1 = arith.constant 0 : index
    %c0_2 = arith.constant 0 : index
    %1 = vector.load %arg0[%c0_1, %c0_2] : memref<2048x128xbf16, #tpu.memory_space<vmem>>, vector<2048x128xbf16>
    %cst = arith.constant dense<0.000000e+00> : vector<8x128xf32>
    %2 = tpu.matmul %0, %1, %cst {dimension_numbers = #tpu.dot_dimension_numbers<[1], [0], [0], [1], [0, 0, 1, 1], [], []>} : vector<8x2048xbf16>, vector<2048x128xbf16>, vector<8x128xf32> -> vector<8x128xf32>
    %3 = arith.truncf %2 : vector<8x128xf32> to vector<8x128xbf16>
    %c0_3 = arith.constant 0 : index
    %c0_4 = arith.constant 0 : index
    %4 = vector.load %arg2[%c0_3, %c0_4] : memref<128x128xbf16, #tpu.memory_space<vmem>>, vector<128x128xbf16>
    %cst_5 = arith.constant dense<0.000000e+00> : vector<8x128xf32>
    %5 = tpu.matmul %3, %4, %cst_5 {dimension_numbers = #tpu.dot_dimension_numbers<[1], [0], [0], [1], [0, 0, 1, 1], [], []>} : vector<8x128xbf16>, vector<128x128xbf16>, vector<8x128xf32> -> vector<8x128xf32>
    %c0_6 = arith.constant 0 : index
    %c0_7 = arith.constant 0 : index
    %6 = vector.load %arg3[%c0_6, %c0_7] : memref<1x128xf32, #tpu.memory_space<vmem>>, vector<1x128xf32>
    %7 = vector.broadcast %6 : vector<1x128xf32> to vector<8x128xf32>
    %8 = arith.addf %5, %7 : vector<8x128xf32>
    %c0_8 = arith.constant 0 : index
    %c0_9 = arith.constant 0 : index
    %9 = vector.load %arg4[%c0_8, %c0_9] : memref<8x128xf32, #tpu.memory_space<vmem>>, vector<8x128xf32>
    tpu.vector_store %arg4[%c0_8, %c0_9], %8 {strides = array<i32>} : memref<8x128xf32, #tpu.memory_space<vmem>>, vector<8x128xf32>,
    return
  }
}

</mosaic_0001>

<llo_original>
// kernel: discriminator_forward.3
$region0: #{discriminator_forward.3}
  #allocation0 [shape = 'u32[]', space=smem, size = 0x4, offset = 0x4, fixed_abs, tag = 'smem constant byte address 0x4 - core index']
  #allocation1 [shape = 'u32[72,128]{1,0:T(1,128)}', space=vmem, size = 0x9000, scoped, tag = 'internal scratch']
  %s0 = inlined_call_operand.vmem [shape: bf16[16,2048], index: 0, kind: input, shape index: {}]
  %s1 = inlined_call_operand.vmem [shape: bf16[64,16], index: 1, kind: input, shape index: {}]
  %s2 = inlined_call_operand.vmem [shape: f32[64,1], index: 2, kind: input, shape index: {}]
  %s3 = inlined_call_operand.vmem [shape: f32[64,1], index: 3, kind: input, shape index: {}]
  %s4 = inlined_call_operand.vmem [shape: bf16[64,2048], index: 4, kind: output, shape index: {}]
  %s5 = sld [smem:[#allocation0]]
  $region26: #{discriminator_forward.3} parent=0
    _
  %s7 = ssub.s32 1, %s5
  %s8 = scalar_select 0, %s7, %s5
  // Predicated region
  $region2: #{discriminator_forward.3} parent=0 // pred_check
    _
  $region3: #{discriminator_forward.3} parent=0 // pred_check_branch
    %10 = sbr.rel (0) target = $region5
  $region4: #{discriminator_forward.3} parent=0 // pred_region
    _
  $region5: #{discriminator_forward.3} parent=0 // pred_fallthru
    _
  // Predicated region
  $region6: #{discriminator_forward.3} parent=0 // pred_check
    _
  $region7: #{discriminator_forward.3} parent=0 // pred_check_branch
    %12 = sbr.rel (0) target = $region9
  $region8: #{discriminator_forward.3} parent=0 // pred_region
    _
  $region9: #{discriminator_forward.3} parent=0 // pred_fallthru
    _
  // Predicated region
  $region10: #{discriminator_forward.3} parent=0 // pred_check
    _
  $region11: #{discriminator_forward.3} parent=0 // pred_check_branch
    %14 = sbr.rel (0) target = $region13
  $region12: #{discriminator_forward.3} parent=0 // pred_region
    _
  $region13: #{discriminator_forward.3} parent=0 // pred_fallthru
    _
  // Predicated region
  $region14: #{discriminator_forward.3} parent=0 // pred_check
    _
  $region15: #{discriminator_forward.3} parent=0 // pred_check_branch
    %16 = sbr.rel (0) target = $region17
  $region16: #{discriminator_forward.3} parent=0 // pred_region
    _
  $region17: #{discriminator_forward.3} parent=0 // pred_fallthru
    _
  %v18 = vld [vmem:[%s1] sm:$0xf]
  %v19 = vld [vmem:[%s1 + $0x4] sm:$0xf]
  %v20 = vld [vmem:[%s1 + $0x8] sm:$0xf]
  %v21 = vld [vmem:[%s1 + $0xc] sm:$0xf]
  %v22 = vld [vmem:[%s1 + $0x10] sm:$0xf]
  %v23 = vld [vmem:[%s1 + $0x14] sm:$0xf]
  %v24 = vld [vmem:[%s1 + $0x18] sm:$0xf]
  %v25 = vld [vmem:[%s1 + $0x1c] sm:$0xf]
  %v26 = vld [vmem:[%s0] sm:$0xff]
  %v27 = vld [vmem:[%s0 + $0x8] sm:$0xff]
  %v28 = vld [vmem:[%s0 + $0x10] sm:$0xff]
  %v29 = vld [vmem:[%s0 + $0x18] sm:$0xff]
  %v30 = vld [vmem:[%s0 + $0x20] sm:$0xff]
  %v31 = vld [vmem:[%s0 + $0x28] sm:$0xff]
  %v32 = vld [vmem:[%s0 + $0x30] sm:$0xff]
  %v33 = vld [vmem:[%s0 + $0x38] sm:$0xff]
  %v34 = vld [vmem:[%s0 + $0x40] sm:$0xff]
  %v35 = vld [vmem:[%s0 + $0x48] sm:$0xff]
  %v36 = vld [vmem:[%s0 + $0x50] sm:$0xff]
  %v37 = vld [vmem:[%s0 + $0x58] sm:$0xff]
  %v38 = vld [vmem:[%s0 + $0x60] sm:$0xff]
  %v39 = vld [vmem:[%s0 + $0x68] sm:$0xff]
  %v40 = vld [vmem:[%s0 + $0x70] sm:$0xff]
  %v41 = vld [vmem:[%s0 + $0x78] sm:$0xff]
  %v50 = vunpack.c.l.b16 %v18
  %v51 = vunpack.c.l.b16 %v19
  %v52 = vunpack.c.l.b16 %v20
  %v53 = vunpack.c.l.b16 %v21
  %v54 = vunpack.c.l.b16 %v22
  %v55 = vunpack.c.l.b16 %v23
  %v56 = vunpack.c.l.b16 %v24
  %v57 = vunpack.c.l.b16 %v25
  %v58 = vpack.c.b16 %v51, %v50
  %v59 = vpack.c.b16 %v53, %v52
  %v60 = vpack.c.b16 %v55, %v54
  %v61 = vpack.c.b16 %v57, %v56
  %v78 = vunpack.c.l.b16 %v26
  %v79 = vunpack.c.h.b16 %v26
  %v80 = vunpack.c.l.b16 %v27
  %v81 = vunpack.c.h.b16 %v27
  %v82 = vunpack.c.l.b16 %v28
  %v83 = vunpack.c.h.b16 %v28
  %v84 = vunpack.c.l.b16 %v29
  %v85 = vunpack.c.h.b16 %v29
  %v86 = vunpack.c.l.b16 %v30
  %v87 = vunpack.c.h.b16 %v30
  %v88 = vunpack.c.l.b16 %v31
  %v89 = vunpack.c.h.b16 %v31
  %v90 = vunpack.c.l.b16 %v32
  %v91 = vunpack.c.h.b16 %v32
  %v92 = vunpack.c.l.b16 %v33
  %v93 = vunpack.c.h.b16 %v33
  %v94 = vunpack.c.l.b16 %v34
  %v95 = vunpack.c.h.b16 %v34
  %v96 = vunpack.c.l.b16 %v35
  %v97 = vunpack.c.h.b16 %v35
  %v98 = vunpack.c.l.b16 %v36
  %v99 = vunpack.c.h.b16 %v36
  %v100 = vunpack.c.l.b16 %v37
  %v101 = vunpack.c.h.b16 %v37
  %v102 = vunpack.c.l.b16 %v38
  %v103 = vunpack.c.h.b16 %v38
  %v104 = vunpack.c.l.b16 %v39
  %v105 = vunpack.c.h.b16 %v39
  %v106 = vunpack.c.l.b16 %v40
  %v107 = vunpack.c.h.b16 %v40
  %v108 = vunpack.c.l.b16 %v41
  %v109 = vunpack.c.h.b16 %v41
  %v110 = vpack.c.b16 %v94, %v78
  %v111 = vpack.c.b16 %v95, %v79
  %v112 = vpack.c.b16 %v96, %v80
  %v113 = vpack.c.b16 %v97, %v81
  %v114 = vpack.c.b16 %v98, %v82
  %v115 = vpack.c.b16 %v99, %v83
  %v116 = vpack.c.b16 %v100, %v84
  %v117 = vpack.c.b16 %v101, %v85
  %v118 = vpack.c.b16 %v102, %v86
  %v119 = vpack.c.b16 %v103, %v87
  %v120 = vpack.c.b16 %v104, %v88
  %v121 = vpack.c.b16 %v105, %v89
  %v122 = vpack.c.b16 %v106, %v90
  %v123 = vpack.c.b16 %v107, %v91
  %v124 = vpack.c.b16 %v108, %v92
  %v125 = vpack.c.b16 %v109, %v93
  %vm142 = vcmask 130048
  %v144 = vsel %vm142, %v58, 0
  %v147 = vsel %vm142, %v59, 0
  %v150 = vsel %vm142, %v60, 0
  %v153 = vsel %vm142, %v61, 0
  %155 = vmatpush.bf16.msra.mxu0 0
  %156 = vmatpush.bf16.msra.mxu0 0
  %157 = vmatpush.bf16.msra.mxu0 0
  %158 = vmatpush.bf16.msra.mxu0 0
  %159 = vmatpush.bf16.msra.mxu0 0
  %160 = vmatpush.bf16.msra.mxu0 0
  %161 = vmatpush.bf16.msra.mxu0 0
  %162 = vmatpush.bf16.msra.mxu0 %v110
  %163 = vmatmul.bf16.gmra.mxu0 %v144
  %v164 = vpop.f32.mrf.mxu0
  %v165 = vadd.f32 0.0, %v164
  %v166 = vpop.f32.mrf.mxu0
  %v167 = vadd.f32 0.0, %v166
  %168 = vmatmul.bf16.gmra.mxu0 %v147
  %v169 = vpop.f32.mrf.mxu0
  %v170 = vadd.f32 0.0, %v169
  %v171 = vpop.f32.mrf.mxu0
  %v172 = vadd.f32 0.0, %v171
  %173 = vmatmul.bf16.gmra.mxu0 %v150
  %v174 = vpop.f32.mrf.mxu0
  %v175 = vadd.f32 0.0, %v174
  %v176 = vpop.f32.mrf.mxu0
  %v177 = vadd.f32 0.0, %v176
  %178 = vmatmul.bf16.gmra.mxu0 %v153
  %v179 = vpop.f32.mrf.mxu0
  %v180 = vadd.f32 0.0, %v179
  %v181 = vpop.f32.mrf.mxu0
  %v182 = vadd.f32 0.0, %v181
  %183 = vdwg.mxu0
  %184 = vmatpush.bf16.msra.mxu0 0
  %185 = vmatpush.bf16.msra.mxu0 0
  %186 = vmatpush.bf16.msra.mxu0 0
  %187 = vmatpush.bf16.msra.mxu0 0
  %188 = vmatpush.bf16.msra.mxu0 0
  %189 = vmatpush.bf16.msra.mxu0 0
  %190 = vmatpush.bf16.msra.mxu0 0
  %191 = vmatpush.bf16.msra.mxu0 %v111
  %192 = vmatmul.bf16.gmra.mxu0 %v144
  %v193 = vpop.f32.mrf.mxu0
  %v194 = vadd.f32 0.0, %v193
  %v195 = vpop.f32.mrf.mxu0
  %v196 = vadd.f32 0.0, %v195
  %197 = vmatmul.bf16.gmra.mxu0 %v147
  %v198 = vpop.f32.mrf.mxu0
  %v199 = vadd.f32 0.0, %v198
  %v200 = vpop.f32.mrf.mxu0
  %v201 = vadd.f32 0.0, %v200
  %202 = vmatmul.bf16.gmra.mxu0 %v150
  %v203 = vpop.f32.mrf.mxu0
  %v204 = vadd.f32 0.0, %v203
  %v205 = vpop.f32.mrf.mxu0
  %v206 = vadd.f32 0.0, %v205
  %207 = vmatmul.bf16.gmra.mxu0 %v153
  %v208 = vpop.f32.mrf.mxu0
  %v209 = vadd.f32 0.0, %v208
  %v210 = vpop.f32.mrf.mxu0
  %v211 = vadd.f32 0.0, %v210
  %212 = vdwg.mxu0
  %213 = vmatpush.bf16.msra.mxu0 0
  %214 = vmatpush.bf16.msra.mxu0 0
  %215 = vmatpush.bf16.msra.mxu0 0
  %216 = vmatpush.bf16.msra.mxu0 0
  %217 = vmatpush.bf16.msra.mxu0 0
  %218 = vmatpush.bf16.msra.mxu0 0
  %219 = vmatpush.bf16.msra.mxu0 0
  %220 = vmatpush.bf16.msra.mxu0 %v112
  %221 = vmatmul.bf16.gmra.mxu0 %v144
  %v222 = vpop.f32.mrf.mxu0
  %v223 = vadd.f32 0.0, %v222
  %v224 = vpop.f32.mrf.mxu0
  %v225 = vadd.f32 0.0, %v224
  %226 = vmatmul.bf16.gmra.mxu0 %v147
  %v227 = vpop.f32.mrf.mxu0
  %v228 = vadd.f32 0.0, %v227
  %v229 = vpop.f32.mrf.mxu0
  %v230 = vadd.f32 0.0, %v229
  %231 = vmatmul.bf16.gmra.mxu0 %v150
  %v232 = vpop.f32.mrf.mxu0
  %v233 = vadd.f32 0.0, %v232
  %v234 = vpop.f32.mrf.mxu0
  %v235 = vadd.f32 0.0, %v234
  %236 = vmatmul.bf16.gmra.mxu0 %v153
  %v237 = vpop.f32.mrf.mxu0
  %v238 = vadd.f32 0.0, %v237
  %v239 = vpop.f32.mrf.mxu0
  %v240 = vadd.f32 0.0, %v239
  %241 = vdwg.mxu0
  %242 = vmatpush.bf16.msra.mxu0 0
  %243 = vmatpush.bf16.msra.mxu0 0
  %244 = vmatpush.bf16.msra.mxu0 0
  %245 = vmatpush.bf16.msra.mxu0 0
  %246 = vmatpush.bf16.msra.mxu0 0
  %247 = vmatpush.bf16.msra.mxu0 0
  %248 = vmatpush.bf16.msra.mxu0 0
  %249 = vmatpush.bf16.msra.mxu0 %v113
  %250 = vmatmul.bf16.gmra.mxu0 %v144
  %v251 = vpop.f32.mrf.mxu0
  %v252 = vadd.f32 0.0, %v251
  %v253 = vpop.f32.mrf.mxu0
  %v254 = vadd.f32 0.0, %v253
  %255 = vmatmul.bf16.gmra.mxu0 %v147
  %v256 = vpop.f32.mrf.mxu0
  %v257 = vadd.f32 0.0, %v256
  %v258 = vpop.f32.mrf.mxu0
  %v259 = vadd.f32 0.0, %v258
  %260 = vmatmul.bf16.gmra.mxu0 %v150
  %v261 = vpop.f32.mrf.mxu0
  %v262 = vadd.f32 0.0, %v261
  %v263 = vpop.f32.mrf.mxu0
  %v264 = vadd.f32 0.0, %v263
  %265 = vmatmul.bf16.gmra.mxu0 %v153
  %v266 = vpop.f32.mrf.mxu0
  %v267 = vadd.f32 0.0, %v266
  %v268 = vpop.f32.mrf.mxu0
  %v269 = vadd.f32 0.0, %v268
  %270 = vdwg.mxu0
  %271 = vmatpush.bf16.msra.mxu0 0
  %272 = vmatpush.bf16.msra.mxu0 0
  %273 = vmatpush.bf16.msra.mxu0 0
  %274 = vmatpush.bf16.msra.mxu0 0
  %275 = vmatpush.bf16.msra.mxu0 0
  %276 = vmatpush.bf16.msra.mxu0 0
  %277 = vmatpush.bf16.msra.mxu0 0
  %278 = vmatpush.bf16.msra.mxu0 %v114
  %279 = vmatmul.bf16.gmra.mxu0 %v144
  %v280 = vpop.f32.mrf.mxu0
  %v281 = vadd.f32 0.0, %v280
  %v282 = vpop.f32.mrf.mxu0
  %v283 = vadd.f32 0.0, %v282
  %284 = vmatmul.bf16.gmra.mxu0 %v147
  %v285 = vpop.f32.mrf.mxu0
  %v286 = vadd.f32 0.0, %v285
  %v287 = vpop.f32.mrf.mxu0
  %v288 = vadd.f32 0.0, %v287
  %289 = vmatmul.bf16.gmra.mxu0 %v150
  %v290 = vpop.f32.mrf.mxu0
  %v291 = vadd.f32 0.0, %v290
  %v292 = vpop.f32.mrf.mxu0
  %v293 = vadd.f32 0.0, %v292
  %294 = vmatmul.bf16.gmra.mxu0 %v153
  %v295 = vpop.f32.mrf.mxu0
  %v296 = vadd.f32 0.0, %v295
  %v297 = vpop.f32.mrf.mxu0
  %v298 = vadd.f32 0.0, %v297
  %299 = vdwg.mxu0
  %300 = vmatpush.bf16.msra.mxu0 0
  %301 = vmatpush.bf16.msra.mxu0 0
  %302 = vmatpush.bf16.msra.mxu0 0
  %303 = vmatpush.bf16.msra.mxu0 0
  %304 = vmatpush.bf16.msra.mxu0 0
  %305 = vmatpush.bf16.msra.mxu0 0
  %306 = vmatpush.bf16.msra.mxu0 0
  %307 = vmatpush.bf16.msra.mxu0 %v115
  %308 = vmatmul.bf16.gmra.mxu0 %v144
  %v309 = vpop.f32.mrf.mxu0
  %v310 = vadd.f32 0.0, %v309
  %v311 = vpop.f32.mrf.mxu0
  %v312 = vadd.f32 0.0, %v311
  %313 = vmatmul.bf16.gmra.mxu0 %v147
  %v314 = vpop.f32.mrf.mxu0
  %v315 = vadd.f32 0.0, %v314
  %v316 = vpop.f32.mrf.mxu0
  %v317 = vadd.f32 0.0, %v316
  %318 = vmatmul.bf16.gmra.mxu0 %v150
  %v319 = vpop.f32.mrf.mxu0
  %v320 = vadd.f32 0.0, %v319
  %v321 = vpop.f32.mrf.mxu0
  %v322 = vadd.f32 0.0, %v321
  %323 = vmatmul.bf16.gmra.mxu0 %v153
  %v324 = vpop.f32.mrf.mxu0
  %v325 = vadd.f32 0.0, %v324
  %v326 = vpop.f32.mrf.mxu0
  %v327 = vadd.f32 0.0, %v326
  %328 = vdwg.mxu0
  %329 = vmatpush.bf16.msra.mxu0 0
  %330 = vmatpush.bf16.msra.mxu0 0
  %331 = vmatpush.bf16.msra.mxu0 0
  %332 = vmatpush.bf16.msra.mxu0 0
  %333 = vmatpush.bf16.msra.mxu0 0
  %334 = vmatpush.bf16.msra.mxu0 0
  %335 = vmatpush.bf16.msra.mxu0 0
  %336 = vmatpush.bf16.msra.mxu0 %v116
  %337 = vmatmul.bf16.gmra.mxu0 %v144
  %v338 = vpop.f32.mrf.mxu0
  %v339 = vadd.f32 0.0, %v338
  %v340 = vpop.f32.mrf.mxu0
  %v341 = vadd.f32 0.0, %v340
  %342 = vmatmul.bf16.gmra.mxu0 %v147
  %v343 = vpop.f32.mrf.mxu0
  %v344 = vadd.f32 0.0, %v343
  %v345 = vpop.f32.mrf.mxu0
  %v346 = vadd.f32 0.0, %v345
  %347 = vmatmul.bf16.gmra.mxu0 %v150
  %v348 = vpop.f32.mrf.mxu0
  %v349 = vadd.f32 0.0, %v348
  %v350 = vpop.f32.mrf.mxu0
  %v351 = vadd.f32 0.0, %v350
  %352 = vmatmul.bf16.gmra.mxu0 %v153
  %v353 = vpop.f32.mrf.mxu0
  %v354 = vadd.f32 0.0, %v353
  %v355 = vpop.f32.mrf.mxu0
  %v356 = vadd.f32 0.0, %v355
  %357 = vdwg.mxu0
  %358 = vmatpush.bf16.msra.mxu0 0
  %359 = vmatpush.bf16.msra.mxu0 0
  %360 = vmatpush.bf16.msra.mxu0 0
  %361 = vmatpush.bf16.msra.mxu0 0
  %362 = vmatpush.bf16.msra.mxu0 0
  %363 = vmatpush.bf16.msra.mxu0 0
  %364 = vmatpush.bf16.msra.mxu0 0
  %365 = vmatpush.bf16.msra.mxu0 %v117
  %366 = vmatmul.bf16.gmra.mxu0 %v144
  %v367 = vpop.f32.mrf.mxu0
  %v368 = vadd.f32 0.0, %v367
  %v369 = vpop.f32.mrf.mxu0
  %v370 = vadd.f32 0.0, %v369
  %371 = vmatmul.bf16.gmra.mxu0 %v147
  %v372 = vpop.f32.mrf.mxu0
  %v373 = vadd.f32 0.0, %v372
  %v374 = vpop.f32.mrf.mxu0
  %v375 = vadd.f32 0.0, %v374
  %376 = vmatmul.bf16.gmra.mxu0 %v150
  %v377 = vpop.f32.mrf.mxu0
  %v378 = vadd.f32 0.0, %v377
  %v379 = vpop.f32.mrf.mxu0
  %v380 = vadd.f32 0.0, %v379
  %381 = vmatmul.bf16.gmra.mxu0 %v153
  %v382 = vpop.f32.mrf.mxu0
  %v383 = vadd.f32 0.0, %v382
  %v384 = vpop.f32.mrf.mxu0
  %v385 = vadd.f32 0.0, %v384
  %386 = vdwg.mxu0
  %387 = vmatpush.bf16.msra.mxu0 0
  %388 = vmatpush.bf16.msra.mxu0 0
  %389 = vmatpush.bf16.msra.mxu0 0
  %390 = vmatpush.bf16.msra.mxu0 0
  %391 = vmatpush.bf16.msra.mxu0 0
  %392 = vmatpush.bf16.msra.mxu0 0
  %393 = vmatpush.bf16.msra.mxu0 0
  %394 = vmatpush.bf16.msra.mxu0 %v118
  %395 = vmatmul.bf16.gmra.mxu0 %v144
  %v396 = vpop.f32.mrf.mxu0
  %v397 = vadd.f32 0.0, %v396
  %v398 = vpop.f32.mrf.mxu0
  %v399 = vadd.f32 0.0, %v398
  %400 = vmatmul.bf16.gmra.mxu0 %v147
  %v401 = vpop.f32.mrf.mxu0
  %v402 = vadd.f32 0.0, %v401
  %v403 = vpop.f32.mrf.mxu0
  %v404 = vadd.f32 0.0, %v403
  %405 = vmatmul.bf16.gmra.mxu0 %v150
  %v406 = vpop.f32.mrf.mxu0
  %v407 = vadd.f32 0.0, %v406
  %v408 = vpop.f32.mrf.mxu0
  %v409 = vadd.f32 0.0, %v408
  %410 = vmatmul.bf16.gmra.mxu0 %v153
  %v411 = vpop.f32.mrf.mxu0
  %v412 = vadd.f32 0.0, %v411
  %v413 = vpop.f32.mrf.mxu0
  %v414 = vadd.f32 0.0, %v413
  %415 = vdwg.mxu0
  %416 = vmatpush.bf16.msra.mxu0 0
  %417 = vmatpush.bf16.msra.mxu0 0
  %418 = vmatpush.bf16.msra.mxu0 0
  %419 = vmatpush.bf16.msra.mxu0 0
  %420 = vmatpush.bf16.msra.mxu0 0
  %421 = vmatpush.bf16.msra.mxu0 0
  %422 = vmatpush.bf16.msra.mxu0 0
  %423 = vmatpush.bf16.msra.mxu0 %v119
  %424 = vmatmul.bf16.gmra.mxu0 %v144
  %v425 = vpop.f32.mrf.mxu0
  %v426 = vadd.f32 0.0, %v425
  %v427 = vpop.f32.mrf.mxu0
  %v428 = vadd.f32 0.0, %v427
  %429 = vmatmul.bf16.gmra.mxu0 %v147
  %v430 = vpop.f32.mrf.mxu0
  %v431 = vadd.f32 0.0, %v430
  %v432 = vpop.f32.mrf.mxu0
  %v433 = vadd.f32 0.0, %v432
  %434 = vmatmul.bf16.gmra.mxu0 %v150
  %v435 = vpop.f32.mrf.mxu0
  %v436 = vadd.f32 0.0, %v435
  %v437 = vpop.f32.mrf.mxu0
  %v438 = vadd.f32 0.0, %v437
  %439 = vmatmul.bf16.gmra.mxu0 %v153
  %v440 = vpop.f32.mrf.mxu0
  %v441 = vadd.f32 0.0, %v440
  %v442 = vpop.f32.mrf.mxu0
  %v443 = vadd.f32 0.0, %v442
  %444 = vdwg.mxu0
  %445 = vmatpush.bf16.msra.mxu0 0
  %446 = vmatpush.bf16.msra.mxu0 0
  %447 = vmatpush.bf16.msra.mxu0 0
  %448 = vmatpush.bf16.msra.mxu0 0
  %449 = vmatpush.bf16.msra.mxu0 0
  %450 = vmatpush.bf16.msra.mxu0 0
  %451 = vmatpush.bf16.msra.mxu0 0
  %452 = vmatpush.bf16.msra.mxu0 %v120
  %453 = vmatmul.bf16.gmra.mxu0 %v144
  %v454 = vpop.f32.mrf.mxu0
  %v455 = vadd.f32 0.0, %v454
  %v456 = vpop.f32.mrf.mxu0
  %v457 = vadd.f32 0.0, %v456
  %458 = vmatmul.bf16.gmra.mxu0 %v147
  %v459 = vpop.f32.mrf.mxu0
  %v460 = vadd.f32 0.0, %v459
  %v461 = vpop.f32.mrf.mxu0
  %v462 = vadd.f32 0.0, %v461
  %463 = vmatmul.bf16.gmra.mxu0 %v150
  %v464 = vpop.f32.mrf.mxu0
  %v465 = vadd.f32 0.0, %v464
  %v466 = vpop.f32.mrf.mxu0
  %v467 = vadd.f32 0.0, %v466
  %468 = vmatmul.bf16.gmra.mxu0 %v153
  %v469 = vpop.f32.mrf.mxu0
  %v470 = vadd.f32 0.0, %v469
  %v471 = vpop.f32.mrf.mxu0
  %v472 = vadd.f32 0.0, %v471
  %473 = vdwg.mxu0
  %474 = vmatpush.bf16.msra.mxu0 0
  %475 = vmatpush.bf16.msra.mxu0 0
  %476 = vmatpush.bf16.msra.mxu0 0
  %477 = vmatpush.bf16.msra.mxu0 0
  %478 = vmatpush.bf16.msra.mxu0 0
  %479 = vmatpush.bf16.msra.mxu0 0
  %480 = vmatpush.bf16.msra.mxu0 0
  %481 = vmatpush.bf16.msra.mxu0 %v121
  %482 = vmatmul.bf16.gmra.mxu0 %v144
  %v483 = vpop.f32.mrf.mxu0
  %v484 = vadd.f32 0.0, %v483
  %v485 = vpop.f32.mrf.mxu0
  %v486 = vadd.f32 0.0, %v485
  %487 = vmatmul.bf16.gmra.mxu0 %v147
  %v488 = vpop.f32.mrf.mxu0
  %v489 = vadd.f32 0.0, %v488
  %v490 = vpop.f32.mrf.mxu0
  %v491 = vadd.f32 0.0, %v490
  %492 = vmatmul.bf16.gmra.mxu0 %v150
  %v493 = vpop.f32.mrf.mxu0
  %v494 = vadd.f32 0.0, %v493
  %v495 = vpop.f32.mrf.mxu0
  %v496 = vadd.f32 0.0, %v495
  %497 = vmatmul.bf16.gmra.mxu0 %v153
  %v498 = vpop.f32.mrf.mxu0
  %v499 = vadd.f32 0.0, %v498
  %v500 = vpop.f32.mrf.mxu0
  %v501 = vadd.f32 0.0, %v500
  %502 = vdwg.mxu0
  %503 = vmatpush.bf16.msra.mxu0 0
  %504 = vmatpush.bf16.msra.mxu0 0
  %505 = vmatpush.bf16.msra.mxu0 0
  %506 = vmatpush.bf16.msra.mxu0 0
  %507 = vmatpush.bf16.msra.mxu0 0
  %508 = vmatpush.bf16.msra.mxu0 0
  %509 = vmatpush.bf16.msra.mxu0 0
  %510 = vmatpush.bf16.msra.mxu0 %v122
  %511 = vmatmul.bf16.gmra.mxu0 %v144
  %v512 = vpop.f32.mrf.mxu0
  %v513 = vadd.f32 0.0, %v512
  %v514 = vpop.f32.mrf.mxu0
  %v515 = vadd.f32 0.0, %v514
  %516 = vmatmul.bf16.gmra.mxu0 %v147
  %v517 = vpop.f32.mrf.mxu0
  %v518 = vadd.f32 0.0, %v517
  %v519 = vpop.f32.mrf.mxu0
  %v520 = vadd.f32 0.0, %v519
  %521 = vmatmul.bf16.gmra.mxu0 %v150
  %v522 = vpop.f32.mrf.mxu0
  %v523 = vadd.f32 0.0, %v522
  %v524 = vpop.f32.mrf.mxu0
  %v525 = vadd.f32 0.0, %v524
  %526 = vmatmul.bf16.gmra.mxu0 %v153
  %v527 = vpop.f32.mrf.mxu0
  %v528 = vadd.f32 0.0, %v527
  %v529 = vpop.f32.mrf.mxu0
  %v530 = vadd.f32 0.0, %v529
  %531 = vdwg.mxu0
  %532 = vmatpush.bf16.msra.mxu0 0
  %533 = vmatpush.bf16.msra.mxu0 0
  %534 = vmatpush.bf16.msra.mxu0 0
  %535 = vmatpush.bf16.msra.mxu0 0
  %536 = vmatpush.bf16.msra.mxu0 0
  %537 = vmatpush.bf16.msra.mxu0 0
  %538 = vmatpush.bf16.msra.mxu0 0
  %539 = vmatpush.bf16.msra.mxu0 %v123
  %540 = vmatmul.bf16.gmra.mxu0 %v144
  %v541 = vpop.f32.mrf.mxu0
  %v542 = vadd.f32 0.0, %v541
  %v543 = vpop.f32.mrf.mxu0
  %v544 = vadd.f32 0.0, %v543
  %545 = vmatmul.bf16.gmra.mxu0 %v147
  %v546 = vpop.f32.mrf.mxu0
  %v547 = vadd.f32 0.0, %v546
  %v548 = vpop.f32.mrf.mxu0
  %v549 = vadd.f32 0.0, %v548
  %550 = vmatmul.bf16.gmra.mxu0 %v150
  %v551 = vpop.f32.mrf.mxu0
  %v552 = vadd.f32 0.0, %v551
  %v553 = vpop.f32.mrf.mxu0
  %v554 = vadd.f32 0.0, %v553
  %555 = vmatmul.bf16.gmra.mxu0 %v153
  %v556 = vpop.f32.mrf.mxu0
  %v557 = vadd.f32 0.0, %v556
  %v558 = vpop.f32.mrf.mxu0
  %v559 = vadd.f32 0.0, %v558
  %560 = vdwg.mxu0
  %561 = vmatpush.bf16.msra.mxu0 0
  %562 = vmatpush.bf16.msra.mxu0 0
  %563 = vmatpush.bf16.msra.mxu0 0
  %564 = vmatpush.bf16.msra.mxu0 0
  %565 = vmatpush.bf16.msra.mxu0 0
  %566 = vmatpush.bf16.msra.mxu0 0
  %567 = vmatpush.bf16.msra.mxu0 0
  %568 = vmatpush.bf16.msra.mxu0 %v124
  %569 = vmatmul.bf16.gmra.mxu0 %v144
  %v570 = vpop.f32.mrf.mxu0
  %v571 = vadd.f32 0.0, %v570
  %v572 = vpop.f32.mrf.mxu0
  %v573 = vadd.f32 0.0, %v572
  %574 = vmatmul.bf16.gmra.mxu0 %v147
  %v575 = vpop.f32.mrf.mxu0
  %v576 = vadd.f32 0.0, %v575
  %v577 = vpop.f32.mrf.mxu0
  %v578 = vadd.f32 0.0, %v577
  %579 = vmatmul.bf16.gmra.mxu0 %v150
  %v580 = vpop.f32.mrf.mxu0
  %v581 = vadd.f32 0.0, %v580
  %v582 = vpop.f32.mrf.mxu0
  %v583 = vadd.f32 0.0, %v582
  %584 = vmatmul.bf16.gmra.mxu0 %v153
  %v585 = vpop.f32.mrf.mxu0
  %v586 = vadd.f32 0.0, %v585
  %v587 = vpop.f32.mrf.mxu0
  %v588 = vadd.f32 0.0, %v587
  %589 = vdwg.mxu0
  %590 = vmatpush.bf16.msra.mxu0 0
  %591 = vmatpush.bf16.msra.mxu0 0
  %592 = vmatpush.bf16.msra.mxu0 0
  %593 = vmatpush.bf16.msra.mxu0 0
  %594 = vmatpush.bf16.msra.mxu0 0
  %595 = vmatpush.bf16.msra.mxu0 0
  %596 = vmatpush.bf16.msra.mxu0 0
  %597 = vmatpush.bf16.msra.mxu0 %v125
  %598 = vmatmul.bf16.gmra.mxu0 %v144
  %v599 = vpop.f32.mrf.mxu0
  %v600 = vadd.f32 0.0, %v599
  %v601 = vpop.f32.mrf.mxu0
  %v602 = vadd.f32 0.0, %v601
  %603 = vmatmul.bf16.gmra.mxu0 %v147
  %v604 = vpop.f32.mrf.mxu0
  %v605 = vadd.f32 0.0, %v604
  %v606 = vpop.f32.mrf.mxu0
  %v607 = vadd.f32 0.0, %v606
  %608 = vmatmul.bf16.gmra.mxu0 %v150
  %v609 = vpop.f32.mrf.mxu0
  %v610 = vadd.f32 0.0, %v609
  %v611 = vpop.f32.mrf.mxu0
  %v612 = vadd.f32 0.0, %v611
  %613 = vmatmul.bf16.gmra.mxu0 %v153
  %v614 = vpop.f32.mrf.mxu0
  %v615 = vadd.f32 0.0, %v614
  %v616 = vpop.f32.mrf.mxu0
  %v617 = vadd.f32 0.0, %v616
  %618 = vdwg.mxu0
  %v619 = vadd.f32 %v165, %v194
  %v620 = vadd.f32 %v619, %v223
  %v621 = vadd.f32 %v620, %v252
  %v622 = vadd.f32 %v621, %v281
  %v623 = vadd.f32 %v622, %v310
  %v624 = vadd.f32 %v623, %v339
  %v625 = vadd.f32 %v624, %v368
  %v626 = vadd.f32 %v625, %v397
  %v627 = vadd.f32 %v626, %v426
  %v628 = vadd.f32 %v627, %v455
  %v629 = vadd.f32 %v628, %v484
  %v630 = vadd.f32 %v629, %v513
  %v631 = vadd.f32 %v630, %v542
  %v632 = vadd.f32 %v631, %v571
  %v633 = vadd.f32 %v632, %v600
  %634 = vadd.xlane.f32.xlu0 %v633
  %v635 = vpop.xlane.xlu0 %634
  %v636 = vadd.f32 %v167, %v196
  %v637 = vadd.f32 %v636, %v225
  %v638 = vadd.f32 %v637, %v254
  %v639 = vadd.f32 %v638, %v283
  %v640 = vadd.f32 %v639, %v312
  %v641 = vadd.f32 %v640, %v341
  %v642 = vadd.f32 %v641, %v370
  %v643 = vadd.f32 %v642, %v399
  %v644 = vadd.f32 %v643, %v428
  %v645 = vadd.f32 %v644, %v457
  %v646 = vadd.f32 %v645, %v486
  %v647 = vadd.f32 %v646, %v515
  %v648 = vadd.f32 %v647, %v544
  %v649 = vadd.f32 %v648, %v573
  %v650 = vadd.f32 %v649, %v602
  %651 = vadd.xlane.f32.xlu0 %v650
  %v652 = vpop.xlane.xlu0 %651
  %v653 = vadd.f32 %v170, %v199
  %v654 = vadd.f32 %v653, %v228
  %v655 = vadd.f32 %v654, %v257
  %v656 = vadd.f32 %v655, %v286
  %v657 = vadd.f32 %v656, %v315
  %v658 = vadd.f32 %v657, %v344
  %v659 = vadd.f32 %v658, %v373
  %v660 = vadd.f32 %v659, %v402
  %v661 = vadd.f32 %v660, %v431
  %v662 = vadd.f32 %v661, %v460
  %v663 = vadd.f32 %v662, %v489
  %v664 = vadd.f32 %v663, %v518
  %v665 = vadd.f32 %v664, %v547
  %v666 = vadd.f32 %v665, %v576
  %v667 = vadd.f32 %v666, %v605
  %668 = vadd.xlane.f32.xlu0 %v667
  %v669 = vpop.xlane.xlu0 %668
  %v670 = vadd.f32 %v172, %v201
  %v671 = vadd.f32 %v670, %v230
  %v672 = vadd.f32 %v671, %v259
  %v673 = vadd.f32 %v672, %v288
  %v674 = vadd.f32 %v673, %v317
  %v675 = vadd.f32 %v674, %v346
  %v676 = vadd.f32 %v675, %v375
  %v677 = vadd.f32 %v676, %v404
  %v678 = vadd.f32 %v677, %v433
  %v679 = vadd.f32 %v678, %v462
  %v680 = vadd.f32 %v679, %v491
  %v681 = vadd.f32 %v680, %v520
  %v682 = vadd.f32 %v681, %v549
  %v683 = vadd.f32 %v682, %v578
  %v684 = vadd.f32 %v683, %v607
  %685 = vadd.xlane.f32.xlu0 %v684
  %v686 = vpop.xlane.xlu0 %685
  %v687 = vadd.f32 %v175, %v204
  %v688 = vadd.f32 %v687, %v233
  %v689 = vadd.f32 %v688, %v262
  %v690 = vadd.f32 %v689, %v291
  %v691 = vadd.f32 %v690, %v320
  %v692 = vadd.f32 %v691, %v349
  %v693 = vadd.f32 %v692, %v378
  %v694 = vadd.f32 %v693, %v407
  %v695 = vadd.f32 %v694, %v436
  %v696 = vadd.f32 %v695, %v465
  %v697 = vadd.f32 %v696, %v494
  %v698 = vadd.f32 %v697, %v523
  %v699 = vadd.f32 %v698, %v552
  %v700 = vadd.f32 %v699, %v581
  %v701 = vadd.f32 %v700, %v610
  %702 = vadd.xlane.f32.xlu0 %v701
  %v703 = vpop.xlane.xlu0 %702
  %v704 = vadd.f32 %v177, %v206
  %v705 = vadd.f32 %v704, %v235
  %v706 = vadd.f32 %v705, %v264
  %v707 = vadd.f32 %v706, %v293
  %v708 = vadd.f32 %v707, %v322
  %v709 = vadd.f32 %v708, %v351
  %v710 = vadd.f32 %v709, %v380
  %v711 = vadd.f32 %v710, %v409
  %v712 = vadd.f32 %v711, %v438
  %v713 = vadd.f32 %v712, %v467
  %v714 = vadd.f32 %v713, %v496
  %v715 = vadd.f32 %v714, %v525
  %v716 = vadd.f32 %v715, %v554
  %v717 = vadd.f32 %v716, %v583
  %v718 = vadd.f32 %v717, %v612
  %719 = vadd.xlane.f32.xlu0 %v718
  %v720 = vpop.xlane.xlu0 %719
  %v721 = vadd.f32 %v180, %v209
  %v722 = vadd.f32 %v721, %v238
  %v723 = vadd.f32 %v722, %v267
  %v724 = vadd.f32 %v723, %v296
  %v725 = vadd.f32 %v724, %v325
  %v726 = vadd.f32 %v725, %v354
  %v727 = vadd.f32 %v726, %v383
  %v728 = vadd.f32 %v727, %v412
  %v729 = vadd.f32 %v728, %v441
  %v730 = vadd.f32 %v729, %v470
  %v731 = vadd.f32 %v730, %v499
  %v732 = vadd.f32 %v731, %v528
  %v733 = vadd.f32 %v732, %v557
  %v734 = vadd.f32 %v733, %v586
  %v735 = vadd.f32 %v734, %v615
  %736 = vadd.xlane.f32.xlu0 %v735
  %v737 = vpop.xlane.xlu0 %736
  %v738 = vadd.f32 %v182, %v211
  %v739 = vadd.f32 %v738, %v240
  %v740 = vadd.f32 %v739, %v269
  %v741 = vadd.f32 %v740, %v298
  %v742 = vadd.f32 %v741, %v327
  %v743 = vadd.f32 %v742, %v356
  %v744 = vadd.f32 %v743, %v385
  %v745 = vadd.f32 %v744, %v414
  %v746 = vadd.f32 %v745, %v443
  %v747 = vadd.f32 %v746, %v472
  %v748 = vadd.f32 %v747, %v501
  %v749 = vadd.f32 %v748, %v530
  %v750 = vadd.f32 %v749, %v559
  %v751 = vadd.f32 %v750, %v588
  %v752 = vadd.f32 %v751, %v617
  %753 = vadd.xlane.f32.xlu0 %v752
  %v754 = vpop.xlane.xlu0 %753
  %v755 = vmul.f32 %v635, 0.0005202914
  %v756 = vmul.f32 %v652, 0.0005202914
  %v757 = vmul.f32 %v669, 0.0005202914
  %v758 = vmul.f32 %v686, 0.0005202914
  %v759 = vmul.f32 %v703, 0.0005202914
  %v760 = vmul.f32 %v720, 0.0005202914
  %v761 = vmul.f32 %v737, 0.0005202914
  %v762 = vmul.f32 %v754, 0.0005202914
  %v763 = vsub.f32 %v165, %v755
  %v764 = vsub.f32 %v194, %v755
  %v765 = vsub.f32 %v223, %v755
  %v766 = vsub.f32 %v252, %v755
  %v767 = vsub.f32 %v281, %v755
  %v768 = vsub.f32 %v310, %v755
  %v769 = vsub.f32 %v339, %v755
  %v770 = vsub.f32 %v368, %v755
  %v771 = vsub.f32 %v397, %v755
  %v772 = vsub.f32 %v426, %v755
  %v773 = vsub.f32 %v455, %v755
  %v774 = vsub.f32 %v484, %v755
  %v775 = vsub.f32 %v513, %v755
  %v776 = vsub.f32 %v542, %v755
  %v777 = vsub.f32 %v571, %v755
  %v778 = vsub.f32 %v600, %v755
  %v779 = vsub.f32 %v167, %v756
  %v780 = vsub.f32 %v196, %v756
  %v781 = vsub.f32 %v225, %v756
  %v782 = vsub.f32 %v254, %v756
  %v783 = vsub.f32 %v283, %v756
  %v784 = vsub.f32 %v312, %v756
  %v785 = vsub.f32 %v341, %v756
  %v786 = vsub.f32 %v370, %v756
  %v787 = vsub.f32 %v399, %v756
  %v788 = vsub.f32 %v428, %v756
  %v789 = vsub.f32 %v457, %v756
  %v790 = vsub.f32 %v486, %v756
  %v791 = vsub.f32 %v515, %v756
  %v792 = vsub.f32 %v544, %v756
  %v793 = vsub.f32 %v573, %v756
  %v794 = vsub.f32 %v602, %v756
  %v795 = vsub.f32 %v170, %v757
  %v796 = vsub.f32 %v199, %v757
  %v797 = vsub.f32 %v228, %v757
  %v798 = vsub.f32 %v257, %v757
  %v799 = vsub.f32 %v286, %v757
  %v800 = vsub.f32 %v315, %v757
  %v801 = vsub.f32 %v344, %v757
  %v802 = vsub.f32 %v373, %v757
  %v803 = vsub.f32 %v402, %v757
  %v804 = vsub.f32 %v431, %v757
  %v805 = vsub.f32 %v460, %v757
  %v806 = vsub.f32 %v489, %v757
  %v807 = vsub.f32 %v518, %v757
  %v808 = vsub.f32 %v547, %v757
  %v809 = vsub.f32 %v576, %v757
  %v810 = vsub.f32 %v605, %v757
  %v811 = vsub.f32 %v172, %v758
  %v812 = vsub.f32 %v201, %v758
  %v813 = vsub.f32 %v230, %v758
  %v814 = vsub.f32 %v259, %v758
  %v815 = vsub.f32 %v288, %v758
  %v816 = vsub.f32 %v317, %v758
  %v817 = vsub.f32 %v346, %v758
  %v818 = vsub.f32 %v375, %v758
  %v819 = vsub.f32 %v404, %v758
  %v820 = vsub.f32 %v433, %v758
  %v821 = vsub.f32 %v462, %v758
  %v822 = vsub.f32 %v491, %v758
  %v823 = vsub.f32 %v520, %v758
  %v824 = vsub.f32 %v549, %v758
  %v825 = vsub.f32 %v578, %v758
  %v826 = vsub.f32 %v607, %v758
  %v827 = vsub.f32 %v175, %v759
  %v828 = vsub.f32 %v204, %v759
  %v829 = vsub.f32 %v233, %v759
  %v830 = vsub.f32 %v262, %v759
  %v831 = vsub.f32 %v291, %v759
  %v832 = vsub.f32 %v320, %v759
  %v833 = vsub.f32 %v349, %v759
  %v834 = vsub.f32 %v378, %v759
  %v835 = vsub.f32 %v407, %v759
  %v836 = vsub.f32 %v436, %v759
  %v837 = vsub.f32 %v465, %v759
  %v838 = vsub.f32 %v494, %v759
  %v839 = vsub.f32 %v523, %v759
  %v840 = vsub.f32 %v552, %v759
  %v841 = vsub.f32 %v581, %v759
  %v842 = vsub.f32 %v610, %v759
  %v843 = vsub.f32 %v177, %v760
  %v844 = vsub.f32 %v206, %v760
  %v845 = vsub.f32 %v235, %v760
  %v846 = vsub.f32 %v264, %v760
  %v847 = vsub.f32 %v293, %v760
  %v848 = vsub.f32 %v322, %v760
  %v849 = vsub.f32 %v351, %v760
  %v850 = vsub.f32 %v380, %v760
  %v851 = vsub.f32 %v409, %v760
  %v852 = vsub.f32 %v438, %v760
  %v853 = vsub.f32 %v467, %v760
  %v854 = vsub.f32 %v496, %v760
  %v855 = vsub.f32 %v525, %v760
  %v856 = vsub.f32 %v554, %v760
  %v857 = vsub.f32 %v583, %v760
  %v858 = vsub.f32 %v612, %v760
  %v859 = vsub.f32 %v180, %v761
  %v860 = vsub.f32 %v209, %v761
  %v861 = vsub.f32 %v238, %v761
  %v862 = vsub.f32 %v267, %v761
  %v863 = vsub.f32 %v296, %v761
  %v864 = vsub.f32 %v325, %v761
  %v865 = vsub.f32 %v354, %v761
  %v866 = vsub.f32 %v383, %v761
  %v867 = vsub.f32 %v412, %v761
  %v868 = vsub.f32 %v441, %v761
  %v869 = vsub.f32 %v470, %v761
  %v870 = vsub.f32 %v499, %v761
  %v871 = vsub.f32 %v528, %v761
  %v872 = vsub.f32 %v557, %v761
  %v873 = vsub.f32 %v586, %v761
  %v874 = vsub.f32 %v615, %v761
  %v875 = vsub.f32 %v182, %v762
  %v876 = vsub.f32 %v211, %v762
  %v877 = vsub.f32 %v240, %v762
  %v878 = vsub.f32 %v269, %v762
  %v879 = vsub.f32 %v298, %v762
  %v880 = vsub.f32 %v327, %v762
  %v881 = vsub.f32 %v356, %v762
  %v882 = vsub.f32 %v385, %v762
  %v883 = vsub.f32 %v414, %v762
  %v884 = vsub.f32 %v443, %v762
  %v885 = vsub.f32 %v472, %v762
  %v886 = vsub.f32 %v501, %v762
  %v887 = vsub.f32 %v530, %v762
  %v888 = vsub.f32 %v559, %v762
  %v889 = vsub.f32 %v588, %v762
  %v890 = vsub.f32 %v617, %v762
  %v891 = vmul.f32 %v763, %v763
  %v892 = vmul.f32 %v764, %v764
  %v893 = vmul.f32 %v765, %v765
  %v894 = vmul.f32 %v766, %v766
  %v895 = vmul.f32 %v767, %v767
  %v896 = vmul.f32 %v768, %v768
  %v897 = vmul.f32 %v769, %v769
  %v898 = vmul.f32 %v770, %v770
  %v899 = vmul.f32 %v771, %v771
  %v900 = vmul.f32 %v772, %v772
  %v901 = vmul.f32 %v773, %v773
  %v902 = vmul.f32 %v774, %v774
  %v903 = vmul.f32 %v775, %v775
  %v904 = vmul.f32 %v776, %v776
  %v905 = vmul.f32 %v777, %v777
  %v906 = vmul.f32 %v778, %v778
  %v907 = vmul.f32 %v779, %v779
  %v908 = vmul.f32 %v780, %v780
  %v909 = vmul.f32 %v781, %v781
  %v910 = vmul.f32 %v782, %v782
  %v911 = vmul.f32 %v783, %v783
  %v912 = vmul.f32 %v784, %v784
  %v913 = vmul.f32 %v785, %v785
  %v914 = vmul.f32 %v786, %v786
  %v915 = vmul.f32 %v787, %v787
  %v916 = vmul.f32 %v788, %v788
  %v917 = vmul.f32 %v789, %v789
  %v918 = vmul.f32 %v790, %v790
  %v919 = vmul.f32 %v791, %v791
  %v920 = vmul.f32 %v792, %v792
  %v921 = vmul.f32 %v793, %v793
  %v922 = vmul.f32 %v794, %v794
  %v923 = vmul.f32 %v795, %v795
  %v924 = vmul.f32 %v796, %v796
  %v925 = vmul.f32 %v797, %v797
  %v926 = vmul.f32 %v798, %v798
  %v927 = vmul.f32 %v799, %v799
  %v928 = vmul.f32 %v800, %v800
  %v929 = vmul.f32 %v801, %v801
  %v930 = vmul.f32 %v802, %v802
  %v931 = vmul.f32 %v803, %v803
  %v932 = vmul.f32 %v804, %v804
  %v933 = vmul.f32 %v805, %v805
  %v934 = vmul.f32 %v806, %v806
  %v935 = vmul.f32 %v807, %v807
  %v936 = vmul.f32 %v808, %v808
  %v937 = vmul.f32 %v809, %v809
  %v938 = vmul.f32 %v810, %v810
  %v939 = vmul.f32 %v811, %v811
  %v940 = vmul.f32 %v812, %v812
  %v941 = vmul.f32 %v813, %v813
  %v942 = vmul.f32 %v814, %v814
  %v943 = vmul.f32 %v815, %v815
  %v944 = vmul.f32 %v816, %v816
  %v945 = vmul.f32 %v817, %v817
  %v946 = vmul.f32 %v818, %v818
  %v947 = vmul.f32 %v819, %v819
  %v948 = vmul.f32 %v820, %v820
  %v949 = vmul.f32 %v821, %v821
  %v950 = vmul.f32 %v822, %v822
  %v951 = vmul.f32 %v823, %v823
  %v952 = vmul.f32 %v824, %v824
  %v953 = vmul.f32 %v825, %v825
  %v954 = vmul.f32 %v826, %v826
  %v955 = vmul.f32 %v827, %v827
  %v956 = vmul.f32 %v828, %v828
  %v957 = vmul.f32 %v829, %v829
  %v958 = vmul.f32 %v830, %v830
  %v959 = vmul.f32 %v831, %v831
  %v960 = vmul.f32 %v832, %v832
  %v961 = vmul.f32 %v833, %v833
  %v962 = vmul.f32 %v834, %v834
  %v963 = vmul.f32 %v835, %v835
  %v964 = vmul.f32 %v836, %v836
  %v965 = vmul.f32 %v837, %v837
  %v966 = vmul.f32 %v838, %v838
  %v967 = vmul.f32 %v839, %v839
  %v968 = vmul.f32 %v840, %v840
  %v969 = vmul.f32 %v841, %v841
  %v970 = vmul.f32 %v842, %v842
  %v971 = vmul.f32 %v843, %v843
  %v972 = vmul.f32 %v844, %v844
  %v973 = vmul.f32 %v845, %v845
  %v974 = vmul.f32 %v846, %v846
  %v975 = vmul.f32 %v847, %v847
  %v976 = vmul.f32 %v848, %v848
  %v977 = vmul.f32 %v849, %v849
  %v978 = vmul.f32 %v850, %v850
  %v979 = vmul.f32 %v851, %v851
  %v980 = vmul.f32 %v852, %v852
  %v981 = vmul.f32 %v853, %v853
  %v982 = vmul.f32 %v854, %v854
  %v983 = vmul.f32 %v855, %v855
  %v984 = vmul.f32 %v856, %v856
  %v985 = vmul.f32 %v857, %v857
  %v986 = vmul.f32 %v858, %v858
  %v987 = vmul.f32 %v859, %v859
  %v988 = vmul.f32 %v860, %v860
  %v989 = vmul.f32 %v861, %v861
  %v990 = vmul.f32 %v862, %v862
  %v991 = vmul.f32 %v863, %v863
  %v992 = vmul.f32 %v864, %v864
  %v993 = vmul.f32 %v865, %v865
  %v994 = vmul.f32 %v866, %v866
  %v995 = vmul.f32 %v867, %v867
  %v996 = vmul.f32 %v868, %v868
  %v997 = vmul.f32 %v869, %v869
  %v998 = vmul.f32 %v870, %v870
  %v999 = vmul.f32 %v871, %v871
  %v1000 = vmul.f32 %v872, %v872
  %v1001 = vmul.f32 %v873, %v873
  %v1002 = vmul.f32 %v874, %v874
  %v1003 = vmul.f32 %v875, %v875
  %v1004 = vmul.f32 %v876, %v876
  %v1005 = vmul.f32 %v877, %v877
  %v1006 = vmul.f32 %v878, %v878
  %v1007 = vmul.f32 %v879, %v879
  %v1008 = vmul.f32 %v880, %v880
  %v1009 = vmul.f32 %v881, %v881
  %v1010 = vmul.f32 %v882, %v882
  %v1011 = vmul.f32 %v883, %v883
  %v1012 = vmul.f32 %v884, %v884
  %v1013 = vmul.f32 %v885, %v885
  %v1014 = vmul.f32 %v886, %v886
  %v1015 = vmul.f32 %v887, %v887
  %v1016 = vmul.f32 %v888, %v888
  %v1017 = vmul.f32 %v889, %v889
  %v1018 = vmul.f32 %v890, %v890
  %v1019 = vadd.f32 %v891, %v892
  %v1020 = vadd.f32 %v1019, %v893
  %v1021 = vadd.f32 %v1020, %v894
  %v1022 = vadd.f32 %v1021, %v895
  %v1023 = vadd.f32 %v1022, %v896
  %v1024 = vadd.f32 %v1023, %v897
  %v1025 = vadd.f32 %v1024, %v898
  %v1026 = vadd.f32 %v1025, %v899
  %v1027 = vadd.f32 %v1026, %v900
  %v1028 = vadd.f32 %v1027, %v901
  %v1029 = vadd.f32 %v1028, %v902
  %v1030 = vadd.f32 %v1029, %v903
  %v1031 = vadd.f32 %v1030, %v904
  %v1032 = vadd.f32 %v1031, %v905
  %v1033 = vadd.f32 %v1032, %v906
  %1034 = vadd.xlane.f32.xlu0 %v1033
  %v1035 = vpop.xlane.xlu0 %1034
  %v1036 = vadd.f32 %v907, %v908
  %v1037 = vadd.f32 %v1036, %v909
  %v1038 = vadd.f32 %v1037, %v910
  %v1039 = vadd.f32 %v1038, %v911
  %v1040 = vadd.f32 %v1039, %v912
  %v1041 = vadd.f32 %v1040, %v913
  %v1042 = vadd.f32 %v1041, %v914
  %v1043 = vadd.f32 %v1042, %v915
  %v1044 = vadd.f32 %v1043, %v916
  %v1045 = vadd.f32 %v1044, %v917
  %v1046 = vadd.f32 %v1045, %v918
  %v1047 = vadd.f32 %v1046, %v919
  %v1048 = vadd.f32 %v1047, %v920
  %v1049 = vadd.f32 %v1048, %v921
  %v1050 = vadd.f32 %v1049, %v922
  %1051 = vadd.xlane.f32.xlu0 %v1050
  %v1052 = vpop.xlane.xlu0 %1051
  %v1053 = vadd.f32 %v923, %v924
  %v1054 = vadd.f32 %v1053, %v925
  %v1055 = vadd.f32 %v1054, %v926
  %v1056 = vadd.f32 %v1055, %v927
  %v1057 = vadd.f32 %v1056, %v928
  %v1058 = vadd.f32 %v1057, %v929
  %v1059 = vadd.f32 %v1058, %v930
  %v1060 = vadd.f32 %v1059, %v931
  %v1061 = vadd.f32 %v1060, %v932
  %v1062 = vadd.f32 %v1061, %v933
  %v1063 = vadd.f32 %v1062, %v934
  %v1064 = vadd.f32 %v1063, %v935
  %v1065 = vadd.f32 %v1064, %v936
  %v1066 = vadd.f32 %v1065, %v937
  %v1067 = vadd.f32 %v1066, %v938
  %1068 = vadd.xlane.f32.xlu0 %v1067
  %v1069 = vpop.xlane.xlu0 %1068
  %v1070 = vadd.f32 %v939, %v940
  %v1071 = vadd.f32 %v1070, %v941
  %v1072 = vadd.f32 %v1071, %v942
  %v1073 = vadd.f32 %v1072, %v943
  %v1074 = vadd.f32 %v1073, %v944
  %v1075 = vadd.f32 %v1074, %v945
  %v1076 = vadd.f32 %v1075, %v946
  %v1077 = vadd.f32 %v1076, %v947
  %v1078 = vadd.f32 %v1077, %v948
  %v1079 = vadd.f32 %v1078, %v949
  %v1080 = vadd.f32 %v1079, %v950
  %v1081 = vadd.f32 %v1080, %v951
  %v1082 = vadd.f32 %v1081, %v952
  %v1083 = vadd.f32 %v1082, %v953
  %v1084 = vadd.f32 %v1083, %v954
  %1085 = vadd.xlane.f32.xlu0 %v1084
  %v1086 = vpop.xlane.xlu0 %1085
  %v1087 = vadd.f32 %v955, %v956
  %v1088 = vadd.f32 %v1087, %v957
  %v1089 = vadd.f32 %v1088, %v958
  %v1090 = vadd.f32 %v1089, %v959
  %v1091 = vadd.f32 %v1090, %v960
  %v1092 = vadd.f32 %v1091, %v961
  %v1093 = vadd.f32 %v1092, %v962
  %v1094 = vadd.f32 %v1093, %v963
  %v1095 = vadd.f32 %v1094, %v964
  %v1096 = vadd.f32 %v1095, %v965
  %v1097 = vadd.f32 %v1096, %v966
  %v1098 = vadd.f32 %v1097, %v967
  %v1099 = vadd.f32 %v1098, %v968
  %v1100 = vadd.f32 %v1099, %v969
  %v1101 = vadd.f32 %v1100, %v970
  %1102 = vadd.xlane.f32.xlu0 %v1101
  %v1103 = vpop.xlane.xlu0 %1102
  %v1104 = vadd.f32 %v971, %v972
  %v1105 = vadd.f32 %v1104, %v973
  %v1106 = vadd.f32 %v1105, %v974
  %v1107 = vadd.f32 %v1106, %v975
  %v1108 = vadd.f32 %v1107, %v976
  %v1109 = vadd.f32 %v1108, %v977
  %v1110 = vadd.f32 %v1109, %v978
  %v1111 = vadd.f32 %v1110, %v979
  %v1112 = vadd.f32 %v1111, %v980
  %v1113 = vadd.f32 %v1112, %v981
  %v1114 = vadd.f32 %v1113, %v982
  %v1115 = vadd.f32 %v1114, %v983
  %v1116 = vadd.f32 %v1115, %v984
  %v1117 = vadd.f32 %v1116, %v985
  %v1118 = vadd.f32 %v1117, %v986
  %1119 = vadd.xlane.f32.xlu0 %v1118
  %v1120 = vpop.xlane.xlu0 %1119
  %v1121 = vadd.f32 %v987, %v988
  %v1122 = vadd.f32 %v1121, %v989
  %v1123 = vadd.f32 %v1122, %v990
  %v1124 = vadd.f32 %v1123, %v991
  %v1125 = vadd.f32 %v1124, %v992
  %v1126 = vadd.f32 %v1125, %v993
  %v1127 = vadd.f32 %v1126, %v994
  %v1128 = vadd.f32 %v1127, %v995
  %v1129 = vadd.f32 %v1128, %v996
  %v1130 = vadd.f32 %v1129, %v997
  %v1131 = vadd.f32 %v1130, %v998
  %v1132 = vadd.f32 %v1131, %v999
  %v1133 = vadd.f32 %v1132, %v1000
  %v1134 = vadd.f32 %v1133, %v1001
  %v1135 = vadd.f32 %v1134, %v1002
  %1136 = vadd.xlane.f32.xlu0 %v1135
  %v1137 = vpop.xlane.xlu0 %1136
  %v1138 = vadd.f32 %v1003, %v1004
  %v1139 = vadd.f32 %v1138, %v1005
  %v1140 = vadd.f32 %v1139, %v1006
  %v1141 = vadd.f32 %v1140, %v1007
  %v1142 = vadd.f32 %v1141, %v1008
  %v1143 = vadd.f32 %v1142, %v1009
  %v1144 = vadd.f32 %v1143, %v1010
  %v1145 = vadd.f32 %v1144, %v1011
  %v1146 = vadd.f32 %v1145, %v1012
  %v1147 = vadd.f32 %v1146, %v1013
  %v1148 = vadd.f32 %v1147, %v1014
  %v1149 = vadd.f32 %v1148, %v1015
  %v1150 = vadd.f32 %v1149, %v1016
  %v1151 = vadd.f32 %v1150, %v1017
  %v1152 = vadd.f32 %v1151, %v1018
  %1153 = vadd.xlane.f32.xlu0 %v1152
  %v1154 = vpop.xlane.xlu0 %1153
  %v1155 = vmul.f32 %v755, 126.0
  %v1156 = vmul.f32 %v756, 126.0
  %v1157 = vmul.f32 %v757, 126.0
  %v1158 = vmul.f32 %v758, 126.0
  %v1159 = vmul.f32 %v759, 126.0
  %v1160 = vmul.f32 %v760, 126.0
  %v1161 = vmul.f32 %v761, 126.0
  %v1162 = vmul.f32 %v762, 126.0
  %v1163 = vmul.f32 %v1155, %v755
  %v1164 = vmul.f32 %v1156, %v756
  %v1165 = vmul.f32 %v1157, %v757
  %v1166 = vmul.f32 %v1158, %v758
  %v1167 = vmul.f32 %v1159, %v759
  %v1168 = vmul.f32 %v1160, %v760
  %v1169 = vmul.f32 %v1161, %v761
  %v1170 = vmul.f32 %v1162, %v762
  %v1171 = vsub.f32 %v1035, %v1163
  %v1172 = vsub.f32 %v1052, %v1164
  %v1173 = vsub.f32 %v1069, %v1165
  %v1174 = vsub.f32 %v1086, %v1166
  %v1175 = vsub.f32 %v1103, %v1167
  %v1176 = vsub.f32 %v1120, %v1168
  %v1177 = vsub.f32 %v1137, %v1169
  %v1178 = vsub.f32 %v1154, %v1170
  %v1179 = vmul.f32 %v1171, 0.0005202914
  %v1180 = vmul.f32 %v1172, 0.0005202914
  %v1181 = vmul.f32 %v1173, 0.0005202914
  %v1182 = vmul.f32 %v1174, 0.0005202914
  %v1183 = vmul.f32 %v1175, 0.0005202914
  %v1184 = vmul.f32 %v1176, 0.0005202914
  %v1185 = vmul.f32 %v1177, 0.0005202914
  %v1186 = vmul.f32 %v1178, 0.0005202914
  %v1187 = vld [vmem:[%s2] sm:$0xff]
  %v1188 = vld [vmem:[%s2 + $0x8] sm:$0xff]
  %v1189 = vld [vmem:[%s2 + $0x10] sm:$0xff]
  %v1190 = vld [vmem:[%s2 + $0x18] sm:$0xff]
  %v1191 = vld [vmem:[%s2 + $0x20] sm:$0xff]
  %v1192 = vld [vmem:[%s2 + $0x28] sm:$0xff]
  %v1193 = vld [vmem:[%s2 + $0x30] sm:$0xff]
  %v1194 = vld [vmem:[%s2 + $0x38] sm:$0xff]
  %v1195 = vadd.f32 %v1179, 1e-05
  %v1196 = vadd.f32 %v1180, 1e-05
  %v1197 = vadd.f32 %v1181, 1e-05
  %v1198 = vadd.f32 %v1182, 1e-05
  %v1199 = vadd.f32 %v1183, 1e-05
  %v1200 = vadd.f32 %v1184, 1e-05
  %v1201 = vadd.f32 %v1185, 1e-05
  %v1202 = vadd.f32 %v1186, 1e-05
  %v1203 = vrsqrt.pop %v1195
  %v1204 = vmul.f32 %v1203, %v1195
  %v1205 = vmul.f32 %v1204, %v1203
  %v1206 = vmul.f32 0.5, %v1205
  %v1207 = vsub.f32 1.5, %v1206
  %v1208 = vmul.f32 %v1203, %v1207
  %vm1209 = vweird.f32 %v1195
  %vm1210 = vweird.f32 %v1203
  %vm1211 = vmor %vm1209, %vm1210
  %v1212 = vsel %vm1211, %v1203, %v1208
  %v1213 = vrsqrt.pop %v1196
  %v1214 = vmul.f32 %v1213, %v1196
  %v1215 = vmul.f32 %v1214, %v1213
  %v1216 = vmul.f32 0.5, %v1215
  %v1217 = vsub.f32 1.5, %v1216
  %v1218 = vmul.f32 %v1213, %v1217
  %vm1219 = vweird.f32 %v1196
  %vm1220 = vweird.f32 %v1213
  %vm1221 = vmor %vm1219, %vm1220
  %v1222 = vsel %vm1221, %v1213, %v1218
  %v1223 = vrsqrt.pop %v1197
  %v1224 = vmul.f32 %v1223, %v1197
  %v1225 = vmul.f32 %v1224, %v1223
  %v1226 = vmul.f32 0.5, %v1225
  %v1227 = vsub.f32 1.5, %v1226
  %v1228 = vmul.f32 %v1223, %v1227
  %vm1229 = vweird.f32 %v1197
  %vm1230 = vweird.f32 %v1223
  %vm1231 = vmor %vm1229, %vm1230
  %v1232 = vsel %vm1231, %v1223, %v1228
  %v1233 = vrsqrt.pop %v1198
  %v1234 = vmul.f32 %v1233, %v1198
  %v1235 = vmul.f32 %v1234, %v1233
  %v1236 = vmul.f32 0.5, %v1235
  %v1237 = vsub.f32 1.5, %v1236
  %v1238 = vmul.f32 %v1233, %v1237
  %vm1239 = vweird.f32 %v1198
  %vm1240 = vweird.f32 %v1233
  %vm1241 = vmor %vm1239, %vm1240
  %v1242 = vsel %vm1241, %v1233, %v1238
  %v1243 = vrsqrt.pop %v1199
  %v1244 = vmul.f32 %v1243, %v1199
  %v1245 = vmul.f32 %v1244, %v1243
  %v1246 = vmul.f32 0.5, %v1245
  %v1247 = vsub.f32 1.5, %v1246
  %v1248 = vmul.f32 %v1243, %v1247
  %vm1249 = vweird.f32 %v1199
  %vm1250 = vweird.f32 %v1243
  %vm1251 = vmor %vm1249, %vm1250
  %v1252 = vsel %vm1251, %v1243, %v1248
  %v1253 = vrsqrt.pop %v1200
  %v1254 = vmul.f32 %v1253, %v1200
  %v1255 = vmul.f32 %v1254, %v1253
  %v1256 = vmul.f32 0.5, %v1255
  %v1257 = vsub.f32 1.5, %v1256
  %v1258 = vmul.f32 %v1253, %v1257
  %vm1259 = vweird.f32 %v1200
  %vm1260 = vweird.f32 %v1253
  %vm1261 = vmor %vm1259, %vm1260
  %v1262 = vsel %vm1261, %v1253, %v1258
  %v1263 = vrsqrt.pop %v1201
  %v1264 = vmul.f32 %v1263, %v1201
  %v1265 = vmul.f32 %v1264, %v1263
  %v1266 = vmul.f32 0.5, %v1265
  %v1267 = vsub.f32 1.5, %v1266
  %v1268 = vmul.f32 %v1263, %v1267
  %vm1269 = vweird.f32 %v1201
  %vm1270 = vweird.f32 %v1263
  %vm1271 = vmor %vm1269, %vm1270
  %v1272 = vsel %vm1271, %v1263, %v1268
  %v1273 = vrsqrt.pop %v1202
  %v1274 = vmul.f32 %v1273, %v1202
  %v1275 = vmul.f32 %v1274, %v1273
  %v1276 = vmul.f32 0.5, %v1275
  %v1277 = vsub.f32 1.5, %v1276
  %v1278 = vmul.f32 %v1273, %v1277
  %vm1279 = vweird.f32 %v1202
  %vm1280 = vweird.f32 %v1273
  %vm1281 = vmor %vm1279, %vm1280
  %v1282 = vsel %vm1281, %v1273, %v1278
  %v1283 = vmul.f32 %v1187, %v1212
  %v1284 = vmul.f32 %v1188, %v1222
  %v1285 = vmul.f32 %v1189, %v1232
  %v1286 = vmul.f32 %v1190, %v1242
  %v1287 = vmul.f32 %v1191, %v1252
  %v1288 = vmul.f32 %v1192, %v1262
  %v1289 = vmul.f32 %v1193, %v1272
  %v1290 = vmul.f32 %v1194, %v1282
  %v1291 = vld [vmem:[%s3] sm:$0xff]
  %v1292 = vld [vmem:[%s3 + $0x8] sm:$0xff]
  %v1293 = vld [vmem:[%s3 + $0x10] sm:$0xff]
  %v1294 = vld [vmem:[%s3 + $0x18] sm:$0xff]
  %v1295 = vld [vmem:[%s3 + $0x20] sm:$0xff]
  %v1296 = vld [vmem:[%s3 + $0x28] sm:$0xff]
  %v1297 = vld [vmem:[%s3 + $0x30] sm:$0xff]
  %v1298 = vld [vmem:[%s3 + $0x38] sm:$0xff]
  %v1299 = vmul.f32 %v755, %v1283
  %v1300 = vmul.f32 %v756, %v1284
  %v1301 = vmul.f32 %v757, %v1285
  %v1302 = vmul.f32 %v758, %v1286
  %v1303 = vmul.f32 %v759, %v1287
  %v1304 = vmul.f32 %v760, %v1288
  %v1305 = vmul.f32 %v761, %v1289
  %v1306 = vmul.f32 %v762, %v1290
  %v1307 = vsub.f32 %v1291, %v1299
  %v1308 = vsub.f32 %v1292, %v1300
  %v1309 = vsub.f32 %v1293, %v1301
  %v1310 = vsub.f32 %v1294, %v1302
  %v1311 = vsub.f32 %v1295, %v1303
  %v1312 = vsub.f32 %v1296, %v1304
  %v1313 = vsub.f32 %v1297, %v1305
  %v1314 = vsub.f32 %v1298, %v1306
  %1316 = vset.pattern.permute.xlu0 0
  %1317 = vperm.xlu0 %1316, %v1283
  %v1318 = vpop.permute.xlu0 %1317
  %1321 = vset.pattern.permute.xlu0 0
  %1322 = vperm.xlu0 %1321, %v1284
  %v1323 = vpop.permute.xlu0 %1322
  %1326 = vset.pattern.permute.xlu0 0
  %1327 = vperm.xlu0 %1326, %v1285
  %v1328 = vpop.permute.xlu0 %1327
  %1331 = vset.pattern.permute.xlu0 0
  %1332 = vperm.xlu0 %1331, %v1286
  %v1333 = vpop.permute.xlu0 %1332
  %1336 = vset.pattern.permute.xlu0 0
  %1337 = vperm.xlu0 %1336, %v1287
  %v1338 = vpop.permute.xlu0 %1337
  %1341 = vset.pattern.permute.xlu0 0
  %1342 = vperm.xlu0 %1341, %v1288
  %v1343 = vpop.permute.xlu0 %1342
  %1346 = vset.pattern.permute.xlu0 0
  %1347 = vperm.xlu0 %1346, %v1289
  %v1348 = vpop.permute.xlu0 %1347
  %1351 = vset.pattern.permute.xlu0 0
  %1352 = vperm.xlu0 %1351, %v1290
  %v1353 = vpop.permute.xlu0 %1352
  %v1355 = vmul.f32 %v165, %v1318
  %v1356 = vmul.f32 %v194, %v1318
  %v1357 = vmul.f32 %v223, %v1318
  %v1358 = vmul.f32 %v252, %v1318
  %v1359 = vmul.f32 %v281, %v1318
  %v1360 = vmul.f32 %v310, %v1318
  %v1361 = vmul.f32 %v339, %v1318
  %v1362 = vmul.f32 %v368, %v1318
  %v1363 = vmul.f32 %v397, %v1318
  %v1364 = vmul.f32 %v426, %v1318
  %v1365 = vmul.f32 %v455, %v1318
  %v1366 = vmul.f32 %v484, %v1318
  %v1367 = vmul.f32 %v513, %v1318
  %v1368 = vmul.f32 %v542, %v1318
  %v1369 = vmul.f32 %v571, %v1318
  %v1370 = vmul.f32 %v600, %v1318
  %v1371 = vmul.f32 %v167, %v1323
  %v1372 = vmul.f32 %v196, %v1323
  %v1373 = vmul.f32 %v225, %v1323
  %v1374 = vmul.f32 %v254, %v1323
  %v1375 = vmul.f32 %v283, %v1323
  %v1376 = vmul.f32 %v312, %v1323
  %v1377 = vmul.f32 %v341, %v1323
  %v1378 = vmul.f32 %v370, %v1323
  %v1379 = vmul.f32 %v399, %v1323
  %v1380 = vmul.f32 %v428, %v1323
  %v1381 = vmul.f32 %v457, %v1323
  %v1382 = vmul.f32 %v486, %v1323
  %v1383 = vmul.f32 %v515, %v1323
  %v1384 = vmul.f32 %v544, %v1323
  %v1385 = vmul.f32 %v573, %v1323
  %v1386 = vmul.f32 %v602, %v1323
  %v1387 = vmul.f32 %v170, %v1328
  %v1388 = vmul.f32 %v199, %v1328
  %v1389 = vmul.f32 %v228, %v1328
  %v1390 = vmul.f32 %v257, %v1328
  %v1391 = vmul.f32 %v286, %v1328
  %v1392 = vmul.f32 %v315, %v1328
  %v1393 = vmul.f32 %v344, %v1328
  %v1394 = vmul.f32 %v373, %v1328
  %v1395 = vmul.f32 %v402, %v1328
  %v1396 = vmul.f32 %v431, %v1328
  %v1397 = vmul.f32 %v460, %v1328
  %v1398 = vmul.f32 %v489, %v1328
  %v1399 = vmul.f32 %v518, %v1328
  %v1400 = vmul.f32 %v547, %v1328
  %v1401 = vmul.f32 %v576, %v1328
  %v1402 = vmul.f32 %v605, %v1328
  %v1403 = vmul.f32 %v172, %v1333
  %v1404 = vmul.f32 %v201, %v1333
  %v1405 = vmul.f32 %v230, %v1333
  %v1406 = vmul.f32 %v259, %v1333
  %v1407 = vmul.f32 %v288, %v1333
  %v1408 = vmul.f32 %v317, %v1333
  %v1409 = vmul.f32 %v346, %v1333
  %v1410 = vmul.f32 %v375, %v1333
  %v1411 = vmul.f32 %v404, %v1333
  %v1412 = vmul.f32 %v433, %v1333
  %v1413 = vmul.f32 %v462, %v1333
  %v1414 = vmul.f32 %v491, %v1333
  %v1415 = vmul.f32 %v520, %v1333
  %v1416 = vmul.f32 %v549, %v1333
  %v1417 = vmul.f32 %v578, %v1333
  %v1418 = vmul.f32 %v607, %v1333
  %v1419 = vmul.f32 %v175, %v1338
  %v1420 = vmul.f32 %v204, %v1338
  %v1421 = vmul.f32 %v233, %v1338
  %v1422 = vmul.f32 %v262, %v1338
  %v1423 = vmul.f32 %v291, %v1338
  %v1424 = vmul.f32 %v320, %v1338
  %v1425 = vmul.f32 %v349, %v1338
  %v1426 = vmul.f32 %v378, %v1338
  %v1427 = vmul.f32 %v407, %v1338
  %v1428 = vmul.f32 %v436, %v1338
  %v1429 = vmul.f32 %v465, %v1338
  %v1430 = vmul.f32 %v494, %v1338
  %v1431 = vmul.f32 %v523, %v1338
  %v1432 = vmul.f32 %v552, %v1338
  %v1433 = vmul.f32 %v581, %v1338
  %v1434 = vmul.f32 %v610, %v1338
  %v1435 = vmul.f32 %v177, %v1343
  %v1436 = vmul.f32 %v206, %v1343
  %v1437 = vmul.f32 %v235, %v1343
  %v1438 = vmul.f32 %v264, %v1343
  %v1439 = vmul.f32 %v293, %v1343
  %v1440 = vmul.f32 %v322, %v1343
  %v1441 = vmul.f32 %v351, %v1343
  %v1442 = vmul.f32 %v380, %v1343
  %v1443 = vmul.f32 %v409, %v1343
  %v1444 = vmul.f32 %v438, %v1343
  %v1445 = vmul.f32 %v467, %v1343
  %v1446 = vmul.f32 %v496, %v1343
  %v1447 = vmul.f32 %v525, %v1343
  %v1448 = vmul.f32 %v554, %v1343
  %v1449 = vmul.f32 %v583, %v1343
  %v1450 = vmul.f32 %v612, %v1343
  %v1451 = vmul.f32 %v180, %v1348
  %v1452 = vmul.f32 %v209, %v1348
  %v1453 = vmul.f32 %v238, %v1348
  %v1454 = vmul.f32 %v267, %v1348
  %v1455 = vmul.f32 %v296, %v1348
  %v1456 = vmul.f32 %v325, %v1348
  %v1457 = vmul.f32 %v354, %v1348
  %v1458 = vmul.f32 %v383, %v1348
  %v1459 = vmul.f32 %v412, %v1348
  %v1460 = vmul.f32 %v441, %v1348
  %v1461 = vmul.f32 %v470, %v1348
  %v1462 = vmul.f32 %v499, %v1348
  %v1463 = vmul.f32 %v528, %v1348
  %v1464 = vmul.f32 %v557, %v1348
  %v1465 = vmul.f32 %v586, %v1348
  %v1466 = vmul.f32 %v615, %v1348
  %v1467 = vmul.f32 %v182, %v1353
  %v1468 = vmul.f32 %v211, %v1353
  %v1469 = vmul.f32 %v240, %v1353
  %v1470 = vmul.f32 %v269, %v1353
  %v1471 = vmul.f32 %v298, %v1353
  %v1472 = vmul.f32 %v327, %v1353
  %v1473 = vmul.f32 %v356, %v1353
  %v1474 = vmul.f32 %v385, %v1353
  %v1475 = vmul.f32 %v414, %v1353
  %v1476 = vmul.f32 %v443, %v1353
  %v1477 = vmul.f32 %v472, %v1353
  %v1478 = vmul.f32 %v501, %v1353
  %v1479 = vmul.f32 %v530, %v1353
  %v1480 = vmul.f32 %v559, %v1353
  %v1481 = vmul.f32 %v588, %v1353
  %v1482 = vmul.f32 %v617, %v1353
  %1484 = vset.pattern.permute.xlu0 0
  %1485 = vperm.xlu0 %1484, %v1307
  %v1486 = vpop.permute.xlu0 %1485
  %1489 = vset.pattern.permute.xlu0 0
  %1490 = vperm.xlu0 %1489, %v1308
  %v1491 = vpop.permute.xlu0 %1490
  %1494 = vset.pattern.permute.xlu0 0
  %1495 = vperm.xlu0 %1494, %v1309
  %v1496 = vpop.permute.xlu0 %1495
  %1499 = vset.pattern.permute.xlu0 0
  %1500 = vperm.xlu0 %1499, %v1310
  %v1501 = vpop.permute.xlu0 %1500
  %1504 = vset.pattern.permute.xlu0 0
  %1505 = vperm.xlu0 %1504, %v1311
  %v1506 = vpop.permute.xlu0 %1505
  %1509 = vset.pattern.permute.xlu0 0
  %1510 = vperm.xlu0 %1509, %v1312
  %v1511 = vpop.permute.xlu0 %1510
  %1514 = vset.pattern.permute.xlu0 0
  %1515 = vperm.xlu0 %1514, %v1313
  %v1516 = vpop.permute.xlu0 %1515
  %1519 = vset.pattern.permute.xlu0 0
  %1520 = vperm.xlu0 %1519, %v1314
  %v1521 = vpop.permute.xlu0 %1520
  %v1523 = vadd.f32 %v1355, %v1486
  %v1524 = vadd.f32 %v1356, %v1486
  %v1525 = vadd.f32 %v1357, %v1486
  %v1526 = vadd.f32 %v1358, %v1486
  %v1527 = vadd.f32 %v1359, %v1486
  %v1528 = vadd.f32 %v1360, %v1486
  %v1529 = vadd.f32 %v1361, %v1486
  %v1530 = vadd.f32 %v1362, %v1486
  %v1531 = vadd.f32 %v1363, %v1486
  %v1532 = vadd.f32 %v1364, %v1486
  %v1533 = vadd.f32 %v1365, %v1486
  %v1534 = vadd.f32 %v1366, %v1486
  %v1535 = vadd.f32 %v1367, %v1486
  %v1536 = vadd.f32 %v1368, %v1486
  %v1537 = vadd.f32 %v1369, %v1486
  %v1538 = vadd.f32 %v1370, %v1486
  %v1539 = vadd.f32 %v1371, %v1491
  %v1540 = vadd.f32 %v1372, %v1491
  %v1541 = vadd.f32 %v1373, %v1491
  %v1542 = vadd.f32 %v1374, %v1491
  %v1543 = vadd.f32 %v1375, %v1491
  %v1544 = vadd.f32 %v1376, %v1491
  %v1545 = vadd.f32 %v1377, %v1491
  %v1546 = vadd.f32 %v1378, %v1491
  %v1547 = vadd.f32 %v1379, %v1491
  %v1548 = vadd.f32 %v1380, %v1491
  %v1549 = vadd.f32 %v1381, %v1491
  %v1550 = vadd.f32 %v1382, %v1491
  %v1551 = vadd.f32 %v1383, %v1491
  %v1552 = vadd.f32 %v1384, %v1491
  %v1553 = vadd.f32 %v1385, %v1491
  %v1554 = vadd.f32 %v1386, %v1491
  %v1555 = vadd.f32 %v1387, %v1496
  %v1556 = vadd.f32 %v1388, %v1496
  %v1557 = vadd.f32 %v1389, %v1496
  %v1558 = vadd.f32 %v1390, %v1496
  %v1559 = vadd.f32 %v1391, %v1496
  %v1560 = vadd.f32 %v1392, %v1496
  %v1561 = vadd.f32 %v1393, %v1496
  %v1562 = vadd.f32 %v1394, %v1496
  %v1563 = vadd.f32 %v1395, %v1496
  %v1564 = vadd.f32 %v1396, %v1496
  %v1565 = vadd.f32 %v1397, %v1496
  %v1566 = vadd.f32 %v1398, %v1496
  %v1567 = vadd.f32 %v1399, %v1496
  %v1568 = vadd.f32 %v1400, %v1496
  %v1569 = vadd.f32 %v1401, %v1496
  %v1570 = vadd.f32 %v1402, %v1496
  %v1571 = vadd.f32 %v1403, %v1501
  %v1572 = vadd.f32 %v1404, %v1501
  %v1573 = vadd.f32 %v1405, %v1501
  %v1574 = vadd.f32 %v1406, %v1501
  %v1575 = vadd.f32 %v1407, %v1501
  %v1576 = vadd.f32 %v1408, %v1501
  %v1577 = vadd.f32 %v1409, %v1501
  %v1578 = vadd.f32 %v1410, %v1501
  %v1579 = vadd.f32 %v1411, %v1501
  %v1580 = vadd.f32 %v1412, %v1501
  %v1581 = vadd.f32 %v1413, %v1501
  %v1582 = vadd.f32 %v1414, %v1501
  %v1583 = vadd.f32 %v1415, %v1501
  %v1584 = vadd.f32 %v1416, %v1501
  %v1585 = vadd.f32 %v1417, %v1501
  %v1586 = vadd.f32 %v1418, %v1501
  %v1587 = vadd.f32 %v1419, %v1506
  %v1588 = vadd.f32 %v1420, %v1506
  %v1589 = vadd.f32 %v1421, %v1506
  %v1590 = vadd.f32 %v1422, %v1506
  %v1591 = vadd.f32 %v1423, %v1506
  %v1592 = vadd.f32 %v1424, %v1506
  %v1593 = vadd.f32 %v1425, %v1506
  %v1594 = vadd.f32 %v1426, %v1506
  %v1595 = vadd.f32 %v1427, %v1506
  %v1596 = vadd.f32 %v1428, %v1506
  %v1597 = vadd.f32 %v1429, %v1506
  %v1598 = vadd.f32 %v1430, %v1506
  %v1599 = vadd.f32 %v1431, %v1506
  %v1600 = vadd.f32 %v1432, %v1506
  %v1601 = vadd.f32 %v1433, %v1506
  %v1602 = vadd.f32 %v1434, %v1506
  %v1603 = vadd.f32 %v1435, %v1511
  %v1604 = vadd.f32 %v1436, %v1511
  %v1605 = vadd.f32 %v1437, %v1511
  %v1606 = vadd.f32 %v1438, %v1511
  %v1607 = vadd.f32 %v1439, %v1511
  %v1608 = vadd.f32 %v1440, %v1511
  %v1609 = vadd.f32 %v1441, %v1511
  %v1610 = vadd.f32 %v1442, %v1511
  %v1611 = vadd.f32 %v1443, %v1511
  %v1612 = vadd.f32 %v1444, %v1511
  %v1613 = vadd.f32 %v1445, %v1511
  %v1614 = vadd.f32 %v1446, %v1511
  %v1615 = vadd.f32 %v1447, %v1511
  %v1616 = vadd.f32 %v1448, %v1511
  %v1617 = vadd.f32 %v1449, %v1511
  %v1618 = vadd.f32 %v1450, %v1511
  %v1619 = vadd.f32 %v1451, %v1516
  %v1620 = vadd.f32 %v1452, %v1516
  %v1621 = vadd.f32 %v1453, %v1516
  %v1622 = vadd.f32 %v1454, %v1516
  %v1623 = vadd.f32 %v1455, %v1516
  %v1624 = vadd.f32 %v1456, %v1516
  %v1625 = vadd.f32 %v1457, %v1516
  %v1626 = vadd.f32 %v1458, %v1516
  %v1627 = vadd.f32 %v1459, %v1516
  %v1628 = vadd.f32 %v1460, %v1516
  %v1629 = vadd.f32 %v1461, %v1516
  %v1630 = vadd.f32 %v1462, %v1516
  %v1631 = vadd.f32 %v1463, %v1516
  %v1632 = vadd.f32 %v1464, %v1516
  %v1633 = vadd.f32 %v1465, %v1516
  %v1634 = vadd.f32 %v1466, %v1516
  %v1635 = vadd.f32 %v1467, %v1521
  %v1636 = vadd.f32 %v1468, %v1521
  %v1637 = vadd.f32 %v1469, %v1521
  %v1638 = vadd.f32 %v1470, %v1521
  %v1639 = vadd.f32 %v1471, %v1521
  %v1640 = vadd.f32 %v1472, %v1521
  %v1641 = vadd.f32 %v1473, %v1521
  %v1642 = vadd.f32 %v1474, %v1521
  %v1643 = vadd.f32 %v1475, %v1521
  %v1644 = vadd.f32 %v1476, %v1521
  %v1645 = vadd.f32 %v1477, %v1521
  %v1646 = vadd.f32 %v1478, %v1521
  %v1647 = vadd.f32 %v1479, %v1521
  %v1648 = vadd.f32 %v1480, %v1521
  %v1649 = vadd.f32 %v1481, %v1521
  %v1650 = vadd.f32 %v1482, %v1521
  %v1651 = vmul.f32 %v1523, 0.2
  %v1652 = vmul.f32 %v1524, 0.2
  %v1653 = vmul.f32 %v1525, 0.2
  %v1654 = vmul.f32 %v1526, 0.2
  %v1655 = vmul.f32 %v1527, 0.2
  %v1656 = vmul.f32 %v1528, 0.2
  %v1657 = vmul.f32 %v1529, 0.2
  %v1658 = vmul.f32 %v1530, 0.2
  %v1659 = vmul.f32 %v1531, 0.2
  %v1660 = vmul.f32 %v1532, 0.2
  %v1661 = vmul.f32 %v1533, 0.2
  %v1662 = vmul.f32 %v1534, 0.2
  %v1663 = vmul.f32 %v1535, 0.2
  %v1664 = vmul.f32 %v1536, 0.2
  %v1665 = vmul.f32 %v1537, 0.2
  %v1666 = vmul.f32 %v1538, 0.2
  %v1667 = vmul.f32 %v1539, 0.2
  %v1668 = vmul.f32 %v1540, 0.2
  %v1669 = vmul.f32 %v1541, 0.2
  %v1670 = vmul.f32 %v1542, 0.2
  %v1671 = vmul.f32 %v1543, 0.2
  %v1672 = vmul.f32 %v1544, 0.2
  %v1673 = vmul.f32 %v1545, 0.2
  %v1674 = vmul.f32 %v1546, 0.2
  %v1675 = vmul.f32 %v1547, 0.2
  %v1676 = vmul.f32 %v1548, 0.2
  %v1677 = vmul.f32 %v1549, 0.2
  %v1678 = vmul.f32 %v1550, 0.2
  %v1679 = vmul.f32 %v1551, 0.2
  %v1680 = vmul.f32 %v1552, 0.2
  %v1681 = vmul.f32 %v1553, 0.2
  %v1682 = vmul.f32 %v1554, 0.2
  %v1683 = vmul.f32 %v1555, 0.2
  %v1684 = vmul.f32 %v1556, 0.2
  %v1685 = vmul.f32 %v1557, 0.2
  %v1686 = vmul.f32 %v1558, 0.2
  %v1687 = vmul.f32 %v1559, 0.2
  %v1688 = vmul.f32 %v1560, 0.2
  %v1689 = vmul.f32 %v1561, 0.2
  %v1690 = vmul.f32 %v1562, 0.2
  %v1691 = vmul.f32 %v1563, 0.2
  %v1692 = vmul.f32 %v1564, 0.2
  %v1693 = vmul.f32 %v1565, 0.2
  %v1694 = vmul.f32 %v1566, 0.2
  %v1695 = vmul.f32 %v1567, 0.2
  %v1696 = vmul.f32 %v1568, 0.2
  %v1697 = vmul.f32 %v1569, 0.2
  %v1698 = vmul.f32 %v1570, 0.2
  %v1699 = vmul.f32 %v1571, 0.2
  %v1700 = vmul.f32 %v1572, 0.2
  %v1701 = vmul.f32 %v1573, 0.2
  %v1702 = vmul.f32 %v1574, 0.2
  %v1703 = vmul.f32 %v1575, 0.2
  %v1704 = vmul.f32 %v1576, 0.2
  %v1705 = vmul.f32 %v1577, 0.2
  %v1706 = vmul.f32 %v1578, 0.2
  %v1707 = vmul.f32 %v1579, 0.2
  %v1708 = vmul.f32 %v1580, 0.2
  %v1709 = vmul.f32 %v1581, 0.2
  %v1710 = vmul.f32 %v1582, 0.2
  %v1711 = vmul.f32 %v1583, 0.2
  %v1712 = vmul.f32 %v1584, 0.2
  %v1713 = vmul.f32 %v1585, 0.2
  %v1714 = vmul.f32 %v1586, 0.2
  %v1715 = vmul.f32 %v1587, 0.2
  %v1716 = vmul.f32 %v1588, 0.2
  %v1717 = vmul.f32 %v1589, 0.2
  %v1718 = vmul.f32 %v1590, 0.2
  %v1719 = vmul.f32 %v1591, 0.2
  %v1720 = vmul.f32 %v1592, 0.2
  %v1721 = vmul.f32 %v1593, 0.2
  %v1722 = vmul.f32 %v1594, 0.2
  %v1723 = vmul.f32 %v1595, 0.2
  %v1724 = vmul.f32 %v1596, 0.2
  %v1725 = vmul.f32 %v1597, 0.2
  %v1726 = vmul.f32 %v1598, 0.2
  %v1727 = vmul.f32 %v1599, 0.2
  %v1728 = vmul.f32 %v1600, 0.2
  %v1729 = vmul.f32 %v1601, 0.2
  %v1730 = vmul.f32 %v1602, 0.2
  %v1731 = vmul.f32 %v1603, 0.2
  %v1732 = vmul.f32 %v1604, 0.2
  %v1733 = vmul.f32 %v1605, 0.2
  %v1734 = vmul.f32 %v1606, 0.2
  %v1735 = vmul.f32 %v1607, 0.2
  %v1736 = vmul.f32 %v1608, 0.2
  %v1737 = vmul.f32 %v1609, 0.2
  %v1738 = vmul.f32 %v1610, 0.2
  %v1739 = vmul.f32 %v1611, 0.2
  %v1740 = vmul.f32 %v1612, 0.2
  %v1741 = vmul.f32 %v1613, 0.2
  %v1742 = vmul.f32 %v1614, 0.2
  %v1743 = vmul.f32 %v1615, 0.2
  %v1744 = vmul.f32 %v1616, 0.2
  %v1745 = vmul.f32 %v1617, 0.2
  %v1746 = vmul.f32 %v1618, 0.2
  %v1747 = vmul.f32 %v1619, 0.2
  %v1748 = vmul.f32 %v1620, 0.2
  %v1749 = vmul.f32 %v1621, 0.2
  %v1750 = vmul.f32 %v1622, 0.2
  %v1751 = vmul.f32 %v1623, 0.2
  %v1752 = vmul.f32 %v1624, 0.2
  %v1753 = vmul.f32 %v1625, 0.2
  %v1754 = vmul.f32 %v1626, 0.2
  %v1755 = vmul.f32 %v1627, 0.2
  %v1756 = vmul.f32 %v1628, 0.2
  %v1757 = vmul.f32 %v1629, 0.2
  %v1758 = vmul.f32 %v1630, 0.2
  %v1759 = vmul.f32 %v1631, 0.2
  %v1760 = vmul.f32 %v1632, 0.2
  %v1761 = vmul.f32 %v1633, 0.2
  %v1762 = vmul.f32 %v1634, 0.2
  %v1763 = vmul.f32 %v1635, 0.2
  %v1764 = vmul.f32 %v1636, 0.2
  %v1765 = vmul.f32 %v1637, 0.2
  %v1766 = vmul.f32 %v1638, 0.2
  %v1767 = vmul.f32 %v1639, 0.2
  %v1768 = vmul.f32 %v1640, 0.2
  %v1769 = vmul.f32 %v1641, 0.2
  %v1770 = vmul.f32 %v1642, 0.2
  %v1771 = vmul.f32 %v1643, 0.2
  %v1772 = vmul.f32 %v1644, 0.2
  %v1773 = vmul.f32 %v1645, 0.2
  %v1774 = vmul.f32 %v1646, 0.2
  %v1775 = vmul.f32 %v1647, 0.2
  %v1776 = vmul.f32 %v1648, 0.2
  %v1777 = vmul.f32 %v1649, 0.2
  %v1778 = vmul.f32 %v1650, 0.2
  %v1779 = vmax.f32 %v1523, %v1651
  %v1780 = vmax.f32 %v1524, %v1652
  %v1781 = vmax.f32 %v1525, %v1653
  %v1782 = vmax.f32 %v1526, %v1654
  %v1783 = vmax.f32 %v1527, %v1655
  %v1784 = vmax.f32 %v1528, %v1656
  %v1785 = vmax.f32 %v1529, %v1657
  %v1786 = vmax.f32 %v1530, %v1658
  %v1787 = vmax.f32 %v1531, %v1659
  %v1788 = vmax.f32 %v1532, %v1660
  %v1789 = vmax.f32 %v1533, %v1661
  %v1790 = vmax.f32 %v1534, %v1662
  %v1791 = vmax.f32 %v1535, %v1663
  %v1792 = vmax.f32 %v1536, %v1664
  %v1793 = vmax.f32 %v1537, %v1665
  %v1794 = vmax.f32 %v1538, %v1666
  %v1795 = vmax.f32 %v1539, %v1667
  %v1796 = vmax.f32 %v1540, %v1668
  %v1797 = vmax.f32 %v1541, %v1669
  %v1798 = vmax.f32 %v1542, %v1670
  %v1799 = vmax.f32 %v1543, %v1671
  %v1800 = vmax.f32 %v1544, %v1672
  %v1801 = vmax.f32 %v1545, %v1673
  %v1802 = vmax.f32 %v1546, %v1674
  %v1803 = vmax.f32 %v1547, %v1675
  %v1804 = vmax.f32 %v1548, %v1676
  %v1805 = vmax.f32 %v1549, %v1677
  %v1806 = vmax.f32 %v1550, %v1678
  %v1807 = vmax.f32 %v1551, %v1679
  %v1808 = vmax.f32 %v1552, %v1680
  %v1809 = vmax.f32 %v1553, %v1681
  %v1810 = vmax.f32 %v1554, %v1682
  %v1811 = vmax.f32 %v1555, %v1683
  %v1812 = vmax.f32 %v1556, %v1684
  %v1813 = vmax.f32 %v1557, %v1685
  %v1814 = vmax.f32 %v1558, %v1686
  %v1815 = vmax.f32 %v1559, %v1687
  %v1816 = vmax.f32 %v1560, %v1688
  %v1817 = vmax.f32 %v1561, %v1689
  %v1818 = vmax.f32 %v1562, %v1690
  %v1819 = vmax.f32 %v1563, %v1691
  %v1820 = vmax.f32 %v1564, %v1692
  %v1821 = vmax.f32 %v1565, %v1693
  %v1822 = vmax.f32 %v1566, %v1694
  %v1823 = vmax.f32 %v1567, %v1695
  %v1824 = vmax.f32 %v1568, %v1696
  %v1825 = vmax.f32 %v1569, %v1697
  %v1826 = vmax.f32 %v1570, %v1698
  %v1827 = vmax.f32 %v1571, %v1699
  %v1828 = vmax.f32 %v1572, %v1700
  %v1829 = vmax.f32 %v1573, %v1701
  %v1830 = vmax.f32 %v1574, %v1702
  %v1831 = vmax.f32 %v1575, %v1703
  %v1832 = vmax.f32 %v1576, %v1704
  %v1833 = vmax.f32 %v1577, %v1705
  %v1834 = vmax.f32 %v1578, %v1706
  %v1835 = vmax.f32 %v1579, %v1707
  %v1836 = vmax.f32 %v1580, %v1708
  %v1837 = vmax.f32 %v1581, %v1709
  %v1838 = vmax.f32 %v1582, %v1710
  %v1839 = vmax.f32 %v1583, %v1711
  %v1840 = vmax.f32 %v1584, %v1712
  %v1841 = vmax.f32 %v1585, %v1713
  %v1842 = vmax.f32 %v1586, %v1714
  %v1843 = vmax.f32 %v1587, %v1715
  %v1844 = vmax.f32 %v1588, %v1716
  %v1845 = vmax.f32 %v1589, %v1717
  %v1846 = vmax.f32 %v1590, %v1718
  %v1847 = vmax.f32 %v1591, %v1719
  %v1848 = vmax.f32 %v1592, %v1720
  %v1849 = vmax.f32 %v1593, %v1721
  %v1850 = vmax.f32 %v1594, %v1722
  %v1851 = vmax.f32 %v1595, %v1723
  %v1852 = vmax.f32 %v1596, %v1724
  %v1853 = vmax.f32 %v1597, %v1725
  %v1854 = vmax.f32 %v1598, %v1726
  %v1855 = vmax.f32 %v1599, %v1727
  %v1856 = vmax.f32 %v1600, %v1728
  %v1857 = vmax.f32 %v1601, %v1729
  %v1858 = vmax.f32 %v1602, %v1730
  %v1859 = vmax.f32 %v1603, %v1731
  %v1860 = vmax.f32 %v1604, %v1732
  %v1861 = vmax.f32 %v1605, %v1733
  %v1862 = vmax.f32 %v1606, %v1734
  %v1863 = vmax.f32 %v1607, %v1735
  %v1864 = vmax.f32 %v1608, %v1736
  %v1865 = vmax.f32 %v1609, %v1737
  %v1866 = vmax.f32 %v1610, %v1738
  %v1867 = vmax.f32 %v1611, %v1739
  %v1868 = vmax.f32 %v1612, %v1740
  %v1869 = vmax.f32 %v1613, %v1741
  %v1870 = vmax.f32 %v1614, %v1742
  %v1871 = vmax.f32 %v1615, %v1743
  %v1872 = vmax.f32 %v1616, %v1744
  %v1873 = vmax.f32 %v1617, %v1745
  %v1874 = vmax.f32 %v1618, %v1746
  %v1875 = vmax.f32 %v1619, %v1747
  %v1876 = vmax.f32 %v1620, %v1748
  %v1877 = vmax.f32 %v1621, %v1749
  %v1878 = vmax.f32 %v1622, %v1750
  %v1879 = vmax.f32 %v1623, %v1751
  %v1880 = vmax.f32 %v1624, %v1752
  %v1881 = vmax.f32 %v1625, %v1753
  %v1882 = vmax.f32 %v1626, %v1754
  %v1883 = vmax.f32 %v1627, %v1755
  %v1884 = vmax.f32 %v1628, %v1756
  %v1885 = vmax.f32 %v1629, %v1757
  %v1886 = vmax.f32 %v1630, %v1758
  %v1887 = vmax.f32 %v1631, %v1759
  %v1888 = vmax.f32 %v1632, %v1760
  %v1889 = vmax.f32 %v1633, %v1761
  %v1890 = vmax.f32 %v1634, %v1762
  %v1891 = vmax.f32 %v1635, %v1763
  %v1892 = vmax.f32 %v1636, %v1764
  %v1893 = vmax.f32 %v1637, %v1765
  %v1894 = vmax.f32 %v1638, %v1766
  %v1895 = vmax.f32 %v1639, %v1767
  %v1896 = vmax.f32 %v1640, %v1768
  %v1897 = vmax.f32 %v1641, %v1769
  %v1898 = vmax.f32 %v1642, %v1770
  %v1899 = vmax.f32 %v1643, %v1771
  %v1900 = vmax.f32 %v1644, %v1772
  %v1901 = vmax.f32 %v1645, %v1773
  %v1902 = vmax.f32 %v1646, %v1774
  %v1903 = vmax.f32 %v1647, %v1775
  %v1904 = vmax.f32 %v1648, %v1776
  %v1905 = vmax.f32 %v1649, %v1777
  %v1906 = vmax.f32 %v1650, %v1778
  %v1907 = vpack.c.bf16 %v1780, %v1779
  %v1908 = vpack.c.bf16 %v1782, %v1781
  %v1909 = vpack.c.bf16 %v1784, %v1783
  %v1910 = vpack.c.bf16 %v1786, %v1785
  %v1911 = vpack.c.bf16 %v1788, %v1787
  %v1912 = vpack.c.bf16 %v1790, %v1789
  %v1913 = vpack.c.bf16 %v1792, %v1791
  %v1914 = vpack.c.bf16 %v1794, %v1793
  %v1915 = vpack.c.bf16 %v1796, %v1795
  %v1916 = vpack.c.bf16 %v1798, %v1797
  %v1917 = vpack.c.bf16 %v1800, %v1799
  %v1918 = vpack.c.bf16 %v1802, %v1801
  %v1919 = vpack.c.bf16 %v1804, %v1803
  %v1920 = vpack.c.bf16 %v1806, %v1805
  %v1921 = vpack.c.bf16 %v1808, %v1807
  %v1922 = vpack.c.bf16 %v1810, %v1809
  %v1923 = vpack.c.bf16 %v1812, %v1811
  %v1924 = vpack.c.bf16 %v1814, %v1813
  %v1925 = vpack.c.bf16 %v1816, %v1815
  %v1926 = vpack.c.bf16 %v1818, %v1817
  %v1927 = vpack.c.bf16 %v1820, %v1819
  %v1928 = vpack.c.bf16 %v1822, %v1821
  %v1929 = vpack.c.bf16 %v1824, %v1823
  %v1930 = vpack.c.bf16 %v1826, %v1825
  %v1931 = vpack.c.bf16 %v1828, %v1827
  %v1932 = vpack.c.bf16 %v1830, %v1829
  %v1933 = vpack.c.bf16 %v1832, %v1831
  %v1934 = vpack.c.bf16 %v1834, %v1833
  %v1935 = vpack.c.bf16 %v1836, %v1835
  %v1936 = vpack.c.bf16 %v1838, %v1837
  %v1937 = vpack.c.bf16 %v1840, %v1839
  %v1938 = vpack.c.bf16 %v1842, %v1841
  %v1939 = vpack.c.bf16 %v1844, %v1843
  %v1940 = vpack.c.bf16 %v1846, %v1845
  %v1941 = vpack.c.bf16 %v1848, %v1847
  %v1942 = vpack.c.bf16 %v1850, %v1849
  %v1943 = vpack.c.bf16 %v1852, %v1851
  %v1944 = vpack.c.bf16 %v1854, %v1853
  %v1945 = vpack.c.bf16 %v1856, %v1855
  %v1946 = vpack.c.bf16 %v1858, %v1857
  %v1947 = vpack.c.bf16 %v1860, %v1859
  %v1948 = vpack.c.bf16 %v1862, %v1861
  %v1949 = vpack.c.bf16 %v1864, %v1863
  %v1950 = vpack.c.bf16 %v1866, %v1865
  %v1951 = vpack.c.bf16 %v1868, %v1867
  %v1952 = vpack.c.bf16 %v1870, %v1869
  %v1953 = vpack.c.bf16 %v1872, %v1871
  %v1954 = vpack.c.bf16 %v1874, %v1873
  %v1955 = vpack.c.bf16 %v1876, %v1875
  %v1956 = vpack.c.bf16 %v1878, %v1877
  %v1957 = vpack.c.bf16 %v1880, %v1879
  %v1958 = vpack.c.bf16 %v1882, %v1881
  %v1959 = vpack.c.bf16 %v1884, %v1883
  %v1960 = vpack.c.bf16 %v1886, %v1885
  %v1961 = vpack.c.bf16 %v1888, %v1887
  %v1962 = vpack.c.bf16 %v1890, %v1889
  %v1963 = vpack.c.bf16 %v1892, %v1891
  %v1964 = vpack.c.bf16 %v1894, %v1893
  %v1965 = vpack.c.bf16 %v1896, %v1895
  %v1966 = vpack.c.bf16 %v1898, %v1897
  %v1967 = vpack.c.bf16 %v1900, %v1899
  %v1968 = vpack.c.bf16 %v1902, %v1901
  %v1969 = vpack.c.bf16 %v1904, %v1903
  %v1970 = vpack.c.bf16 %v1906, %v1905
  %1971 = vst [vmem:[%s4] sm:$0xff] %v1907
  %1972 = vst [vmem:[%s4 + $0x8] sm:$0xff] %v1908
  %1973 = vst [vmem:[%s4 + $0x10] sm:$0xff] %v1909
  %1974 = vst [vmem:[%s4 + $0x18] sm:$0xff] %v1910
  %1975 = vst [vmem:[%s4 + $0x20] sm:$0xff] %v1911
  %1976 = vst [vmem:[%s4 + $0x28] sm:$0xff] %v1912
  %1977 = vst [vmem:[%s4 + $0x30] sm:$0xff] %v1913
  %1978 = vst [vmem:[%s4 + $0x38] sm:$0xff] %v1914
  %1979 = vst [vmem:[%s4 + $0x40] sm:$0xff] %v1915
  %1980 = vst [vmem:[%s4 + $0x48] sm:$0xff] %v1916
  %1981 = vst [vmem:[%s4 + $0x50] sm:$0xff] %v1917
  %1982 = vst [vmem:[%s4 + $0x58] sm:$0xff] %v1918
  %1983 = vst [vmem:[%s4 + $0x60] sm:$0xff] %v1919
  %1984 = vst [vmem:[%s4 + $0x68] sm:$0xff] %v1920
  %1985 = vst [vmem:[%s4 + $0x70] sm:$0xff] %v1921
  %1986 = vst [vmem:[%s4 + $0x78] sm:$0xff] %v1922
  %1987 = vst [vmem:[%s4 + $0x80] sm:$0xff] %v1923
  %1988 = vst [vmem:[%s4 + $0x88] sm:$0xff] %v1924
  %1989 = vst [vmem:[%s4 + $0x90] sm:$0xff] %v1925
  %1990 = vst [vmem:[%s4 + $0x98] sm:$0xff] %v1926
  %1991 = vst [vmem:[%s4 + $0xa0] sm:$0xff] %v1927
  %1992 = vst [vmem:[%s4 + $0xa8] sm:$0xff] %v1928
  %1993 = vst [vmem:[%s4 + $0xb0] sm:$0xff] %v1929
  %1994 = vst [vmem:[%s4 + $0xb8] sm:$0xff] %v1930
  %1995 = vst [vmem:[%s4 + $0xc0] sm:$0xff] %v1931
  %1996 = vst [vmem:[%s4 + $0xc8] sm:$0xff] %v1932
  %1997 = vst [vmem:[%s4 + $0xd0] sm:$0xff] %v1933
  %1998 = vst [vmem:[%s4 + $0xd8] sm:$0xff] %v1934
  %1999 = vst [vmem:[%s4 + $0xe0] sm:$0xff] %v1935
  %2000 = vst [vmem:[%s4 + $0xe8] sm:$0xff] %v1936
  %2001 = vst [vmem:[%s4 + $0xf0] sm:$0xff] %v1937
  %2002 = vst [vmem:[%s4 + $0xf8] sm:$0xff] %v1938
  %2003 = vst [vmem:[%s4 + $0x100] sm:$0xff] %v1939
  %2004 = vst [vmem:[%s4 + $0x108] sm:$0xff] %v1940
  %2005 = vst [vmem:[%s4 + $0x110] sm:$0xff] %v1941
  %2006 = vst [vmem:[%s4 + $0x118] sm:$0xff] %v1942
  %2007 = vst [vmem:[%s4 + $0x120] sm:$0xff] %v1943
  %2008 = vst [vmem:[%s4 + $0x128] sm:$0xff] %v1944
  %2009 = vst [vmem:[%s4 + $0x130] sm:$0xff] %v1945
  %2010 = vst [vmem:[%s4 + $0x138] sm:$0xff] %v1946
  %2011 = vst [vmem:[%s4 + $0x140] sm:$0xff] %v1947
  %2012 = vst [vmem:[%s4 + $0x148] sm:$0xff] %v1948
  %2013 = vst [vmem:[%s4 + $0x150] sm:$0xff] %v1949
  %2014 = vst [vmem:[%s4 + $0x158] sm:$0xff] %v1950
  %2015 = vst [vmem:[%s4 + $0x160] sm:$0xff] %v1951
  %2016 = vst [vmem:[%s4 + $0x168] sm:$0xff] %v1952
  %2017 = vst [vmem:[%s4 + $0x170] sm:$0xff] %v1953
  %2018 = vst [vmem:[%s4 + $0x178] sm:$0xff] %v1954
  %2019 = vst [vmem:[%s4 + $0x180] sm:$0xff] %v1955
  %2020 = vst [vmem:[%s4 + $0x188] sm:$0xff] %v1956
  %2021 = vst [vmem:[%s4 + $0x190] sm:$0xff] %v1957
  %2022 = vst [vmem:[%s4 + $0x198] sm:$0xff] %v1958
  %2023 = vst [vmem:[%s4 + $0x1a0] sm:$0xff] %v1959
  %2024 = vst [vmem:[%s4 + $0x1a8] sm:$0xff] %v1960
  %2025 = vst [vmem:[%s4 + $0x1b0] sm:$0xff] %v1961
  %2026 = vst [vmem:[%s4 + $0x1b8] sm:$0xff] %v1962
  %2027 = vst [vmem:[%s4 + $0x1c0] sm:$0xff] %v1963
  %2028 = vst [vmem:[%s4 + $0x1c8] sm:$0xff] %v1964
  %2029 = vst [vmem:[%s4 + $0x1d0] sm:$0xff] %v1965
  %2030 = vst [vmem:[%s4 + $0x1d8] sm:$0xff] %v1966
  %2031 = vst [vmem:[%s4 + $0x1e0] sm:$0xff] %v1967
  %2032 = vst [vmem:[%s4 + $0x1e8] sm:$0xff] %v1968
  %2033 = vst [vmem:[%s4 + $0x1f0] sm:$0xff] %v1969
  %2034 = vst [vmem:[%s4 + $0x1f8] sm:$0xff] %v1970
  // Predicated region
  $region18: #{discriminator_forward.3} parent=0 // pred_check
    _
  $region19: #{discriminator_forward.3} parent=0 // pred_check_branch
    %2036 = sbr.rel (0) target = $region21
  $region20: #{discriminator_forward.3} parent=0 // pred_region
    _
  $region21: #{discriminator_forward.3} parent=0 // pred_fallthru
    _
  // Predicated region
  $region22: #{discriminator_forward.3} parent=0 // pred_check
    _
  $region23: #{discriminator_forward.3} parent=0 // pred_check_branch
    %2038 = sbr.rel (0) target = $region25
  $region24: #{discriminator_forward.3} parent=0 // pred_region
    _
  $region25: #{discriminator_forward.3} parent=0 // pred_fallthru
    _

// kernel: discriminator_forward.4
$region0: #{discriminator_forward.4}
  #allocation0 [shape = 'u32[]', space=smem, size = 0x4, offset = 0x4, fixed_abs, tag = 'smem constant byte address 0x4 - core index']
  #allocation1 [shape = 'u32[72,128]{1,0:T(1,128)}', space=vmem, size = 0x9000, scoped, tag = 'internal scratch']
  %s0 = inlined_call_operand.vmem [shape: bf16[1024,512], index: 0, kind: input, shape index: {}]
  %s1 = inlined_call_operand.vmem [shape: bf16[128,1024], index: 1, kind: input, shape index: {}]
  %s2 = inlined_call_operand.vmem [shape: f32[128,1], index: 2, kind: input, shape index: {}]
  %s3 = inlined_call_operand.vmem [shape: f32[128,1], index: 3, kind: input, shape index: {}]
  %s4 = inlined_call_operand.vmem [shape: bf16[128,512], index: 4, kind: output, shape index: {}]
  %s5 = sld [smem:[#allocation0]]
  $region26: #{discriminator_forward.4} parent=0
    _
  %s7 = ssub.s32 1, %s5
  %s8 = scalar_select 0, %s7, %s5
  // Predicated region
  $region2: #{discriminator_forward.4} parent=0 // pred_check
    _
  $region3: #{discriminator_forward.4} parent=0 // pred_check_branch
    %10 = sbr.rel (0) target = $region5
  $region4: #{discriminator_forward.4} parent=0 // pred_region
    _
  $region5: #{discriminator_forward.4} parent=0 // pred_fallthru
    _
  // Predicated region
  $region6: #{discriminator_forward.4} parent=0 // pred_check
    _
  $region7: #{discriminator_forward.4} parent=0 // pred_check_branch
    %12 = sbr.rel (0) target = $region9
  $region8: #{discriminator_forward.4} parent=0 // pred_region
    _
  $region9: #{discriminator_forward.4} parent=0 // pred_fallthru
    _
  // Predicated region
  $region10: #{discriminator_forward.4} parent=0 // pred_check
    _
  $region11: #{discriminator_forward.4} parent=0 // pred_check_branch
    %14 = sbr.rel (0) target = $region13
  $region12: #{discriminator_forward.4} parent=0 // pred_region
    _
  $region13: #{discriminator_forward.4} parent=0 // pred_fallthru
    _
  // Predicated region
  $region14: #{discriminator_forward.4} parent=0 // pred_check
    _
  $region15: #{discriminator_forward.4} parent=0 // pred_check_branch
    %16 = sbr.rel (0) target = $region17
  $region16: #{discriminator_forward.4} parent=0 // pred_region
    _
  $region17: #{discriminator_forward.4} parent=0 // pred_fallthru
    _
  %v17 = vld [vmem:[%s1] sm:$0xff]
  %v18 = vld [vmem:[%s1 + $0x8] sm:$0xff]
  %v19 = vld [vmem:[%s1 + $0x10] sm:$0xff]
  %v20 = vld [vmem:[%s1 + $0x18] sm:$0xff]
  %v21 = vld [vmem:[%s1 + $0x20] sm:$0xff]
  %v22 = vld [vmem:[%s1 + $0x28] sm:$0xff]
  %v23 = vld [vmem:[%s1 + $0x30] sm:$0xff]
  %v24 = vld [vmem:[%s1 + $0x38] sm:$0xff]
  %v25 = vld [vmem:[%s1 + $0x40] sm:$0xff]
  %v26 = vld [vmem:[%s1 + $0x48] sm:$0xff]
  %v27 = vld [vmem:[%s1 + $0x50] sm:$0xff]
  %v28 = vld [vmem:[%s1 + $0x58] sm:$0xff]
  %v29 = vld [vmem:[%s1 + $0x60] sm:$0xff]
  %v30 = vld [vmem:[%s1 + $0x68] sm:$0xff]
  %v31 = vld [vmem:[%s1 + $0x70] sm:$0xff]
  %v32 = vld [vmem:[%s1 + $0x78] sm:$0xff]
  %v33 = vld [vmem:[%s1 + $0x80] sm:$0xff]
  %v34 = vld [vmem:[%s1 + $0x88] sm:$0xff]
  %v35 = vld [vmem:[%s1 + $0x90] sm:$0xff]
  %v36 = vld [vmem:[%s1 + $0x98] sm:$0xff]
  %v37 = vld [vmem:[%s1 + $0xa0] sm:$0xff]
  %v38 = vld [vmem:[%s1 + $0xa8] sm:$0xff]
  %v39 = vld [vmem:[%s1 + $0xb0] sm:$0xff]
  %v40 = vld [vmem:[%s1 + $0xb8] sm:$0xff]
  %v41 = vld [vmem:[%s1 + $0xc0] sm:$0xff]
  %v42 = vld [vmem:[%s1 + $0xc8] sm:$0xff]
  %v43 = vld [vmem:[%s1 + $0xd0] sm:$0xff]
  %v44 = vld [vmem:[%s1 + $0xd8] sm:$0xff]
  %v45 = vld [vmem:[%s1 + $0xe0] sm:$0xff]
  %v46 = vld [vmem:[%s1 + $0xe8] sm:$0xff]
  %v47 = vld [vmem:[%s1 + $0xf0] sm:$0xff]
  %v48 = vld [vmem:[%s1 + $0xf8] sm:$0xff]
  %v49 = vld [vmem:[%s1 + $0x100] sm:$0xff]
  %v50 = vld [vmem:[%s1 + $0x108] sm:$0xff]
  %v51 = vld [vmem:[%s1 + $0x110] sm:$0xff]
  %v52 = vld [vmem:[%s1 + $0x118] sm:$0xff]
  %v53 = vld [vmem:[%s1 + $0x120] sm:$0xff]
  %v54 = vld [vmem:[%s1 + $0x128] sm:$0xff]
  %v55 = vld [vmem:[%s1 + $0x130] sm:$0xff]
  %v56 = vld [vmem:[%s1 + $0x138] sm:$0xff]
  %v57 = vld [vmem:[%s1 + $0x140] sm:$0xff]
  %v58 = vld [vmem:[%s1 + $0x148] sm:$0xff]
  %v59 = vld [vmem:[%s1 + $0x150] sm:$0xff]
  %v60 = vld [vmem:[%s1 + $0x158] sm:$0xff]
  %v61 = vld [vmem:[%s1 + $0x160] sm:$0xff]
  %v62 = vld [vmem:[%s1 + $0x168] sm:$0xff]
  %v63 = vld [vmem:[%s1 + $0x170] sm:$0xff]
  %v64 = vld [vmem:[%s1 + $0x178] sm:$0xff]
  %v65 = vld [vmem:[%s1 + $0x180] sm:$0xff]
  %v66 = vld [vmem:[%s1 + $0x188] sm:$0xff]
  %v67 = vld [vmem:[%s1 + $0x190] sm:$0xff]
  %v68 = vld [vmem:[%s1 + $0x198] sm:$0xff]
  %v69 = vld [vmem:[%s1 + $0x1a0] sm:$0xff]
  %v70 = vld [vmem:[%s1 + $0x1a8] sm:$0xff]
  %v71 = vld [vmem:[%s1 + $0x1b0] sm:$0xff]
  %v72 = vld [vmem:[%s1 + $0x1b8] sm:$0xff]
  %v73 = vld [vmem:[%s1 + $0x1c0] sm:$0xff]
  %v74 = vld [vmem:[%s1 + $0x1c8] sm:$0xff]
  %v75 = vld [vmem:[%s1 + $0x1d0] sm:$0xff]
  %v76 = vld [vmem:[%s1 + $0x1d8] sm:$0xff]
  %v77 = vld [vmem:[%s1 + $0x1e0] sm:$0xff]
  %v78 = vld [vmem:[%s1 + $0x1e8] sm:$0xff]
  %v79 = vld [vmem:[%s1 + $0x1f0] sm:$0xff]
  %v80 = vld [vmem:[%s1 + $0x1f8] sm:$0xff]
  %v81 = vld [vmem:[%s0] sm:$0xff]
  %v82 = vld [vmem:[%s0 + $0x8] sm:$0xff]
  %v83 = vld [vmem:[%s0 + $0x10] sm:$0xff]
  %v84 = vld [vmem:[%s0 + $0x18] sm:$0xff]
  %v85 = vld [vmem:[%s0 + $0x20] sm:$0xff]
  %v86 = vld [vmem:[%s0 + $0x28] sm:$0xff]
  %v87 = vld [vmem:[%s0 + $0x30] sm:$0xff]
  %v88 = vld [vmem:[%s0 + $0x38] sm:$0xff]
  %v89 = vld [vmem:[%s0 + $0x40] sm:$0xff]
  %v90 = vld [vmem:[%s0 + $0x48] sm:$0xff]
  %v91 = vld [vmem:[%s0 + $0x50] sm:$0xff]
  %v92 = vld [vmem:[%s0 + $0x58] sm:$0xff]
  %v93 = vld [vmem:[%s0 + $0x60] sm:$0xff]
  %v94 = vld [vmem:[%s0 + $0x68] sm:$0xff]
  %v95 = vld [vmem:[%s0 + $0x70] sm:$0xff]
  %v96 = vld [vmem:[%s0 + $0x78] sm:$0xff]
  %v97 = vld [vmem:[%s0 + $0x80] sm:$0xff]
  %v98 = vld [vmem:[%s0 + $0x88] sm:$0xff]
  %v99 = vld [vmem:[%s0 + $0x90] sm:$0xff]
  %v100 = vld [vmem:[%s0 + $0x98] sm:$0xff]
  %v101 = vld [vmem:[%s0 + $0xa0] sm:$0xff]
  %v102 = vld [vmem:[%s0 + $0xa8] sm:$0xff]
  %v103 = vld [vmem:[%s0 + $0xb0] sm:$0xff]
  %v104 = vld [vmem:[%s0 + $0xb8] sm:$0xff]
  %v105 = vld [vmem:[%s0 + $0xc0] sm:$0xff]
  %v106 = vld [vmem:[%s0 + $0xc8] sm:$0xff]
  %v107 = vld [vmem:[%s0 + $0xd0] sm:$0xff]
  %v108 = vld [vmem:[%s0 + $0xd8] sm:$0xff]
  %v109 = vld [vmem:[%s0 + $0xe0] sm:$0xff]
  %v110 = vld [vmem:[%s0 + $0xe8] sm:$0xff]
  %v111 = vld [vmem:[%s0 + $0xf0] sm:$0xff]
  %v112 = vld [vmem:[%s0 + $0xf8] sm:$0xff]
  %v113 = vld [vmem:[%s0 + $0x100] sm:$0xff]
  %v114 = vld [vmem:[%s0 + $0x108] sm:$0xff]
  %v115 = vld [vmem:[%s0 + $0x110] sm:$0xff]
  %v116 = vld [vmem:[%s0 + $0x118] sm:$0xff]
  %v117 = vld [vmem:[%s0 + $0x120] sm:$0xff]
  %v118 = vld [vmem:[%s0 + $0x128] sm:$0xff]
  %v119 = vld [vmem:[%s0 + $0x130] sm:$0xff]
  %v120 = vld [vmem:[%s0 + $0x138] sm:$0xff]
  %v121 = vld [vmem:[%s0 + $0x140] sm:$0xff]
  %v122 = vld [vmem:[%s0 + $0x148] sm:$0xff]
  %v123 = vld [vmem:[%s0 + $0x150] sm:$0xff]
  %v124 = vld [vmem:[%s0 + $0x158] sm:$0xff]
  %v125 = vld [vmem:[%s0 + $0x160] sm:$0xff]
  %v126 = vld [vmem:[%s0 + $0x168] sm:$0xff]
  %v127 = vld [vmem:[%s0 + $0x170] sm:$0xff]
  %v128 = vld [vmem:[%s0 + $0x178] sm:$0xff]
  %v129 = vld [vmem:[%s0 + $0x180] sm:$0xff]
  %v130 = vld [vmem:[%s0 + $0x188] sm:$0xff]
  %v131 = vld [vmem:[%s0 + $0x190] sm:$0xff]
  %v132 = vld [vmem:[%s0 + $0x198] sm:$0xff]
  %v133 = vld [vmem:[%s0 + $0x1a0] sm:$0xff]
  %v134 = vld [vmem:[%s0 + $0x1a8] sm:$0xff]
  %v135 = vld [vmem:[%s0 + $0x1b0] sm:$0xff]
  %v136 = vld [vmem:[%s0 + $0x1b8] sm:$0xff]
  %v137 = vld [vmem:[%s0 + $0x1c0] sm:$0xff]
  %v138 = vld [vmem:[%s0 + $0x1c8] sm:$0xff]
  %v139 = vld [vmem:[%s0 + $0x1d0] sm:$0xff]
  %v140 = vld [vmem:[%s0 + $0x1d8] sm:$0xff]
  %v141 = vld [vmem:[%s0 + $0x1e0] sm:$0xff]
  %v142 = vld [vmem:[%s0 + $0x1e8] sm:$0xff]
  %v143 = vld [vmem:[%s0 + $0x1f0] sm:$0xff]
  %v144 = vld [vmem:[%s0 + $0x1f8] sm:$0xff]
  %v145 = vld [vmem:[%s0 + $0x200] sm:$0xff]
  %v146 = vld [vmem:[%s0 + $0x208] sm:$0xff]
  %v147 = vld [vmem:[%s0 + $0x210] sm:$0xff]
  %v148 = vld [vmem:[%s0 + $0x218] sm:$0xff]
  %v149 = vld [vmem:[%s0 + $0x220] sm:$0xff]
  %v150 = vld [vmem:[%s0 + $0x228] sm:$0xff]
  %v151 = vld [vmem:[%s0 + $0x230] sm:$0xff]
  %v152 = vld [vmem:[%s0 + $0x238] sm:$0xff]
  %v153 = vld [vmem:[%s0 + $0x240] sm:$0xff]
  %v154 = vld [vmem:[%s0 + $0x248] sm:$0xff]
  %v155 = vld [vmem:[%s0 + $0x250] sm:$0xff]
  %v156 = vld [vmem:[%s0 + $0x258] sm:$0xff]
  %v157 = vld [vmem:[%s0 + $0x260] sm:$0xff]
  %v158 = vld [vmem:[%s0 + $0x268] sm:$0xff]
  %v159 = vld [vmem:[%s0 + $0x270] sm:$0xff]
  %v160 = vld [vmem:[%s0 + $0x278] sm:$0xff]
  %v161 = vld [vmem:[%s0 + $0x280] sm:$0xff]
  %v162 = vld [vmem:[%s0 + $0x288] sm:$0xff]
  %v163 = vld [vmem:[%s0 + $0x290] sm:$0xff]
  %v164 = vld [vmem:[%s0 + $0x298] sm:$0xff]
  %v165 = vld [vmem:[%s0 + $0x2a0] sm:$0xff]
  %v166 = vld [vmem:[%s0 + $0x2a8] sm:$0xff]
  %v167 = vld [vmem:[%s0 + $0x2b0] sm:$0xff]
  %v168 = vld [vmem:[%s0 + $0x2b8] sm:$0xff]
  %v169 = vld [vmem:[%s0 + $0x2c0] sm:$0xff]
  %v170 = vld [vmem:[%s0 + $0x2c8] sm:$0xff]
  %v171 = vld [vmem:[%s0 + $0x2d0] sm:$0xff]
  %v172 = vld [vmem:[%s0 + $0x2d8] sm:$0xff]
  %v173 = vld [vmem:[%s0 + $0x2e0] sm:$0xff]
  %v174 = vld [vmem:[%s0 + $0x2e8] sm:$0xff]
  %v175 = vld [vmem:[%s0 + $0x2f0] sm:$0xff]
  %v176 = vld [vmem:[%s0 + $0x2f8] sm:$0xff]
  %v177 = vld [vmem:[%s0 + $0x300] sm:$0xff]
  %v178 = vld [vmem:[%s0 + $0x308] sm:$0xff]
  %v179 = vld [vmem:[%s0 + $0x310] sm:$0xff]
  %v180 = vld [vmem:[%s0 + $0x318] sm:$0xff]
  %v181 = vld [vmem:[%s0 + $0x320] sm:$0xff]
  %v182 = vld [vmem:[%s0 + $0x328] sm:$0xff]
  %v183 = vld [vmem:[%s0 + $0x330] sm:$0xff]
  %v184 = vld [vmem:[%s0 + $0x338] sm:$0xff]
  %v185 = vld [vmem:[%s0 + $0x340] sm:$0xff]
  %v186 = vld [vmem:[%s0 + $0x348] sm:$0xff]
  %v187 = vld [vmem:[%s0 + $0x350] sm:$0xff]
  %v188 = vld [vmem:[%s0 + $0x358] sm:$0xff]
  %v189 = vld [vmem:[%s0 + $0x360] sm:$0xff]
  %v190 = vld [vmem:[%s0 + $0x368] sm:$0xff]
  %v191 = vld [vmem:[%s0 + $0x370] sm:$0xff]
  %v192 = vld [vmem:[%s0 + $0x378] sm:$0xff]
  %v193 = vld [vmem:[%s0 + $0x380] sm:$0xff]
  %v194 = vld [vmem:[%s0 + $0x388] sm:$0xff]
  %v195 = vld [vmem:[%s0 + $0x390] sm:$0xff]
  %v196 = vld [vmem:[%s0 + $0x398] sm:$0xff]
  %v197 = vld [vmem:[%s0 + $0x3a0] sm:$0xff]
  %v198 = vld [vmem:[%s0 + $0x3a8] sm:$0xff]
  %v199 = vld [vmem:[%s0 + $0x3b0] sm:$0xff]
  %v200 = vld [vmem:[%s0 + $0x3b8] sm:$0xff]
  %v201 = vld [vmem:[%s0 + $0x3c0] sm:$0xff]
  %v202 = vld [vmem:[%s0 + $0x3c8] sm:$0xff]
  %v203 = vld [vmem:[%s0 + $0x3d0] sm:$0xff]
  %v204 = vld [vmem:[%s0 + $0x3d8] sm:$0xff]
  %v205 = vld [vmem:[%s0 + $0x3e0] sm:$0xff]
  %v206 = vld [vmem:[%s0 + $0x3e8] sm:$0xff]
  %v207 = vld [vmem:[%s0 + $0x3f0] sm:$0xff]
  %v208 = vld [vmem:[%s0 + $0x3f8] sm:$0xff]
  %v209 = vld [vmem:[%s0 + $0x400] sm:$0xff]
  %v210 = vld [vmem:[%s0 + $0x408] sm:$0xff]
  %v211 = vld [vmem:[%s0 + $0x410] sm:$0xff]
  %v212 = vld [vmem:[%s0 + $0x418] sm:$0xff]
  %v213 = vld [vmem:[%s0 + $0x420] sm:$0xff]
  %v214 = vld [vmem:[%s0 + $0x428] sm:$0xff]
  %v215 = vld [vmem:[%s0 + $0x430] sm:$0xff]
  %v216 = vld [vmem:[%s0 + $0x438] sm:$0xff]
  %v217 = vld [vmem:[%s0 + $0x440] sm:$0xff]
  %v218 = vld [vmem:[%s0 + $0x448] sm:$0xff]
  %v219 = vld [vmem:[%s0 + $0x450] sm:$0xff]
  %v220 = vld [vmem:[%s0 + $0x458] sm:$0xff]
  %v221 = vld [vmem:[%s0 + $0x460] sm:$0xff]
  %v222 = vld [vmem:[%s0 + $0x468] sm:$0xff]
  %v223 = vld [vmem:[%s0 + $0x470] sm:$0xff]
  %v224 = vld [vmem:[%s0 + $0x478] sm:$0xff]
  %v225 = vld [vmem:[%s0 + $0x480] sm:$0xff]
  %v226 = vld [vmem:[%s0 + $0x488] sm:$0xff]
  %v227 = vld [vmem:[%s0 + $0x490] sm:$0xff]
  %v228 = vld [vmem:[%s0 + $0x498] sm:$0xff]
  %v229 = vld [vmem:[%s0 + $0x4a0] sm:$0xff]
  %v230 = vld [vmem:[%s0 + $0x4a8] sm:$0xff]
  %v231 = vld [vmem:[%s0 + $0x4b0] sm:$0xff]
  %v232 = vld [vmem:[%s0 + $0x4b8] sm:$0xff]
  %v233 = vld [vmem:[%s0 + $0x4c0] sm:$0xff]
  %v234 = vld [vmem:[%s0 + $0x4c8] sm:$0xff]
  %v235 = vld [vmem:[%s0 + $0x4d0] sm:$0xff]
  %v236 = vld [vmem:[%s0 + $0x4d8] sm:$0xff]
  %v237 = vld [vmem:[%s0 + $0x4e0] sm:$0xff]
  %v238 = vld [vmem:[%s0 + $0x4e8] sm:$0xff]
  %v239 = vld [vmem:[%s0 + $0x4f0] sm:$0xff]
  %v240 = vld [vmem:[%s0 + $0x4f8] sm:$0xff]
  %v241 = vld [vmem:[%s0 + $0x500] sm:$0xff]
  %v242 = vld [vmem:[%s0 + $0x508] sm:$0xff]
  %v243 = vld [vmem:[%s0 + $0x510] sm:$0xff]
  %v244 = vld [vmem:[%s0 + $0x518] sm:$0xff]
  %v245 = vld [vmem:[%s0 + $0x520] sm:$0xff]
  %v246 = vld [vmem:[%s0 + $0x528] sm:$0xff]
  %v247 = vld [vmem:[%s0 + $0x530] sm:$0xff]
  %v248 = vld [vmem:[%s0 + $0x538] sm:$0xff]
  %v249 = vld [vmem:[%s0 + $0x540] sm:$0xff]
  %v250 = vld [vmem:[%s0 + $0x548] sm:$0xff]
  %v251 = vld [vmem:[%s0 + $0x550] sm:$0xff]
  %v252 = vld [vmem:[%s0 + $0x558] sm:$0xff]
  %v253 = vld [vmem:[%s0 + $0x560] sm:$0xff]
  %v254 = vld [vmem:[%s0 + $0x568] sm:$0xff]
  %v255 = vld [vmem:[%s0 + $0x570] sm:$0xff]
  %v256 = vld [vmem:[%s0 + $0x578] sm:$0xff]
  %v257 = vld [vmem:[%s0 + $0x580] sm:$0xff]
  %v258 = vld [vmem:[%s0 + $0x588] sm:$0xff]
  %v259 = vld [vmem:[%s0 + $0x590] sm:$0xff]
  %v260 = vld [vmem:[%s0 + $0x598] sm:$0xff]
  %v261 = vld [vmem:[%s0 + $0x5a0] sm:$0xff]
  %v262 = vld [vmem:[%s0 + $0x5a8] sm:$0xff]
  %v263 = vld [vmem:[%s0 + $0x5b0] sm:$0xff]
  %v264 = vld [vmem:[%s0 + $0x5b8] sm:$0xff]
  %v265 = vld [vmem:[%s0 + $0x5c0] sm:$0xff]
  %v266 = vld [vmem:[%s0 + $0x5c8] sm:$0xff]
  %v267 = vld [vmem:[%s0 + $0x5d0] sm:$0xff]
  %v268 = vld [vmem:[%s0 + $0x5d8] sm:$0xff]
  %v269 = vld [vmem:[%s0 + $0x5e0] sm:$0xff]
  %v270 = vld [vmem:[%s0 + $0x5e8] sm:$0xff]
  %v271 = vld [vmem:[%s0 + $0x5f0] sm:$0xff]
  %v272 = vld [vmem:[%s0 + $0x5f8] sm:$0xff]
  %v273 = vld [vmem:[%s0 + $0x600] sm:$0xff]
  %v274 = vld [vmem:[%s0 + $0x608] sm:$0xff]
  %v275 = vld [vmem:[%s0 + $0x610] sm:$0xff]
  %v276 = vld [vmem:[%s0 + $0x618] sm:$0xff]
  %v277 = vld [vmem:[%s0 + $0x620] sm:$0xff]
  %v278 = vld [vmem:[%s0 + $0x628] sm:$0xff]
  %v279 = vld [vmem:[%s0 + $0x630] sm:$0xff]
  %v280 = vld [vmem:[%s0 + $0x638] sm:$0xff]
  %v281 = vld [vmem:[%s0 + $0x640] sm:$0xff]
  %v282 = vld [vmem:[%s0 + $0x648] sm:$0xff]
  %v283 = vld [vmem:[%s0 + $0x650] sm:$0xff]
  %v284 = vld [vmem:[%s0 + $0x658] sm:$0xff]
  %v285 = vld [vmem:[%s0 + $0x660] sm:$0xff]
  %v286 = vld [vmem:[%s0 + $0x668] sm:$0xff]
  %v287 = vld [vmem:[%s0 + $0x670] sm:$0xff]
  %v288 = vld [vmem:[%s0 + $0x678] sm:$0xff]
  %v289 = vld [vmem:[%s0 + $0x680] sm:$0xff]
  %v290 = vld [vmem:[%s0 + $0x688] sm:$0xff]
  %v291 = vld [vmem:[%s0 + $0x690] sm:$0xff]
  %v292 = vld [vmem:[%s0 + $0x698] sm:$0xff]
  %v293 = vld [vmem:[%s0 + $0x6a0] sm:$0xff]
  %v294 = vld [vmem:[%s0 + $0x6a8] sm:$0xff]
  %v295 = vld [vmem:[%s0 + $0x6b0] sm:$0xff]
  %v296 = vld [vmem:[%s0 + $0x6b8] sm:$0xff]
  %v297 = vld [vmem:[%s0 + $0x6c0] sm:$0xff]
  %v298 = vld [vmem:[%s0 + $0x6c8] sm:$0xff]
  %v299 = vld [vmem:[%s0 + $0x6d0] sm:$0xff]
  %v300 = vld [vmem:[%s0 + $0x6d8] sm:$0xff]
  %v301 = vld [vmem:[%s0 + $0x6e0] sm:$0xff]
  %v302 = vld [vmem:[%s0 + $0x6e8] sm:$0xff]
  %v303 = vld [vmem:[%s0 + $0x6f0] sm:$0xff]
  %v304 = vld [vmem:[%s0 + $0x6f8] sm:$0xff]
  %v305 = vld [vmem:[%s0 + $0x700] sm:$0xff]
  %v306 = vld [vmem:[%s0 + $0x708] sm:$0xff]
  %v307 = vld [vmem:[%s0 + $0x710] sm:$0xff]
  %v308 = vld [vmem:[%s0 + $0x718] sm:$0xff]
  %v309 = vld [vmem:[%s0 + $0x720] sm:$0xff]
  %v310 = vld [vmem:[%s0 + $0x728] sm:$0xff]
  %v311 = vld [vmem:[%s0 + $0x730] sm:$0xff]
  %v312 = vld [vmem:[%s0 + $0x738] sm:$0xff]
  %v313 = vld [vmem:[%s0 + $0x740] sm:$0xff]
  %v314 = vld [vmem:[%s0 + $0x748] sm:$0xff]
  %v315 = vld [vmem:[%s0 + $0x750] sm:$0xff]
  %v316 = vld [vmem:[%s0 + $0x758] sm:$0xff]
  %v317 = vld [vmem:[%s0 + $0x760] sm:$0xff]
  %v318 = vld [vmem:[%s0 + $0x768] sm:$0xff]
  %v319 = vld [vmem:[%s0 + $0x770] sm:$0xff]
  %v320 = vld [vmem:[%s0 + $0x778] sm:$0xff]
  %v321 = vld [vmem:[%s0 + $0x780] sm:$0xff]
  %v322 = vld [vmem:[%s0 + $0x788] sm:$0xff]
  %v323 = vld [vmem:[%s0 + $0x790] sm:$0xff]
  %v324 = vld [vmem:[%s0 + $0x798] sm:$0xff]
  %v325 = vld [vmem:[%s0 + $0x7a0] sm:$0xff]
  %v326 = vld [vmem:[%s0 + $0x7a8] sm:$0xff]
  %v327 = vld [vmem:[%s0 + $0x7b0] sm:$0xff]
  %v328 = vld [vmem:[%s0 + $0x7b8] sm:$0xff]
  %v329 = vld [vmem:[%s0 + $0x7c0] sm:$0xff]
  %v330 = vld [vmem:[%s0 + $0x7c8] sm:$0xff]
  %v331 = vld [vmem:[%s0 + $0x7d0] sm:$0xff]
  %v332 = vld [vmem:[%s0 + $0x7d8] sm:$0xff]
  %v333 = vld [vmem:[%s0 + $0x7e0] sm:$0xff]
  %v334 = vld [vmem:[%s0 + $0x7e8] sm:$0xff]
  %v335 = vld [vmem:[%s0 + $0x7f0] sm:$0xff]
  %v336 = vld [vmem:[%s0 + $0x7f8] sm:$0xff]
  %v401 = vunpack.c.l.b16 %v17
  %v402 = vunpack.c.h.b16 %v17
  %v403 = vunpack.c.l.b16 %v18
  %v404 = vunpack.c.h.b16 %v18
  %v405 = vunpack.c.l.b16 %v19
  %v406 = vunpack.c.h.b16 %v19
  %v407 = vunpack.c.l.b16 %v20
  %v408 = vunpack.c.h.b16 %v20
  %v409 = vunpack.c.l.b16 %v21
  %v410 = vunpack.c.h.b16 %v21
  %v411 = vunpack.c.l.b16 %v22
  %v412 = vunpack.c.h.b16 %v22
  %v413 = vunpack.c.l.b16 %v23
  %v414 = vunpack.c.h.b16 %v23
  %v415 = vunpack.c.l.b16 %v24
  %v416 = vunpack.c.h.b16 %v24
  %v417 = vunpack.c.l.b16 %v25
  %v418 = vunpack.c.h.b16 %v25
  %v419 = vunpack.c.l.b16 %v26
  %v420 = vunpack.c.h.b16 %v26
  %v421 = vunpack.c.l.b16 %v27
  %v422 = vunpack.c.h.b16 %v27
  %v423 = vunpack.c.l.b16 %v28
  %v424 = vunpack.c.h.b16 %v28
  %v425 = vunpack.c.l.b16 %v29
  %v426 = vunpack.c.h.b16 %v29
  %v427 = vunpack.c.l.b16 %v30
  %v428 = vunpack.c.h.b16 %v30
  %v429 = vunpack.c.l.b16 %v31
  %v430 = vunpack.c.h.b16 %v31
  %v431 = vunpack.c.l.b16 %v32
  %v432 = vunpack.c.h.b16 %v32
  %v433 = vunpack.c.l.b16 %v33
  %v434 = vunpack.c.h.b16 %v33
  %v435 = vunpack.c.l.b16 %v34
  %v436 = vunpack.c.h.b16 %v34
  %v437 = vunpack.c.l.b16 %v35
  %v438 = vunpack.c.h.b16 %v35
  %v439 = vunpack.c.l.b16 %v36
  %v440 = vunpack.c.h.b16 %v36
  %v441 = vunpack.c.l.b16 %v37
  %v442 = vunpack.c.h.b16 %v37
  %v443 = vunpack.c.l.b16 %v38
  %v444 = vunpack.c.h.b16 %v38
  %v445 = vunpack.c.l.b16 %v39
  %v446 = vunpack.c.h.b16 %v39
  %v447 = vunpack.c.l.b16 %v40
  %v448 = vunpack.c.h.b16 %v40
  %v449 = vunpack.c.l.b16 %v41
  %v450 = vunpack.c.h.b16 %v41
  %v451 = vunpack.c.l.b16 %v42
  %v452 = vunpack.c.h.b16 %v42
  %v453 = vunpack.c.l.b16 %v43
  %v454 = vunpack.c.h.b16 %v43
  %v455 = vunpack.c.l.b16 %v44
  %v456 = vunpack.c.h.b16 %v44
  %v457 = vunpack.c.l.b16 %v45
  %v458 = vunpack.c.h.b16 %v45
  %v459 = vunpack.c.l.b16 %v46
  %v460 = vunpack.c.h.b16 %v46
  %v461 = vunpack.c.l.b16 %v47
  %v462 = vunpack.c.h.b16 %v47
  %v463 = vunpack.c.l.b16 %v48
  %v464 = vunpack.c.h.b16 %v48
  %v465 = vunpack.c.l.b16 %v49
  %v466 = vunpack.c.h.b16 %v49
  %v467 = vunpack.c.l.b16 %v50
  %v468 = vunpack.c.h.b16 %v50
  %v469 = vunpack.c.l.b16 %v51
  %v470 = vunpack.c.h.b16 %v51
  %v471 = vunpack.c.l.b16 %v52
  %v472 = vunpack.c.h.b16 %v52
  %v473 = vunpack.c.l.b16 %v53
  %v474 = vunpack.c.h.b16 %v53
  %v475 = vunpack.c.l.b16 %v54
  %v476 = vunpack.c.h.b16 %v54
  %v477 = vunpack.c.l.b16 %v55
  %v478 = vunpack.c.h.b16 %v55
  %v479 = vunpack.c.l.b16 %v56
  %v480 = vunpack.c.h.b16 %v56
  %v481 = vunpack.c.l.b16 %v57
  %v482 = vunpack.c.h.b16 %v57
  %v483 = vunpack.c.l.b16 %v58
  %v484 = vunpack.c.h.b16 %v58
  %v485 = vunpack.c.l.b16 %v59
  %v486 = vunpack.c.h.b16 %v59
  %v487 = vunpack.c.l.b16 %v60
  %v488 = vunpack.c.h.b16 %v60
  %v489 = vunpack.c.l.b16 %v61
  %v490 = vunpack.c.h.b16 %v61
  %v491 = vunpack.c.l.b16 %v62
  %v492 = vunpack.c.h.b16 %v62
  %v493 = vunpack.c.l.b16 %v63
  %v494 = vunpack.c.h.b16 %v63
  %v495 = vunpack.c.l.b16 %v64
  %v496 = vunpack.c.h.b16 %v64
  %v497 = vunpack.c.l.b16 %v65
  %v498 = vunpack.c.h.b16 %v65
  %v499 = vunpack.c.l.b16 %v66
  %v500 = vunpack.c.h.b16 %v66
  %v501 = vunpack.c.l.b16 %v67
  %v502 = vunpack.c.h.b16 %v67
  %v503 = vunpack.c.l.b16 %v68
  %v504 = vunpack.c.h.b16 %v68
  %v505 = vunpack.c.l.b16 %v69
  %v506 = vunpack.c.h.b16 %v69
  %v507 = vunpack.c.l.b16 %v70
  %v508 = vunpack.c.h.b16 %v70
  %v509 = vunpack.c.l.b16 %v71
  %v510 = vunpack.c.h.b16 %v71
  %v511 = vunpack.c.l.b16 %v72
  %v512 = vunpack.c.h.b16 %v72
  %v513 = vunpack.c.l.b16 %v73
  %v514 = vunpack.c.h.b16 %v73
  %v515 = vunpack.c.l.b16 %v74
  %v516 = vunpack.c.h.b16 %v74
  %v517 = vunpack.c.l.b16 %v75
  %v518 = vunpack.c.h.b16 %v75
  %v519 = vunpack.c.l.b16 %v76
  %v520 = vunpack.c.h.b16 %v76
  %v521 = vunpack.c.l.b16 %v77
  %v522 = vunpack.c.h.b16 %v77
  %v523 = vunpack.c.l.b16 %v78
  %v524 = vunpack.c.h.b16 %v78
  %v525 = vunpack.c.l.b16 %v79
  %v526 = vunpack.c.h.b16 %v79
  %v527 = vunpack.c.l.b16 %v80
  %v528 = vunpack.c.h.b16 %v80
  %v529 = vpack.c.b16 %v409, %v401
  %v530 = vpack.c.b16 %v410, %v402
  %v531 = vpack.c.b16 %v411, %v403
  %v532 = vpack.c.b16 %v412, %v404
  %v533 = vpack.c.b16 %v413, %v405
  %v534 = vpack.c.b16 %v414, %v406
  %v535 = vpack.c.b16 %v415, %v407
  %v536 = vpack.c.b16 %v416, %v408
  %v537 = vpack.c.b16 %v425, %v417
  %v538 = vpack.c.b16 %v426, %v418
  %v539 = vpack.c.b16 %v427, %v419
  %v540 = vpack.c.b16 %v428, %v420
  %v541 = vpack.c.b16 %v429, %v421
  %v542 = vpack.c.b16 %v430, %v422
  %v543 = vpack.c.b16 %v431, %v423
  %v544 = vpack.c.b16 %v432, %v424
  %v545 = vpack.c.b16 %v441, %v433
  %v546 = vpack.c.b16 %v442, %v434
  %v547 = vpack.c.b16 %v443, %v435
  %v548 = vpack.c.b16 %v444, %v436
  %v549 = vpack.c.b16 %v445, %v437
  %v550 = vpack.c.b16 %v446, %v438
  %v551 = vpack.c.b16 %v447, %v439
  %v552 = vpack.c.b16 %v448, %v440
  %v553 = vpack.c.b16 %v457, %v449
  %v554 = vpack.c.b16 %v458, %v450
  %v555 = vpack.c.b16 %v459, %v451
  %v556 = vpack.c.b16 %v460, %v452
  %v557 = vpack.c.b16 %v461, %v453
  %v558 = vpack.c.b16 %v462, %v454
  %v559 = vpack.c.b16 %v463, %v455
  %v560 = vpack.c.b16 %v464, %v456
  %v561 = vpack.c.b16 %v473, %v465
  %v562 = vpack.c.b16 %v474, %v466
  %v563 = vpack.c.b16 %v475, %v467
  %v564 = vpack.c.b16 %v476, %v468
  %v565 = vpack.c.b16 %v477, %v469
  %v566 = vpack.c.b16 %v478, %v470
  %v567 = vpack.c.b16 %v479, %v471
  %v568 = vpack.c.b16 %v480, %v472
  %v569 = vpack.c.b16 %v489, %v481
  %v570 = vpack.c.b16 %v490, %v482
  %v571 = vpack.c.b16 %v491, %v483
  %v572 = vpack.c.b16 %v492, %v484
  %v573 = vpack.c.b16 %v493, %v485
  %v574 = vpack.c.b16 %v494, %v486
  %v575 = vpack.c.b16 %v495, %v487
  %v576 = vpack.c.b16 %v496, %v488
  %v577 = vpack.c.b16 %v505, %v497
  %v578 = vpack.c.b16 %v506, %v498
  %v579 = vpack.c.b16 %v507, %v499
  %v580 = vpack.c.b16 %v508, %v500
  %v581 = vpack.c.b16 %v509, %v501
  %v582 = vpack.c.b16 %v510, %v502
  %v583 = vpack.c.b16 %v511, %v503
  %v584 = vpack.c.b16 %v512, %v504
  %v585 = vpack.c.b16 %v521, %v513
  %v586 = vpack.c.b16 %v522, %v514
  %v587 = vpack.c.b16 %v523, %v515
  %v588 = vpack.c.b16 %v524, %v516
  %v589 = vpack.c.b16 %v525, %v517
  %v590 = vpack.c.b16 %v526, %v518
  %v591 = vpack.c.b16 %v527, %v519
  %v592 = vpack.c.b16 %v528, %v520
  %v913 = vunpack.c.l.b16 %v81
  %v914 = vunpack.c.h.b16 %v81
  %v915 = vunpack.c.l.b16 %v82
  %v916 = vunpack.c.h.b16 %v82
  %v917 = vunpack.c.l.b16 %v83
  %v918 = vunpack.c.h.b16 %v83
  %v919 = vunpack.c.l.b16 %v84
  %v920 = vunpack.c.h.b16 %v84
  %v921 = vunpack.c.l.b16 %v85
  %v922 = vunpack.c.h.b16 %v85
  %v923 = vunpack.c.l.b16 %v86
  %v924 = vunpack.c.h.b16 %v86
  %v925 = vunpack.c.l.b16 %v87
  %v926 = vunpack.c.h.b16 %v87
  %v927 = vunpack.c.l.b16 %v88
  %v928 = vunpack.c.h.b16 %v88
  %v929 = vunpack.c.l.b16 %v89
  %v930 = vunpack.c.h.b16 %v89
  %v931 = vunpack.c.l.b16 %v90
  %v932 = vunpack.c.h.b16 %v90
  %v933 = vunpack.c.l.b16 %v91
  %v934 = vunpack.c.h.b16 %v91
  %v935 = vunpack.c.l.b16 %v92
  %v936 = vunpack.c.h.b16 %v92
  %v937 = vunpack.c.l.b16 %v93
  %v938 = vunpack.c.h.b16 %v93
  %v939 = vunpack.c.l.b16 %v94
  %v940 = vunpack.c.h.b16 %v94
  %v941 = vunpack.c.l.b16 %v95
  %v942 = vunpack.c.h.b16 %v95
  %v943 = vunpack.c.l.b16 %v96
  %v944 = vunpack.c.h.b16 %v96
  %v945 = vunpack.c.l.b16 %v97
  %v946 = vunpack.c.h.b16 %v97
  %v947 = vunpack.c.l.b16 %v98
  %v948 = vunpack.c.h.b16 %v98
  %v949 = vunpack.c.l.b16 %v99
  %v950 = vunpack.c.h.b16 %v99
  %v951 = vunpack.c.l.b16 %v100
  %v952 = vunpack.c.h.b16 %v100
  %v953 = vunpack.c.l.b16 %v101
  %v954 = vunpack.c.h.b16 %v101
  %v955 = vunpack.c.l.b16 %v102
  %v956 = vunpack.c.h.b16 %v102
  %v957 = vunpack.c.l.b16 %v103
  %v958 = vunpack.c.h.b16 %v103
  %v959 = vunpack.c.l.b16 %v104
  %v960 = vunpack.c.h.b16 %v104
  %v961 = vunpack.c.l.b16 %v105
  %v962 = vunpack.c.h.b16 %v105
  %v963 = vunpack.c.l.b16 %v106
  %v964 = vunpack.c.h.b16 %v106
  %v965 = vunpack.c.l.b16 %v107
  %v966 = vunpack.c.h.b16 %v107
  %v967 = vunpack.c.l.b16 %v108
  %v968 = vunpack.c.h.b16 %v108
  %v969 = vunpack.c.l.b16 %v109
  %v970 = vunpack.c.h.b16 %v109
  %v971 = vunpack.c.l.b16 %v110
  %v972 = vunpack.c.h.b16 %v110
  %v973 = vunpack.c.l.b16 %v111
  %v974 = vunpack.c.h.b16 %v111
  %v975 = vunpack.c.l.b16 %v112
  %v976 = vunpack.c.h.b16 %v112
  %v977 = vunpack.c.l.b16 %v113
  %v978 = vunpack.c.h.b16 %v113
  %v979 = vunpack.c.l.b16 %v114
  %v980 = vunpack.c.h.b16 %v114
  %v981 = vunpack.c.l.b16 %v115
  %v982 = vunpack.c.h.b16 %v115
  %v983 = vunpack.c.l.b16 %v116
  %v984 = vunpack.c.h.b16 %v116
  %v985 = vunpack.c.l.b16 %v117
  %v986 = vunpack.c.h.b16 %v117
  %v987 = vunpack.c.l.b16 %v118
  %v988 = vunpack.c.h.b16 %v118
  %v989 = vunpack.c.l.b16 %v119
  %v990 = vunpack.c.h.b16 %v119
  %v991 = vunpack.c.l.b16 %v120
  %v992 = vunpack.c.h.b16 %v120
  %v993 = vunpack.c.l.b16 %v121
  %v994 = vunpack.c.h.b16 %v121
  %v995 = vunpack.c.l.b16 %v122
  %v996 = vunpack.c.h.b16 %v122
  %v997 = vunpack.c.l.b16 %v123
  %v998 = vunpack.c.h.b16 %v123
  %v999 = vunpack.c.l.b16 %v124
  %v1000 = vunpack.c.h.b16 %v124
  %v1001 = vunpack.c.l.b16 %v125
  %v1002 = vunpack.c.h.b16 %v125
  %v1003 = vunpack.c.l.b16 %v126
  %v1004 = vunpack.c.h.b16 %v126
  %v1005 = vunpack.c.l.b16 %v127
  %v1006 = vunpack.c.h.b16 %v127
  %v1007 = vunpack.c.l.b16 %v128
  %v1008 = vunpack.c.h.b16 %v128
  %v1009 = vunpack.c.l.b16 %v129
  %v1010 = vunpack.c.h.b16 %v129
  %v1011 = vunpack.c.l.b16 %v130
  %v1012 = vunpack.c.h.b16 %v130
  %v1013 = vunpack.c.l.b16 %v131
  %v1014 = vunpack.c.h.b16 %v131
  %v1015 = vunpack.c.l.b16 %v132
  %v1016 = vunpack.c.h.b16 %v132
  %v1017 = vunpack.c.l.b16 %v133
  %v1018 = vunpack.c.h.b16 %v133
  %v1019 = vunpack.c.l.b16 %v134
  %v1020 = vunpack.c.h.b16 %v134
  %v1021 = vunpack.c.l.b16 %v135
  %v1022 = vunpack.c.h.b16 %v135
  %v1023 = vunpack.c.l.b16 %v136
  %v1024 = vunpack.c.h.b16 %v136
  %v1025 = vunpack.c.l.b16 %v137
  %v1026 = vunpack.c.h.b16 %v137
  %v1027 = vunpack.c.l.b16 %v138
  %v1028 = vunpack.c.h.b16 %v138
  %v1029 = vunpack.c.l.b16 %v139
  %v1030 = vunpack.c.h.b16 %v139
  %v1031 = vunpack.c.l.b16 %v140
  %v1032 = vunpack.c.h.b16 %v140
  %v1033 = vunpack.c.l.b16 %v141
  %v1034 = vunpack.c.h.b16 %v141
  %v1035 = vunpack.c.l.b16 %v142
  %v1036 = vunpack.c.h.b16 %v142
  %v1037 = vunpack.c.l.b16 %v143
  %v1038 = vunpack.c.h.b16 %v143
  %v1039 = vunpack.c.l.b16 %v144
  %v1040 = vunpack.c.h.b16 %v144
  %v1041 = vunpack.c.l.b16 %v145
  %v1042 = vunpack.c.h.b16 %v145
  %v1043 = vunpack.c.l.b16 %v146
  %v1044 = vunpack.c.h.b16 %v146
  %v1045 = vunpack.c.l.b16 %v147
  %v1046 = vunpack.c.h.b16 %v147
  %v1047 = vunpack.c.l.b16 %v148
  %v1048 = vunpack.c.h.b16 %v148
  %v1049 = vunpack.c.l.b16 %v149
  %v1050 = vunpack.c.h.b16 %v149
  %v1051 = vunpack.c.l.b16 %v150
  %v1052 = vunpack.c.h.b16 %v150
  %v1053 = vunpack.c.l.b16 %v151
  %v1054 = vunpack.c.h.b16 %v151
  %v1055 = vunpack.c.l.b16 %v152
  %v1056 = vunpack.c.h.b16 %v152
  %v1057 = vunpack.c.l.b16 %v153
  %v1058 = vunpack.c.h.b16 %v153
  %v1059 = vunpack.c.l.b16 %v154
  %v1060 = vunpack.c.h.b16 %v154
  %v1061 = vunpack.c.l.b16 %v155
  %v1062 = vunpack.c.h.b16 %v155
  %v1063 = vunpack.c.l.b16 %v156
  %v1064 = vunpack.c.h.b16 %v156
  %v1065 = vunpack.c.l.b16 %v157
  %v1066 = vunpack.c.h.b16 %v157
  %v1067 = vunpack.c.l.b16 %v158
  %v1068 = vunpack.c.h.b16 %v158
  %v1069 = vunpack.c.l.b16 %v159
  %v1070 = vunpack.c.h.b16 %v159
  %v1071 = vunpack.c.l.b16 %v160
  %v1072 = vunpack.c.h.b16 %v160
  %v1073 = vunpack.c.l.b16 %v161
  %v1074 = vunpack.c.h.b16 %v161
  %v1075 = vunpack.c.l.b16 %v162
  %v1076 = vunpack.c.h.b16 %v162
  %v1077 = vunpack.c.l.b16 %v163
  %v1078 = vunpack.c.h.b16 %v163
  %v1079 = vunpack.c.l.b16 %v164
  %v1080 = vunpack.c.h.b16 %v164
  %v1081 = vunpack.c.l.b16 %v165
  %v1082 = vunpack.c.h.b16 %v165
  %v1083 = vunpack.c.l.b16 %v166
  %v1084 = vunpack.c.h.b16 %v166
  %v1085 = vunpack.c.l.b16 %v167
  %v1086 = vunpack.c.h.b16 %v167
  %v1087 = vunpack.c.l.b16 %v168
  %v1088 = vunpack.c.h.b16 %v168
  %v1089 = vunpack.c.l.b16 %v169
  %v1090 = vunpack.c.h.b16 %v169
  %v1091 = vunpack.c.l.b16 %v170
  %v1092 = vunpack.c.h.b16 %v170
  %v1093 = vunpack.c.l.b16 %v171
  %v1094 = vunpack.c.h.b16 %v171
  %v1095 = vunpack.c.l.b16 %v172
  %v1096 = vunpack.c.h.b16 %v172
  %v1097 = vunpack.c.l.b16 %v173
  %v1098 = vunpack.c.h.b16 %v173
  %v1099 = vunpack.c.l.b16 %v174
  %v1100 = vunpack.c.h.b16 %v174
  %v1101 = vunpack.c.l.b16 %v175
  %v1102 = vunpack.c.h.b16 %v175
  %v1103 = vunpack.c.l.b16 %v176
  %v1104 = vunpack.c.h.b16 %v176
  %v1105 = vunpack.c.l.b16 %v177
  %v1106 = vunpack.c.h.b16 %v177
  %v1107 = vunpack.c.l.b16 %v178
  %v1108 = vunpack.c.h.b16 %v178
  %v1109 = vunpack.c.l.b16 %v179
  %v1110 = vunpack.c.h.b16 %v179
  %v1111 = vunpack.c.l.b16 %v180
  %v1112 = vunpack.c.h.b16 %v180
  %v1113 = vunpack.c.l.b16 %v181
  %v1114 = vunpack.c.h.b16 %v181
  %v1115 = vunpack.c.l.b16 %v182
  %v1116 = vunpack.c.h.b16 %v182
  %v1117 = vunpack.c.l.b16 %v183
  %v1118 = vunpack.c.h.b16 %v183
  %v1119 = vunpack.c.l.b16 %v184
  %v1120 = vunpack.c.h.b16 %v184
  %v1121 = vunpack.c.l.b16 %v185
  %v1122 = vunpack.c.h.b16 %v185
  %v1123 = vunpack.c.l.b16 %v186
  %v1124 = vunpack.c.h.b16 %v186
  %v1125 = vunpack.c.l.b16 %v187
  %v1126 = vunpack.c.h.b16 %v187
  %v1127 = vunpack.c.l.b16 %v188
  %v1128 = vunpack.c.h.b16 %v188
  %v1129 = vunpack.c.l.b16 %v189
  %v1130 = vunpack.c.h.b16 %v189
  %v1131 = vunpack.c.l.b16 %v190
  %v1132 = vunpack.c.h.b16 %v190
  %v1133 = vunpack.c.l.b16 %v191
  %v1134 = vunpack.c.h.b16 %v191
  %v1135 = vunpack.c.l.b16 %v192
  %v1136 = vunpack.c.h.b16 %v192
  %v1137 = vunpack.c.l.b16 %v193
  %v1138 = vunpack.c.h.b16 %v193
  %v1139 = vunpack.c.l.b16 %v194
  %v1140 = vunpack.c.h.b16 %v194
  %v1141 = vunpack.c.l.b16 %v195
  %v1142 = vunpack.c.h.b16 %v195
  %v1143 = vunpack.c.l.b16 %v196
  %v1144 = vunpack.c.h.b16 %v196
  %v1145 = vunpack.c.l.b16 %v197
  %v1146 = vunpack.c.h.b16 %v197
  %v1147 = vunpack.c.l.b16 %v198
  %v1148 = vunpack.c.h.b16 %v198
  %v1149 = vunpack.c.l.b16 %v199
  %v1150 = vunpack.c.h.b16 %v199
  %v1151 = vunpack.c.l.b16 %v200
  %v1152 = vunpack.c.h.b16 %v200
  %v1153 = vunpack.c.l.b16 %v201
  %v1154 = vunpack.c.h.b16 %v201
  %v1155 = vunpack.c.l.b16 %v202
  %v1156 = vunpack.c.h.b16 %v202
  %v1157 = vunpack.c.l.b16 %v203
  %v1158 = vunpack.c.h.b16 %v203
  %v1159 = vunpack.c.l.b16 %v204
  %v1160 = vunpack.c.h.b16 %v204
  %v1161 = vunpack.c.l.b16 %v205
  %v1162 = vunpack.c.h.b16 %v205
  %v1163 = vunpack.c.l.b16 %v206
  %v1164 = vunpack.c.h.b16 %v206
  %v1165 = vunpack.c.l.b16 %v207
  %v1166 = vunpack.c.h.b16 %v207
  %v1167 = vunpack.c.l.b16 %v208
  %v1168 = vunpack.c.h.b16 %v208
  %v1169 = vunpack.c.l.b16 %v209
  %v1170 = vunpack.c.h.b16 %v209
  %v1171 = vunpack.c.l.b16 %v210
  %v1172 = vunpack.c.h.b16 %v210
  %v1173 = vunpack.c.l.b16 %v211
  %v1174 = vunpack.c.h.b16 %v211
  %v1175 = vunpack.c.l.b16 %v212
  %v1176 = vunpack.c.h.b16 %v212
  %v1177 = vunpack.c.l.b16 %v213
  %v1178 = vunpack.c.h.b16 %v213
  %v1179 = vunpack.c.l.b16 %v214
  %v1180 = vunpack.c.h.b16 %v214
  %v1181 = vunpack.c.l.b16 %v215
  %v1182 = vunpack.c.h.b16 %v215
  %v1183 = vunpack.c.l.b16 %v216
  %v1184 = vunpack.c.h.b16 %v216
  %v1185 = vunpack.c.l.b16 %v217
  %v1186 = vunpack.c.h.b16 %v217
  %v1187 = vunpack.c.l.b16 %v218
  %v1188 = vunpack.c.h.b16 %v218
  %v1189 = vunpack.c.l.b16 %v219
  %v1190 = vunpack.c.h.b16 %v219
  %v1191 = vunpack.c.l.b16 %v220
  %v1192 = vunpack.c.h.b16 %v220
  %v1193 = vunpack.c.l.b16 %v221
  %v1194 = vunpack.c.h.b16 %v221
  %v1195 = vunpack.c.l.b16 %v222
  %v1196 = vunpack.c.h.b16 %v222
  %v1197 = vunpack.c.l.b16 %v223
  %v1198 = vunpack.c.h.b16 %v223
  %v1199 = vunpack.c.l.b16 %v224
  %v1200 = vunpack.c.h.b16 %v224
  %v1201 = vunpack.c.l.b16 %v225
  %v1202 = vunpack.c.h.b16 %v225
  %v1203 = vunpack.c.l.b16 %v226
  %v1204 = vunpack.c.h.b16 %v226
  %v1205 = vunpack.c.l.b16 %v227
  %v1206 = vunpack.c.h.b16 %v227
  %v1207 = vunpack.c.l.b16 %v228
  %v1208 = vunpack.c.h.b16 %v228
  %v1209 = vunpack.c.l.b16 %v229
  %v1210 = vunpack.c.h.b16 %v229
  %v1211 = vunpack.c.l.b16 %v230
  %v1212 = vunpack.c.h.b16 %v230
  %v1213 = vunpack.c.l.b16 %v231
  %v1214 = vunpack.c.h.b16 %v231
  %v1215 = vunpack.c.l.b16 %v232
  %v1216 = vunpack.c.h.b16 %v232
  %v1217 = vunpack.c.l.b16 %v233
  %v1218 = vunpack.c.h.b16 %v233
  %v1219 = vunpack.c.l.b16 %v234
  %v1220 = vunpack.c.h.b16 %v234
  %v1221 = vunpack.c.l.b16 %v235
  %v1222 = vunpack.c.h.b16 %v235
  %v1223 = vunpack.c.l.b16 %v236
  %v1224 = vunpack.c.h.b16 %v236
  %v1225 = vunpack.c.l.b16 %v237
  %v1226 = vunpack.c.h.b16 %v237
  %v1227 = vunpack.c.l.b16 %v238
  %v1228 = vunpack.c.h.b16 %v238
  %v1229 = vunpack.c.l.b16 %v239
  %v1230 = vunpack.c.h.b16 %v239
  %v1231 = vunpack.c.l.b16 %v240
  %v1232 = vunpack.c.h.b16 %v240
  %v1233 = vunpack.c.l.b16 %v241
  %v1234 = vunpack.c.h.b16 %v241
  %v1235 = vunpack.c.l.b16 %v242
  %v1236 = vunpack.c.h.b16 %v242
  %v1237 = vunpack.c.l.b16 %v243
  %v1238 = vunpack.c.h.b16 %v243
  %v1239 = vunpack.c.l.b16 %v244
  %v1240 = vunpack.c.h.b16 %v244
  %v1241 = vunpack.c.l.b16 %v245
  %v1242 = vunpack.c.h.b16 %v245
  %v1243 = vunpack.c.l.b16 %v246
  %v1244 = vunpack.c.h.b16 %v246
  %v1245 = vunpack.c.l.b16 %v247
  %v1246 = vunpack.c.h.b16 %v247
  %v1247 = vunpack.c.l.b16 %v248
  %v1248 = vunpack.c.h.b16 %v248
  %v1249 = vunpack.c.l.b16 %v249
  %v1250 = vunpack.c.h.b16 %v249
  %v1251 = vunpack.c.l.b16 %v250
  %v1252 = vunpack.c.h.b16 %v250
  %v1253 = vunpack.c.l.b16 %v251
  %v1254 = vunpack.c.h.b16 %v251
  %v1255 = vunpack.c.l.b16 %v252
  %v1256 = vunpack.c.h.b16 %v252
  %v1257 = vunpack.c.l.b16 %v253
  %v1258 = vunpack.c.h.b16 %v253
  %v1259 = vunpack.c.l.b16 %v254
  %v1260 = vunpack.c.h.b16 %v254
  %v1261 = vunpack.c.l.b16 %v255
  %v1262 = vunpack.c.h.b16 %v255
  %v1263 = vunpack.c.l.b16 %v256
  %v1264 = vunpack.c.h.b16 %v256
  %v1265 = vunpack.c.l.b16 %v257
  %v1266 = vunpack.c.h.b16 %v257
  %v1267 = vunpack.c.l.b16 %v258
  %v1268 = vunpack.c.h.b16 %v258
  %v1269 = vunpack.c.l.b16 %v259
  %v1270 = vunpack.c.h.b16 %v259
  %v1271 = vunpack.c.l.b16 %v260
  %v1272 = vunpack.c.h.b16 %v260
  %v1273 = vunpack.c.l.b16 %v261
  %v1274 = vunpack.c.h.b16 %v261
  %v1275 = vunpack.c.l.b16 %v262
  %v1276 = vunpack.c.h.b16 %v262
  %v1277 = vunpack.c.l.b16 %v263
  %v1278 = vunpack.c.h.b16 %v263
  %v1279 = vunpack.c.l.b16 %v264
  %v1280 = vunpack.c.h.b16 %v264
  %v1281 = vunpack.c.l.b16 %v265
  %v1282 = vunpack.c.h.b16 %v265
  %v1283 = vunpack.c.l.b16 %v266
  %v1284 = vunpack.c.h.b16 %v266
  %v1285 = vunpack.c.l.b16 %v267
  %v1286 = vunpack.c.h.b16 %v267
  %v1287 = vunpack.c.l.b16 %v268
  %v1288 = vunpack.c.h.b16 %v268
  %v1289 = vunpack.c.l.b16 %v269
  %v1290 = vunpack.c.h.b16 %v269
  %v1291 = vunpack.c.l.b16 %v270
  %v1292 = vunpack.c.h.b16 %v270
  %v1293 = vunpack.c.l.b16 %v271
  %v1294 = vunpack.c.h.b16 %v271
  %v1295 = vunpack.c.l.b16 %v272
  %v1296 = vunpack.c.h.b16 %v272
  %v1297 = vunpack.c.l.b16 %v273
  %v1298 = vunpack.c.h.b16 %v273
  %v1299 = vunpack.c.l.b16 %v274
  %v1300 = vunpack.c.h.b16 %v274
  %v1301 = vunpack.c.l.b16 %v275
  %v1302 = vunpack.c.h.b16 %v275
  %v1303 = vunpack.c.l.b16 %v276
  %v1304 = vunpack.c.h.b16 %v276
  %v1305 = vunpack.c.l.b16 %v277
  %v1306 = vunpack.c.h.b16 %v277
  %v1307 = vunpack.c.l.b16 %v278
  %v1308 = vunpack.c.h.b16 %v278
  %v1309 = vunpack.c.l.b16 %v279
  %v1310 = vunpack.c.h.b16 %v279
  %v1311 = vunpack.c.l.b16 %v280
  %v1312 = vunpack.c.h.b16 %v280
  %v1313 = vunpack.c.l.b16 %v281
  %v1314 = vunpack.c.h.b16 %v281
  %v1315 = vunpack.c.l.b16 %v282
  %v1316 = vunpack.c.h.b16 %v282
  %v1317 = vunpack.c.l.b16 %v283
  %v1318 = vunpack.c.h.b16 %v283
  %v1319 = vunpack.c.l.b16 %v284
  %v1320 = vunpack.c.h.b16 %v284
  %v1321 = vunpack.c.l.b16 %v285
  %v1322 = vunpack.c.h.b16 %v285
  %v1323 = vunpack.c.l.b16 %v286
  %v1324 = vunpack.c.h.b16 %v286
  %v1325 = vunpack.c.l.b16 %v287
  %v1326 = vunpack.c.h.b16 %v287
  %v1327 = vunpack.c.l.b16 %v288
  %v1328 = vunpack.c.h.b16 %v288
  %v1329 = vunpack.c.l.b16 %v289
  %v1330 = vunpack.c.h.b16 %v289
  %v1331 = vunpack.c.l.b16 %v290
  %v1332 = vunpack.c.h.b16 %v290
  %v1333 = vunpack.c.l.b16 %v291
  %v1334 = vunpack.c.h.b16 %v291
  %v1335 = vunpack.c.l.b16 %v292
  %v1336 = vunpack.c.h.b16 %v292
  %v1337 = vunpack.c.l.b16 %v293
  %v1338 = vunpack.c.h.b16 %v293
  %v1339 = vunpack.c.l.b16 %v294
  %v1340 = vunpack.c.h.b16 %v294
  %v1341 = vunpack.c.l.b16 %v295
  %v1342 = vunpack.c.h.b16 %v295
  %v1343 = vunpack.c.l.b16 %v296
  %v1344 = vunpack.c.h.b16 %v296
  %v1345 = vunpack.c.l.b16 %v297
  %v1346 = vunpack.c.h.b16 %v297
  %v1347 = vunpack.c.l.b16 %v298
  %v1348 = vunpack.c.h.b16 %v298
  %v1349 = vunpack.c.l.b16 %v299
  %v1350 = vunpack.c.h.b16 %v299
  %v1351 = vunpack.c.l.b16 %v300
  %v1352 = vunpack.c.h.b16 %v300
  %v1353 = vunpack.c.l.b16 %v301
  %v1354 = vunpack.c.h.b16 %v301
  %v1355 = vunpack.c.l.b16 %v302
  %v1356 = vunpack.c.h.b16 %v302
  %v1357 = vunpack.c.l.b16 %v303
  %v1358 = vunpack.c.h.b16 %v303
  %v1359 = vunpack.c.l.b16 %v304
  %v1360 = vunpack.c.h.b16 %v304
  %v1361 = vunpack.c.l.b16 %v305
  %v1362 = vunpack.c.h.b16 %v305
  %v1363 = vunpack.c.l.b16 %v306
  %v1364 = vunpack.c.h.b16 %v306
  %v1365 = vunpack.c.l.b16 %v307
  %v1366 = vunpack.c.h.b16 %v307
  %v1367 = vunpack.c.l.b16 %v308
  %v1368 = vunpack.c.h.b16 %v308
  %v1369 = vunpack.c.l.b16 %v309
  %v1370 = vunpack.c.h.b16 %v309
  %v1371 = vunpack.c.l.b16 %v310
  %v1372 = vunpack.c.h.b16 %v310
  %v1373 = vunpack.c.l.b16 %v311
  %v1374 = vunpack.c.h.b16 %v311
  %v1375 = vunpack.c.l.b16 %v312
  %v1376 = vunpack.c.h.b16 %v312
  %v1377 = vunpack.c.l.b16 %v313
  %v1378 = vunpack.c.h.b16 %v313
  %v1379 = vunpack.c.l.b16 %v314
  %v1380 = vunpack.c.h.b16 %v314
  %v1381 = vunpack.c.l.b16 %v315
  %v1382 = vunpack.c.h.b16 %v315
  %v1383 = vunpack.c.l.b16 %v316
  %v1384 = vunpack.c.h.b16 %v316
  %v1385 = vunpack.c.l.b16 %v317
  %v1386 = vunpack.c.h.b16 %v317
  %v1387 = vunpack.c.l.b16 %v318
  %v1388 = vunpack.c.h.b16 %v318
  %v1389 = vunpack.c.l.b16 %v319
  %v1390 = vunpack.c.h.b16 %v319
  %v1391 = vunpack.c.l.b16 %v320
  %v1392 = vunpack.c.h.b16 %v320
  %v1393 = vunpack.c.l.b16 %v321
  %v1394 = vunpack.c.h.b16 %v321
  %v1395 = vunpack.c.l.b16 %v322
  %v1396 = vunpack.c.h.b16 %v322
  %v1397 = vunpack.c.l.b16 %v323
  %v1398 = vunpack.c.h.b16 %v323
  %v1399 = vunpack.c.l.b16 %v324
  %v1400 = vunpack.c.h.b16 %v324
  %v1401 = vunpack.c.l.b16 %v325
  %v1402 = vunpack.c.h.b16 %v325
  %v1403 = vunpack.c.l.b16 %v326
  %v1404 = vunpack.c.h.b16 %v326
  %v1405 = vunpack.c.l.b16 %v327
  %v1406 = vunpack.c.h.b16 %v327
  %v1407 = vunpack.c.l.b16 %v328
  %v1408 = vunpack.c.h.b16 %v328
  %v1409 = vunpack.c.l.b16 %v329
  %v1410 = vunpack.c.h.b16 %v329
  %v1411 = vunpack.c.l.b16 %v330
  %v1412 = vunpack.c.h.b16 %v330
  %v1413 = vunpack.c.l.b16 %v331
  %v1414 = vunpack.c.h.b16 %v331
  %v1415 = vunpack.c.l.b16 %v332
  %v1416 = vunpack.c.h.b16 %v332
  %v1417 = vunpack.c.l.b16 %v333
  %v1418 = vunpack.c.h.b16 %v333
  %v1419 = vunpack.c.l.b16 %v334
  %v1420 = vunpack.c.h.b16 %v334
  %v1421 = vunpack.c.l.b16 %v335
  %v1422 = vunpack.c.h.b16 %v335
  %v1423 = vunpack.c.l.b16 %v336
  %v1424 = vunpack.c.h.b16 %v336
  %v1425 = vpack.c.b16 %v917, %v913
  %v1426 = vpack.c.b16 %v918, %v914
  %v1427 = vpack.c.b16 %v919, %v915
  %v1428 = vpack.c.b16 %v920, %v916
  %v1429 = vpack.c.b16 %v925, %v921
  %v1430 = vpack.c.b16 %v926, %v922
  %v1431 = vpack.c.b16 %v927, %v923
  %v1432 = vpack.c.b16 %v928, %v924
  %v1433 = vpack.c.b16 %v933, %v929
  %v1434 = vpack.c.b16 %v934, %v930
  %v1435 = vpack.c.b16 %v935, %v931
  %v1436 = vpack.c.b16 %v936, %v932
  %v1437 = vpack.c.b16 %v941, %v937
  %v1438 = vpack.c.b16 %v942, %v938
  %v1439 = vpack.c.b16 %v943, %v939
  %v1440 = vpack.c.b16 %v944, %v940
  %v1441 = vpack.c.b16 %v949, %v945
  %v1442 = vpack.c.b16 %v950, %v946
  %v1443 = vpack.c.b16 %v951, %v947
  %v1444 = vpack.c.b16 %v952, %v948
  %v1445 = vpack.c.b16 %v957, %v953
  %v1446 = vpack.c.b16 %v958, %v954
  %v1447 = vpack.c.b16 %v959, %v955
  %v1448 = vpack.c.b16 %v960, %v956
  %v1449 = vpack.c.b16 %v965, %v961
  %v1450 = vpack.c.b16 %v966, %v962
  %v1451 = vpack.c.b16 %v967, %v963
  %v1452 = vpack.c.b16 %v968, %v964
  %v1453 = vpack.c.b16 %v973, %v969
  %v1454 = vpack.c.b16 %v974, %v970
  %v1455 = vpack.c.b16 %v975, %v971
  %v1456 = vpack.c.b16 %v976, %v972
  %v1457 = vpack.c.b16 %v981, %v977
  %v1458 = vpack.c.b16 %v982, %v978
  %v1459 = vpack.c.b16 %v983, %v979
  %v1460 = vpack.c.b16 %v984, %v980
  %v1461 = vpack.c.b16 %v989, %v985
  %v1462 = vpack.c.b16 %v990, %v986
  %v1463 = vpack.c.b16 %v991, %v987
  %v1464 = vpack.c.b16 %v992, %v988
  %v1465 = vpack.c.b16 %v997, %v993
  %v1466 = vpack.c.b16 %v998, %v994
  %v1467 = vpack.c.b16 %v999, %v995
  %v1468 = vpack.c.b16 %v1000, %v996
  %v1469 = vpack.c.b16 %v1005, %v1001
  %v1470 = vpack.c.b16 %v1006, %v1002
  %v1471 = vpack.c.b16 %v1007, %v1003
  %v1472 = vpack.c.b16 %v1008, %v1004
  %v1473 = vpack.c.b16 %v1013, %v1009
  %v1474 = vpack.c.b16 %v1014, %v1010
  %v1475 = vpack.c.b16 %v1015, %v1011
  %v1476 = vpack.c.b16 %v1016, %v1012
  %v1477 = vpack.c.b16 %v1021, %v1017
  %v1478 = vpack.c.b16 %v1022, %v1018
  %v1479 = vpack.c.b16 %v1023, %v1019
  %v1480 = vpack.c.b16 %v1024, %v1020
  %v1481 = vpack.c.b16 %v1029, %v1025
  %v1482 = vpack.c.b16 %v1030, %v1026
  %v1483 = vpack.c.b16 %v1031, %v1027
  %v1484 = vpack.c.b16 %v1032, %v1028
  %v1485 = vpack.c.b16 %v1037, %v1033
  %v1486 = vpack.c.b16 %v1038, %v1034
  %v1487 = vpack.c.b16 %v1039, %v1035
  %v1488 = vpack.c.b16 %v1040, %v1036
  %v1489 = vpack.c.b16 %v1045, %v1041
  %v1490 = vpack.c.b16 %v1046, %v1042
  %v1491 = vpack.c.b16 %v1047, %v1043
  %v1492 = vpack.c.b16 %v1048, %v1044
  %v1493 = vpack.c.b16 %v1053, %v1049
  %v1494 = vpack.c.b16 %v1054, %v1050
  %v1495 = vpack.c.b16 %v1055, %v1051
  %v1496 = vpack.c.b16 %v1056, %v1052
  %v1497 = vpack.c.b16 %v1061, %v1057
  %v1498 = vpack.c.b16 %v1062, %v1058
  %v1499 = vpack.c.b16 %v1063, %v1059
  %v1500 = vpack.c.b16 %v1064, %v1060
  %v1501 = vpack.c.b16 %v1069, %v1065
  %v1502 = vpack.c.b16 %v1070, %v1066
  %v1503 = vpack.c.b16 %v1071, %v1067
  %v1504 = vpack.c.b16 %v1072, %v1068
  %v1505 = vpack.c.b16 %v1077, %v1073
  %v1506 = vpack.c.b16 %v1078, %v1074
  %v1507 = vpack.c.b16 %v1079, %v1075
  %v1508 = vpack.c.b16 %v1080, %v1076
  %v1509 = vpack.c.b16 %v1085, %v1081
  %v1510 = vpack.c.b16 %v1086, %v1082
  %v1511 = vpack.c.b16 %v1087, %v1083
  %v1512 = vpack.c.b16 %v1088, %v1084
  %v1513 = vpack.c.b16 %v1093, %v1089
  %v1514 = vpack.c.b16 %v1094, %v1090
  %v1515 = vpack.c.b16 %v1095, %v1091
  %v1516 = vpack.c.b16 %v1096, %v1092
  %v1517 = vpack.c.b16 %v1101, %v1097
  %v1518 = vpack.c.b16 %v1102, %v1098
  %v1519 = vpack.c.b16 %v1103, %v1099
  %v1520 = vpack.c.b16 %v1104, %v1100
  %v1521 = vpack.c.b16 %v1109, %v1105
  %v1522 = vpack.c.b16 %v1110, %v1106
  %v1523 = vpack.c.b16 %v1111, %v1107
  %v1524 = vpack.c.b16 %v1112, %v1108
  %v1525 = vpack.c.b16 %v1117, %v1113
  %v1526 = vpack.c.b16 %v1118, %v1114
  %v1527 = vpack.c.b16 %v1119, %v1115
  %v1528 = vpack.c.b16 %v1120, %v1116
  %v1529 = vpack.c.b16 %v1125, %v1121
  %v1530 = vpack.c.b16 %v1126, %v1122
  %v1531 = vpack.c.b16 %v1127, %v1123
  %v1532 = vpack.c.b16 %v1128, %v1124
  %v1533 = vpack.c.b16 %v1133, %v1129
  %v1534 = vpack.c.b16 %v1134, %v1130
  %v1535 = vpack.c.b16 %v1135, %v1131
  %v1536 = vpack.c.b16 %v1136, %v1132
  %v1537 = vpack.c.b16 %v1141, %v1137
  %v1538 = vpack.c.b16 %v1142, %v1138
  %v1539 = vpack.c.b16 %v1143, %v1139
  %v1540 = vpack.c.b16 %v1144, %v1140
  %v1541 = vpack.c.b16 %v1149, %v1145
  %v1542 = vpack.c.b16 %v1150, %v1146
  %v1543 = vpack.c.b16 %v1151, %v1147
  %v1544 = vpack.c.b16 %v1152, %v1148
  %v1545 = vpack.c.b16 %v1157, %v1153
  %v1546 = vpack.c.b16 %v1158, %v1154
  %v1547 = vpack.c.b16 %v1159, %v1155
  %v1548 = vpack.c.b16 %v1160, %v1156
  %v1549 = vpack.c.b16 %v1165, %v1161
  %v1550 = vpack.c.b16 %v1166, %v1162
  %v1551 = vpack.c.b16 %v1167, %v1163
  %v1552 = vpack.c.b16 %v1168, %v1164
  %v1553 = vpack.c.b16 %v1173, %v1169
  %v1554 = vpack.c.b16 %v1174, %v1170
  %v1555 = vpack.c.b16 %v1175, %v1171
  %v1556 = vpack.c.b16 %v1176, %v1172
  %v1557 = vpack.c.b16 %v1181, %v1177
  %v1558 = vpack.c.b16 %v1182, %v1178
  %v1559 = vpack.c.b16 %v1183, %v1179
  %v1560 = vpack.c.b16 %v1184, %v1180
  %v1561 = vpack.c.b16 %v1189, %v1185
  %v1562 = vpack.c.b16 %v1190, %v1186
  %v1563 = vpack.c.b16 %v1191, %v1187
  %v1564 = vpack.c.b16 %v1192, %v1188
  %v1565 = vpack.c.b16 %v1197, %v1193
  %v1566 = vpack.c.b16 %v1198, %v1194
  %v1567 = vpack.c.b16 %v1199, %v1195
  %v1568 = vpack.c.b16 %v1200, %v1196
  %v1569 = vpack.c.b16 %v1205, %v1201
  %v1570 = vpack.c.b16 %v1206, %v1202
  %v1571 = vpack.c.b16 %v1207, %v1203
  %v1572 = vpack.c.b16 %v1208, %v1204
  %v1573 = vpack.c.b16 %v1213, %v1209
  %v1574 = vpack.c.b16 %v1214, %v1210
  %v1575 = vpack.c.b16 %v1215, %v1211
  %v1576 = vpack.c.b16 %v1216, %v1212
  %v1577 = vpack.c.b16 %v1221, %v1217
  %v1578 = vpack.c.b16 %v1222, %v1218
  %v1579 = vpack.c.b16 %v1223, %v1219
  %v1580 = vpack.c.b16 %v1224, %v1220
  %v1581 = vpack.c.b16 %v1229, %v1225
  %v1582 = vpack.c.b16 %v1230, %v1226
  %v1583 = vpack.c.b16 %v1231, %v1227
  %v1584 = vpack.c.b16 %v1232, %v1228
  %v1585 = vpack.c.b16 %v1237, %v1233
  %v1586 = vpack.c.b16 %v1238, %v1234
  %v1587 = vpack.c.b16 %v1239, %v1235
  %v1588 = vpack.c.b16 %v1240, %v1236
  %v1589 = vpack.c.b16 %v1245, %v1241
  %v1590 = vpack.c.b16 %v1246, %v1242
  %v1591 = vpack.c.b16 %v1247, %v1243
  %v1592 = vpack.c.b16 %v1248, %v1244
  %v1593 = vpack.c.b16 %v1253, %v1249
  %v1594 = vpack.c.b16 %v1254, %v1250
  %v1595 = vpack.c.b16 %v1255, %v1251
  %v1596 = vpack.c.b16 %v1256, %v1252
  %v1597 = vpack.c.b16 %v1261, %v1257
  %v1598 = vpack.c.b16 %v1262, %v1258
  %v1599 = vpack.c.b16 %v1263, %v1259
  %v1600 = vpack.c.b16 %v1264, %v1260
  %v1601 = vpack.c.b16 %v1269, %v1265
  %v1602 = vpack.c.b16 %v1270, %v1266
  %v1603 = vpack.c.b16 %v1271, %v1267
  %v1604 = vpack.c.b16 %v1272, %v1268
  %v1605 = vpack.c.b16 %v1277, %v1273
  %v1606 = vpack.c.b16 %v1278, %v1274
  %v1607 = vpack.c.b16 %v1279, %v1275
  %v1608 = vpack.c.b16 %v1280, %v1276
  %v1609 = vpack.c.b16 %v1285, %v1281
  %v1610 = vpack.c.b16 %v1286, %v1282
  %v1611 = vpack.c.b16 %v1287, %v1283
  %v1612 = vpack.c.b16 %v1288, %v1284
  %v1613 = vpack.c.b16 %v1293, %v1289
  %v1614 = vpack.c.b16 %v1294, %v1290
  %v1615 = vpack.c.b16 %v1295, %v1291
  %v1616 = vpack.c.b16 %v1296, %v1292
  %v1617 = vpack.c.b16 %v1301, %v1297
  %v1618 = vpack.c.b16 %v1302, %v1298
  %v1619 = vpack.c.b16 %v1303, %v1299
  %v1620 = vpack.c.b16 %v1304, %v1300
  %v1621 = vpack.c.b16 %v1309, %v1305
  %v1622 = vpack.c.b16 %v1310, %v1306
  %v1623 = vpack.c.b16 %v1311, %v1307
  %v1624 = vpack.c.b16 %v1312, %v1308
  %v1625 = vpack.c.b16 %v1317, %v1313
  %v1626 = vpack.c.b16 %v1318, %v1314
  %v1627 = vpack.c.b16 %v1319, %v1315
  %v1628 = vpack.c.b16 %v1320, %v1316
  %v1629 = vpack.c.b16 %v1325, %v1321
  %v1630 = vpack.c.b16 %v1326, %v1322
  %v1631 = vpack.c.b16 %v1327, %v1323
  %v1632 = vpack.c.b16 %v1328, %v1324
  %v1633 = vpack.c.b16 %v1333, %v1329
  %v1634 = vpack.c.b16 %v1334, %v1330
  %v1635 = vpack.c.b16 %v1335, %v1331
  %v1636 = vpack.c.b16 %v1336, %v1332
  %v1637 = vpack.c.b16 %v1341, %v1337
  %v1638 = vpack.c.b16 %v1342, %v1338
  %v1639 = vpack.c.b16 %v1343, %v1339
  %v1640 = vpack.c.b16 %v1344, %v1340
  %v1641 = vpack.c.b16 %v1349, %v1345
  %v1642 = vpack.c.b16 %v1350, %v1346
  %v1643 = vpack.c.b16 %v1351, %v1347
  %v1644 = vpack.c.b16 %v1352, %v1348
  %v1645 = vpack.c.b16 %v1357, %v1353
  %v1646 = vpack.c.b16 %v1358, %v1354
  %v1647 = vpack.c.b16 %v1359, %v1355
  %v1648 = vpack.c.b16 %v1360, %v1356
  %v1649 = vpack.c.b16 %v1365, %v1361
  %v1650 = vpack.c.b16 %v1366, %v1362
  %v1651 = vpack.c.b16 %v1367, %v1363
  %v1652 = vpack.c.b16 %v1368, %v1364
  %v1653 = vpack.c.b16 %v1373, %v1369
  %v1654 = vpack.c.b16 %v1374, %v1370
  %v1655 = vpack.c.b16 %v1375, %v1371
  %v1656 = vpack.c.b16 %v1376, %v1372
  %v1657 = vpack.c.b16 %v1381, %v1377
  %v1658 = vpack.c.b16 %v1382, %v1378
  %v1659 = vpack.c.b16 %v1383, %v1379
  %v1660 = vpack.c.b16 %v1384, %v1380
  %v1661 = vpack.c.b16 %v1389, %v1385
  %v1662 = vpack.c.b16 %v1390, %v1386
  %v1663 = vpack.c.b16 %v1391, %v1387
  %v1664 = vpack.c.b16 %v1392, %v1388
  %v1665 = vpack.c.b16 %v1397, %v1393
  %v1666 = vpack.c.b16 %v1398, %v1394
  %v1667 = vpack.c.b16 %v1399, %v1395
  %v1668 = vpack.c.b16 %v1400, %v1396
  %v1669 = vpack.c.b16 %v1405, %v1401
  %v1670 = vpack.c.b16 %v1406, %v1402
  %v1671 = vpack.c.b16 %v1407, %v1403
  %v1672 = vpack.c.b16 %v1408, %v1404
  %v1673 = vpack.c.b16 %v1413, %v1409
  %v1674 = vpack.c.b16 %v1414, %v1410
  %v1675 = vpack.c.b16 %v1415, %v1411
  %v1676 = vpack.c.b16 %v1416, %v1412
  %v1677 = vpack.c.b16 %v1421, %v1417
  %v1678 = vpack.c.b16 %v1422, %v1418
  %v1679 = vpack.c.b16 %v1423, %v1419
  %v1680 = vpack.c.b16 %v1424, %v1420
  %1937 = vmatpush.bf16.msra.mxu0 %v1453
  %1938 = vmatpush.bf16.msra.mxu0 %v1449
  %1939 = vmatpush.bf16.msra.mxu0 %v1445
  %1940 = vmatpush.bf16.msra.mxu0 %v1441
  %1941 = vmatpush.bf16.msra.mxu0 %v1437
  %1942 = vmatpush.bf16.msra.mxu0 %v1433
  %1943 = vmatpush.bf16.msra.mxu0 %v1429
  %1944 = vmatpush.bf16.msra.mxu0 %v1425
  %1945 = vmatmul.bf16.gmra.mxu0 %v529
  %v1946 = vpop.f32.mrf.mxu0
  %v1947 = vadd.f32 0.0, %v1946
  %v1948 = vpop.f32.mrf.mxu0
  %v1949 = vadd.f32 0.0, %v1948
  %1950 = vmatmul.bf16.gmra.mxu0 %v537
  %v1951 = vpop.f32.mrf.mxu0
  %v1952 = vadd.f32 0.0, %v1951
  %v1953 = vpop.f32.mrf.mxu0
  %v1954 = vadd.f32 0.0, %v1953
  %1955 = vmatmul.bf16.gmra.mxu0 %v545
  %v1956 = vpop.f32.mrf.mxu0
  %v1957 = vadd.f32 0.0, %v1956
  %v1958 = vpop.f32.mrf.mxu0
  %v1959 = vadd.f32 0.0, %v1958
  %1960 = vmatmul.bf16.gmra.mxu0 %v553
  %v1961 = vpop.f32.mrf.mxu0
  %v1962 = vadd.f32 0.0, %v1961
  %v1963 = vpop.f32.mrf.mxu0
  %v1964 = vadd.f32 0.0, %v1963
  %1965 = vmatmul.bf16.gmra.mxu0 %v561
  %v1966 = vpop.f32.mrf.mxu0
  %v1967 = vadd.f32 0.0, %v1966
  %v1968 = vpop.f32.mrf.mxu0
  %v1969 = vadd.f32 0.0, %v1968
  %1970 = vmatmul.bf16.gmra.mxu0 %v569
  %v1971 = vpop.f32.mrf.mxu0
  %v1972 = vadd.f32 0.0, %v1971
  %v1973 = vpop.f32.mrf.mxu0
  %v1974 = vadd.f32 0.0, %v1973
  %1975 = vmatmul.bf16.gmra.mxu0 %v577
  %v1976 = vpop.f32.mrf.mxu0
  %v1977 = vadd.f32 0.0, %v1976
  %v1978 = vpop.f32.mrf.mxu0
  %v1979 = vadd.f32 0.0, %v1978
  %1980 = vmatmul.bf16.gmra.mxu0 %v585
  %v1981 = vpop.f32.mrf.mxu0
  %v1982 = vadd.f32 0.0, %v1981
  %v1983 = vpop.f32.mrf.mxu0
  %v1984 = vadd.f32 0.0, %v1983
  %1985 = vdwg.mxu0
  %1986 = vmatpush.bf16.msra.mxu0 %v1485
  %1987 = vmatpush.bf16.msra.mxu0 %v1481
  %1988 = vmatpush.bf16.msra.mxu0 %v1477
  %1989 = vmatpush.bf16.msra.mxu0 %v1473
  %1990 = vmatpush.bf16.msra.mxu0 %v1469
  %1991 = vmatpush.bf16.msra.mxu0 %v1465
  %1992 = vmatpush.bf16.msra.mxu0 %v1461
  %1993 = vmatpush.bf16.msra.mxu0 %v1457
  %1994 = vmatmul.bf16.gmra.mxu0 %v530
  %v1995 = vpop.f32.mrf.mxu0
  %v1996 = vadd.f32 %v1947, %v1995
  %v1997 = vpop.f32.mrf.mxu0
  %v1998 = vadd.f32 %v1949, %v1997
  %1999 = vmatmul.bf16.gmra.mxu0 %v538
  %v2000 = vpop.f32.mrf.mxu0
  %v2001 = vadd.f32 %v1952, %v2000
  %v2002 = vpop.f32.mrf.mxu0
  %v2003 = vadd.f32 %v1954, %v2002
  %2004 = vmatmul.bf16.gmra.mxu0 %v546
  %v2005 = vpop.f32.mrf.mxu0
  %v2006 = vadd.f32 %v1957, %v2005
  %v2007 = vpop.f32.mrf.mxu0
  %v2008 = vadd.f32 %v1959, %v2007
  %2009 = vmatmul.bf16.gmra.mxu0 %v554
  %v2010 = vpop.f32.mrf.mxu0
  %v2011 = vadd.f32 %v1962, %v2010
  %v2012 = vpop.f32.mrf.mxu0
  %v2013 = vadd.f32 %v1964, %v2012
  %2014 = vmatmul.bf16.gmra.mxu0 %v562
  %v2015 = vpop.f32.mrf.mxu0
  %v2016 = vadd.f32 %v1967, %v2015
  %v2017 = vpop.f32.mrf.mxu0
  %v2018 = vadd.f32 %v1969, %v2017
  %2019 = vmatmul.bf16.gmra.mxu0 %v570
  %v2020 = vpop.f32.mrf.mxu0
  %v2021 = vadd.f32 %v1972, %v2020
  %v2022 = vpop.f32.mrf.mxu0
  %v2023 = vadd.f32 %v1974, %v2022
  %2024 = vmatmul.bf16.gmra.mxu0 %v578
  %v2025 = vpop.f32.mrf.mxu0
  %v2026 = vadd.f32 %v1977, %v2025
  %v2027 = vpop.f32.mrf.mxu0
  %v2028 = vadd.f32 %v1979, %v2027
  %2029 = vmatmul.bf16.gmra.mxu0 %v586
  %v2030 = vpop.f32.mrf.mxu0
  %v2031 = vadd.f32 %v1982, %v2030
  %v2032 = vpop.f32.mrf.mxu0
  %v2033 = vadd.f32 %v1984, %v2032
  %2034 = vdwg.mxu0
  %2035 = vmatpush.bf16.msra.mxu0 %v1517
  %2036 = vmatpush.bf16.msra.mxu0 %v1513
  %2037 = vmatpush.bf16.msra.mxu0 %v1509
  %2038 = vmatpush.bf16.msra.mxu0 %v1505
  %2039 = vmatpush.bf16.msra.mxu0 %v1501
  %2040 = vmatpush.bf16.msra.mxu0 %v1497
  %2041 = vmatpush.bf16.msra.mxu0 %v1493
  %2042 = vmatpush.bf16.msra.mxu0 %v1489
  %2043 = vmatmul.bf16.gmra.mxu0 %v531
  %v2044 = vpop.f32.mrf.mxu0
  %v2045 = vadd.f32 %v1996, %v2044
  %v2046 = vpop.f32.mrf.mxu0
  %v2047 = vadd.f32 %v1998, %v2046
  %2048 = vmatmul.bf16.gmra.mxu0 %v539
  %v2049 = vpop.f32.mrf.mxu0
  %v2050 = vadd.f32 %v2001, %v2049
  %v2051 = vpop.f32.mrf.mxu0
  %v2052 = vadd.f32 %v2003, %v2051
  %2053 = vmatmul.bf16.gmra.mxu0 %v547
  %v2054 = vpop.f32.mrf.mxu0
  %v2055 = vadd.f32 %v2006, %v2054
  %v2056 = vpop.f32.mrf.mxu0
  %v2057 = vadd.f32 %v2008, %v2056
  %2058 = vmatmul.bf16.gmra.mxu0 %v555
  %v2059 = vpop.f32.mrf.mxu0
  %v2060 = vadd.f32 %v2011, %v2059
  %v2061 = vpop.f32.mrf.mxu0
  %v2062 = vadd.f32 %v2013, %v2061
  %2063 = vmatmul.bf16.gmra.mxu0 %v563
  %v2064 = vpop.f32.mrf.mxu0
  %v2065 = vadd.f32 %v2016, %v2064
  %v2066 = vpop.f32.mrf.mxu0
  %v2067 = vadd.f32 %v2018, %v2066
  %2068 = vmatmul.bf16.gmra.mxu0 %v571
  %v2069 = vpop.f32.mrf.mxu0
  %v2070 = vadd.f32 %v2021, %v2069
  %v2071 = vpop.f32.mrf.mxu0
  %v2072 = vadd.f32 %v2023, %v2071
  %2073 = vmatmul.bf16.gmra.mxu0 %v579
  %v2074 = vpop.f32.mrf.mxu0
  %v2075 = vadd.f32 %v2026, %v2074
  %v2076 = vpop.f32.mrf.mxu0
  %v2077 = vadd.f32 %v2028, %v2076
  %2078 = vmatmul.bf16.gmra.mxu0 %v587
  %v2079 = vpop.f32.mrf.mxu0
  %v2080 = vadd.f32 %v2031, %v2079
  %v2081 = vpop.f32.mrf.mxu0
  %v2082 = vadd.f32 %v2033, %v2081
  %2083 = vdwg.mxu0
  %2084 = vmatpush.bf16.msra.mxu0 %v1549
  %2085 = vmatpush.bf16.msra.mxu0 %v1545
  %2086 = vmatpush.bf16.msra.mxu0 %v1541
  %2087 = vmatpush.bf16.msra.mxu0 %v1537
  %2088 = vmatpush.bf16.msra.mxu0 %v1533
  %2089 = vmatpush.bf16.msra.mxu0 %v1529
  %2090 = vmatpush.bf16.msra.mxu0 %v1525
  %2091 = vmatpush.bf16.msra.mxu0 %v1521
  %2092 = vmatmul.bf16.gmra.mxu0 %v532
  %v2093 = vpop.f32.mrf.mxu0
  %v2094 = vadd.f32 %v2045, %v2093
  %v2095 = vpop.f32.mrf.mxu0
  %v2096 = vadd.f32 %v2047, %v2095
  %2097 = vmatmul.bf16.gmra.mxu0 %v540
  %v2098 = vpop.f32.mrf.mxu0
  %v2099 = vadd.f32 %v2050, %v2098
  %v2100 = vpop.f32.mrf.mxu0
  %v2101 = vadd.f32 %v2052, %v2100
  %2102 = vmatmul.bf16.gmra.mxu0 %v548
  %v2103 = vpop.f32.mrf.mxu0
  %v2104 = vadd.f32 %v2055, %v2103
  %v2105 = vpop.f32.mrf.mxu0
  %v2106 = vadd.f32 %v2057, %v2105
  %2107 = vmatmul.bf16.gmra.mxu0 %v556
  %v2108 = vpop.f32.mrf.mxu0
  %v2109 = vadd.f32 %v2060, %v2108
  %v2110 = vpop.f32.mrf.mxu0
  %v2111 = vadd.f32 %v2062, %v2110
  %2112 = vmatmul.bf16.gmra.mxu0 %v564
  %v2113 = vpop.f32.mrf.mxu0
  %v2114 = vadd.f32 %v2065, %v2113
  %v2115 = vpop.f32.mrf.mxu0
  %v2116 = vadd.f32 %v2067, %v2115
  %2117 = vmatmul.bf16.gmra.mxu0 %v572
  %v2118 = vpop.f32.mrf.mxu0
  %v2119 = vadd.f32 %v2070, %v2118
  %v2120 = vpop.f32.mrf.mxu0
  %v2121 = vadd.f32 %v2072, %v2120
  %2122 = vmatmul.bf16.gmra.mxu0 %v580
  %v2123 = vpop.f32.mrf.mxu0
  %v2124 = vadd.f32 %v2075, %v2123
  %v2125 = vpop.f32.mrf.mxu0
  %v2126 = vadd.f32 %v2077, %v2125
  %2127 = vmatmul.bf16.gmra.mxu0 %v588
  %v2128 = vpop.f32.mrf.mxu0
  %v2129 = vadd.f32 %v2080, %v2128
  %v2130 = vpop.f32.mrf.mxu0
  %v2131 = vadd.f32 %v2082, %v2130
  %2132 = vdwg.mxu0
  %2133 = vmatpush.bf16.msra.mxu0 %v1581
  %2134 = vmatpush.bf16.msra.mxu0 %v1577
  %2135 = vmatpush.bf16.msra.mxu0 %v1573
  %2136 = vmatpush.bf16.msra.mxu0 %v1569
  %2137 = vmatpush.bf16.msra.mxu0 %v1565
  %2138 = vmatpush.bf16.msra.mxu0 %v1561
  %2139 = vmatpush.bf16.msra.mxu0 %v1557
  %2140 = vmatpush.bf16.msra.mxu0 %v1553
  %2141 = vmatmul.bf16.gmra.mxu0 %v533
  %v2142 = vpop.f32.mrf.mxu0
  %v2143 = vadd.f32 %v2094, %v2142
  %v2144 = vpop.f32.mrf.mxu0
  %v2145 = vadd.f32 %v2096, %v2144
  %2146 = vmatmul.bf16.gmra.mxu0 %v541
  %v2147 = vpop.f32.mrf.mxu0
  %v2148 = vadd.f32 %v2099, %v2147
  %v2149 = vpop.f32.mrf.mxu0
  %v2150 = vadd.f32 %v2101, %v2149
  %2151 = vmatmul.bf16.gmra.mxu0 %v549
  %v2152 = vpop.f32.mrf.mxu0
  %v2153 = vadd.f32 %v2104, %v2152
  %v2154 = vpop.f32.mrf.mxu0
  %v2155 = vadd.f32 %v2106, %v2154
  %2156 = vmatmul.bf16.gmra.mxu0 %v557
  %v2157 = vpop.f32.mrf.mxu0
  %v2158 = vadd.f32 %v2109, %v2157
  %v2159 = vpop.f32.mrf.mxu0
  %v2160 = vadd.f32 %v2111, %v2159
  %2161 = vmatmul.bf16.gmra.mxu0 %v565
  %v2162 = vpop.f32.mrf.mxu0
  %v2163 = vadd.f32 %v2114, %v2162
  %v2164 = vpop.f32.mrf.mxu0
  %v2165 = vadd.f32 %v2116, %v2164
  %2166 = vmatmul.bf16.gmra.mxu0 %v573
  %v2167 = vpop.f32.mrf.mxu0
  %v2168 = vadd.f32 %v2119, %v2167
  %v2169 = vpop.f32.mrf.mxu0
  %v2170 = vadd.f32 %v2121, %v2169
  %2171 = vmatmul.bf16.gmra.mxu0 %v581
  %v2172 = vpop.f32.mrf.mxu0
  %v2173 = vadd.f32 %v2124, %v2172
  %v2174 = vpop.f32.mrf.mxu0
  %v2175 = vadd.f32 %v2126, %v2174
  %2176 = vmatmul.bf16.gmra.mxu0 %v589
  %v2177 = vpop.f32.mrf.mxu0
  %v2178 = vadd.f32 %v2129, %v2177
  %v2179 = vpop.f32.mrf.mxu0
  %v2180 = vadd.f32 %v2131, %v2179
  %2181 = vdwg.mxu0
  %2182 = vmatpush.bf16.msra.mxu0 %v1613
  %2183 = vmatpush.bf16.msra.mxu0 %v1609
  %2184 = vmatpush.bf16.msra.mxu0 %v1605
  %2185 = vmatpush.bf16.msra.mxu0 %v1601
  %2186 = vmatpush.bf16.msra.mxu0 %v1597
  %2187 = vmatpush.bf16.msra.mxu0 %v1593
  %2188 = vmatpush.bf16.msra.mxu0 %v1589
  %2189 = vmatpush.bf16.msra.mxu0 %v1585
  %2190 = vmatmul.bf16.gmra.mxu0 %v534
  %v2191 = vpop.f32.mrf.mxu0
  %v2192 = vadd.f32 %v2143, %v2191
  %v2193 = vpop.f32.mrf.mxu0
  %v2194 = vadd.f32 %v2145, %v2193
  %2195 = vmatmul.bf16.gmra.mxu0 %v542
  %v2196 = vpop.f32.mrf.mxu0
  %v2197 = vadd.f32 %v2148, %v2196
  %v2198 = vpop.f32.mrf.mxu0
  %v2199 = vadd.f32 %v2150, %v2198
  %2200 = vmatmul.bf16.gmra.mxu0 %v550
  %v2201 = vpop.f32.mrf.mxu0
  %v2202 = vadd.f32 %v2153, %v2201
  %v2203 = vpop.f32.mrf.mxu0
  %v2204 = vadd.f32 %v2155, %v2203
  %2205 = vmatmul.bf16.gmra.mxu0 %v558
  %v2206 = vpop.f32.mrf.mxu0
  %v2207 = vadd.f32 %v2158, %v2206
  %v2208 = vpop.f32.mrf.mxu0
  %v2209 = vadd.f32 %v2160, %v2208
  %2210 = vmatmul.bf16.gmra.mxu0 %v566
  %v2211 = vpop.f32.mrf.mxu0
  %v2212 = vadd.f32 %v2163, %v2211
  %v2213 = vpop.f32.mrf.mxu0
  %v2214 = vadd.f32 %v2165, %v2213
  %2215 = vmatmul.bf16.gmra.mxu0 %v574
  %v2216 = vpop.f32.mrf.mxu0
  %v2217 = vadd.f32 %v2168, %v2216
  %v2218 = vpop.f32.mrf.mxu0
  %v2219 = vadd.f32 %v2170, %v2218
  %2220 = vmatmul.bf16.gmra.mxu0 %v582
  %v2221 = vpop.f32.mrf.mxu0
  %v2222 = vadd.f32 %v2173, %v2221
  %v2223 = vpop.f32.mrf.mxu0
  %v2224 = vadd.f32 %v2175, %v2223
  %2225 = vmatmul.bf16.gmra.mxu0 %v590
  %v2226 = vpop.f32.mrf.mxu0
  %v2227 = vadd.f32 %v2178, %v2226
  %v2228 = vpop.f32.mrf.mxu0
  %v2229 = vadd.f32 %v2180, %v2228
  %2230 = vdwg.mxu0
  %2231 = vmatpush.bf16.msra.mxu0 %v1645
  %2232 = vmatpush.bf16.msra.mxu0 %v1641
  %2233 = vmatpush.bf16.msra.mxu0 %v1637
  %2234 = vmatpush.bf16.msra.mxu0 %v1633
  %2235 = vmatpush.bf16.msra.mxu0 %v1629
  %2236 = vmatpush.bf16.msra.mxu0 %v1625
  %2237 = vmatpush.bf16.msra.mxu0 %v1621
  %2238 = vmatpush.bf16.msra.mxu0 %v1617
  %2239 = vmatmul.bf16.gmra.mxu0 %v535
  %v2240 = vpop.f32.mrf.mxu0
  %v2241 = vadd.f32 %v2192, %v2240
  %v2242 = vpop.f32.mrf.mxu0
  %v2243 = vadd.f32 %v2194, %v2242
  %2244 = vmatmul.bf16.gmra.mxu0 %v543
  %v2245 = vpop.f32.mrf.mxu0
  %v2246 = vadd.f32 %v2197, %v2245
  %v2247 = vpop.f32.mrf.mxu0
  %v2248 = vadd.f32 %v2199, %v2247
  %2249 = vmatmul.bf16.gmra.mxu0 %v551
  %v2250 = vpop.f32.mrf.mxu0
  %v2251 = vadd.f32 %v2202, %v2250
  %v2252 = vpop.f32.mrf.mxu0
  %v2253 = vadd.f32 %v2204, %v2252
  %2254 = vmatmul.bf16.gmra.mxu0 %v559
  %v2255 = vpop.f32.mrf.mxu0
  %v2256 = vadd.f32 %v2207, %v2255
  %v2257 = vpop.f32.mrf.mxu0
  %v2258 = vadd.f32 %v2209, %v2257
  %2259 = vmatmul.bf16.gmra.mxu0 %v567
  %v2260 = vpop.f32.mrf.mxu0
  %v2261 = vadd.f32 %v2212, %v2260
  %v2262 = vpop.f32.mrf.mxu0
  %v2263 = vadd.f32 %v2214, %v2262
  %2264 = vmatmul.bf16.gmra.mxu0 %v575
  %v2265 = vpop.f32.mrf.mxu0
  %v2266 = vadd.f32 %v2217, %v2265
  %v2267 = vpop.f32.mrf.mxu0
  %v2268 = vadd.f32 %v2219, %v2267
  %2269 = vmatmul.bf16.gmra.mxu0 %v583
  %v2270 = vpop.f32.mrf.mxu0
  %v2271 = vadd.f32 %v2222, %v2270
  %v2272 = vpop.f32.mrf.mxu0
  %v2273 = vadd.f32 %v2224, %v2272
  %2274 = vmatmul.bf16.gmra.mxu0 %v591
  %v2275 = vpop.f32.mrf.mxu0
  %v2276 = vadd.f32 %v2227, %v2275
  %v2277 = vpop.f32.mrf.mxu0
  %v2278 = vadd.f32 %v2229, %v2277
  %2279 = vdwg.mxu0
  %2280 = vmatpush.bf16.msra.mxu0 %v1677
  %2281 = vmatpush.bf16.msra.mxu0 %v1673
  %2282 = vmatpush.bf16.msra.mxu0 %v1669
  %2283 = vmatpush.bf16.msra.mxu0 %v1665
  %2284 = vmatpush.bf16.msra.mxu0 %v1661
  %2285 = vmatpush.bf16.msra.mxu0 %v1657
  %2286 = vmatpush.bf16.msra.mxu0 %v1653
  %2287 = vmatpush.bf16.msra.mxu0 %v1649
  %2288 = vmatmul.bf16.gmra.mxu0 %v536
  %v2289 = vpop.f32.mrf.mxu0
  %v2290 = vadd.f32 %v2241, %v2289
  %v2291 = vpop.f32.mrf.mxu0
  %v2292 = vadd.f32 %v2243, %v2291
  %2293 = vmatmul.bf16.gmra.mxu0 %v544
  %v2294 = vpop.f32.mrf.mxu0
  %v2295 = vadd.f32 %v2246, %v2294
  %v2296 = vpop.f32.mrf.mxu0
  %v2297 = vadd.f32 %v2248, %v2296
  %2298 = vmatmul.bf16.gmra.mxu0 %v552
  %v2299 = vpop.f32.mrf.mxu0
  %v2300 = vadd.f32 %v2251, %v2299
  %v2301 = vpop.f32.mrf.mxu0
  %v2302 = vadd.f32 %v2253, %v2301
  %2303 = vmatmul.bf16.gmra.mxu0 %v560
  %v2304 = vpop.f32.mrf.mxu0
  %v2305 = vadd.f32 %v2256, %v2304
  %v2306 = vpop.f32.mrf.mxu0
  %v2307 = vadd.f32 %v2258, %v2306
  %2308 = vmatmul.bf16.gmra.mxu0 %v568
  %v2309 = vpop.f32.mrf.mxu0
  %v2310 = vadd.f32 %v2261, %v2309
  %v2311 = vpop.f32.mrf.mxu0
  %v2312 = vadd.f32 %v2263, %v2311
  %2313 = vmatmul.bf16.gmra.mxu0 %v576
  %v2314 = vpop.f32.mrf.mxu0
  %v2315 = vadd.f32 %v2266, %v2314
  %v2316 = vpop.f32.mrf.mxu0
  %v2317 = vadd.f32 %v2268, %v2316
  %2318 = vmatmul.bf16.gmra.mxu0 %v584
  %v2319 = vpop.f32.mrf.mxu0
  %v2320 = vadd.f32 %v2271, %v2319
  %v2321 = vpop.f32.mrf.mxu0
  %v2322 = vadd.f32 %v2273, %v2321
  %2323 = vmatmul.bf16.gmra.mxu0 %v592
  %v2324 = vpop.f32.mrf.mxu0
  %v2325 = vadd.f32 %v2276, %v2324
  %v2326 = vpop.f32.mrf.mxu0
  %v2327 = vadd.f32 %v2278, %v2326
  %2328 = vdwg.mxu0
  %2329 = vmatpush.bf16.msra.mxu0 %v1454
  %2330 = vmatpush.bf16.msra.mxu0 %v1450
  %2331 = vmatpush.bf16.msra.mxu0 %v1446
  %2332 = vmatpush.bf16.msra.mxu0 %v1442
  %2333 = vmatpush.bf16.msra.mxu0 %v1438
  %2334 = vmatpush.bf16.msra.mxu0 %v1434
  %2335 = vmatpush.bf16.msra.mxu0 %v1430
  %2336 = vmatpush.bf16.msra.mxu0 %v1426
  %2337 = vmatmul.bf16.gmra.mxu0 %v529
  %v2338 = vpop.f32.mrf.mxu0
  %v2339 = vadd.f32 0.0, %v2338
  %v2340 = vpop.f32.mrf.mxu0
  %v2341 = vadd.f32 0.0, %v2340
  %2342 = vmatmul.bf16.gmra.mxu0 %v537
  %v2343 = vpop.f32.mrf.mxu0
  %v2344 = vadd.f32 0.0, %v2343
  %v2345 = vpop.f32.mrf.mxu0
  %v2346 = vadd.f32 0.0, %v2345
  %2347 = vmatmul.bf16.gmra.mxu0 %v545
  %v2348 = vpop.f32.mrf.mxu0
  %v2349 = vadd.f32 0.0, %v2348
  %v2350 = vpop.f32.mrf.mxu0
  %v2351 = vadd.f32 0.0, %v2350
  %2352 = vmatmul.bf16.gmra.mxu0 %v553
  %v2353 = vpop.f32.mrf.mxu0
  %v2354 = vadd.f32 0.0, %v2353
  %v2355 = vpop.f32.mrf.mxu0
  %v2356 = vadd.f32 0.0, %v2355
  %2357 = vmatmul.bf16.gmra.mxu0 %v561
  %v2358 = vpop.f32.mrf.mxu0
  %v2359 = vadd.f32 0.0, %v2358
  %v2360 = vpop.f32.mrf.mxu0
  %v2361 = vadd.f32 0.0, %v2360
  %2362 = vmatmul.bf16.gmra.mxu0 %v569
  %v2363 = vpop.f32.mrf.mxu0
  %v2364 = vadd.f32 0.0, %v2363
  %v2365 = vpop.f32.mrf.mxu0
  %v2366 = vadd.f32 0.0, %v2365
  %2367 = vmatmul.bf16.gmra.mxu0 %v577
  %v2368 = vpop.f32.mrf.mxu0
  %v2369 = vadd.f32 0.0, %v2368
  %v2370 = vpop.f32.mrf.mxu0
  %v2371 = vadd.f32 0.0, %v2370
  %2372 = vmatmul.bf16.gmra.mxu0 %v585
  %v2373 = vpop.f32.mrf.mxu0
  %v2374 = vadd.f32 0.0, %v2373
  %v2375 = vpop.f32.mrf.mxu0
  %v2376 = vadd.f32 0.0, %v2375
  %2377 = vdwg.mxu0
  %2378 = vmatpush.bf16.msra.mxu0 %v1486
  %2379 = vmatpush.bf16.msra.mxu0 %v1482
  %2380 = vmatpush.bf16.msra.mxu0 %v1478
  %2381 = vmatpush.bf16.msra.mxu0 %v1474
  %2382 = vmatpush.bf16.msra.mxu0 %v1470
  %2383 = vmatpush.bf16.msra.mxu0 %v1466
  %2384 = vmatpush.bf16.msra.mxu0 %v1462
  %2385 = vmatpush.bf16.msra.mxu0 %v1458
  %2386 = vmatmul.bf16.gmra.mxu0 %v530
  %v2387 = vpop.f32.mrf.mxu0
  %v2388 = vadd.f32 %v2339, %v2387
  %v2389 = vpop.f32.mrf.mxu0
  %v2390 = vadd.f32 %v2341, %v2389
  %2391 = vmatmul.bf16.gmra.mxu0 %v538
  %v2392 = vpop.f32.mrf.mxu0
  %v2393 = vadd.f32 %v2344, %v2392
  %v2394 = vpop.f32.mrf.mxu0
  %v2395 = vadd.f32 %v2346, %v2394
  %2396 = vmatmul.bf16.gmra.mxu0 %v546
  %v2397 = vpop.f32.mrf.mxu0
  %v2398 = vadd.f32 %v2349, %v2397
  %v2399 = vpop.f32.mrf.mxu0
  %v2400 = vadd.f32 %v2351, %v2399
  %2401 = vmatmul.bf16.gmra.mxu0 %v554
  %v2402 = vpop.f32.mrf.mxu0
  %v2403 = vadd.f32 %v2354, %v2402
  %v2404 = vpop.f32.mrf.mxu0
  %v2405 = vadd.f32 %v2356, %v2404
  %2406 = vmatmul.bf16.gmra.mxu0 %v562
  %v2407 = vpop.f32.mrf.mxu0
  %v2408 = vadd.f32 %v2359, %v2407
  %v2409 = vpop.f32.mrf.mxu0
  %v2410 = vadd.f32 %v2361, %v2409
  %2411 = vmatmul.bf16.gmra.mxu0 %v570
  %v2412 = vpop.f32.mrf.mxu0
  %v2413 = vadd.f32 %v2364, %v2412
  %v2414 = vpop.f32.mrf.mxu0
  %v2415 = vadd.f32 %v2366, %v2414
  %2416 = vmatmul.bf16.gmra.mxu0 %v578
  %v2417 = vpop.f32.mrf.mxu0
  %v2418 = vadd.f32 %v2369, %v2417
  %v2419 = vpop.f32.mrf.mxu0
  %v2420 = vadd.f32 %v2371, %v2419
  %2421 = vmatmul.bf16.gmra.mxu0 %v586
  %v2422 = vpop.f32.mrf.mxu0
  %v2423 = vadd.f32 %v2374, %v2422
  %v2424 = vpop.f32.mrf.mxu0
  %v2425 = vadd.f32 %v2376, %v2424
  %2426 = vdwg.mxu0
  %2427 = vmatpush.bf16.msra.mxu0 %v1518
  %2428 = vmatpush.bf16.msra.mxu0 %v1514
  %2429 = vmatpush.bf16.msra.mxu0 %v1510
  %2430 = vmatpush.bf16.msra.mxu0 %v1506
  %2431 = vmatpush.bf16.msra.mxu0 %v1502
  %2432 = vmatpush.bf16.msra.mxu0 %v1498
  %2433 = vmatpush.bf16.msra.mxu0 %v1494
  %2434 = vmatpush.bf16.msra.mxu0 %v1490
  %2435 = vmatmul.bf16.gmra.mxu0 %v531
  %v2436 = vpop.f32.mrf.mxu0
  %v2437 = vadd.f32 %v2388, %v2436
  %v2438 = vpop.f32.mrf.mxu0
  %v2439 = vadd.f32 %v2390, %v2438
  %2440 = vmatmul.bf16.gmra.mxu0 %v539
  %v2441 = vpop.f32.mrf.mxu0
  %v2442 = vadd.f32 %v2393, %v2441
  %v2443 = vpop.f32.mrf.mxu0
  %v2444 = vadd.f32 %v2395, %v2443
  %2445 = vmatmul.bf16.gmra.mxu0 %v547
  %v2446 = vpop.f32.mrf.mxu0
  %v2447 = vadd.f32 %v2398, %v2446
  %v2448 = vpop.f32.mrf.mxu0
  %v2449 = vadd.f32 %v2400, %v2448
  %2450 = vmatmul.bf16.gmra.mxu0 %v555
  %v2451 = vpop.f32.mrf.mxu0
  %v2452 = vadd.f32 %v2403, %v2451
  %v2453 = vpop.f32.mrf.mxu0
  %v2454 = vadd.f32 %v2405, %v2453
  %2455 = vmatmul.bf16.gmra.mxu0 %v563
  %v2456 = vpop.f32.mrf.mxu0
  %v2457 = vadd.f32 %v2408, %v2456
  %v2458 = vpop.f32.mrf.mxu0
  %v2459 = vadd.f32 %v2410, %v2458
  %2460 = vmatmul.bf16.gmra.mxu0 %v571
  %v2461 = vpop.f32.mrf.mxu0
  %v2462 = vadd.f32 %v2413, %v2461
  %v2463 = vpop.f32.mrf.mxu0
  %v2464 = vadd.f32 %v2415, %v2463
  %2465 = vmatmul.bf16.gmra.mxu0 %v579
  %v2466 = vpop.f32.mrf.mxu0
  %v2467 = vadd.f32 %v2418, %v2466
  %v2468 = vpop.f32.mrf.mxu0
  %v2469 = vadd.f32 %v2420, %v2468
  %2470 = vmatmul.bf16.gmra.mxu0 %v587
  %v2471 = vpop.f32.mrf.mxu0
  %v2472 = vadd.f32 %v2423, %v2471
  %v2473 = vpop.f32.mrf.mxu0
  %v2474 = vadd.f32 %v2425, %v2473
  %2475 = vdwg.mxu0
  %2476 = vmatpush.bf16.msra.mxu0 %v1550
  %2477 = vmatpush.bf16.msra.mxu0 %v1546
  %2478 = vmatpush.bf16.msra.mxu0 %v1542
  %2479 = vmatpush.bf16.msra.mxu0 %v1538
  %2480 = vmatpush.bf16.msra.mxu0 %v1534
  %2481 = vmatpush.bf16.msra.mxu0 %v1530
  %2482 = vmatpush.bf16.msra.mxu0 %v1526
  %2483 = vmatpush.bf16.msra.mxu0 %v1522
  %2484 = vmatmul.bf16.gmra.mxu0 %v532
  %v2485 = vpop.f32.mrf.mxu0
  %v2486 = vadd.f32 %v2437, %v2485
  %v2487 = vpop.f32.mrf.mxu0
  %v2488 = vadd.f32 %v2439, %v2487
  %2489 = vmatmul.bf16.gmra.mxu0 %v540
  %v2490 = vpop.f32.mrf.mxu0
  %v2491 = vadd.f32 %v2442, %v2490
  %v2492 = vpop.f32.mrf.mxu0
  %v2493 = vadd.f32 %v2444, %v2492
  %2494 = vmatmul.bf16.gmra.mxu0 %v548
  %v2495 = vpop.f32.mrf.mxu0
  %v2496 = vadd.f32 %v2447, %v2495
  %v2497 = vpop.f32.mrf.mxu0
  %v2498 = vadd.f32 %v2449, %v2497
  %2499 = vmatmul.bf16.gmra.mxu0 %v556
  %v2500 = vpop.f32.mrf.mxu0
  %v2501 = vadd.f32 %v2452, %v2500
  %v2502 = vpop.f32.mrf.mxu0
  %v2503 = vadd.f32 %v2454, %v2502
  %2504 = vmatmul.bf16.gmra.mxu0 %v564
  %v2505 = vpop.f32.mrf.mxu0
  %v2506 = vadd.f32 %v2457, %v2505
  %v2507 = vpop.f32.mrf.mxu0
  %v2508 = vadd.f32 %v2459, %v2507
  %2509 = vmatmul.bf16.gmra.mxu0 %v572
  %v2510 = vpop.f32.mrf.mxu0
  %v2511 = vadd.f32 %v2462, %v2510
  %v2512 = vpop.f32.mrf.mxu0
  %v2513 = vadd.f32 %v2464, %v2512
  %2514 = vmatmul.bf16.gmra.mxu0 %v580
  %v2515 = vpop.f32.mrf.mxu0
  %v2516 = vadd.f32 %v2467, %v2515
  %v2517 = vpop.f32.mrf.mxu0
  %v2518 = vadd.f32 %v2469, %v2517
  %2519 = vmatmul.bf16.gmra.mxu0 %v588
  %v2520 = vpop.f32.mrf.mxu0
  %v2521 = vadd.f32 %v2472, %v2520
  %v2522 = vpop.f32.mrf.mxu0
  %v2523 = vadd.f32 %v2474, %v2522
  %2524 = vdwg.mxu0
  %2525 = vmatpush.bf16.msra.mxu0 %v1582
  %2526 = vmatpush.bf16.msra.mxu0 %v1578
  %2527 = vmatpush.bf16.msra.mxu0 %v1574
  %2528 = vmatpush.bf16.msra.mxu0 %v1570
  %2529 = vmatpush.bf16.msra.mxu0 %v1566
  %2530 = vmatpush.bf16.msra.mxu0 %v1562
  %2531 = vmatpush.bf16.msra.mxu0 %v1558
  %2532 = vmatpush.bf16.msra.mxu0 %v1554
  %2533 = vmatmul.bf16.gmra.mxu0 %v533
  %v2534 = vpop.f32.mrf.mxu0
  %v2535 = vadd.f32 %v2486, %v2534
  %v2536 = vpop.f32.mrf.mxu0
  %v2537 = vadd.f32 %v2488, %v2536
  %2538 = vmatmul.bf16.gmra.mxu0 %v541
  %v2539 = vpop.f32.mrf.mxu0
  %v2540 = vadd.f32 %v2491, %v2539
  %v2541 = vpop.f32.mrf.mxu0
  %v2542 = vadd.f32 %v2493, %v2541
  %2543 = vmatmul.bf16.gmra.mxu0 %v549
  %v2544 = vpop.f32.mrf.mxu0
  %v2545 = vadd.f32 %v2496, %v2544
  %v2546 = vpop.f32.mrf.mxu0
  %v2547 = vadd.f32 %v2498, %v2546
  %2548 = vmatmul.bf16.gmra.mxu0 %v557
  %v2549 = vpop.f32.mrf.mxu0
  %v2550 = vadd.f32 %v2501, %v2549
  %v2551 = vpop.f32.mrf.mxu0
  %v2552 = vadd.f32 %v2503, %v2551
  %2553 = vmatmul.bf16.gmra.mxu0 %v565
  %v2554 = vpop.f32.mrf.mxu0
  %v2555 = vadd.f32 %v2506, %v2554
  %v2556 = vpop.f32.mrf.mxu0
  %v2557 = vadd.f32 %v2508, %v2556
  %2558 = vmatmul.bf16.gmra.mxu0 %v573
  %v2559 = vpop.f32.mrf.mxu0
  %v2560 = vadd.f32 %v2511, %v2559
  %v2561 = vpop.f32.mrf.mxu0
  %v2562 = vadd.f32 %v2513, %v2561
  %2563 = vmatmul.bf16.gmra.mxu0 %v581
  %v2564 = vpop.f32.mrf.mxu0
  %v2565 = vadd.f32 %v2516, %v2564
  %v2566 = vpop.f32.mrf.mxu0
  %v2567 = vadd.f32 %v2518, %v2566
  %2568 = vmatmul.bf16.gmra.mxu0 %v589
  %v2569 = vpop.f32.mrf.mxu0
  %v2570 = vadd.f32 %v2521, %v2569
  %v2571 = vpop.f32.mrf.mxu0
  %v2572 = vadd.f32 %v2523, %v2571
  %2573 = vdwg.mxu0
  %2574 = vmatpush.bf16.msra.mxu0 %v1614
  %2575 = vmatpush.bf16.msra.mxu0 %v1610
  %2576 = vmatpush.bf16.msra.mxu0 %v1606
  %2577 = vmatpush.bf16.msra.mxu0 %v1602
  %2578 = vmatpush.bf16.msra.mxu0 %v1598
  %2579 = vmatpush.bf16.msra.mxu0 %v1594
  %2580 = vmatpush.bf16.msra.mxu0 %v1590
  %2581 = vmatpush.bf16.msra.mxu0 %v1586
  %2582 = vmatmul.bf16.gmra.mxu0 %v534
  %v2583 = vpop.f32.mrf.mxu0
  %v2584 = vadd.f32 %v2535, %v2583
  %v2585 = vpop.f32.mrf.mxu0
  %v2586 = vadd.f32 %v2537, %v2585
  %2587 = vmatmul.bf16.gmra.mxu0 %v542
  %v2588 = vpop.f32.mrf.mxu0
  %v2589 = vadd.f32 %v2540, %v2588
  %v2590 = vpop.f32.mrf.mxu0
  %v2591 = vadd.f32 %v2542, %v2590
  %2592 = vmatmul.bf16.gmra.mxu0 %v550
  %v2593 = vpop.f32.mrf.mxu0
  %v2594 = vadd.f32 %v2545, %v2593
  %v2595 = vpop.f32.mrf.mxu0
  %v2596 = vadd.f32 %v2547, %v2595
  %2597 = vmatmul.bf16.gmra.mxu0 %v558
  %v2598 = vpop.f32.mrf.mxu0
  %v2599 = vadd.f32 %v2550, %v2598
  %v2600 = vpop.f32.mrf.mxu0
  %v2601 = vadd.f32 %v2552, %v2600
  %2602 = vmatmul.bf16.gmra.mxu0 %v566
  %v2603 = vpop.f32.mrf.mxu0
  %v2604 = vadd.f32 %v2555, %v2603
  %v2605 = vpop.f32.mrf.mxu0
  %v2606 = vadd.f32 %v2557, %v2605
  %2607 = vmatmul.bf16.gmra.mxu0 %v574
  %v2608 = vpop.f32.mrf.mxu0
  %v2609 = vadd.f32 %v2560, %v2608
  %v2610 = vpop.f32.mrf.mxu0
  %v2611 = vadd.f32 %v2562, %v2610
  %2612 = vmatmul.bf16.gmra.mxu0 %v582
  %v2613 = vpop.f32.mrf.mxu0
  %v2614 = vadd.f32 %v2565, %v2613
  %v2615 = vpop.f32.mrf.mxu0
  %v2616 = vadd.f32 %v2567, %v2615
  %2617 = vmatmul.bf16.gmra.mxu0 %v590
  %v2618 = vpop.f32.mrf.mxu0
  %v2619 = vadd.f32 %v2570, %v2618
  %v2620 = vpop.f32.mrf.mxu0
  %v2621 = vadd.f32 %v2572, %v2620
  %2622 = vdwg.mxu0
  %2623 = vmatpush.bf16.msra.mxu0 %v1646
  %2624 = vmatpush.bf16.msra.mxu0 %v1642
  %2625 = vmatpush.bf16.msra.mxu0 %v1638
  %2626 = vmatpush.bf16.msra.mxu0 %v1634
  %2627 = vmatpush.bf16.msra.mxu0 %v1630
  %2628 = vmatpush.bf16.msra.mxu0 %v1626
  %2629 = vmatpush.bf16.msra.mxu0 %v1622
  %2630 = vmatpush.bf16.msra.mxu0 %v1618
  %2631 = vmatmul.bf16.gmra.mxu0 %v535
  %v2632 = vpop.f32.mrf.mxu0
  %v2633 = vadd.f32 %v2584, %v2632
  %v2634 = vpop.f32.mrf.mxu0
  %v2635 = vadd.f32 %v2586, %v2634
  %2636 = vmatmul.bf16.gmra.mxu0 %v543
  %v2637 = vpop.f32.mrf.mxu0
  %v2638 = vadd.f32 %v2589, %v2637
  %v2639 = vpop.f32.mrf.mxu0
  %v2640 = vadd.f32 %v2591, %v2639
  %2641 = vmatmul.bf16.gmra.mxu0 %v551
  %v2642 = vpop.f32.mrf.mxu0
  %v2643 = vadd.f32 %v2594, %v2642
  %v2644 = vpop.f32.mrf.mxu0
  %v2645 = vadd.f32 %v2596, %v2644
  %2646 = vmatmul.bf16.gmra.mxu0 %v559
  %v2647 = vpop.f32.mrf.mxu0
  %v2648 = vadd.f32 %v2599, %v2647
  %v2649 = vpop.f32.mrf.mxu0
  %v2650 = vadd.f32 %v2601, %v2649
  %2651 = vmatmul.bf16.gmra.mxu0 %v567
  %v2652 = vpop.f32.mrf.mxu0
  %v2653 = vadd.f32 %v2604, %v2652
  %v2654 = vpop.f32.mrf.mxu0
  %v2655 = vadd.f32 %v2606, %v2654
  %2656 = vmatmul.bf16.gmra.mxu0 %v575
  %v2657 = vpop.f32.mrf.mxu0
  %v2658 = vadd.f32 %v2609, %v2657
  %v2659 = vpop.f32.mrf.mxu0
  %v2660 = vadd.f32 %v2611, %v2659
  %2661 = vmatmul.bf16.gmra.mxu0 %v583
  %v2662 = vpop.f32.mrf.mxu0
  %v2663 = vadd.f32 %v2614, %v2662
  %v2664 = vpop.f32.mrf.mxu0
  %v2665 = vadd.f32 %v2616, %v2664
  %2666 = vmatmul.bf16.gmra.mxu0 %v591
  %v2667 = vpop.f32.mrf.mxu0
  %v2668 = vadd.f32 %v2619, %v2667
  %v2669 = vpop.f32.mrf.mxu0
  %v2670 = vadd.f32 %v2621, %v2669
  %2671 = vdwg.mxu0
  %2672 = vmatpush.bf16.msra.mxu0 %v1678
  %2673 = vmatpush.bf16.msra.mxu0 %v1674
  %2674 = vmatpush.bf16.msra.mxu0 %v1670
  %2675 = vmatpush.bf16.msra.mxu0 %v1666
  %2676 = vmatpush.bf16.msra.mxu0 %v1662
  %2677 = vmatpush.bf16.msra.mxu0 %v1658
  %2678 = vmatpush.bf16.msra.mxu0 %v1654
  %2679 = vmatpush.bf16.msra.mxu0 %v1650
  %2680 = vmatmul.bf16.gmra.mxu0 %v536
  %v2681 = vpop.f32.mrf.mxu0
  %v2682 = vadd.f32 %v2633, %v2681
  %v2683 = vpop.f32.mrf.mxu0
  %v2684 = vadd.f32 %v2635, %v2683
  %2685 = vmatmul.bf16.gmra.mxu0 %v544
  %v2686 = vpop.f32.mrf.mxu0
  %v2687 = vadd.f32 %v2638, %v2686
  %v2688 = vpop.f32.mrf.mxu0
  %v2689 = vadd.f32 %v2640, %v2688
  %2690 = vmatmul.bf16.gmra.mxu0 %v552
  %v2691 = vpop.f32.mrf.mxu0
  %v2692 = vadd.f32 %v2643, %v2691
  %v2693 = vpop.f32.mrf.mxu0
  %v2694 = vadd.f32 %v2645, %v2693
  %2695 = vmatmul.bf16.gmra.mxu0 %v560
  %v2696 = vpop.f32.mrf.mxu0
  %v2697 = vadd.f32 %v2648, %v2696
  %v2698 = vpop.f32.mrf.mxu0
  %v2699 = vadd.f32 %v2650, %v2698
  %2700 = vmatmul.bf16.gmra.mxu0 %v568
  %v2701 = vpop.f32.mrf.mxu0
  %v2702 = vadd.f32 %v2653, %v2701
  %v2703 = vpop.f32.mrf.mxu0
  %v2704 = vadd.f32 %v2655, %v2703
  %2705 = vmatmul.bf16.gmra.mxu0 %v576
  %v2706 = vpop.f32.mrf.mxu0
  %v2707 = vadd.f32 %v2658, %v2706
  %v2708 = vpop.f32.mrf.mxu0
  %v2709 = vadd.f32 %v2660, %v2708
  %2710 = vmatmul.bf16.gmra.mxu0 %v584
  %v2711 = vpop.f32.mrf.mxu0
  %v2712 = vadd.f32 %v2663, %v2711
  %v2713 = vpop.f32.mrf.mxu0
  %v2714 = vadd.f32 %v2665, %v2713
  %2715 = vmatmul.bf16.gmra.mxu0 %v592
  %v2716 = vpop.f32.mrf.mxu0
  %v2717 = vadd.f32 %v2668, %v2716
  %v2718 = vpop.f32.mrf.mxu0
  %v2719 = vadd.f32 %v2670, %v2718
  %2720 = vdwg.mxu0
  %2721 = vmatpush.bf16.msra.mxu0 %v1455
  %2722 = vmatpush.bf16.msra.mxu0 %v1451
  %2723 = vmatpush.bf16.msra.mxu0 %v1447
  %2724 = vmatpush.bf16.msra.mxu0 %v1443
  %2725 = vmatpush.bf16.msra.mxu0 %v1439
  %2726 = vmatpush.bf16.msra.mxu0 %v1435
  %2727 = vmatpush.bf16.msra.mxu0 %v1431
  %2728 = vmatpush.bf16.msra.mxu0 %v1427
  %2729 = vmatmul.bf16.gmra.mxu0 %v529
  %v2730 = vpop.f32.mrf.mxu0
  %v2731 = vadd.f32 0.0, %v2730
  %v2732 = vpop.f32.mrf.mxu0
  %v2733 = vadd.f32 0.0, %v2732
  %2734 = vmatmul.bf16.gmra.mxu0 %v537
  %v2735 = vpop.f32.mrf.mxu0
  %v2736 = vadd.f32 0.0, %v2735
  %v2737 = vpop.f32.mrf.mxu0
  %v2738 = vadd.f32 0.0, %v2737
  %2739 = vmatmul.bf16.gmra.mxu0 %v545
  %v2740 = vpop.f32.mrf.mxu0
  %v2741 = vadd.f32 0.0, %v2740
  %v2742 = vpop.f32.mrf.mxu0
  %v2743 = vadd.f32 0.0, %v2742
  %2744 = vmatmul.bf16.gmra.mxu0 %v553
  %v2745 = vpop.f32.mrf.mxu0
  %v2746 = vadd.f32 0.0, %v2745
  %v2747 = vpop.f32.mrf.mxu0
  %v2748 = vadd.f32 0.0, %v2747
  %2749 = vmatmul.bf16.gmra.mxu0 %v561
  %v2750 = vpop.f32.mrf.mxu0
  %v2751 = vadd.f32 0.0, %v2750
  %v2752 = vpop.f32.mrf.mxu0
  %v2753 = vadd.f32 0.0, %v2752
  %2754 = vmatmul.bf16.gmra.mxu0 %v569
  %v2755 = vpop.f32.mrf.mxu0
  %v2756 = vadd.f32 0.0, %v2755
  %v2757 = vpop.f32.mrf.mxu0
  %v2758 = vadd.f32 0.0, %v2757
  %2759 = vmatmul.bf16.gmra.mxu0 %v577
  %v2760 = vpop.f32.mrf.mxu0
  %v2761 = vadd.f32 0.0, %v2760
  %v2762 = vpop.f32.mrf.mxu0
  %v2763 = vadd.f32 0.0, %v2762
  %2764 = vmatmul.bf16.gmra.mxu0 %v585
  %v2765 = vpop.f32.mrf.mxu0
  %v2766 = vadd.f32 0.0, %v2765
  %v2767 = vpop.f32.mrf.mxu0
  %v2768 = vadd.f32 0.0, %v2767
  %2769 = vdwg.mxu0
  %2770 = vmatpush.bf16.msra.mxu0 %v1487
  %2771 = vmatpush.bf16.msra.mxu0 %v1483
  %2772 = vmatpush.bf16.msra.mxu0 %v1479
  %2773 = vmatpush.bf16.msra.mxu0 %v1475
  %2774 = vmatpush.bf16.msra.mxu0 %v1471
  %2775 = vmatpush.bf16.msra.mxu0 %v1467
  %2776 = vmatpush.bf16.msra.mxu0 %v1463
  %2777 = vmatpush.bf16.msra.mxu0 %v1459
  %2778 = vmatmul.bf16.gmra.mxu0 %v530
  %v2779 = vpop.f32.mrf.mxu0
  %v2780 = vadd.f32 %v2731, %v2779
  %v2781 = vpop.f32.mrf.mxu0
  %v2782 = vadd.f32 %v2733, %v2781
  %2783 = vmatmul.bf16.gmra.mxu0 %v538
  %v2784 = vpop.f32.mrf.mxu0
  %v2785 = vadd.f32 %v2736, %v2784
  %v2786 = vpop.f32.mrf.mxu0
  %v2787 = vadd.f32 %v2738, %v2786
  %2788 = vmatmul.bf16.gmra.mxu0 %v546
  %v2789 = vpop.f32.mrf.mxu0
  %v2790 = vadd.f32 %v2741, %v2789
  %v2791 = vpop.f32.mrf.mxu0
  %v2792 = vadd.f32 %v2743, %v2791
  %2793 = vmatmul.bf16.gmra.mxu0 %v554
  %v2794 = vpop.f32.mrf.mxu0
  %v2795 = vadd.f32 %v2746, %v2794
  %v2796 = vpop.f32.mrf.mxu0
  %v2797 = vadd.f32 %v2748, %v2796
  %2798 = vmatmul.bf16.gmra.mxu0 %v562
  %v2799 = vpop.f32.mrf.mxu0
  %v2800 = vadd.f32 %v2751, %v2799
  %v2801 = vpop.f32.mrf.mxu0
  %v2802 = vadd.f32 %v2753, %v2801
  %2803 = vmatmul.bf16.gmra.mxu0 %v570
  %v2804 = vpop.f32.mrf.mxu0
  %v2805 = vadd.f32 %v2756, %v2804
  %v2806 = vpop.f32.mrf.mxu0
  %v2807 = vadd.f32 %v2758, %v2806
  %2808 = vmatmul.bf16.gmra.mxu0 %v578
  %v2809 = vpop.f32.mrf.mxu0
  %v2810 = vadd.f32 %v2761, %v2809
  %v2811 = vpop.f32.mrf.mxu0
  %v2812 = vadd.f32 %v2763, %v2811
  %2813 = vmatmul.bf16.gmra.mxu0 %v586
  %v2814 = vpop.f32.mrf.mxu0
  %v2815 = vadd.f32 %v2766, %v2814
  %v2816 = vpop.f32.mrf.mxu0
  %v2817 = vadd.f32 %v2768, %v2816
  %2818 = vdwg.mxu0
  %2819 = vmatpush.bf16.msra.mxu0 %v1519
  %2820 = vmatpush.bf16.msra.mxu0 %v1515
  %2821 = vmatpush.bf16.msra.mxu0 %v1511
  %2822 = vmatpush.bf16.msra.mxu0 %v1507
  %2823 = vmatpush.bf16.msra.mxu0 %v1503
  %2824 = vmatpush.bf16.msra.mxu0 %v1499
  %2825 = vmatpush.bf16.msra.mxu0 %v1495
  %2826 = vmatpush.bf16.msra.mxu0 %v1491
  %2827 = vmatmul.bf16.gmra.mxu0 %v531
  %v2828 = vpop.f32.mrf.mxu0
  %v2829 = vadd.f32 %v2780, %v2828
  %v2830 = vpop.f32.mrf.mxu0
  %v2831 = vadd.f32 %v2782, %v2830
  %2832 = vmatmul.bf16.gmra.mxu0 %v539
  %v2833 = vpop.f32.mrf.mxu0
  %v2834 = vadd.f32 %v2785, %v2833
  %v2835 = vpop.f32.mrf.mxu0
  %v2836 = vadd.f32 %v2787, %v2835
  %2837 = vmatmul.bf16.gmra.mxu0 %v547
  %v2838 = vpop.f32.mrf.mxu0
  %v2839 = vadd.f32 %v2790, %v2838
  %v2840 = vpop.f32.mrf.mxu0
  %v2841 = vadd.f32 %v2792, %v2840
  %2842 = vmatmul.bf16.gmra.mxu0 %v555
  %v2843 = vpop.f32.mrf.mxu0
  %v2844 = vadd.f32 %v2795, %v2843
  %v2845 = vpop.f32.mrf.mxu0
  %v2846 = vadd.f32 %v2797, %v2845
  %2847 = vmatmul.bf16.gmra.mxu0 %v563
  %v2848 = vpop.f32.mrf.mxu0
  %v2849 = vadd.f32 %v2800, %v2848
  %v2850 = vpop.f32.mrf.mxu0
  %v2851 = vadd.f32 %v2802, %v2850
  %2852 = vmatmul.bf16.gmra.mxu0 %v571
  %v2853 = vpop.f32.mrf.mxu0
  %v2854 = vadd.f32 %v2805, %v2853
  %v2855 = vpop.f32.mrf.mxu0
  %v2856 = vadd.f32 %v2807, %v2855
  %2857 = vmatmul.bf16.gmra.mxu0 %v579
  %v2858 = vpop.f32.mrf.mxu0
  %v2859 = vadd.f32 %v2810, %v2858
  %v2860 = vpop.f32.mrf.mxu0
  %v2861 = vadd.f32 %v2812, %v2860
  %2862 = vmatmul.bf16.gmra.mxu0 %v587
  %v2863 = vpop.f32.mrf.mxu0
  %v2864 = vadd.f32 %v2815, %v2863
  %v2865 = vpop.f32.mrf.mxu0
  %v2866 = vadd.f32 %v2817, %v2865
  %2867 = vdwg.mxu0
  %2868 = vmatpush.bf16.msra.mxu0 %v1551
  %2869 = vmatpush.bf16.msra.mxu0 %v1547
  %2870 = vmatpush.bf16.msra.mxu0 %v1543
  %2871 = vmatpush.bf16.msra.mxu0 %v1539
  %2872 = vmatpush.bf16.msra.mxu0 %v1535
  %2873 = vmatpush.bf16.msra.mxu0 %v1531
  %2874 = vmatpush.bf16.msra.mxu0 %v1527
  %2875 = vmatpush.bf16.msra.mxu0 %v1523
  %2876 = vmatmul.bf16.gmra.mxu0 %v532
  %v2877 = vpop.f32.mrf.mxu0
  %v2878 = vadd.f32 %v2829, %v2877
  %v2879 = vpop.f32.mrf.mxu0
  %v2880 = vadd.f32 %v2831, %v2879
  %2881 = vmatmul.bf16.gmra.mxu0 %v540
  %v2882 = vpop.f32.mrf.mxu0
  %v2883 = vadd.f32 %v2834, %v2882
  %v2884 = vpop.f32.mrf.mxu0
  %v2885 = vadd.f32 %v2836, %v2884
  %2886 = vmatmul.bf16.gmra.mxu0 %v548
  %v2887 = vpop.f32.mrf.mxu0
  %v2888 = vadd.f32 %v2839, %v2887
  %v2889 = vpop.f32.mrf.mxu0
  %v2890 = vadd.f32 %v2841, %v2889
  %2891 = vmatmul.bf16.gmra.mxu0 %v556
  %v2892 = vpop.f32.mrf.mxu0
  %v2893 = vadd.f32 %v2844, %v2892
  %v2894 = vpop.f32.mrf.mxu0
  %v2895 = vadd.f32 %v2846, %v2894
  %2896 = vmatmul.bf16.gmra.mxu0 %v564
  %v2897 = vpop.f32.mrf.mxu0
  %v2898 = vadd.f32 %v2849, %v2897
  %v2899 = vpop.f32.mrf.mxu0
  %v2900 = vadd.f32 %v2851, %v2899
  %2901 = vmatmul.bf16.gmra.mxu0 %v572
  %v2902 = vpop.f32.mrf.mxu0
  %v2903 = vadd.f32 %v2854, %v2902
  %v2904 = vpop.f32.mrf.mxu0
  %v2905 = vadd.f32 %v2856, %v2904
  %2906 = vmatmul.bf16.gmra.mxu0 %v580
  %v2907 = vpop.f32.mrf.mxu0
  %v2908 = vadd.f32 %v2859, %v2907
  %v2909 = vpop.f32.mrf.mxu0
  %v2910 = vadd.f32 %v2861, %v2909
  %2911 = vmatmul.bf16.gmra.mxu0 %v588
  %v2912 = vpop.f32.mrf.mxu0
  %v2913 = vadd.f32 %v2864, %v2912
  %v2914 = vpop.f32.mrf.mxu0
  %v2915 = vadd.f32 %v2866, %v2914
  %2916 = vdwg.mxu0
  %2917 = vmatpush.bf16.msra.mxu0 %v1583
  %2918 = vmatpush.bf16.msra.mxu0 %v1579
  %2919 = vmatpush.bf16.msra.mxu0 %v1575
  %2920 = vmatpush.bf16.msra.mxu0 %v1571
  %2921 = vmatpush.bf16.msra.mxu0 %v1567
  %2922 = vmatpush.bf16.msra.mxu0 %v1563
  %2923 = vmatpush.bf16.msra.mxu0 %v1559
  %2924 = vmatpush.bf16.msra.mxu0 %v1555
  %2925 = vmatmul.bf16.gmra.mxu0 %v533
  %v2926 = vpop.f32.mrf.mxu0
  %v2927 = vadd.f32 %v2878, %v2926
  %v2928 = vpop.f32.mrf.mxu0
  %v2929 = vadd.f32 %v2880, %v2928
  %2930 = vmatmul.bf16.gmra.mxu0 %v541
  %v2931 = vpop.f32.mrf.mxu0
  %v2932 = vadd.f32 %v2883, %v2931
  %v2933 = vpop.f32.mrf.mxu0
  %v2934 = vadd.f32 %v2885, %v2933
  %2935 = vmatmul.bf16.gmra.mxu0 %v549
  %v2936 = vpop.f32.mrf.mxu0
  %v2937 = vadd.f32 %v2888, %v2936
  %v2938 = vpop.f32.mrf.mxu0
  %v2939 = vadd.f32 %v2890, %v2938
  %2940 = vmatmul.bf16.gmra.mxu0 %v557
  %v2941 = vpop.f32.mrf.mxu0
  %v2942 = vadd.f32 %v2893, %v2941
  %v2943 = vpop.f32.mrf.mxu0
  %v2944 = vadd.f32 %v2895, %v2943
  %2945 = vmatmul.bf16.gmra.mxu0 %v565
  %v2946 = vpop.f32.mrf.mxu0
  %v2947 = vadd.f32 %v2898, %v2946
  %v2948 = vpop.f32.mrf.mxu0
  %v2949 = vadd.f32 %v2900, %v2948
  %2950 = vmatmul.bf16.gmra.mxu0 %v573
  %v2951 = vpop.f32.mrf.mxu0
  %v2952 = vadd.f32 %v2903, %v2951
  %v2953 = vpop.f32.mrf.mxu0
  %v2954 = vadd.f32 %v2905, %v2953
  %2955 = vmatmul.bf16.gmra.mxu0 %v581
  %v2956 = vpop.f32.mrf.mxu0
  %v2957 = vadd.f32 %v2908, %v2956
  %v2958 = vpop.f32.mrf.mxu0
  %v2959 = vadd.f32 %v2910, %v2958
  %2960 = vmatmul.bf16.gmra.mxu0 %v589
  %v2961 = vpop.f32.mrf.mxu0
  %v2962 = vadd.f32 %v2913, %v2961
  %v2963 = vpop.f32.mrf.mxu0
  %v2964 = vadd.f32 %v2915, %v2963
  %2965 = vdwg.mxu0
  %2966 = vmatpush.bf16.msra.mxu0 %v1615
  %2967 = vmatpush.bf16.msra.mxu0 %v1611
  %2968 = vmatpush.bf16.msra.mxu0 %v1607
  %2969 = vmatpush.bf16.msra.mxu0 %v1603
  %2970 = vmatpush.bf16.msra.mxu0 %v1599
  %2971 = vmatpush.bf16.msra.mxu0 %v1595
  %2972 = vmatpush.bf16.msra.mxu0 %v1591
  %2973 = vmatpush.bf16.msra.mxu0 %v1587
  %2974 = vmatmul.bf16.gmra.mxu0 %v534
  %v2975 = vpop.f32.mrf.mxu0
  %v2976 = vadd.f32 %v2927, %v2975
  %v2977 = vpop.f32.mrf.mxu0
  %v2978 = vadd.f32 %v2929, %v2977
  %2979 = vmatmul.bf16.gmra.mxu0 %v542
  %v2980 = vpop.f32.mrf.mxu0
  %v2981 = vadd.f32 %v2932, %v2980
  %v2982 = vpop.f32.mrf.mxu0
  %v2983 = vadd.f32 %v2934, %v2982
  %2984 = vmatmul.bf16.gmra.mxu0 %v550
  %v2985 = vpop.f32.mrf.mxu0
  %v2986 = vadd.f32 %v2937, %v2985
  %v2987 = vpop.f32.mrf.mxu0
  %v2988 = vadd.f32 %v2939, %v2987
  %2989 = vmatmul.bf16.gmra.mxu0 %v558
  %v2990 = vpop.f32.mrf.mxu0
  %v2991 = vadd.f32 %v2942, %v2990
  %v2992 = vpop.f32.mrf.mxu0
  %v2993 = vadd.f32 %v2944, %v2992
  %2994 = vmatmul.bf16.gmra.mxu0 %v566
  %v2995 = vpop.f32.mrf.mxu0
  %v2996 = vadd.f32 %v2947, %v2995
  %v2997 = vpop.f32.mrf.mxu0
  %v2998 = vadd.f32 %v2949, %v2997
  %2999 = vmatmul.bf16.gmra.mxu0 %v574
  %v3000 = vpop.f32.mrf.mxu0
  %v3001 = vadd.f32 %v2952, %v3000
  %v3002 = vpop.f32.mrf.mxu0
  %v3003 = vadd.f32 %v2954, %v3002
  %3004 = vmatmul.bf16.gmra.mxu0 %v582
  %v3005 = vpop.f32.mrf.mxu0
  %v3006 = vadd.f32 %v2957, %v3005
  %v3007 = vpop.f32.mrf.mxu0
  %v3008 = vadd.f32 %v2959, %v3007
  %3009 = vmatmul.bf16.gmra.mxu0 %v590
  %v3010 = vpop.f32.mrf.mxu0
  %v3011 = vadd.f32 %v2962, %v3010
  %v3012 = vpop.f32.mrf.mxu0
  %v3013 = vadd.f32 %v2964, %v3012
  %3014 = vdwg.mxu0
  %3015 = vmatpush.bf16.msra.mxu0 %v1647
  %3016 = vmatpush.bf16.msra.mxu0 %v1643
  %3017 = vmatpush.bf16.msra.mxu0 %v1639
  %3018 = vmatpush.bf16.msra.mxu0 %v1635
  %3019 = vmatpush.bf16.msra.mxu0 %v1631
  %3020 = vmatpush.bf16.msra.mxu0 %v1627
  %3021 = vmatpush.bf16.msra.mxu0 %v1623
  %3022 = vmatpush.bf16.msra.mxu0 %v1619
  %3023 = vmatmul.bf16.gmra.mxu0 %v535
  %v3024 = vpop.f32.mrf.mxu0
  %v3025 = vadd.f32 %v2976, %v3024
  %v3026 = vpop.f32.mrf.mxu0
  %v3027 = vadd.f32 %v2978, %v3026
  %3028 = vmatmul.bf16.gmra.mxu0 %v543
  %v3029 = vpop.f32.mrf.mxu0
  %v3030 = vadd.f32 %v2981, %v3029
  %v3031 = vpop.f32.mrf.mxu0
  %v3032 = vadd.f32 %v2983, %v3031
  %3033 = vmatmul.bf16.gmra.mxu0 %v551
  %v3034 = vpop.f32.mrf.mxu0
  %v3035 = vadd.f32 %v2986, %v3034
  %v3036 = vpop.f32.mrf.mxu0
  %v3037 = vadd.f32 %v2988, %v3036
  %3038 = vmatmul.bf16.gmra.mxu0 %v559
  %v3039 = vpop.f32.mrf.mxu0
  %v3040 = vadd.f32 %v2991, %v3039
  %v3041 = vpop.f32.mrf.mxu0
  %v3042 = vadd.f32 %v2993, %v3041
  %3043 = vmatmul.bf16.gmra.mxu0 %v567
  %v3044 = vpop.f32.mrf.mxu0
  %v3045 = vadd.f32 %v2996, %v3044
  %v3046 = vpop.f32.mrf.mxu0
  %v3047 = vadd.f32 %v2998, %v3046
  %3048 = vmatmul.bf16.gmra.mxu0 %v575
  %v3049 = vpop.f32.mrf.mxu0
  %v3050 = vadd.f32 %v3001, %v3049
  %v3051 = vpop.f32.mrf.mxu0
  %v3052 = vadd.f32 %v3003, %v3051
  %3053 = vmatmul.bf16.gmra.mxu0 %v583
  %v3054 = vpop.f32.mrf.mxu0
  %v3055 = vadd.f32 %v3006, %v3054
  %v3056 = vpop.f32.mrf.mxu0
  %v3057 = vadd.f32 %v3008, %v3056
  %3058 = vmatmul.bf16.gmra.mxu0 %v591
  %v3059 = vpop.f32.mrf.mxu0
  %v3060 = vadd.f32 %v3011, %v3059
  %v3061 = vpop.f32.mrf.mxu0
  %v3062 = vadd.f32 %v3013, %v3061
  %3063 = vdwg.mxu0
  %3064 = vmatpush.bf16.msra.mxu0 %v1679
  %3065 = vmatpush.bf16.msra.mxu0 %v1675
  %3066 = vmatpush.bf16.msra.mxu0 %v1671
  %3067 = vmatpush.bf16.msra.mxu0 %v1667
  %3068 = vmatpush.bf16.msra.mxu0 %v1663
  %3069 = vmatpush.bf16.msra.mxu0 %v1659
  %3070 = vmatpush.bf16.msra.mxu0 %v1655
  %3071 = vmatpush.bf16.msra.mxu0 %v1651
  %3072 = vmatmul.bf16.gmra.mxu0 %v536
  %v3073 = vpop.f32.mrf.mxu0
  %v3074 = vadd.f32 %v3025, %v3073
  %v3075 = vpop.f32.mrf.mxu0
  %v3076 = vadd.f32 %v3027, %v3075
  %3077 = vmatmul.bf16.gmra.mxu0 %v544
  %v3078 = vpop.f32.mrf.mxu0
  %v3079 = vadd.f32 %v3030, %v3078
  %v3080 = vpop.f32.mrf.mxu0
  %v3081 = vadd.f32 %v3032, %v3080
  %3082 = vmatmul.bf16.gmra.mxu0 %v552
  %v3083 = vpop.f32.mrf.mxu0
  %v3084 = vadd.f32 %v3035, %v3083
  %v3085 = vpop.f32.mrf.mxu0
  %v3086 = vadd.f32 %v3037, %v3085
  %3087 = vmatmul.bf16.gmra.mxu0 %v560
  %v3088 = vpop.f32.mrf.mxu0
  %v3089 = vadd.f32 %v3040, %v3088
  %v3090 = vpop.f32.mrf.mxu0
  %v3091 = vadd.f32 %v3042, %v3090
  %3092 = vmatmul.bf16.gmra.mxu0 %v568
  %v3093 = vpop.f32.mrf.mxu0
  %v3094 = vadd.f32 %v3045, %v3093
  %v3095 = vpop.f32.mrf.mxu0
  %v3096 = vadd.f32 %v3047, %v3095
  %3097 = vmatmul.bf16.gmra.mxu0 %v576
  %v3098 = vpop.f32.mrf.mxu0
  %v3099 = vadd.f32 %v3050, %v3098
  %v3100 = vpop.f32.mrf.mxu0
  %v3101 = vadd.f32 %v3052, %v3100
  %3102 = vmatmul.bf16.gmra.mxu0 %v584
  %v3103 = vpop.f32.mrf.mxu0
  %v3104 = vadd.f32 %v3055, %v3103
  %v3105 = vpop.f32.mrf.mxu0
  %v3106 = vadd.f32 %v3057, %v3105
  %3107 = vmatmul.bf16.gmra.mxu0 %v592
  %v3108 = vpop.f32.mrf.mxu0
  %v3109 = vadd.f32 %v3060, %v3108
  %v3110 = vpop.f32.mrf.mxu0
  %v3111 = vadd.f32 %v3062, %v3110
  %3112 = vdwg.mxu0
  %3113 = vmatpush.bf16.msra.mxu0 %v1456
  %3114 = vmatpush.bf16.msra.mxu0 %v1452
  %3115 = vmatpush.bf16.msra.mxu0 %v1448
  %3116 = vmatpush.bf16.msra.mxu0 %v1444
  %3117 = vmatpush.bf16.msra.mxu0 %v1440
  %3118 = vmatpush.bf16.msra.mxu0 %v1436
  %3119 = vmatpush.bf16.msra.mxu0 %v1432
  %3120 = vmatpush.bf16.msra.mxu0 %v1428
  %3121 = vmatmul.bf16.gmra.mxu0 %v529
  %v3122 = vpop.f32.mrf.mxu0
  %v3123 = vadd.f32 0.0, %v3122
  %v3124 = vpop.f32.mrf.mxu0
  %v3125 = vadd.f32 0.0, %v3124
  %3126 = vmatmul.bf16.gmra.mxu0 %v537
  %v3127 = vpop.f32.mrf.mxu0
  %v3128 = vadd.f32 0.0, %v3127
  %v3129 = vpop.f32.mrf.mxu0
  %v3130 = vadd.f32 0.0, %v3129
  %3131 = vmatmul.bf16.gmra.mxu0 %v545
  %v3132 = vpop.f32.mrf.mxu0
  %v3133 = vadd.f32 0.0, %v3132
  %v3134 = vpop.f32.mrf.mxu0
  %v3135 = vadd.f32 0.0, %v3134
  %3136 = vmatmul.bf16.gmra.mxu0 %v553
  %v3137 = vpop.f32.mrf.mxu0
  %v3138 = vadd.f32 0.0, %v3137
  %v3139 = vpop.f32.mrf.mxu0
  %v3140 = vadd.f32 0.0, %v3139
  %3141 = vmatmul.bf16.gmra.mxu0 %v561
  %v3142 = vpop.f32.mrf.mxu0
  %v3143 = vadd.f32 0.0, %v3142
  %v3144 = vpop.f32.mrf.mxu0
  %v3145 = vadd.f32 0.0, %v3144
  %3146 = vmatmul.bf16.gmra.mxu0 %v569
  %v3147 = vpop.f32.mrf.mxu0
  %v3148 = vadd.f32 0.0, %v3147
  %v3149 = vpop.f32.mrf.mxu0
  %v3150 = vadd.f32 0.0, %v3149
  %3151 = vmatmul.bf16.gmra.mxu0 %v577
  %v3152 = vpop.f32.mrf.mxu0
  %v3153 = vadd.f32 0.0, %v3152
  %v3154 = vpop.f32.mrf.mxu0
  %v3155 = vadd.f32 0.0, %v3154
  %3156 = vmatmul.bf16.gmra.mxu0 %v585
  %v3157 = vpop.f32.mrf.mxu0
  %v3158 = vadd.f32 0.0, %v3157
  %v3159 = vpop.f32.mrf.mxu0
  %v3160 = vadd.f32 0.0, %v3159
  %3161 = vdwg.mxu0
  %3162 = vmatpush.bf16.msra.mxu0 %v1488
  %3163 = vmatpush.bf16.msra.mxu0 %v1484
  %3164 = vmatpush.bf16.msra.mxu0 %v1480
  %3165 = vmatpush.bf16.msra.mxu0 %v1476
  %3166 = vmatpush.bf16.msra.mxu0 %v1472
  %3167 = vmatpush.bf16.msra.mxu0 %v1468
  %3168 = vmatpush.bf16.msra.mxu0 %v1464
  %3169 = vmatpush.bf16.msra.mxu0 %v1460
  %3170 = vmatmul.bf16.gmra.mxu0 %v530
  %v3171 = vpop.f32.mrf.mxu0
  %v3172 = vadd.f32 %v3123, %v3171
  %v3173 = vpop.f32.mrf.mxu0
  %v3174 = vadd.f32 %v3125, %v3173
  %3175 = vmatmul.bf16.gmra.mxu0 %v538
  %v3176 = vpop.f32.mrf.mxu0
  %v3177 = vadd.f32 %v3128, %v3176
  %v3178 = vpop.f32.mrf.mxu0
  %v3179 = vadd.f32 %v3130, %v3178
  %3180 = vmatmul.bf16.gmra.mxu0 %v546
  %v3181 = vpop.f32.mrf.mxu0
  %v3182 = vadd.f32 %v3133, %v3181
  %v3183 = vpop.f32.mrf.mxu0
  %v3184 = vadd.f32 %v3135, %v3183
  %3185 = vmatmul.bf16.gmra.mxu0 %v554
  %v3186 = vpop.f32.mrf.mxu0
  %v3187 = vadd.f32 %v3138, %v3186
  %v3188 = vpop.f32.mrf.mxu0
  %v3189 = vadd.f32 %v3140, %v3188
  %3190 = vmatmul.bf16.gmra.mxu0 %v562
  %v3191 = vpop.f32.mrf.mxu0
  %v3192 = vadd.f32 %v3143, %v3191
  %v3193 = vpop.f32.mrf.mxu0
  %v3194 = vadd.f32 %v3145, %v3193
  %3195 = vmatmul.bf16.gmra.mxu0 %v570
  %v3196 = vpop.f32.mrf.mxu0
  %v3197 = vadd.f32 %v3148, %v3196
  %v3198 = vpop.f32.mrf.mxu0
  %v3199 = vadd.f32 %v3150, %v3198
  %3200 = vmatmul.bf16.gmra.mxu0 %v578
  %v3201 = vpop.f32.mrf.mxu0
  %v3202 = vadd.f32 %v3153, %v3201
  %v3203 = vpop.f32.mrf.mxu0
  %v3204 = vadd.f32 %v3155, %v3203
  %3205 = vmatmul.bf16.gmra.mxu0 %v586
  %v3206 = vpop.f32.mrf.mxu0
  %v3207 = vadd.f32 %v3158, %v3206
  %v3208 = vpop.f32.mrf.mxu0
  %v3209 = vadd.f32 %v3160, %v3208
  %3210 = vdwg.mxu0
  %3211 = vmatpush.bf16.msra.mxu0 %v1520
  %3212 = vmatpush.bf16.msra.mxu0 %v1516
  %3213 = vmatpush.bf16.msra.mxu0 %v1512
  %3214 = vmatpush.bf16.msra.mxu0 %v1508
  %3215 = vmatpush.bf16.msra.mxu0 %v1504
  %3216 = vmatpush.bf16.msra.mxu0 %v1500
  %3217 = vmatpush.bf16.msra.mxu0 %v1496
  %3218 = vmatpush.bf16.msra.mxu0 %v1492
  %3219 = vmatmul.bf16.gmra.mxu0 %v531
  %v3220 = vpop.f32.mrf.mxu0
  %v3221 = vadd.f32 %v3172, %v3220
  %v3222 = vpop.f32.mrf.mxu0
  %v3223 = vadd.f32 %v3174, %v3222
  %3224 = vmatmul.bf16.gmra.mxu0 %v539
  %v3225 = vpop.f32.mrf.mxu0
  %v3226 = vadd.f32 %v3177, %v3225
  %v3227 = vpop.f32.mrf.mxu0
  %v3228 = vadd.f32 %v3179, %v3227
  %3229 = vmatmul.bf16.gmra.mxu0 %v547
  %v3230 = vpop.f32.mrf.mxu0
  %v3231 = vadd.f32 %v3182, %v3230
  %v3232 = vpop.f32.mrf.mxu0
  %v3233 = vadd.f32 %v3184, %v3232
  %3234 = vmatmul.bf16.gmra.mxu0 %v555
  %v3235 = vpop.f32.mrf.mxu0
  %v3236 = vadd.f32 %v3187, %v3235
  %v3237 = vpop.f32.mrf.mxu0
  %v3238 = vadd.f32 %v3189, %v3237
  %3239 = vmatmul.bf16.gmra.mxu0 %v563
  %v3240 = vpop.f32.mrf.mxu0
  %v3241 = vadd.f32 %v3192, %v3240
  %v3242 = vpop.f32.mrf.mxu0
  %v3243 = vadd.f32 %v3194, %v3242
  %3244 = vmatmul.bf16.gmra.mxu0 %v571
  %v3245 = vpop.f32.mrf.mxu0
  %v3246 = vadd.f32 %v3197, %v3245
  %v3247 = vpop.f32.mrf.mxu0
  %v3248 = vadd.f32 %v3199, %v3247
  %3249 = vmatmul.bf16.gmra.mxu0 %v579
  %v3250 = vpop.f32.mrf.mxu0
  %v3251 = vadd.f32 %v3202, %v3250
  %v3252 = vpop.f32.mrf.mxu0
  %v3253 = vadd.f32 %v3204, %v3252
  %3254 = vmatmul.bf16.gmra.mxu0 %v587
  %v3255 = vpop.f32.mrf.mxu0
  %v3256 = vadd.f32 %v3207, %v3255
  %v3257 = vpop.f32.mrf.mxu0
  %v3258 = vadd.f32 %v3209, %v3257
  %3259 = vdwg.mxu0
  %3260 = vmatpush.bf16.msra.mxu0 %v1552
  %3261 = vmatpush.bf16.msra.mxu0 %v1548
  %3262 = vmatpush.bf16.msra.mxu0 %v1544
  %3263 = vmatpush.bf16.msra.mxu0 %v1540
  %3264 = vmatpush.bf16.msra.mxu0 %v1536
  %3265 = vmatpush.bf16.msra.mxu0 %v1532
  %3266 = vmatpush.bf16.msra.mxu0 %v1528
  %3267 = vmatpush.bf16.msra.mxu0 %v1524
  %3268 = vmatmul.bf16.gmra.mxu0 %v532
  %v3269 = vpop.f32.mrf.mxu0
  %v3270 = vadd.f32 %v3221, %v3269
  %v3271 = vpop.f32.mrf.mxu0
  %v3272 = vadd.f32 %v3223, %v3271
  %3273 = vmatmul.bf16.gmra.mxu0 %v540
  %v3274 = vpop.f32.mrf.mxu0
  %v3275 = vadd.f32 %v3226, %v3274
  %v3276 = vpop.f32.mrf.mxu0
  %v3277 = vadd.f32 %v3228, %v3276
  %3278 = vmatmul.bf16.gmra.mxu0 %v548
  %v3279 = vpop.f32.mrf.mxu0
  %v3280 = vadd.f32 %v3231, %v3279
  %v3281 = vpop.f32.mrf.mxu0
  %v3282 = vadd.f32 %v3233, %v3281
  %3283 = vmatmul.bf16.gmra.mxu0 %v556
  %v3284 = vpop.f32.mrf.mxu0
  %v3285 = vadd.f32 %v3236, %v3284
  %v3286 = vpop.f32.mrf.mxu0
  %v3287 = vadd.f32 %v3238, %v3286
  %3288 = vmatmul.bf16.gmra.mxu0 %v564
  %v3289 = vpop.f32.mrf.mxu0
  %v3290 = vadd.f32 %v3241, %v3289
  %v3291 = vpop.f32.mrf.mxu0
  %v3292 = vadd.f32 %v3243, %v3291
  %3293 = vmatmul.bf16.gmra.mxu0 %v572
  %v3294 = vpop.f32.mrf.mxu0
  %v3295 = vadd.f32 %v3246, %v3294
  %v3296 = vpop.f32.mrf.mxu0
  %v3297 = vadd.f32 %v3248, %v3296
  %3298 = vmatmul.bf16.gmra.mxu0 %v580
  %v3299 = vpop.f32.mrf.mxu0
  %v3300 = vadd.f32 %v3251, %v3299
  %v3301 = vpop.f32.mrf.mxu0
  %v3302 = vadd.f32 %v3253, %v3301
  %3303 = vmatmul.bf16.gmra.mxu0 %v588
  %v3304 = vpop.f32.mrf.mxu0
  %v3305 = vadd.f32 %v3256, %v3304
  %v3306 = vpop.f32.mrf.mxu0
  %v3307 = vadd.f32 %v3258, %v3306
  %3308 = vdwg.mxu0
  %3309 = vmatpush.bf16.msra.mxu0 %v1584
  %3310 = vmatpush.bf16.msra.mxu0 %v1580
  %3311 = vmatpush.bf16.msra.mxu0 %v1576
  %3312 = vmatpush.bf16.msra.mxu0 %v1572
  %3313 = vmatpush.bf16.msra.mxu0 %v1568
  %3314 = vmatpush.bf16.msra.mxu0 %v1564
  %3315 = vmatpush.bf16.msra.mxu0 %v1560
  %3316 = vmatpush.bf16.msra.mxu0 %v1556
  %3317 = vmatmul.bf16.gmra.mxu0 %v533
  %v3318 = vpop.f32.mrf.mxu0
  %v3319 = vadd.f32 %v3270, %v3318
  %v3320 = vpop.f32.mrf.mxu0
  %v3321 = vadd.f32 %v3272, %v3320
  %3322 = vmatmul.bf16.gmra.mxu0 %v541
  %v3323 = vpop.f32.mrf.mxu0
  %v3324 = vadd.f32 %v3275, %v3323
  %v3325 = vpop.f32.mrf.mxu0
  %v3326 = vadd.f32 %v3277, %v3325
  %3327 = vmatmul.bf16.gmra.mxu0 %v549
  %v3328 = vpop.f32.mrf.mxu0
  %v3329 = vadd.f32 %v3280, %v3328
  %v3330 = vpop.f32.mrf.mxu0
  %v3331 = vadd.f32 %v3282, %v3330
  %3332 = vmatmul.bf16.gmra.mxu0 %v557
  %v3333 = vpop.f32.mrf.mxu0
  %v3334 = vadd.f32 %v3285, %v3333
  %v3335 = vpop.f32.mrf.mxu0
  %v3336 = vadd.f32 %v3287, %v3335
  %3337 = vmatmul.bf16.gmra.mxu0 %v565
  %v3338 = vpop.f32.mrf.mxu0
  %v3339 = vadd.f32 %v3290, %v3338
  %v3340 = vpop.f32.mrf.mxu0
  %v3341 = vadd.f32 %v3292, %v3340
  %3342 = vmatmul.bf16.gmra.mxu0 %v573
  %v3343 = vpop.f32.mrf.mxu0
  %v3344 = vadd.f32 %v3295, %v3343
  %v3345 = vpop.f32.mrf.mxu0
  %v3346 = vadd.f32 %v3297, %v3345
  %3347 = vmatmul.bf16.gmra.mxu0 %v581
  %v3348 = vpop.f32.mrf.mxu0
  %v3349 = vadd.f32 %v3300, %v3348
  %v3350 = vpop.f32.mrf.mxu0
  %v3351 = vadd.f32 %v3302, %v3350
  %3352 = vmatmul.bf16.gmra.mxu0 %v589
  %v3353 = vpop.f32.mrf.mxu0
  %v3354 = vadd.f32 %v3305, %v3353
  %v3355 = vpop.f32.mrf.mxu0
  %v3356 = vadd.f32 %v3307, %v3355
  %3357 = vdwg.mxu0
  %3358 = vmatpush.bf16.msra.mxu0 %v1616
  %3359 = vmatpush.bf16.msra.mxu0 %v1612
  %3360 = vmatpush.bf16.msra.mxu0 %v1608
  %3361 = vmatpush.bf16.msra.mxu0 %v1604
  %3362 = vmatpush.bf16.msra.mxu0 %v1600
  %3363 = vmatpush.bf16.msra.mxu0 %v1596
  %3364 = vmatpush.bf16.msra.mxu0 %v1592
  %3365 = vmatpush.bf16.msra.mxu0 %v1588
  %3366 = vmatmul.bf16.gmra.mxu0 %v534
  %v3367 = vpop.f32.mrf.mxu0
  %v3368 = vadd.f32 %v3319, %v3367
  %v3369 = vpop.f32.mrf.mxu0
  %v3370 = vadd.f32 %v3321, %v3369
  %3371 = vmatmul.bf16.gmra.mxu0 %v542
  %v3372 = vpop.f32.mrf.mxu0
  %v3373 = vadd.f32 %v3324, %v3372
  %v3374 = vpop.f32.mrf.mxu0
  %v3375 = vadd.f32 %v3326, %v3374
  %3376 = vmatmul.bf16.gmra.mxu0 %v550
  %v3377 = vpop.f32.mrf.mxu0
  %v3378 = vadd.f32 %v3329, %v3377
  %v3379 = vpop.f32.mrf.mxu0
  %v3380 = vadd.f32 %v3331, %v3379
  %3381 = vmatmul.bf16.gmra.mxu0 %v558
  %v3382 = vpop.f32.mrf.mxu0
  %v3383 = vadd.f32 %v3334, %v3382
  %v3384 = vpop.f32.mrf.mxu0
  %v3385 = vadd.f32 %v3336, %v3384
  %3386 = vmatmul.bf16.gmra.mxu0 %v566
  %v3387 = vpop.f32.mrf.mxu0
  %v3388 = vadd.f32 %v3339, %v3387
  %v3389 = vpop.f32.mrf.mxu0
  %v3390 = vadd.f32 %v3341, %v3389
  %3391 = vmatmul.bf16.gmra.mxu0 %v574
  %v3392 = vpop.f32.mrf.mxu0
  %v3393 = vadd.f32 %v3344, %v3392
  %v3394 = vpop.f32.mrf.mxu0
  %v3395 = vadd.f32 %v3346, %v3394
  %3396 = vmatmul.bf16.gmra.mxu0 %v582
  %v3397 = vpop.f32.mrf.mxu0
  %v3398 = vadd.f32 %v3349, %v3397
  %v3399 = vpop.f32.mrf.mxu0
  %v3400 = vadd.f32 %v3351, %v3399
  %3401 = vmatmul.bf16.gmra.mxu0 %v590
  %v3402 = vpop.f32.mrf.mxu0
  %v3403 = vadd.f32 %v3354, %v3402
  %v3404 = vpop.f32.mrf.mxu0
  %v3405 = vadd.f32 %v3356, %v3404
  %3406 = vdwg.mxu0
  %3407 = vmatpush.bf16.msra.mxu0 %v1648
  %3408 = vmatpush.bf16.msra.mxu0 %v1644
  %3409 = vmatpush.bf16.msra.mxu0 %v1640
  %3410 = vmatpush.bf16.msra.mxu0 %v1636
  %3411 = vmatpush.bf16.msra.mxu0 %v1632
  %3412 = vmatpush.bf16.msra.mxu0 %v1628
  %3413 = vmatpush.bf16.msra.mxu0 %v1624
  %3414 = vmatpush.bf16.msra.mxu0 %v1620
  %3415 = vmatmul.bf16.gmra.mxu0 %v535
  %v3416 = vpop.f32.mrf.mxu0
  %v3417 = vadd.f32 %v3368, %v3416
  %v3418 = vpop.f32.mrf.mxu0
  %v3419 = vadd.f32 %v3370, %v3418
  %3420 = vmatmul.bf16.gmra.mxu0 %v543
  %v3421 = vpop.f32.mrf.mxu0
  %v3422 = vadd.f32 %v3373, %v3421
  %v3423 = vpop.f32.mrf.mxu0
  %v3424 = vadd.f32 %v3375, %v3423
  %3425 = vmatmul.bf16.gmra.mxu0 %v551
  %v3426 = vpop.f32.mrf.mxu0
  %v3427 = vadd.f32 %v3378, %v3426
  %v3428 = vpop.f32.mrf.mxu0
  %v3429 = vadd.f32 %v3380, %v3428
  %3430 = vmatmul.bf16.gmra.mxu0 %v559
  %v3431 = vpop.f32.mrf.mxu0
  %v3432 = vadd.f32 %v3383, %v3431
  %v3433 = vpop.f32.mrf.mxu0
  %v3434 = vadd.f32 %v3385, %v3433
  %3435 = vmatmul.bf16.gmra.mxu0 %v567
  %v3436 = vpop.f32.mrf.mxu0
  %v3437 = vadd.f32 %v3388, %v3436
  %v3438 = vpop.f32.mrf.mxu0
  %v3439 = vadd.f32 %v3390, %v3438
  %3440 = vmatmul.bf16.gmra.mxu0 %v575
  %v3441 = vpop.f32.mrf.mxu0
  %v3442 = vadd.f32 %v3393, %v3441
  %v3443 = vpop.f32.mrf.mxu0
  %v3444 = vadd.f32 %v3395, %v3443
  %3445 = vmatmul.bf16.gmra.mxu0 %v583
  %v3446 = vpop.f32.mrf.mxu0
  %v3447 = vadd.f32 %v3398, %v3446
  %v3448 = vpop.f32.mrf.mxu0
  %v3449 = vadd.f32 %v3400, %v3448
  %3450 = vmatmul.bf16.gmra.mxu0 %v591
  %v3451 = vpop.f32.mrf.mxu0
  %v3452 = vadd.f32 %v3403, %v3451
  %v3453 = vpop.f32.mrf.mxu0
  %v3454 = vadd.f32 %v3405, %v3453
  %3455 = vdwg.mxu0
  %3456 = vmatpush.bf16.msra.mxu0 %v1680
  %3457 = vmatpush.bf16.msra.mxu0 %v1676
  %3458 = vmatpush.bf16.msra.mxu0 %v1672
  %3459 = vmatpush.bf16.msra.mxu0 %v1668
  %3460 = vmatpush.bf16.msra.mxu0 %v1664
  %3461 = vmatpush.bf16.msra.mxu0 %v1660
  %3462 = vmatpush.bf16.msra.mxu0 %v1656
  %3463 = vmatpush.bf16.msra.mxu0 %v1652
  %3464 = vmatmul.bf16.gmra.mxu0 %v536
  %v3465 = vpop.f32.mrf.mxu0
  %v3466 = vadd.f32 %v3417, %v3465
  %v3467 = vpop.f32.mrf.mxu0
  %v3468 = vadd.f32 %v3419, %v3467
  %3469 = vmatmul.bf16.gmra.mxu0 %v544
  %v3470 = vpop.f32.mrf.mxu0
  %v3471 = vadd.f32 %v3422, %v3470
  %v3472 = vpop.f32.mrf.mxu0
  %v3473 = vadd.f32 %v3424, %v3472
  %3474 = vmatmul.bf16.gmra.mxu0 %v552
  %v3475 = vpop.f32.mrf.mxu0
  %v3476 = vadd.f32 %v3427, %v3475
  %v3477 = vpop.f32.mrf.mxu0
  %v3478 = vadd.f32 %v3429, %v3477
  %3479 = vmatmul.bf16.gmra.mxu0 %v560
  %v3480 = vpop.f32.mrf.mxu0
  %v3481 = vadd.f32 %v3432, %v3480
  %v3482 = vpop.f32.mrf.mxu0
  %v3483 = vadd.f32 %v3434, %v3482
  %3484 = vmatmul.bf16.gmra.mxu0 %v568
  %v3485 = vpop.f32.mrf.mxu0
  %v3486 = vadd.f32 %v3437, %v3485
  %v3487 = vpop.f32.mrf.mxu0
  %v3488 = vadd.f32 %v3439, %v3487
  %3489 = vmatmul.bf16.gmra.mxu0 %v576
  %v3490 = vpop.f32.mrf.mxu0
  %v3491 = vadd.f32 %v3442, %v3490
  %v3492 = vpop.f32.mrf.mxu0
  %v3493 = vadd.f32 %v3444, %v3492
  %3494 = vmatmul.bf16.gmra.mxu0 %v584
  %v3495 = vpop.f32.mrf.mxu0
  %v3496 = vadd.f32 %v3447, %v3495
  %v3497 = vpop.f32.mrf.mxu0
  %v3498 = vadd.f32 %v3449, %v3497
  %3499 = vmatmul.bf16.gmra.mxu0 %v592
  %v3500 = vpop.f32.mrf.mxu0
  %v3501 = vadd.f32 %v3452, %v3500
  %v3502 = vpop.f32.mrf.mxu0
  %v3503 = vadd.f32 %v3454, %v3502
  %3504 = vdwg.mxu0
  %v3505 = vadd.f32 %v2290, %v2682
  %v3506 = vadd.f32 %v3505, %v3074
  %v3507 = vadd.f32 %v3506, %v3466
  %3508 = vadd.xlane.f32.xlu0 %v3507
  %v3509 = vpop.xlane.xlu0 %3508
  %v3510 = vadd.f32 %v2292, %v2684
  %v3511 = vadd.f32 %v3510, %v3076
  %v3512 = vadd.f32 %v3511, %v3468
  %3513 = vadd.xlane.f32.xlu0 %v3512
  %v3514 = vpop.xlane.xlu0 %3513
  %v3515 = vadd.f32 %v2295, %v2687
  %v3516 = vadd.f32 %v3515, %v3079
  %v3517 = vadd.f32 %v3516, %v3471
  %3518 = vadd.xlane.f32.xlu0 %v3517
  %v3519 = vpop.xlane.xlu0 %3518
  %v3520 = vadd.f32 %v2297, %v2689
  %v3521 = vadd.f32 %v3520, %v3081
  %v3522 = vadd.f32 %v3521, %v3473
  %3523 = vadd.xlane.f32.xlu0 %v3522
  %v3524 = vpop.xlane.xlu0 %3523
  %v3525 = vadd.f32 %v2300, %v2692
  %v3526 = vadd.f32 %v3525, %v3084
  %v3527 = vadd.f32 %v3526, %v3476
  %3528 = vadd.xlane.f32.xlu0 %v3527
  %v3529 = vpop.xlane.xlu0 %3528
  %v3530 = vadd.f32 %v2302, %v2694
  %v3531 = vadd.f32 %v3530, %v3086
  %v3532 = vadd.f32 %v3531, %v3478
  %3533 = vadd.xlane.f32.xlu0 %v3532
  %v3534 = vpop.xlane.xlu0 %3533
  %v3535 = vadd.f32 %v2305, %v2697
  %v3536 = vadd.f32 %v3535, %v3089
  %v3537 = vadd.f32 %v3536, %v3481
  %3538 = vadd.xlane.f32.xlu0 %v3537
  %v3539 = vpop.xlane.xlu0 %3538
  %v3540 = vadd.f32 %v2307, %v2699
  %v3541 = vadd.f32 %v3540, %v3091
  %v3542 = vadd.f32 %v3541, %v3483
  %3543 = vadd.xlane.f32.xlu0 %v3542
  %v3544 = vpop.xlane.xlu0 %3543
  %v3545 = vadd.f32 %v2310, %v2702
  %v3546 = vadd.f32 %v3545, %v3094
  %v3547 = vadd.f32 %v3546, %v3486
  %3548 = vadd.xlane.f32.xlu0 %v3547
  %v3549 = vpop.xlane.xlu0 %3548
  %v3550 = vadd.f32 %v2312, %v2704
  %v3551 = vadd.f32 %v3550, %v3096
  %v3552 = vadd.f32 %v3551, %v3488
  %3553 = vadd.xlane.f32.xlu0 %v3552
  %v3554 = vpop.xlane.xlu0 %3553
  %v3555 = vadd.f32 %v2315, %v2707
  %v3556 = vadd.f32 %v3555, %v3099
  %v3557 = vadd.f32 %v3556, %v3491
  %3558 = vadd.xlane.f32.xlu0 %v3557
  %v3559 = vpop.xlane.xlu0 %3558
  %v3560 = vadd.f32 %v2317, %v2709
  %v3561 = vadd.f32 %v3560, %v3101
  %v3562 = vadd.f32 %v3561, %v3493
  %3563 = vadd.xlane.f32.xlu0 %v3562
  %v3564 = vpop.xlane.xlu0 %3563
  %v3565 = vadd.f32 %v2320, %v2712
  %v3566 = vadd.f32 %v3565, %v3104
  %v3567 = vadd.f32 %v3566, %v3496
  %3568 = vadd.xlane.f32.xlu0 %v3567
  %v3569 = vpop.xlane.xlu0 %3568
  %v3570 = vadd.f32 %v2322, %v2714
  %v3571 = vadd.f32 %v3570, %v3106
  %v3572 = vadd.f32 %v3571, %v3498
  %3573 = vadd.xlane.f32.xlu0 %v3572
  %v3574 = vpop.xlane.xlu0 %3573
  %v3575 = vadd.f32 %v2325, %v2717
  %v3576 = vadd.f32 %v3575, %v3109
  %v3577 = vadd.f32 %v3576, %v3501
  %3578 = vadd.xlane.f32.xlu0 %v3577
  %v3579 = vpop.xlane.xlu0 %3578
  %v3580 = vadd.f32 %v2327, %v2719
  %v3581 = vadd.f32 %v3580, %v3111
  %v3582 = vadd.f32 %v3581, %v3503
  %3583 = vadd.xlane.f32.xlu0 %v3582
  %v3584 = vpop.xlane.xlu0 %3583
  %v3585 = vmul.f32 %v3509, 0.0025510204
  %v3586 = vmul.f32 %v3514, 0.0025510204
  %v3587 = vmul.f32 %v3519, 0.0025510204
  %v3588 = vmul.f32 %v3524, 0.0025510204
  %v3589 = vmul.f32 %v3529, 0.0025510204
  %v3590 = vmul.f32 %v3534, 0.0025510204
  %v3591 = vmul.f32 %v3539, 0.0025510204
  %v3592 = vmul.f32 %v3544, 0.0025510204
  %v3593 = vmul.f32 %v3549, 0.0025510204
  %v3594 = vmul.f32 %v3554, 0.0025510204
  %v3595 = vmul.f32 %v3559, 0.0025510204
  %v3596 = vmul.f32 %v3564, 0.0025510204
  %v3597 = vmul.f32 %v3569, 0.0025510204
  %v3598 = vmul.f32 %v3574, 0.0025510204
  %v3599 = vmul.f32 %v3579, 0.0025510204
  %v3600 = vmul.f32 %v3584, 0.0025510204
  %v3601 = vsub.f32 %v2290, %v3585
  %v3602 = vsub.f32 %v2682, %v3585
  %v3603 = vsub.f32 %v3074, %v3585
  %v3604 = vsub.f32 %v3466, %v3585
  %v3605 = vsub.f32 %v2292, %v3586
  %v3606 = vsub.f32 %v2684, %v3586
  %v3607 = vsub.f32 %v3076, %v3586
  %v3608 = vsub.f32 %v3468, %v3586
  %v3609 = vsub.f32 %v2295, %v3587
  %v3610 = vsub.f32 %v2687, %v3587
  %v3611 = vsub.f32 %v3079, %v3587
  %v3612 = vsub.f32 %v3471, %v3587
  %v3613 = vsub.f32 %v2297, %v3588
  %v3614 = vsub.f32 %v2689, %v3588
  %v3615 = vsub.f32 %v3081, %v3588
  %v3616 = vsub.f32 %v3473, %v3588
  %v3617 = vsub.f32 %v2300, %v3589
  %v3618 = vsub.f32 %v2692, %v3589
  %v3619 = vsub.f32 %v3084, %v3589
  %v3620 = vsub.f32 %v3476, %v3589
  %v3621 = vsub.f32 %v2302, %v3590
  %v3622 = vsub.f32 %v2694, %v3590
  %v3623 = vsub.f32 %v3086, %v3590
  %v3624 = vsub.f32 %v3478, %v3590
  %v3625 = vsub.f32 %v2305, %v3591
  %v3626 = vsub.f32 %v2697, %v3591
  %v3627 = vsub.f32 %v3089, %v3591
  %v3628 = vsub.f32 %v3481, %v3591
  %v3629 = vsub.f32 %v2307, %v3592
  %v3630 = vsub.f32 %v2699, %v3592
  %v3631 = vsub.f32 %v3091, %v3592
  %v3632 = vsub.f32 %v3483, %v3592
  %v3633 = vsub.f32 %v2310, %v3593
  %v3634 = vsub.f32 %v2702, %v3593
  %v3635 = vsub.f32 %v3094, %v3593
  %v3636 = vsub.f32 %v3486, %v3593
  %v3637 = vsub.f32 %v2312, %v3594
  %v3638 = vsub.f32 %v2704, %v3594
  %v3639 = vsub.f32 %v3096, %v3594
  %v3640 = vsub.f32 %v3488, %v3594
  %v3641 = vsub.f32 %v2315, %v3595
  %v3642 = vsub.f32 %v2707, %v3595
  %v3643 = vsub.f32 %v3099, %v3595
  %v3644 = vsub.f32 %v3491, %v3595
  %v3645 = vsub.f32 %v2317, %v3596
  %v3646 = vsub.f32 %v2709, %v3596
  %v3647 = vsub.f32 %v3101, %v3596
  %v3648 = vsub.f32 %v3493, %v3596
  %v3649 = vsub.f32 %v2320, %v3597
  %v3650 = vsub.f32 %v2712, %v3597
  %v3651 = vsub.f32 %v3104, %v3597
  %v3652 = vsub.f32 %v3496, %v3597
  %v3653 = vsub.f32 %v2322, %v3598
  %v3654 = vsub.f32 %v2714, %v3598
  %v3655 = vsub.f32 %v3106, %v3598
  %v3656 = vsub.f32 %v3498, %v3598
  %v3657 = vsub.f32 %v2325, %v3599
  %v3658 = vsub.f32 %v2717, %v3599
  %v3659 = vsub.f32 %v3109, %v3599
  %v3660 = vsub.f32 %v3501, %v3599
  %v3661 = vsub.f32 %v2327, %v3600
  %v3662 = vsub.f32 %v2719, %v3600
  %v3663 = vsub.f32 %v3111, %v3600
  %v3664 = vsub.f32 %v3503, %v3600
  %v3665 = vmul.f32 %v3601, %v3601
  %v3666 = vmul.f32 %v3602, %v3602
  %v3667 = vmul.f32 %v3603, %v3603
  %v3668 = vmul.f32 %v3604, %v3604
  %v3669 = vmul.f32 %v3605, %v3605
  %v3670 = vmul.f32 %v3606, %v3606
  %v3671 = vmul.f32 %v3607, %v3607
  %v3672 = vmul.f32 %v3608, %v3608
  %v3673 = vmul.f32 %v3609, %v3609
  %v3674 = vmul.f32 %v3610, %v3610
  %v3675 = vmul.f32 %v3611, %v3611
  %v3676 = vmul.f32 %v3612, %v3612
  %v3677 = vmul.f32 %v3613, %v3613
  %v3678 = vmul.f32 %v3614, %v3614
  %v3679 = vmul.f32 %v3615, %v3615
  %v3680 = vmul.f32 %v3616, %v3616
  %v3681 = vmul.f32 %v3617, %v3617
  %v3682 = vmul.f32 %v3618, %v3618
  %v3683 = vmul.f32 %v3619, %v3619
  %v3684 = vmul.f32 %v3620, %v3620
  %v3685 = vmul.f32 %v3621, %v3621
  %v3686 = vmul.f32 %v3622, %v3622
  %v3687 = vmul.f32 %v3623, %v3623
  %v3688 = vmul.f32 %v3624, %v3624
  %v3689 = vmul.f32 %v3625, %v3625
  %v3690 = vmul.f32 %v3626, %v3626
  %v3691 = vmul.f32 %v3627, %v3627
  %v3692 = vmul.f32 %v3628, %v3628
  %v3693 = vmul.f32 %v3629, %v3629
  %v3694 = vmul.f32 %v3630, %v3630
  %v3695 = vmul.f32 %v3631, %v3631
  %v3696 = vmul.f32 %v3632, %v3632
  %v3697 = vmul.f32 %v3633, %v3633
  %v3698 = vmul.f32 %v3634, %v3634
  %v3699 = vmul.f32 %v3635, %v3635
  %v3700 = vmul.f32 %v3636, %v3636
  %v3701 = vmul.f32 %v3637, %v3637
  %v3702 = vmul.f32 %v3638, %v3638
  %v3703 = vmul.f32 %v3639, %v3639
  %v3704 = vmul.f32 %v3640, %v3640
  %v3705 = vmul.f32 %v3641, %v3641
  %v3706 = vmul.f32 %v3642, %v3642
  %v3707 = vmul.f32 %v3643, %v3643
  %v3708 = vmul.f32 %v3644, %v3644
  %v3709 = vmul.f32 %v3645, %v3645
  %v3710 = vmul.f32 %v3646, %v3646
  %v3711 = vmul.f32 %v3647, %v3647
  %v3712 = vmul.f32 %v3648, %v3648
  %v3713 = vmul.f32 %v3649, %v3649
  %v3714 = vmul.f32 %v3650, %v3650
  %v3715 = vmul.f32 %v3651, %v3651
  %v3716 = vmul.f32 %v3652, %v3652
  %v3717 = vmul.f32 %v3653, %v3653
  %v3718 = vmul.f32 %v3654, %v3654
  %v3719 = vmul.f32 %v3655, %v3655
  %v3720 = vmul.f32 %v3656, %v3656
  %v3721 = vmul.f32 %v3657, %v3657
  %v3722 = vmul.f32 %v3658, %v3658
  %v3723 = vmul.f32 %v3659, %v3659
  %v3724 = vmul.f32 %v3660, %v3660
  %v3725 = vmul.f32 %v3661, %v3661
  %v3726 = vmul.f32 %v3662, %v3662
  %v3727 = vmul.f32 %v3663, %v3663
  %v3728 = vmul.f32 %v3664, %v3664
  %v3729 = vadd.f32 %v3665, %v3666
  %v3730 = vadd.f32 %v3729, %v3667
  %v3731 = vadd.f32 %v3730, %v3668
  %3732 = vadd.xlane.f32.xlu0 %v3731
  %v3733 = vpop.xlane.xlu0 %3732
  %v3734 = vadd.f32 %v3669, %v3670
  %v3735 = vadd.f32 %v3734, %v3671
  %v3736 = vadd.f32 %v3735, %v3672
  %3737 = vadd.xlane.f32.xlu0 %v3736
  %v3738 = vpop.xlane.xlu0 %3737
  %v3739 = vadd.f32 %v3673, %v3674
  %v3740 = vadd.f32 %v3739, %v3675
  %v3741 = vadd.f32 %v3740, %v3676
  %3742 = vadd.xlane.f32.xlu0 %v3741
  %v3743 = vpop.xlane.xlu0 %3742
  %v3744 = vadd.f32 %v3677, %v3678
  %v3745 = vadd.f32 %v3744, %v3679
  %v3746 = vadd.f32 %v3745, %v3680
  %3747 = vadd.xlane.f32.xlu0 %v3746
  %v3748 = vpop.xlane.xlu0 %3747
  %v3749 = vadd.f32 %v3681, %v3682
  %v3750 = vadd.f32 %v3749, %v3683
  %v3751 = vadd.f32 %v3750, %v3684
  %3752 = vadd.xlane.f32.xlu0 %v3751
  %v3753 = vpop.xlane.xlu0 %3752
  %v3754 = vadd.f32 %v3685, %v3686
  %v3755 = vadd.f32 %v3754, %v3687
  %v3756 = vadd.f32 %v3755, %v3688
  %3757 = vadd.xlane.f32.xlu0 %v3756
  %v3758 = vpop.xlane.xlu0 %3757
  %v3759 = vadd.f32 %v3689, %v3690
  %v3760 = vadd.f32 %v3759, %v3691
  %v3761 = vadd.f32 %v3760, %v3692
  %3762 = vadd.xlane.f32.xlu0 %v3761
  %v3763 = vpop.xlane.xlu0 %3762
  %v3764 = vadd.f32 %v3693, %v3694
  %v3765 = vadd.f32 %v3764, %v3695
  %v3766 = vadd.f32 %v3765, %v3696
  %3767 = vadd.xlane.f32.xlu0 %v3766
  %v3768 = vpop.xlane.xlu0 %3767
  %v3769 = vadd.f32 %v3697, %v3698
  %v3770 = vadd.f32 %v3769, %v3699
  %v3771 = vadd.f32 %v3770, %v3700
  %3772 = vadd.xlane.f32.xlu0 %v3771
  %v3773 = vpop.xlane.xlu0 %3772
  %v3774 = vadd.f32 %v3701, %v3702
  %v3775 = vadd.f32 %v3774, %v3703
  %v3776 = vadd.f32 %v3775, %v3704
  %3777 = vadd.xlane.f32.xlu0 %v3776
  %v3778 = vpop.xlane.xlu0 %3777
  %v3779 = vadd.f32 %v3705, %v3706
  %v3780 = vadd.f32 %v3779, %v3707
  %v3781 = vadd.f32 %v3780, %v3708
  %3782 = vadd.xlane.f32.xlu0 %v3781
  %v3783 = vpop.xlane.xlu0 %3782
  %v3784 = vadd.f32 %v3709, %v3710
  %v3785 = vadd.f32 %v3784, %v3711
  %v3786 = vadd.f32 %v3785, %v3712
  %3787 = vadd.xlane.f32.xlu0 %v3786
  %v3788 = vpop.xlane.xlu0 %3787
  %v3789 = vadd.f32 %v3713, %v3714
  %v3790 = vadd.f32 %v3789, %v3715
  %v3791 = vadd.f32 %v3790, %v3716
  %3792 = vadd.xlane.f32.xlu0 %v3791
  %v3793 = vpop.xlane.xlu0 %3792
  %v3794 = vadd.f32 %v3717, %v3718
  %v3795 = vadd.f32 %v3794, %v3719
  %v3796 = vadd.f32 %v3795, %v3720
  %3797 = vadd.xlane.f32.xlu0 %v3796
  %v3798 = vpop.xlane.xlu0 %3797
  %v3799 = vadd.f32 %v3721, %v3722
  %v3800 = vadd.f32 %v3799, %v3723
  %v3801 = vadd.f32 %v3800, %v3724
  %3802 = vadd.xlane.f32.xlu0 %v3801
  %v3803 = vpop.xlane.xlu0 %3802
  %v3804 = vadd.f32 %v3725, %v3726
  %v3805 = vadd.f32 %v3804, %v3727
  %v3806 = vadd.f32 %v3805, %v3728
  %3807 = vadd.xlane.f32.xlu0 %v3806
  %v3808 = vpop.xlane.xlu0 %3807
  %v3809 = vmul.f32 %v3585, 120.0
  %v3810 = vmul.f32 %v3586, 120.0
  %v3811 = vmul.f32 %v3587, 120.0
  %v3812 = vmul.f32 %v3588, 120.0
  %v3813 = vmul.f32 %v3589, 120.0
  %v3814 = vmul.f32 %v3590, 120.0
  %v3815 = vmul.f32 %v3591, 120.0
  %v3816 = vmul.f32 %v3592, 120.0
  %v3817 = vmul.f32 %v3593, 120.0
  %v3818 = vmul.f32 %v3594, 120.0
  %v3819 = vmul.f32 %v3595, 120.0
  %v3820 = vmul.f32 %v3596, 120.0
  %v3821 = vmul.f32 %v3597, 120.0
  %v3822 = vmul.f32 %v3598, 120.0
  %v3823 = vmul.f32 %v3599, 120.0
  %v3824 = vmul.f32 %v3600, 120.0
  %v3825 = vmul.f32 %v3809, %v3585
  %v3826 = vmul.f32 %v3810, %v3586
  %v3827 = vmul.f32 %v3811, %v3587
  %v3828 = vmul.f32 %v3812, %v3588
  %v3829 = vmul.f32 %v3813, %v3589
  %v3830 = vmul.f32 %v3814, %v3590
  %v3831 = vmul.f32 %v3815, %v3591
  %v3832 = vmul.f32 %v3816, %v3592
  %v3833 = vmul.f32 %v3817, %v3593
  %v3834 = vmul.f32 %v3818, %v3594
  %v3835 = vmul.f32 %v3819, %v3595
  %v3836 = vmul.f32 %v3820, %v3596
  %v3837 = vmul.f32 %v3821, %v3597
  %v3838 = vmul.f32 %v3822, %v3598
  %v3839 = vmul.f32 %v3823, %v3599
  %v3840 = vmul.f32 %v3824, %v3600
  %v3841 = vsub.f32 %v3733, %v3825
  %v3842 = vsub.f32 %v3738, %v3826
  %v3843 = vsub.f32 %v3743, %v3827
  %v3844 = vsub.f32 %v3748, %v3828
  %v3845 = vsub.f32 %v3753, %v3829
  %v3846 = vsub.f32 %v3758, %v3830
  %v3847 = vsub.f32 %v3763, %v3831
  %v3848 = vsub.f32 %v3768, %v3832
  %v3849 = vsub.f32 %v3773, %v3833
  %v3850 = vsub.f32 %v3778, %v3834
  %v3851 = vsub.f32 %v3783, %v3835
  %v3852 = vsub.f32 %v3788, %v3836
  %v3853 = vsub.f32 %v3793, %v3837
  %v3854 = vsub.f32 %v3798, %v3838
  %v3855 = vsub.f32 %v3803, %v3839
  %v3856 = vsub.f32 %v3808, %v3840
  %v3857 = vmul.f32 %v3841, 0.0025510204
  %v3858 = vmul.f32 %v3842, 0.0025510204
  %v3859 = vmul.f32 %v3843, 0.0025510204
  %v3860 = vmul.f32 %v3844, 0.0025510204
  %v3861 = vmul.f32 %v3845, 0.0025510204
  %v3862 = vmul.f32 %v3846, 0.0025510204
  %v3863 = vmul.f32 %v3847, 0.0025510204
  %v3864 = vmul.f32 %v3848, 0.0025510204
  %v3865 = vmul.f32 %v3849, 0.0025510204
  %v3866 = vmul.f32 %v3850, 0.0025510204
  %v3867 = vmul.f32 %v3851, 0.0025510204
  %v3868 = vmul.f32 %v3852, 0.0025510204
  %v3869 = vmul.f32 %v3853, 0.0025510204
  %v3870 = vmul.f32 %v3854, 0.0025510204
  %v3871 = vmul.f32 %v3855, 0.0025510204
  %v3872 = vmul.f32 %v3856, 0.0025510204
  %v3873 = vld [vmem:[%s2] sm:$0xff]
  %v3874 = vld [vmem:[%s2 + $0x8] sm:$0xff]
  %v3875 = vld [vmem:[%s2 + $0x10] sm:$0xff]
  %v3876 = vld [vmem:[%s2 + $0x18] sm:$0xff]
  %v3877 = vld [vmem:[%s2 + $0x20] sm:$0xff]
  %v3878 = vld [vmem:[%s2 + $0x28] sm:$0xff]
  %v3879 = vld [vmem:[%s2 + $0x30] sm:$0xff]
  %v3880 = vld [vmem:[%s2 + $0x38] sm:$0xff]
  %v3881 = vld [vmem:[%s2 + $0x40] sm:$0xff]
  %v3882 = vld [vmem:[%s2 + $0x48] sm:$0xff]
  %v3883 = vld [vmem:[%s2 + $0x50] sm:$0xff]
  %v3884 = vld [vmem:[%s2 + $0x58] sm:$0xff]
  %v3885 = vld [vmem:[%s2 + $0x60] sm:$0xff]
  %v3886 = vld [vmem:[%s2 + $0x68] sm:$0xff]
  %v3887 = vld [vmem:[%s2 + $0x70] sm:$0xff]
  %v3888 = vld [vmem:[%s2 + $0x78] sm:$0xff]
  %v3889 = vadd.f32 %v3857, 1e-05
  %v3890 = vadd.f32 %v3858, 1e-05
  %v3891 = vadd.f32 %v3859, 1e-05
  %v3892 = vadd.f32 %v3860, 1e-05
  %v3893 = vadd.f32 %v3861, 1e-05
  %v3894 = vadd.f32 %v3862, 1e-05
  %v3895 = vadd.f32 %v3863, 1e-05
  %v3896 = vadd.f32 %v3864, 1e-05
  %v3897 = vadd.f32 %v3865, 1e-05
  %v3898 = vadd.f32 %v3866, 1e-05
  %v3899 = vadd.f32 %v3867, 1e-05
  %v3900 = vadd.f32 %v3868, 1e-05
  %v3901 = vadd.f32 %v3869, 1e-05
  %v3902 = vadd.f32 %v3870, 1e-05
  %v3903 = vadd.f32 %v3871, 1e-05
  %v3904 = vadd.f32 %v3872, 1e-05
  %v3905 = vrsqrt.pop %v3889
  %v3906 = vmul.f32 %v3905, %v3889
  %v3907 = vmul.f32 %v3906, %v3905
  %v3908 = vmul.f32 0.5, %v3907
  %v3909 = vsub.f32 1.5, %v3908
  %v3910 = vmul.f32 %v3905, %v3909
  %vm3911 = vweird.f32 %v3889
  %vm3912 = vweird.f32 %v3905
  %vm3913 = vmor %vm3911, %vm3912
  %v3914 = vsel %vm3913, %v3905, %v3910
  %v3915 = vrsqrt.pop %v3890
  %v3916 = vmul.f32 %v3915, %v3890
  %v3917 = vmul.f32 %v3916, %v3915
  %v3918 = vmul.f32 0.5, %v3917
  %v3919 = vsub.f32 1.5, %v3918
  %v3920 = vmul.f32 %v3915, %v3919
  %vm3921 = vweird.f32 %v3890
  %vm3922 = vweird.f32 %v3915
  %vm3923 = vmor %vm3921, %vm3922
  %v3924 = vsel %vm3923, %v3915, %v3920
  %v3925 = vrsqrt.pop %v3891
  %v3926 = vmul.f32 %v3925, %v3891
  %v3927 = vmul.f32 %v3926, %v3925
  %v3928 = vmul.f32 0.5, %v3927
  %v3929 = vsub.f32 1.5, %v3928
  %v3930 = vmul.f32 %v3925, %v3929
  %vm3931 = vweird.f32 %v3891
  %vm3932 = vweird.f32 %v3925
  %vm3933 = vmor %vm3931, %vm3932
  %v3934 = vsel %vm3933, %v3925, %v3930
  %v3935 = vrsqrt.pop %v3892
  %v3936 = vmul.f32 %v3935, %v3892
  %v3937 = vmul.f32 %v3936, %v3935
  %v3938 = vmul.f32 0.5, %v3937
  %v3939 = vsub.f32 1.5, %v3938
  %v3940 = vmul.f32 %v3935, %v3939
  %vm3941 = vweird.f32 %v3892
  %vm3942 = vweird.f32 %v3935
  %vm3943 = vmor %vm3941, %vm3942
  %v3944 = vsel %vm3943, %v3935, %v3940
  %v3945 = vrsqrt.pop %v3893
  %v3946 = vmul.f32 %v3945, %v3893
  %v3947 = vmul.f32 %v3946, %v3945
  %v3948 = vmul.f32 0.5, %v3947
  %v3949 = vsub.f32 1.5, %v3948
  %v3950 = vmul.f32 %v3945, %v3949
  %vm3951 = vweird.f32 %v3893
  %vm3952 = vweird.f32 %v3945
  %vm3953 = vmor %vm3951, %vm3952
  %v3954 = vsel %vm3953, %v3945, %v3950
  %v3955 = vrsqrt.pop %v3894
  %v3956 = vmul.f32 %v3955, %v3894
  %v3957 = vmul.f32 %v3956, %v3955
  %v3958 = vmul.f32 0.5, %v3957
  %v3959 = vsub.f32 1.5, %v3958
  %v3960 = vmul.f32 %v3955, %v3959
  %vm3961 = vweird.f32 %v3894
  %vm3962 = vweird.f32 %v3955
  %vm3963 = vmor %vm3961, %vm3962
  %v3964 = vsel %vm3963, %v3955, %v3960
  %v3965 = vrsqrt.pop %v3895
  %v3966 = vmul.f32 %v3965, %v3895
  %v3967 = vmul.f32 %v3966, %v3965
  %v3968 = vmul.f32 0.5, %v3967
  %v3969 = vsub.f32 1.5, %v3968
  %v3970 = vmul.f32 %v3965, %v3969
  %vm3971 = vweird.f32 %v3895
  %vm3972 = vweird.f32 %v3965
  %vm3973 = vmor %vm3971, %vm3972
  %v3974 = vsel %vm3973, %v3965, %v3970
  %v3975 = vrsqrt.pop %v3896
  %v3976 = vmul.f32 %v3975, %v3896
  %v3977 = vmul.f32 %v3976, %v3975
  %v3978 = vmul.f32 0.5, %v3977
  %v3979 = vsub.f32 1.5, %v3978
  %v3980 = vmul.f32 %v3975, %v3979
  %vm3981 = vweird.f32 %v3896
  %vm3982 = vweird.f32 %v3975
  %vm3983 = vmor %vm3981, %vm3982
  %v3984 = vsel %vm3983, %v3975, %v3980
  %v3985 = vrsqrt.pop %v3897
  %v3986 = vmul.f32 %v3985, %v3897
  %v3987 = vmul.f32 %v3986, %v3985
  %v3988 = vmul.f32 0.5, %v3987
  %v3989 = vsub.f32 1.5, %v3988
  %v3990 = vmul.f32 %v3985, %v3989
  %vm3991 = vweird.f32 %v3897
  %vm3992 = vweird.f32 %v3985
  %vm3993 = vmor %vm3991, %vm3992
  %v3994 = vsel %vm3993, %v3985, %v3990
  %v3995 = vrsqrt.pop %v3898
  %v3996 = vmul.f32 %v3995, %v3898
  %v3997 = vmul.f32 %v3996, %v3995
  %v3998 = vmul.f32 0.5, %v3997
  %v3999 = vsub.f32 1.5, %v3998
  %v4000 = vmul.f32 %v3995, %v3999
  %vm4001 = vweird.f32 %v3898
  %vm4002 = vweird.f32 %v3995
  %vm4003 = vmor %vm4001, %vm4002
  %v4004 = vsel %vm4003, %v3995, %v4000
  %v4005 = vrsqrt.pop %v3899
  %v4006 = vmul.f32 %v4005, %v3899
  %v4007 = vmul.f32 %v4006, %v4005
  %v4008 = vmul.f32 0.5, %v4007
  %v4009 = vsub.f32 1.5, %v4008
  %v4010 = vmul.f32 %v4005, %v4009
  %vm4011 = vweird.f32 %v3899
  %vm4012 = vweird.f32 %v4005
  %vm4013 = vmor %vm4011, %vm4012
  %v4014 = vsel %vm4013, %v4005, %v4010
  %v4015 = vrsqrt.pop %v3900
  %v4016 = vmul.f32 %v4015, %v3900
  %v4017 = vmul.f32 %v4016, %v4015
  %v4018 = vmul.f32 0.5, %v4017
  %v4019 = vsub.f32 1.5, %v4018
  %v4020 = vmul.f32 %v4015, %v4019
  %vm4021 = vweird.f32 %v3900
  %vm4022 = vweird.f32 %v4015
  %vm4023 = vmor %vm4021, %vm4022
  %v4024 = vsel %vm4023, %v4015, %v4020
  %v4025 = vrsqrt.pop %v3901
  %v4026 = vmul.f32 %v4025, %v3901
  %v4027 = vmul.f32 %v4026, %v4025
  %v4028 = vmul.f32 0.5, %v4027
  %v4029 = vsub.f32 1.5, %v4028
  %v4030 = vmul.f32 %v4025, %v4029
  %vm4031 = vweird.f32 %v3901
  %vm4032 = vweird.f32 %v4025
  %vm4033 = vmor %vm4031, %vm4032
  %v4034 = vsel %vm4033, %v4025, %v4030
  %v4035 = vrsqrt.pop %v3902
  %v4036 = vmul.f32 %v4035, %v3902
  %v4037 = vmul.f32 %v4036, %v4035
  %v4038 = vmul.f32 0.5, %v4037
  %v4039 = vsub.f32 1.5, %v4038
  %v4040 = vmul.f32 %v4035, %v4039
  %vm4041 = vweird.f32 %v3902
  %vm4042 = vweird.f32 %v4035
  %vm4043 = vmor %vm4041, %vm4042
  %v4044 = vsel %vm4043, %v4035, %v4040
  %v4045 = vrsqrt.pop %v3903
  %v4046 = vmul.f32 %v4045, %v3903
  %v4047 = vmul.f32 %v4046, %v4045
  %v4048 = vmul.f32 0.5, %v4047
  %v4049 = vsub.f32 1.5, %v4048
  %v4050 = vmul.f32 %v4045, %v4049
  %vm4051 = vweird.f32 %v3903
  %vm4052 = vweird.f32 %v4045
  %vm4053 = vmor %vm4051, %vm4052
  %v4054 = vsel %vm4053, %v4045, %v4050
  %v4055 = vrsqrt.pop %v3904
  %v4056 = vmul.f32 %v4055, %v3904
  %v4057 = vmul.f32 %v4056, %v4055
  %v4058 = vmul.f32 0.5, %v4057
  %v4059 = vsub.f32 1.5, %v4058
  %v4060 = vmul.f32 %v4055, %v4059
  %vm4061 = vweird.f32 %v3904
  %vm4062 = vweird.f32 %v4055
  %vm4063 = vmor %vm4061, %vm4062
  %v4064 = vsel %vm4063, %v4055, %v4060
  %v4065 = vmul.f32 %v3873, %v3914
  %v4066 = vmul.f32 %v3874, %v3924
  %v4067 = vmul.f32 %v3875, %v3934
  %v4068 = vmul.f32 %v3876, %v3944
  %v4069 = vmul.f32 %v3877, %v3954
  %v4070 = vmul.f32 %v3878, %v3964
  %v4071 = vmul.f32 %v3879, %v3974
  %v4072 = vmul.f32 %v3880, %v3984
  %v4073 = vmul.f32 %v3881, %v3994
  %v4074 = vmul.f32 %v3882, %v4004
  %v4075 = vmul.f32 %v3883, %v4014
  %v4076 = vmul.f32 %v3884, %v4024
  %v4077 = vmul.f32 %v3885, %v4034
  %v4078 = vmul.f32 %v3886, %v4044
  %v4079 = vmul.f32 %v3887, %v4054
  %v4080 = vmul.f32 %v3888, %v4064
  %v4081 = vld [vmem:[%s3] sm:$0xff]
  %v4082 = vld [vmem:[%s3 + $0x8] sm:$0xff]
  %v4083 = vld [vmem:[%s3 + $0x10] sm:$0xff]
  %v4084 = vld [vmem:[%s3 + $0x18] sm:$0xff]
  %v4085 = vld [vmem:[%s3 + $0x20] sm:$0xff]
  %v4086 = vld [vmem:[%s3 + $0x28] sm:$0xff]
  %v4087 = vld [vmem:[%s3 + $0x30] sm:$0xff]
  %v4088 = vld [vmem:[%s3 + $0x38] sm:$0xff]
  %v4089 = vld [vmem:[%s3 + $0x40] sm:$0xff]
  %v4090 = vld [vmem:[%s3 + $0x48] sm:$0xff]
  %v4091 = vld [vmem:[%s3 + $0x50] sm:$0xff]
  %v4092 = vld [vmem:[%s3 + $0x58] sm:$0xff]
  %v4093 = vld [vmem:[%s3 + $0x60] sm:$0xff]
  %v4094 = vld [vmem:[%s3 + $0x68] sm:$0xff]
  %v4095 = vld [vmem:[%s3 + $0x70] sm:$0xff]
  %v4096 = vld [vmem:[%s3 + $0x78] sm:$0xff]
  %v4097 = vmul.f32 %v3585, %v4065
  %v4098 = vmul.f32 %v3586, %v4066
  %v4099 = vmul.f32 %v3587, %v4067
  %v4100 = vmul.f32 %v3588, %v4068
  %v4101 = vmul.f32 %v3589, %v4069
  %v4102 = vmul.f32 %v3590, %v4070
  %v4103 = vmul.f32 %v3591, %v4071
  %v4104 = vmul.f32 %v3592, %v4072
  %v4105 = vmul.f32 %v3593, %v4073
  %v4106 = vmul.f32 %v3594, %v4074
  %v4107 = vmul.f32 %v3595, %v4075
  %v4108 = vmul.f32 %v3596, %v4076
  %v4109 = vmul.f32 %v3597, %v4077
  %v4110 = vmul.f32 %v3598, %v4078
  %v4111 = vmul.f32 %v3599, %v4079
  %v4112 = vmul.f32 %v3600, %v4080
  %v4113 = vsub.f32 %v4081, %v4097
  %v4114 = vsub.f32 %v4082, %v4098
  %v4115 = vsub.f32 %v4083, %v4099
  %v4116 = vsub.f32 %v4084, %v4100
  %v4117 = vsub.f32 %v4085, %v4101
  %v4118 = vsub.f32 %v4086, %v4102
  %v4119 = vsub.f32 %v4087, %v4103
  %v4120 = vsub.f32 %v4088, %v4104
  %v4121 = vsub.f32 %v4089, %v4105
  %v4122 = vsub.f32 %v4090, %v4106
  %v4123 = vsub.f32 %v4091, %v4107
  %v4124 = vsub.f32 %v4092, %v4108
  %v4125 = vsub.f32 %v4093, %v4109
  %v4126 = vsub.f32 %v4094, %v4110
  %v4127 = vsub.f32 %v4095, %v4111
  %v4128 = vsub.f32 %v4096, %v4112
  %4130 = vset.pattern.permute.xlu0 0
  %4131 = vperm.xlu0 %4130, %v4065
  %v4132 = vpop.permute.xlu0 %4131
  %4135 = vset.pattern.permute.xlu0 0
  %4136 = vperm.xlu0 %4135, %v4066
  %v4137 = vpop.permute.xlu0 %4136
  %4140 = vset.pattern.permute.xlu0 0
  %4141 = vperm.xlu0 %4140, %v4067
  %v4142 = vpop.permute.xlu0 %4141
  %4145 = vset.pattern.permute.xlu0 0
  %4146 = vperm.xlu0 %4145, %v4068
  %v4147 = vpop.permute.xlu0 %4146
  %4150 = vset.pattern.permute.xlu0 0
  %4151 = vperm.xlu0 %4150, %v4069
  %v4152 = vpop.permute.xlu0 %4151
  %4155 = vset.pattern.permute.xlu0 0
  %4156 = vperm.xlu0 %4155, %v4070
  %v4157 = vpop.permute.xlu0 %4156
  %4160 = vset.pattern.permute.xlu0 0
  %4161 = vperm.xlu0 %4160, %v4071
  %v4162 = vpop.permute.xlu0 %4161
  %4165 = vset.pattern.permute.xlu0 0
  %4166 = vperm.xlu0 %4165, %v4072
  %v4167 = vpop.permute.xlu0 %4166
  %4170 = vset.pattern.permute.xlu0 0
  %4171 = vperm.xlu0 %4170, %v4073
  %v4172 = vpop.permute.xlu0 %4171
  %4175 = vset.pattern.permute.xlu0 0
  %4176 = vperm.xlu0 %4175, %v4074
  %v4177 = vpop.permute.xlu0 %4176
  %4180 = vset.pattern.permute.xlu0 0
  %4181 = vperm.xlu0 %4180, %v4075
  %v4182 = vpop.permute.xlu0 %4181
  %4185 = vset.pattern.permute.xlu0 0
  %4186 = vperm.xlu0 %4185, %v4076
  %v4187 = vpop.permute.xlu0 %4186
  %4190 = vset.pattern.permute.xlu0 0
  %4191 = vperm.xlu0 %4190, %v4077
  %v4192 = vpop.permute.xlu0 %4191
  %4195 = vset.pattern.permute.xlu0 0
  %4196 = vperm.xlu0 %4195, %v4078
  %v4197 = vpop.permute.xlu0 %4196
  %4200 = vset.pattern.permute.xlu0 0
  %4201 = vperm.xlu0 %4200, %v4079
  %v4202 = vpop.permute.xlu0 %4201
  %4205 = vset.pattern.permute.xlu0 0
  %4206 = vperm.xlu0 %4205, %v4080
  %v4207 = vpop.permute.xlu0 %4206
  %v4209 = vmul.f32 %v2290, %v4132
  %v4210 = vmul.f32 %v2682, %v4132
  %v4211 = vmul.f32 %v3074, %v4132
  %v4212 = vmul.f32 %v3466, %v4132
  %v4213 = vmul.f32 %v2292, %v4137
  %v4214 = vmul.f32 %v2684, %v4137
  %v4215 = vmul.f32 %v3076, %v4137
  %v4216 = vmul.f32 %v3468, %v4137
  %v4217 = vmul.f32 %v2295, %v4142
  %v4218 = vmul.f32 %v2687, %v4142
  %v4219 = vmul.f32 %v3079, %v4142
  %v4220 = vmul.f32 %v3471, %v4142
  %v4221 = vmul.f32 %v2297, %v4147
  %v4222 = vmul.f32 %v2689, %v4147
  %v4223 = vmul.f32 %v3081, %v4147
  %v4224 = vmul.f32 %v3473, %v4147
  %v4225 = vmul.f32 %v2300, %v4152
  %v4226 = vmul.f32 %v2692, %v4152
  %v4227 = vmul.f32 %v3084, %v4152
  %v4228 = vmul.f32 %v3476, %v4152
  %v4229 = vmul.f32 %v2302, %v4157
  %v4230 = vmul.f32 %v2694, %v4157
  %v4231 = vmul.f32 %v3086, %v4157
  %v4232 = vmul.f32 %v3478, %v4157
  %v4233 = vmul.f32 %v2305, %v4162
  %v4234 = vmul.f32 %v2697, %v4162
  %v4235 = vmul.f32 %v3089, %v4162
  %v4236 = vmul.f32 %v3481, %v4162
  %v4237 = vmul.f32 %v2307, %v4167
  %v4238 = vmul.f32 %v2699, %v4167
  %v4239 = vmul.f32 %v3091, %v4167
  %v4240 = vmul.f32 %v3483, %v4167
  %v4241 = vmul.f32 %v2310, %v4172
  %v4242 = vmul.f32 %v2702, %v4172
  %v4243 = vmul.f32 %v3094, %v4172
  %v4244 = vmul.f32 %v3486, %v4172
  %v4245 = vmul.f32 %v2312, %v4177
  %v4246 = vmul.f32 %v2704, %v4177
  %v4247 = vmul.f32 %v3096, %v4177
  %v4248 = vmul.f32 %v3488, %v4177
  %v4249 = vmul.f32 %v2315, %v4182
  %v4250 = vmul.f32 %v2707, %v4182
  %v4251 = vmul.f32 %v3099, %v4182
  %v4252 = vmul.f32 %v3491, %v4182
  %v4253 = vmul.f32 %v2317, %v4187
  %v4254 = vmul.f32 %v2709, %v4187
  %v4255 = vmul.f32 %v3101, %v4187
  %v4256 = vmul.f32 %v3493, %v4187
  %v4257 = vmul.f32 %v2320, %v4192
  %v4258 = vmul.f32 %v2712, %v4192
  %v4259 = vmul.f32 %v3104, %v4192
  %v4260 = vmul.f32 %v3496, %v4192
  %v4261 = vmul.f32 %v2322, %v4197
  %v4262 = vmul.f32 %v2714, %v4197
  %v4263 = vmul.f32 %v3106, %v4197
  %v4264 = vmul.f32 %v3498, %v4197
  %v4265 = vmul.f32 %v2325, %v4202
  %v4266 = vmul.f32 %v2717, %v4202
  %v4267 = vmul.f32 %v3109, %v4202
  %v4268 = vmul.f32 %v3501, %v4202
  %v4269 = vmul.f32 %v2327, %v4207
  %v4270 = vmul.f32 %v2719, %v4207
  %v4271 = vmul.f32 %v3111, %v4207
  %v4272 = vmul.f32 %v3503, %v4207
  %4274 = vset.pattern.permute.xlu0 0
  %4275 = vperm.xlu0 %4274, %v4113
  %v4276 = vpop.permute.xlu0 %4275
  %4279 = vset.pattern.permute.xlu0 0
  %4280 = vperm.xlu0 %4279, %v4114
  %v4281 = vpop.permute.xlu0 %4280
  %4284 = vset.pattern.permute.xlu0 0
  %4285 = vperm.xlu0 %4284, %v4115
  %v4286 = vpop.permute.xlu0 %4285
  %4289 = vset.pattern.permute.xlu0 0
  %4290 = vperm.xlu0 %4289, %v4116
  %v4291 = vpop.permute.xlu0 %4290
  %4294 = vset.pattern.permute.xlu0 0
  %4295 = vperm.xlu0 %4294, %v4117
  %v4296 = vpop.permute.xlu0 %4295
  %4299 = vset.pattern.permute.xlu0 0
  %4300 = vperm.xlu0 %4299, %v4118
  %v4301 = vpop.permute.xlu0 %4300
  %4304 = vset.pattern.permute.xlu0 0
  %4305 = vperm.xlu0 %4304, %v4119
  %v4306 = vpop.permute.xlu0 %4305
  %4309 = vset.pattern.permute.xlu0 0
  %4310 = vperm.xlu0 %4309, %v4120
  %v4311 = vpop.permute.xlu0 %4310
  %4314 = vset.pattern.permute.xlu0 0
  %4315 = vperm.xlu0 %4314, %v4121
  %v4316 = vpop.permute.xlu0 %4315
  %4319 = vset.pattern.permute.xlu0 0
  %4320 = vperm.xlu0 %4319, %v4122
  %v4321 = vpop.permute.xlu0 %4320
  %4324 = vset.pattern.permute.xlu0 0
  %4325 = vperm.xlu0 %4324, %v4123
  %v4326 = vpop.permute.xlu0 %4325
  %4329 = vset.pattern.permute.xlu0 0
  %4330 = vperm.xlu0 %4329, %v4124
  %v4331 = vpop.permute.xlu0 %4330
  %4334 = vset.pattern.permute.xlu0 0
  %4335 = vperm.xlu0 %4334, %v4125
  %v4336 = vpop.permute.xlu0 %4335
  %4339 = vset.pattern.permute.xlu0 0
  %4340 = vperm.xlu0 %4339, %v4126
  %v4341 = vpop.permute.xlu0 %4340
  %4344 = vset.pattern.permute.xlu0 0
  %4345 = vperm.xlu0 %4344, %v4127
  %v4346 = vpop.permute.xlu0 %4345
  %4349 = vset.pattern.permute.xlu0 0
  %4350 = vperm.xlu0 %4349, %v4128
  %v4351 = vpop.permute.xlu0 %4350
  %v4353 = vadd.f32 %v4209, %v4276
  %v4354 = vadd.f32 %v4210, %v4276
  %v4355 = vadd.f32 %v4211, %v4276
  %v4356 = vadd.f32 %v4212, %v4276
  %v4357 = vadd.f32 %v4213, %v4281
  %v4358 = vadd.f32 %v4214, %v4281
  %v4359 = vadd.f32 %v4215, %v4281
  %v4360 = vadd.f32 %v4216, %v4281
  %v4361 = vadd.f32 %v4217, %v4286
  %v4362 = vadd.f32 %v4218, %v4286
  %v4363 = vadd.f32 %v4219, %v4286
  %v4364 = vadd.f32 %v4220, %v4286
  %v4365 = vadd.f32 %v4221, %v4291
  %v4366 = vadd.f32 %v4222, %v4291
  %v4367 = vadd.f32 %v4223, %v4291
  %v4368 = vadd.f32 %v4224, %v4291
  %v4369 = vadd.f32 %v4225, %v4296
  %v4370 = vadd.f32 %v4226, %v4296
  %v4371 = vadd.f32 %v4227, %v4296
  %v4372 = vadd.f32 %v4228, %v4296
  %v4373 = vadd.f32 %v4229, %v4301
  %v4374 = vadd.f32 %v4230, %v4301
  %v4375 = vadd.f32 %v4231, %v4301
  %v4376 = vadd.f32 %v4232, %v4301
  %v4377 = vadd.f32 %v4233, %v4306
  %v4378 = vadd.f32 %v4234, %v4306
  %v4379 = vadd.f32 %v4235, %v4306
  %v4380 = vadd.f32 %v4236, %v4306
  %v4381 = vadd.f32 %v4237, %v4311
  %v4382 = vadd.f32 %v4238, %v4311
  %v4383 = vadd.f32 %v4239, %v4311
  %v4384 = vadd.f32 %v4240, %v4311
  %v4385 = vadd.f32 %v4241, %v4316
  %v4386 = vadd.f32 %v4242, %v4316
  %v4387 = vadd.f32 %v4243, %v4316
  %v4388 = vadd.f32 %v4244, %v4316
  %v4389 = vadd.f32 %v4245, %v4321
  %v4390 = vadd.f32 %v4246, %v4321
  %v4391 = vadd.f32 %v4247, %v4321
  %v4392 = vadd.f32 %v4248, %v4321
  %v4393 = vadd.f32 %v4249, %v4326
  %v4394 = vadd.f32 %v4250, %v4326
  %v4395 = vadd.f32 %v4251, %v4326
  %v4396 = vadd.f32 %v4252, %v4326
  %v4397 = vadd.f32 %v4253, %v4331
  %v4398 = vadd.f32 %v4254, %v4331
  %v4399 = vadd.f32 %v4255, %v4331
  %v4400 = vadd.f32 %v4256, %v4331
  %v4401 = vadd.f32 %v4257, %v4336
  %v4402 = vadd.f32 %v4258, %v4336
  %v4403 = vadd.f32 %v4259, %v4336
  %v4404 = vadd.f32 %v4260, %v4336
  %v4405 = vadd.f32 %v4261, %v4341
  %v4406 = vadd.f32 %v4262, %v4341
  %v4407 = vadd.f32 %v4263, %v4341
  %v4408 = vadd.f32 %v4264, %v4341
  %v4409 = vadd.f32 %v4265, %v4346
  %v4410 = vadd.f32 %v4266, %v4346
  %v4411 = vadd.f32 %v4267, %v4346
  %v4412 = vadd.f32 %v4268, %v4346
  %v4413 = vadd.f32 %v4269, %v4351
  %v4414 = vadd.f32 %v4270, %v4351
  %v4415 = vadd.f32 %v4271, %v4351
  %v4416 = vadd.f32 %v4272, %v4351
  %v4417 = vmul.f32 %v4353, 0.2
  %v4418 = vmul.f32 %v4354, 0.2
  %v4419 = vmul.f32 %v4355, 0.2
  %v4420 = vmul.f32 %v4356, 0.2
  %v4421 = vmul.f32 %v4357, 0.2
  %v4422 = vmul.f32 %v4358, 0.2
  %v4423 = vmul.f32 %v4359, 0.2
  %v4424 = vmul.f32 %v4360, 0.2
  %v4425 = vmul.f32 %v4361, 0.2
  %v4426 = vmul.f32 %v4362, 0.2
  %v4427 = vmul.f32 %v4363, 0.2
  %v4428 = vmul.f32 %v4364, 0.2
  %v4429 = vmul.f32 %v4365, 0.2
  %v4430 = vmul.f32 %v4366, 0.2
  %v4431 = vmul.f32 %v4367, 0.2
  %v4432 = vmul.f32 %v4368, 0.2
  %v4433 = vmul.f32 %v4369, 0.2
  %v4434 = vmul.f32 %v4370, 0.2
  %v4435 = vmul.f32 %v4371, 0.2
  %v4436 = vmul.f32 %v4372, 0.2
  %v4437 = vmul.f32 %v4373, 0.2
  %v4438 = vmul.f32 %v4374, 0.2
  %v4439 = vmul.f32 %v4375, 0.2
  %v4440 = vmul.f32 %v4376, 0.2
  %v4441 = vmul.f32 %v4377, 0.2
  %v4442 = vmul.f32 %v4378, 0.2
  %v4443 = vmul.f32 %v4379, 0.2
  %v4444 = vmul.f32 %v4380, 0.2
  %v4445 = vmul.f32 %v4381, 0.2
  %v4446 = vmul.f32 %v4382, 0.2
  %v4447 = vmul.f32 %v4383, 0.2
  %v4448 = vmul.f32 %v4384, 0.2
  %v4449 = vmul.f32 %v4385, 0.2
  %v4450 = vmul.f32 %v4386, 0.2
  %v4451 = vmul.f32 %v4387, 0.2
  %v4452 = vmul.f32 %v4388, 0.2
  %v4453 = vmul.f32 %v4389, 0.2
  %v4454 = vmul.f32 %v4390, 0.2
  %v4455 = vmul.f32 %v4391, 0.2
  %v4456 = vmul.f32 %v4392, 0.2
  %v4457 = vmul.f32 %v4393, 0.2
  %v4458 = vmul.f32 %v4394, 0.2
  %v4459 = vmul.f32 %v4395, 0.2
  %v4460 = vmul.f32 %v4396, 0.2
  %v4461 = vmul.f32 %v4397, 0.2
  %v4462 = vmul.f32 %v4398, 0.2
  %v4463 = vmul.f32 %v4399, 0.2
  %v4464 = vmul.f32 %v4400, 0.2
  %v4465 = vmul.f32 %v4401, 0.2
  %v4466 = vmul.f32 %v4402, 0.2
  %v4467 = vmul.f32 %v4403, 0.2
  %v4468 = vmul.f32 %v4404, 0.2
  %v4469 = vmul.f32 %v4405, 0.2
  %v4470 = vmul.f32 %v4406, 0.2
  %v4471 = vmul.f32 %v4407, 0.2
  %v4472 = vmul.f32 %v4408, 0.2
  %v4473 = vmul.f32 %v4409, 0.2
  %v4474 = vmul.f32 %v4410, 0.2
  %v4475 = vmul.f32 %v4411, 0.2
  %v4476 = vmul.f32 %v4412, 0.2
  %v4477 = vmul.f32 %v4413, 0.2
  %v4478 = vmul.f32 %v4414, 0.2
  %v4479 = vmul.f32 %v4415, 0.2
  %v4480 = vmul.f32 %v4416, 0.2
  %v4481 = vmax.f32 %v4353, %v4417
  %v4482 = vmax.f32 %v4354, %v4418
  %v4483 = vmax.f32 %v4355, %v4419
  %v4484 = vmax.f32 %v4356, %v4420
  %v4485 = vmax.f32 %v4357, %v4421
  %v4486 = vmax.f32 %v4358, %v4422
  %v4487 = vmax.f32 %v4359, %v4423
  %v4488 = vmax.f32 %v4360, %v4424
  %v4489 = vmax.f32 %v4361, %v4425
  %v4490 = vmax.f32 %v4362, %v4426
  %v4491 = vmax.f32 %v4363, %v4427
  %v4492 = vmax.f32 %v4364, %v4428
  %v4493 = vmax.f32 %v4365, %v4429
  %v4494 = vmax.f32 %v4366, %v4430
  %v4495 = vmax.f32 %v4367, %v4431
  %v4496 = vmax.f32 %v4368, %v4432
  %v4497 = vmax.f32 %v4369, %v4433
  %v4498 = vmax.f32 %v4370, %v4434
  %v4499 = vmax.f32 %v4371, %v4435
  %v4500 = vmax.f32 %v4372, %v4436
  %v4501 = vmax.f32 %v4373, %v4437
  %v4502 = vmax.f32 %v4374, %v4438
  %v4503 = vmax.f32 %v4375, %v4439
  %v4504 = vmax.f32 %v4376, %v4440
  %v4505 = vmax.f32 %v4377, %v4441
  %v4506 = vmax.f32 %v4378, %v4442
  %v4507 = vmax.f32 %v4379, %v4443
  %v4508 = vmax.f32 %v4380, %v4444
  %v4509 = vmax.f32 %v4381, %v4445
  %v4510 = vmax.f32 %v4382, %v4446
  %v4511 = vmax.f32 %v4383, %v4447
  %v4512 = vmax.f32 %v4384, %v4448
  %v4513 = vmax.f32 %v4385, %v4449
  %v4514 = vmax.f32 %v4386, %v4450
  %v4515 = vmax.f32 %v4387, %v4451
  %v4516 = vmax.f32 %v4388, %v4452
  %v4517 = vmax.f32 %v4389, %v4453
  %v4518 = vmax.f32 %v4390, %v4454
  %v4519 = vmax.f32 %v4391, %v4455
  %v4520 = vmax.f32 %v4392, %v4456
  %v4521 = vmax.f32 %v4393, %v4457
  %v4522 = vmax.f32 %v4394, %v4458
  %v4523 = vmax.f32 %v4395, %v4459
  %v4524 = vmax.f32 %v4396, %v4460
  %v4525 = vmax.f32 %v4397, %v4461
  %v4526 = vmax.f32 %v4398, %v4462
  %v4527 = vmax.f32 %v4399, %v4463
  %v4528 = vmax.f32 %v4400, %v4464
  %v4529 = vmax.f32 %v4401, %v4465
  %v4530 = vmax.f32 %v4402, %v4466
  %v4531 = vmax.f32 %v4403, %v4467
  %v4532 = vmax.f32 %v4404, %v4468
  %v4533 = vmax.f32 %v4405, %v4469
  %v4534 = vmax.f32 %v4406, %v4470
  %v4535 = vmax.f32 %v4407, %v4471
  %v4536 = vmax.f32 %v4408, %v4472
  %v4537 = vmax.f32 %v4409, %v4473
  %v4538 = vmax.f32 %v4410, %v4474
  %v4539 = vmax.f32 %v4411, %v4475
  %v4540 = vmax.f32 %v4412, %v4476
  %v4541 = vmax.f32 %v4413, %v4477
  %v4542 = vmax.f32 %v4414, %v4478
  %v4543 = vmax.f32 %v4415, %v4479
  %v4544 = vmax.f32 %v4416, %v4480
  %v4545 = vpack.c.bf16 %v4482, %v4481
  %v4546 = vpack.c.bf16 %v4484, %v4483
  %v4547 = vpack.c.bf16 %v4486, %v4485
  %v4548 = vpack.c.bf16 %v4488, %v4487
  %v4549 = vpack.c.bf16 %v4490, %v4489
  %v4550 = vpack.c.bf16 %v4492, %v4491
  %v4551 = vpack.c.bf16 %v4494, %v4493
  %v4552 = vpack.c.bf16 %v4496, %v4495
  %v4553 = vpack.c.bf16 %v4498, %v4497
  %v4554 = vpack.c.bf16 %v4500, %v4499
  %v4555 = vpack.c.bf16 %v4502, %v4501
  %v4556 = vpack.c.bf16 %v4504, %v4503
  %v4557 = vpack.c.bf16 %v4506, %v4505
  %v4558 = vpack.c.bf16 %v4508, %v4507
  %v4559 = vpack.c.bf16 %v4510, %v4509
  %v4560 = vpack.c.bf16 %v4512, %v4511
  %v4561 = vpack.c.bf16 %v4514, %v4513
  %v4562 = vpack.c.bf16 %v4516, %v4515
  %v4563 = vpack.c.bf16 %v4518, %v4517
  %v4564 = vpack.c.bf16 %v4520, %v4519
  %v4565 = vpack.c.bf16 %v4522, %v4521
  %v4566 = vpack.c.bf16 %v4524, %v4523
  %v4567 = vpack.c.bf16 %v4526, %v4525
  %v4568 = vpack.c.bf16 %v4528, %v4527
  %v4569 = vpack.c.bf16 %v4530, %v4529
  %v4570 = vpack.c.bf16 %v4532, %v4531
  %v4571 = vpack.c.bf16 %v4534, %v4533
  %v4572 = vpack.c.bf16 %v4536, %v4535
  %v4573 = vpack.c.bf16 %v4538, %v4537
  %v4574 = vpack.c.bf16 %v4540, %v4539
  %v4575 = vpack.c.bf16 %v4542, %v4541
  %v4576 = vpack.c.bf16 %v4544, %v4543
  %4577 = vst [vmem:[%s4] sm:$0xff] %v4545
  %4578 = vst [vmem:[%s4 + $0x8] sm:$0xff] %v4546
  %4579 = vst [vmem:[%s4 + $0x10] sm:$0xff] %v4547
  %4580 = vst [vmem:[%s4 + $0x18] sm:$0xff] %v4548
  %4581 = vst [vmem:[%s4 + $0x20] sm:$0xff] %v4549
  %4582 = vst [vmem:[%s4 + $0x28] sm:$0xff] %v4550
  %4583 = vst [vmem:[%s4 + $0x30] sm:$0xff] %v4551
  %4584 = vst [vmem:[%s4 + $0x38] sm:$0xff] %v4552
  %4585 = vst [vmem:[%s4 + $0x40] sm:$0xff] %v4553
  %4586 = vst [vmem:[%s4 + $0x48] sm:$0xff] %v4554
  %4587 = vst [vmem:[%s4 + $0x50] sm:$0xff] %v4555
  %4588 = vst [vmem:[%s4 + $0x58] sm:$0xff] %v4556
  %4589 = vst [vmem:[%s4 + $0x60] sm:$0xff] %v4557
  %4590 = vst [vmem:[%s4 + $0x68] sm:$0xff] %v4558
  %4591 = vst [vmem:[%s4 + $0x70] sm:$0xff] %v4559
  %4592 = vst [vmem:[%s4 + $0x78] sm:$0xff] %v4560
  %4593 = vst [vmem:[%s4 + $0x80] sm:$0xff] %v4561
  %4594 = vst [vmem:[%s4 + $0x88] sm:$0xff] %v4562
  %4595 = vst [vmem:[%s4 + $0x90] sm:$0xff] %v4563
  %4596 = vst [vmem:[%s4 + $0x98] sm:$0xff] %v4564
  %4597 = vst [vmem:[%s4 + $0xa0] sm:$0xff] %v4565
  %4598 = vst [vmem:[%s4 + $0xa8] sm:$0xff] %v4566
  %4599 = vst [vmem:[%s4 + $0xb0] sm:$0xff] %v4567
  %4600 = vst [vmem:[%s4 + $0xb8] sm:$0xff] %v4568
  %4601 = vst [vmem:[%s4 + $0xc0] sm:$0xff] %v4569
  %4602 = vst [vmem:[%s4 + $0xc8] sm:$0xff] %v4570
  %4603 = vst [vmem:[%s4 + $0xd0] sm:$0xff] %v4571
  %4604 = vst [vmem:[%s4 + $0xd8] sm:$0xff] %v4572
  %4605 = vst [vmem:[%s4 + $0xe0] sm:$0xff] %v4573
  %4606 = vst [vmem:[%s4 + $0xe8] sm:$0xff] %v4574
  %4607 = vst [vmem:[%s4 + $0xf0] sm:$0xff] %v4575
  %4608 = vst [vmem:[%s4 + $0xf8] sm:$0xff] %v4576
  // Predicated region
  $region18: #{discriminator_forward.4} parent=0 // pred_check
    _
  $region19: #{discriminator_forward.4} parent=0 // pred_check_branch
    %4610 = sbr.rel (0) target = $region21
  $region20: #{discriminator_forward.4} parent=0 // pred_region
    _
  $region21: #{discriminator_forward.4} parent=0 // pred_fallthru
    _
  // Predicated region
  $region22: #{discriminator_forward.4} parent=0 // pred_check
    _
  $region23: #{discriminator_forward.4} parent=0 // pred_check_branch
    %4612 = sbr.rel (0) target = $region25
  $region24: #{discriminator_forward.4} parent=0 // pred_region
    _
  $region25: #{discriminator_forward.4} parent=0 // pred_fallthru
    _

// kernel: discriminator_forward.5
$region0: #{discriminator_forward.5}
  #allocation0 [shape = 'u32[]', space=smem, size = 0x4, offset = 0x4, fixed_abs, tag = 'smem constant byte address 0x4 - core index']
  #allocation1 [shape = 'u32[72,128]{1,0:T(1,128)}', space=vmem, size = 0x9000, scoped, tag = 'internal scratch']
  %s0 = inlined_call_operand.vmem [shape: bf16[2048,128], index: 0, kind: input, shape index: {}]
  %s1 = inlined_call_operand.vmem [shape: bf16[8,2048], index: 1, kind: input, shape index: {}]
  %s2 = inlined_call_operand.vmem [shape: bf16[128,128], index: 2, kind: input, shape index: {}]
  %s3 = inlined_call_operand.vmem [shape: f32[1,128], index: 3, kind: input, shape index: {}]
  %s4 = inlined_call_operand.vmem [shape: f32[8,128], index: 4, kind: output, shape index: {}]
  %s5 = sld [smem:[#allocation0]]
  $region26: #{discriminator_forward.5} parent=0
    _
  %s7 = ssub.s32 1, %s5
  %s8 = scalar_select 0, %s7, %s5
  // Predicated region
  $region2: #{discriminator_forward.5} parent=0 // pred_check
    _
  $region3: #{discriminator_forward.5} parent=0 // pred_check_branch
    %10 = sbr.rel (0) target = $region5
  $region4: #{discriminator_forward.5} parent=0 // pred_region
    _
  $region5: #{discriminator_forward.5} parent=0 // pred_fallthru
    _
  // Predicated region
  $region6: #{discriminator_forward.5} parent=0 // pred_check
    _
  $region7: #{discriminator_forward.5} parent=0 // pred_check_branch
    %12 = sbr.rel (0) target = $region9
  $region8: #{discriminator_forward.5} parent=0 // pred_region
    _
  $region9: #{discriminator_forward.5} parent=0 // pred_fallthru
    _
  // Predicated region
  $region10: #{discriminator_forward.5} parent=0 // pred_check
    _
  $region11: #{discriminator_forward.5} parent=0 // pred_check_branch
    %14 = sbr.rel (0) target = $region13
  $region12: #{discriminator_forward.5} parent=0 // pred_region
    _
  $region13: #{discriminator_forward.5} parent=0 // pred_fallthru
    _
  // Predicated region
  $region14: #{discriminator_forward.5} parent=0 // pred_check
    _
  $region15: #{discriminator_forward.5} parent=0 // pred_check_branch
    %16 = sbr.rel (0) target = $region17
  $region16: #{discriminator_forward.5} parent=0 // pred_region
    _
  $region17: #{discriminator_forward.5} parent=0 // pred_fallthru
    _
  %v17 = vld [vmem:[%s1] sm:$0xff]
  %v18 = vld [vmem:[%s1 + $0x8] sm:$0xff]
  %v19 = vld [vmem:[%s1 + $0x10] sm:$0xff]
  %v20 = vld [vmem:[%s1 + $0x18] sm:$0xff]
  %v21 = vld [vmem:[%s1 + $0x20] sm:$0xff]
  %v22 = vld [vmem:[%s1 + $0x28] sm:$0xff]
  %v23 = vld [vmem:[%s1 + $0x30] sm:$0xff]
  %v24 = vld [vmem:[%s1 + $0x38] sm:$0xff]
  %v25 = vld [vmem:[%s0] sm:$0xf]
  %v26 = vld [vmem:[%s0 + $0x4] sm:$0xf]
  %v27 = vld [vmem:[%s0 + $0x8] sm:$0xf]
  %v28 = vld [vmem:[%s0 + $0xc] sm:$0xf]
  %v29 = vld [vmem:[%s0 + $0x10] sm:$0xf]
  %v30 = vld [vmem:[%s0 + $0x14] sm:$0xf]
  %v31 = vld [vmem:[%s0 + $0x18] sm:$0xf]
  %v32 = vld [vmem:[%s0 + $0x1c] sm:$0xf]
  %v33 = vld [vmem:[%s0 + $0x20] sm:$0xf]
  %v34 = vld [vmem:[%s0 + $0x24] sm:$0xf]
  %v35 = vld [vmem:[%s0 + $0x28] sm:$0xf]
  %v36 = vld [vmem:[%s0 + $0x2c] sm:$0xf]
  %v37 = vld [vmem:[%s0 + $0x30] sm:$0xf]
  %v38 = vld [vmem:[%s0 + $0x34] sm:$0xf]
  %v39 = vld [vmem:[%s0 + $0x38] sm:$0xf]
  %v40 = vld [vmem:[%s0 + $0x3c] sm:$0xf]
  %v41 = vld [vmem:[%s0 + $0x40] sm:$0xf]
  %v42 = vld [vmem:[%s0 + $0x44] sm:$0xf]
  %v43 = vld [vmem:[%s0 + $0x48] sm:$0xf]
  %v44 = vld [vmem:[%s0 + $0x4c] sm:$0xf]
  %v45 = vld [vmem:[%s0 + $0x50] sm:$0xf]
  %v46 = vld [vmem:[%s0 + $0x54] sm:$0xf]
  %v47 = vld [vmem:[%s0 + $0x58] sm:$0xf]
  %v48 = vld [vmem:[%s0 + $0x5c] sm:$0xf]
  %v49 = vld [vmem:[%s0 + $0x60] sm:$0xf]
  %v50 = vld [vmem:[%s0 + $0x64] sm:$0xf]
  %v51 = vld [vmem:[%s0 + $0x68] sm:$0xf]
  %v52 = vld [vmem:[%s0 + $0x6c] sm:$0xf]
  %v53 = vld [vmem:[%s0 + $0x70] sm:$0xf]
  %v54 = vld [vmem:[%s0 + $0x74] sm:$0xf]
  %v55 = vld [vmem:[%s0 + $0x78] sm:$0xf]
  %v56 = vld [vmem:[%s0 + $0x7c] sm:$0xf]
  %v57 = vld [vmem:[%s0 + $0x80] sm:$0xf]
  %v58 = vld [vmem:[%s0 + $0x84] sm:$0xf]
  %v59 = vld [vmem:[%s0 + $0x88] sm:$0xf]
  %v60 = vld [vmem:[%s0 + $0x8c] sm:$0xf]
  %v61 = vld [vmem:[%s0 + $0x90] sm:$0xf]
  %v62 = vld [vmem:[%s0 + $0x94] sm:$0xf]
  %v63 = vld [vmem:[%s0 + $0x98] sm:$0xf]
  %v64 = vld [vmem:[%s0 + $0x9c] sm:$0xf]
  %v65 = vld [vmem:[%s0 + $0xa0] sm:$0xf]
  %v66 = vld [vmem:[%s0 + $0xa4] sm:$0xf]
  %v67 = vld [vmem:[%s0 + $0xa8] sm:$0xf]
  %v68 = vld [vmem:[%s0 + $0xac] sm:$0xf]
  %v69 = vld [vmem:[%s0 + $0xb0] sm:$0xf]
  %v70 = vld [vmem:[%s0 + $0xb4] sm:$0xf]
  %v71 = vld [vmem:[%s0 + $0xb8] sm:$0xf]
  %v72 = vld [vmem:[%s0 + $0xbc] sm:$0xf]
  %v73 = vld [vmem:[%s0 + $0xc0] sm:$0xf]
  %v74 = vld [vmem:[%s0 + $0xc4] sm:$0xf]
  %v75 = vld [vmem:[%s0 + $0xc8] sm:$0xf]
  %v76 = vld [vmem:[%s0 + $0xcc] sm:$0xf]
  %v77 = vld [vmem:[%s0 + $0xd0] sm:$0xf]
  %v78 = vld [vmem:[%s0 + $0xd4] sm:$0xf]
  %v79 = vld [vmem:[%s0 + $0xd8] sm:$0xf]
  %v80 = vld [vmem:[%s0 + $0xdc] sm:$0xf]
  %v81 = vld [vmem:[%s0 + $0xe0] sm:$0xf]
  %v82 = vld [vmem:[%s0 + $0xe4] sm:$0xf]
  %v83 = vld [vmem:[%s0 + $0xe8] sm:$0xf]
  %v84 = vld [vmem:[%s0 + $0xec] sm:$0xf]
  %v85 = vld [vmem:[%s0 + $0xf0] sm:$0xf]
  %v86 = vld [vmem:[%s0 + $0xf4] sm:$0xf]
  %v87 = vld [vmem:[%s0 + $0xf8] sm:$0xf]
  %v88 = vld [vmem:[%s0 + $0xfc] sm:$0xf]
  %v89 = vld [vmem:[%s0 + $0x100] sm:$0xf]
  %v90 = vld [vmem:[%s0 + $0x104] sm:$0xf]
  %v91 = vld [vmem:[%s0 + $0x108] sm:$0xf]
  %v92 = vld [vmem:[%s0 + $0x10c] sm:$0xf]
  %v93 = vld [vmem:[%s0 + $0x110] sm:$0xf]
  %v94 = vld [vmem:[%s0 + $0x114] sm:$0xf]
  %v95 = vld [vmem:[%s0 + $0x118] sm:$0xf]
  %v96 = vld [vmem:[%s0 + $0x11c] sm:$0xf]
  %v97 = vld [vmem:[%s0 + $0x120] sm:$0xf]
  %v98 = vld [vmem:[%s0 + $0x124] sm:$0xf]
  %v99 = vld [vmem:[%s0 + $0x128] sm:$0xf]
  %v100 = vld [vmem:[%s0 + $0x12c] sm:$0xf]
  %v101 = vld [vmem:[%s0 + $0x130] sm:$0xf]
  %v102 = vld [vmem:[%s0 + $0x134] sm:$0xf]
  %v103 = vld [vmem:[%s0 + $0x138] sm:$0xf]
  %v104 = vld [vmem:[%s0 + $0x13c] sm:$0xf]
  %v105 = vld [vmem:[%s0 + $0x140] sm:$0xf]
  %v106 = vld [vmem:[%s0 + $0x144] sm:$0xf]
  %v107 = vld [vmem:[%s0 + $0x148] sm:$0xf]
  %v108 = vld [vmem:[%s0 + $0x14c] sm:$0xf]
  %v109 = vld [vmem:[%s0 + $0x150] sm:$0xf]
  %v110 = vld [vmem:[%s0 + $0x154] sm:$0xf]
  %v111 = vld [vmem:[%s0 + $0x158] sm:$0xf]
  %v112 = vld [vmem:[%s0 + $0x15c] sm:$0xf]
  %v113 = vld [vmem:[%s0 + $0x160] sm:$0xf]
  %v114 = vld [vmem:[%s0 + $0x164] sm:$0xf]
  %v115 = vld [vmem:[%s0 + $0x168] sm:$0xf]
  %v116 = vld [vmem:[%s0 + $0x16c] sm:$0xf]
  %v117 = vld [vmem:[%s0 + $0x170] sm:$0xf]
  %v118 = vld [vmem:[%s0 + $0x174] sm:$0xf]
  %v119 = vld [vmem:[%s0 + $0x178] sm:$0xf]
  %v120 = vld [vmem:[%s0 + $0x17c] sm:$0xf]
  %v121 = vld [vmem:[%s0 + $0x180] sm:$0xf]
  %v122 = vld [vmem:[%s0 + $0x184] sm:$0xf]
  %v123 = vld [vmem:[%s0 + $0x188] sm:$0xf]
  %v124 = vld [vmem:[%s0 + $0x18c] sm:$0xf]
  %v125 = vld [vmem:[%s0 + $0x190] sm:$0xf]
  %v126 = vld [vmem:[%s0 + $0x194] sm:$0xf]
  %v127 = vld [vmem:[%s0 + $0x198] sm:$0xf]
  %v128 = vld [vmem:[%s0 + $0x19c] sm:$0xf]
  %v129 = vld [vmem:[%s0 + $0x1a0] sm:$0xf]
  %v130 = vld [vmem:[%s0 + $0x1a4] sm:$0xf]
  %v131 = vld [vmem:[%s0 + $0x1a8] sm:$0xf]
  %v132 = vld [vmem:[%s0 + $0x1ac] sm:$0xf]
  %v133 = vld [vmem:[%s0 + $0x1b0] sm:$0xf]
  %v134 = vld [vmem:[%s0 + $0x1b4] sm:$0xf]
  %v135 = vld [vmem:[%s0 + $0x1b8] sm:$0xf]
  %v136 = vld [vmem:[%s0 + $0x1bc] sm:$0xf]
  %v137 = vld [vmem:[%s0 + $0x1c0] sm:$0xf]
  %v138 = vld [vmem:[%s0 + $0x1c4] sm:$0xf]
  %v139 = vld [vmem:[%s0 + $0x1c8] sm:$0xf]
  %v140 = vld [vmem:[%s0 + $0x1cc] sm:$0xf]
  %v141 = vld [vmem:[%s0 + $0x1d0] sm:$0xf]
  %v142 = vld [vmem:[%s0 + $0x1d4] sm:$0xf]
  %v143 = vld [vmem:[%s0 + $0x1d8] sm:$0xf]
  %v144 = vld [vmem:[%s0 + $0x1dc] sm:$0xf]
  %v145 = vld [vmem:[%s0 + $0x1e0] sm:$0xf]
  %v146 = vld [vmem:[%s0 + $0x1e4] sm:$0xf]
  %v147 = vld [vmem:[%s0 + $0x1e8] sm:$0xf]
  %v148 = vld [vmem:[%s0 + $0x1ec] sm:$0xf]
  %v149 = vld [vmem:[%s0 + $0x1f0] sm:$0xf]
  %v150 = vld [vmem:[%s0 + $0x1f4] sm:$0xf]
  %v151 = vld [vmem:[%s0 + $0x1f8] sm:$0xf]
  %v152 = vld [vmem:[%s0 + $0x1fc] sm:$0xf]
  %v153 = vld [vmem:[%s0 + $0x200] sm:$0xf]
  %v154 = vld [vmem:[%s0 + $0x204] sm:$0xf]
  %v155 = vld [vmem:[%s0 + $0x208] sm:$0xf]
  %v156 = vld [vmem:[%s0 + $0x20c] sm:$0xf]
  %v157 = vld [vmem:[%s0 + $0x210] sm:$0xf]
  %v158 = vld [vmem:[%s0 + $0x214] sm:$0xf]
  %v159 = vld [vmem:[%s0 + $0x218] sm:$0xf]
  %v160 = vld [vmem:[%s0 + $0x21c] sm:$0xf]
  %v161 = vld [vmem:[%s0 + $0x220] sm:$0xf]
  %v162 = vld [vmem:[%s0 + $0x224] sm:$0xf]
  %v163 = vld [vmem:[%s0 + $0x228] sm:$0xf]
  %v164 = vld [vmem:[%s0 + $0x22c] sm:$0xf]
  %v165 = vld [vmem:[%s0 + $0x230] sm:$0xf]
  %v166 = vld [vmem:[%s0 + $0x234] sm:$0xf]
  %v167 = vld [vmem:[%s0 + $0x238] sm:$0xf]
  %v168 = vld [vmem:[%s0 + $0x23c] sm:$0xf]
  %v169 = vld [vmem:[%s0 + $0x240] sm:$0xf]
  %v170 = vld [vmem:[%s0 + $0x244] sm:$0xf]
  %v171 = vld [vmem:[%s0 + $0x248] sm:$0xf]
  %v172 = vld [vmem:[%s0 + $0x24c] sm:$0xf]
  %v173 = vld [vmem:[%s0 + $0x250] sm:$0xf]
  %v174 = vld [vmem:[%s0 + $0x254] sm:$0xf]
  %v175 = vld [vmem:[%s0 + $0x258] sm:$0xf]
  %v176 = vld [vmem:[%s0 + $0x25c] sm:$0xf]
  %v177 = vld [vmem:[%s0 + $0x260] sm:$0xf]
  %v178 = vld [vmem:[%s0 + $0x264] sm:$0xf]
  %v179 = vld [vmem:[%s0 + $0x268] sm:$0xf]
  %v180 = vld [vmem:[%s0 + $0x26c] sm:$0xf]
  %v181 = vld [vmem:[%s0 + $0x270] sm:$0xf]
  %v182 = vld [vmem:[%s0 + $0x274] sm:$0xf]
  %v183 = vld [vmem:[%s0 + $0x278] sm:$0xf]
  %v184 = vld [vmem:[%s0 + $0x27c] sm:$0xf]
  %v185 = vld [vmem:[%s0 + $0x280] sm:$0xf]
  %v186 = vld [vmem:[%s0 + $0x284] sm:$0xf]
  %v187 = vld [vmem:[%s0 + $0x288] sm:$0xf]
  %v188 = vld [vmem:[%s0 + $0x28c] sm:$0xf]
  %v189 = vld [vmem:[%s0 + $0x290] sm:$0xf]
  %v190 = vld [vmem:[%s0 + $0x294] sm:$0xf]
  %v191 = vld [vmem:[%s0 + $0x298] sm:$0xf]
  %v192 = vld [vmem:[%s0 + $0x29c] sm:$0xf]
  %v193 = vld [vmem:[%s0 + $0x2a0] sm:$0xf]
  %v194 = vld [vmem:[%s0 + $0x2a4] sm:$0xf]
  %v195 = vld [vmem:[%s0 + $0x2a8] sm:$0xf]
  %v196 = vld [vmem:[%s0 + $0x2ac] sm:$0xf]
  %v197 = vld [vmem:[%s0 + $0x2b0] sm:$0xf]
  %v198 = vld [vmem:[%s0 + $0x2b4] sm:$0xf]
  %v199 = vld [vmem:[%s0 + $0x2b8] sm:$0xf]
  %v200 = vld [vmem:[%s0 + $0x2bc] sm:$0xf]
  %v201 = vld [vmem:[%s0 + $0x2c0] sm:$0xf]
  %v202 = vld [vmem:[%s0 + $0x2c4] sm:$0xf]
  %v203 = vld [vmem:[%s0 + $0x2c8] sm:$0xf]
  %v204 = vld [vmem:[%s0 + $0x2cc] sm:$0xf]
  %v205 = vld [vmem:[%s0 + $0x2d0] sm:$0xf]
  %v206 = vld [vmem:[%s0 + $0x2d4] sm:$0xf]
  %v207 = vld [vmem:[%s0 + $0x2d8] sm:$0xf]
  %v208 = vld [vmem:[%s0 + $0x2dc] sm:$0xf]
  %v209 = vld [vmem:[%s0 + $0x2e0] sm:$0xf]
  %v210 = vld [vmem:[%s0 + $0x2e4] sm:$0xf]
  %v211 = vld [vmem:[%s0 + $0x2e8] sm:$0xf]
  %v212 = vld [vmem:[%s0 + $0x2ec] sm:$0xf]
  %v213 = vld [vmem:[%s0 + $0x2f0] sm:$0xf]
  %v214 = vld [vmem:[%s0 + $0x2f4] sm:$0xf]
  %v215 = vld [vmem:[%s0 + $0x2f8] sm:$0xf]
  %v216 = vld [vmem:[%s0 + $0x2fc] sm:$0xf]
  %v217 = vld [vmem:[%s0 + $0x300] sm:$0xf]
  %v218 = vld [vmem:[%s0 + $0x304] sm:$0xf]
  %v219 = vld [vmem:[%s0 + $0x308] sm:$0xf]
  %v220 = vld [vmem:[%s0 + $0x30c] sm:$0xf]
  %v221 = vld [vmem:[%s0 + $0x310] sm:$0xf]
  %v222 = vld [vmem:[%s0 + $0x314] sm:$0xf]
  %v223 = vld [vmem:[%s0 + $0x318] sm:$0xf]
  %v224 = vld [vmem:[%s0 + $0x31c] sm:$0xf]
  %v225 = vld [vmem:[%s0 + $0x320] sm:$0xf]
  %v226 = vld [vmem:[%s0 + $0x324] sm:$0xf]
  %v227 = vld [vmem:[%s0 + $0x328] sm:$0xf]
  %v228 = vld [vmem:[%s0 + $0x32c] sm:$0xf]
  %v229 = vld [vmem:[%s0 + $0x330] sm:$0xf]
  %v230 = vld [vmem:[%s0 + $0x334] sm:$0xf]
  %v231 = vld [vmem:[%s0 + $0x338] sm:$0xf]
  %v232 = vld [vmem:[%s0 + $0x33c] sm:$0xf]
  %v233 = vld [vmem:[%s0 + $0x340] sm:$0xf]
  %v234 = vld [vmem:[%s0 + $0x344] sm:$0xf]
  %v235 = vld [vmem:[%s0 + $0x348] sm:$0xf]
  %v236 = vld [vmem:[%s0 + $0x34c] sm:$0xf]
  %v237 = vld [vmem:[%s0 + $0x350] sm:$0xf]
  %v238 = vld [vmem:[%s0 + $0x354] sm:$0xf]
  %v239 = vld [vmem:[%s0 + $0x358] sm:$0xf]
  %v240 = vld [vmem:[%s0 + $0x35c] sm:$0xf]
  %v241 = vld [vmem:[%s0 + $0x360] sm:$0xf]
  %v242 = vld [vmem:[%s0 + $0x364] sm:$0xf]
  %v243 = vld [vmem:[%s0 + $0x368] sm:$0xf]
  %v244 = vld [vmem:[%s0 + $0x36c] sm:$0xf]
  %v245 = vld [vmem:[%s0 + $0x370] sm:$0xf]
  %v246 = vld [vmem:[%s0 + $0x374] sm:$0xf]
  %v247 = vld [vmem:[%s0 + $0x378] sm:$0xf]
  %v248 = vld [vmem:[%s0 + $0x37c] sm:$0xf]
  %v249 = vld [vmem:[%s0 + $0x380] sm:$0xf]
  %v250 = vld [vmem:[%s0 + $0x384] sm:$0xf]
  %v251 = vld [vmem:[%s0 + $0x388] sm:$0xf]
  %v252 = vld [vmem:[%s0 + $0x38c] sm:$0xf]
  %v253 = vld [vmem:[%s0 + $0x390] sm:$0xf]
  %v254 = vld [vmem:[%s0 + $0x394] sm:$0xf]
  %v255 = vld [vmem:[%s0 + $0x398] sm:$0xf]
  %v256 = vld [vmem:[%s0 + $0x39c] sm:$0xf]
  %v257 = vld [vmem:[%s0 + $0x3a0] sm:$0xf]
  %v258 = vld [vmem:[%s0 + $0x3a4] sm:$0xf]
  %v259 = vld [vmem:[%s0 + $0x3a8] sm:$0xf]
  %v260 = vld [vmem:[%s0 + $0x3ac] sm:$0xf]
  %v261 = vld [vmem:[%s0 + $0x3b0] sm:$0xf]
  %v262 = vld [vmem:[%s0 + $0x3b4] sm:$0xf]
  %v263 = vld [vmem:[%s0 + $0x3b8] sm:$0xf]
  %v264 = vld [vmem:[%s0 + $0x3bc] sm:$0xf]
  %v265 = vld [vmem:[%s0 + $0x3c0] sm:$0xf]
  %v266 = vld [vmem:[%s0 + $0x3c4] sm:$0xf]
  %v267 = vld [vmem:[%s0 + $0x3c8] sm:$0xf]
  %v268 = vld [vmem:[%s0 + $0x3cc] sm:$0xf]
  %v269 = vld [vmem:[%s0 + $0x3d0] sm:$0xf]
  %v270 = vld [vmem:[%s0 + $0x3d4] sm:$0xf]
  %v271 = vld [vmem:[%s0 + $0x3d8] sm:$0xf]
  %v272 = vld [vmem:[%s0 + $0x3dc] sm:$0xf]
  %v273 = vld [vmem:[%s0 + $0x3e0] sm:$0xf]
  %v274 = vld [vmem:[%s0 + $0x3e4] sm:$0xf]
  %v275 = vld [vmem:[%s0 + $0x3e8] sm:$0xf]
  %v276 = vld [vmem:[%s0 + $0x3ec] sm:$0xf]
  %v277 = vld [vmem:[%s0 + $0x3f0] sm:$0xf]
  %v278 = vld [vmem:[%s0 + $0x3f4] sm:$0xf]
  %v279 = vld [vmem:[%s0 + $0x3f8] sm:$0xf]
  %v280 = vld [vmem:[%s0 + $0x3fc] sm:$0xf]
  %v289 = vunpack.c.l.b16 %v17
  %v290 = vunpack.c.h.b16 %v17
  %v291 = vunpack.c.l.b16 %v18
  %v292 = vunpack.c.h.b16 %v18
  %v293 = vunpack.c.l.b16 %v19
  %v294 = vunpack.c.h.b16 %v19
  %v295 = vunpack.c.l.b16 %v20
  %v296 = vunpack.c.h.b16 %v20
  %v297 = vunpack.c.l.b16 %v21
  %v298 = vunpack.c.h.b16 %v21
  %v299 = vunpack.c.l.b16 %v22
  %v300 = vunpack.c.h.b16 %v22
  %v301 = vunpack.c.l.b16 %v23
  %v302 = vunpack.c.h.b16 %v23
  %v303 = vunpack.c.l.b16 %v24
  %v304 = vunpack.c.h.b16 %v24
  %v305 = vpack.c.b16 %v289, %v289
  %v306 = vpack.c.b16 %v290, %v290
  %v307 = vpack.c.b16 %v291, %v291
  %v308 = vpack.c.b16 %v292, %v292
  %v309 = vpack.c.b16 %v293, %v293
  %v310 = vpack.c.b16 %v294, %v294
  %v311 = vpack.c.b16 %v295, %v295
  %v312 = vpack.c.b16 %v296, %v296
  %v313 = vpack.c.b16 %v297, %v297
  %v314 = vpack.c.b16 %v298, %v298
  %v315 = vpack.c.b16 %v299, %v299
  %v316 = vpack.c.b16 %v300, %v300
  %v317 = vpack.c.b16 %v301, %v301
  %v318 = vpack.c.b16 %v302, %v302
  %v319 = vpack.c.b16 %v303, %v303
  %v320 = vpack.c.b16 %v304, %v304
  %v593 = vunpack.c.l.b16 %v25
  %v594 = vunpack.c.l.b16 %v26
  %v595 = vunpack.c.l.b16 %v27
  %v596 = vunpack.c.l.b16 %v28
  %v597 = vunpack.c.l.b16 %v29
  %v598 = vunpack.c.l.b16 %v30
  %v599 = vunpack.c.l.b16 %v31
  %v600 = vunpack.c.l.b16 %v32
  %v601 = vunpack.c.l.b16 %v33
  %v602 = vunpack.c.l.b16 %v34
  %v603 = vunpack.c.l.b16 %v35
  %v604 = vunpack.c.l.b16 %v36
  %v605 = vunpack.c.l.b16 %v37
  %v606 = vunpack.c.l.b16 %v38
  %v607 = vunpack.c.l.b16 %v39
  %v608 = vunpack.c.l.b16 %v40
  %v609 = vunpack.c.l.b16 %v41
  %v610 = vunpack.c.l.b16 %v42
  %v611 = vunpack.c.l.b16 %v43
  %v612 = vunpack.c.l.b16 %v44
  %v613 = vunpack.c.l.b16 %v45
  %v614 = vunpack.c.l.b16 %v46
  %v615 = vunpack.c.l.b16 %v47
  %v616 = vunpack.c.l.b16 %v48
  %v617 = vunpack.c.l.b16 %v49
  %v618 = vunpack.c.l.b16 %v50
  %v619 = vunpack.c.l.b16 %v51
  %v620 = vunpack.c.l.b16 %v52
  %v621 = vunpack.c.l.b16 %v53
  %v622 = vunpack.c.l.b16 %v54
  %v623 = vunpack.c.l.b16 %v55
  %v624 = vunpack.c.l.b16 %v56
  %v625 = vunpack.c.l.b16 %v57
  %v626 = vunpack.c.l.b16 %v58
  %v627 = vunpack.c.l.b16 %v59
  %v628 = vunpack.c.l.b16 %v60
  %v629 = vunpack.c.l.b16 %v61
  %v630 = vunpack.c.l.b16 %v62
  %v631 = vunpack.c.l.b16 %v63
  %v632 = vunpack.c.l.b16 %v64
  %v633 = vunpack.c.l.b16 %v65
  %v634 = vunpack.c.l.b16 %v66
  %v635 = vunpack.c.l.b16 %v67
  %v636 = vunpack.c.l.b16 %v68
  %v637 = vunpack.c.l.b16 %v69
  %v638 = vunpack.c.l.b16 %v70
  %v639 = vunpack.c.l.b16 %v71
  %v640 = vunpack.c.l.b16 %v72
  %v641 = vunpack.c.l.b16 %v73
  %v642 = vunpack.c.l.b16 %v74
  %v643 = vunpack.c.l.b16 %v75
  %v644 = vunpack.c.l.b16 %v76
  %v645 = vunpack.c.l.b16 %v77
  %v646 = vunpack.c.l.b16 %v78
  %v647 = vunpack.c.l.b16 %v79
  %v648 = vunpack.c.l.b16 %v80
  %v649 = vunpack.c.l.b16 %v81
  %v650 = vunpack.c.l.b16 %v82
  %v651 = vunpack.c.l.b16 %v83
  %v652 = vunpack.c.l.b16 %v84
  %v653 = vunpack.c.l.b16 %v85
  %v654 = vunpack.c.l.b16 %v86
  %v655 = vunpack.c.l.b16 %v87
  %v656 = vunpack.c.l.b16 %v88
  %v657 = vunpack.c.l.b16 %v89
  %v658 = vunpack.c.l.b16 %v90
  %v659 = vunpack.c.l.b16 %v91
  %v660 = vunpack.c.l.b16 %v92
  %v661 = vunpack.c.l.b16 %v93
  %v662 = vunpack.c.l.b16 %v94
  %v663 = vunpack.c.l.b16 %v95
  %v664 = vunpack.c.l.b16 %v96
  %v665 = vunpack.c.l.b16 %v97
  %v666 = vunpack.c.l.b16 %v98
  %v667 = vunpack.c.l.b16 %v99
  %v668 = vunpack.c.l.b16 %v100
  %v669 = vunpack.c.l.b16 %v101
  %v670 = vunpack.c.l.b16 %v102
  %v671 = vunpack.c.l.b16 %v103
  %v672 = vunpack.c.l.b16 %v104
  %v673 = vunpack.c.l.b16 %v105
  %v674 = vunpack.c.l.b16 %v106
  %v675 = vunpack.c.l.b16 %v107
  %v676 = vunpack.c.l.b16 %v108
  %v677 = vunpack.c.l.b16 %v109
  %v678 = vunpack.c.l.b16 %v110
  %v679 = vunpack.c.l.b16 %v111
  %v680 = vunpack.c.l.b16 %v112
  %v681 = vunpack.c.l.b16 %v113
  %v682 = vunpack.c.l.b16 %v114
  %v683 = vunpack.c.l.b16 %v115
  %v684 = vunpack.c.l.b16 %v116
  %v685 = vunpack.c.l.b16 %v117
  %v686 = vunpack.c.l.b16 %v118
  %v687 = vunpack.c.l.b16 %v119
  %v688 = vunpack.c.l.b16 %v120
  %v689 = vunpack.c.l.b16 %v121
  %v690 = vunpack.c.l.b16 %v122
  %v691 = vunpack.c.l.b16 %v123
  %v692 = vunpack.c.l.b16 %v124
  %v693 = vunpack.c.l.b16 %v125
  %v694 = vunpack.c.l.b16 %v126
  %v695 = vunpack.c.l.b16 %v127
  %v696 = vunpack.c.l.b16 %v128
  %v697 = vunpack.c.l.b16 %v129
  %v698 = vunpack.c.l.b16 %v130
  %v699 = vunpack.c.l.b16 %v131
  %v700 = vunpack.c.l.b16 %v132
  %v701 = vunpack.c.l.b16 %v133
  %v702 = vunpack.c.l.b16 %v134
  %v703 = vunpack.c.l.b16 %v135
  %v704 = vunpack.c.l.b16 %v136
  %v705 = vunpack.c.l.b16 %v137
  %v706 = vunpack.c.l.b16 %v138
  %v707 = vunpack.c.l.b16 %v139
  %v708 = vunpack.c.l.b16 %v140
  %v709 = vunpack.c.l.b16 %v141
  %v710 = vunpack.c.l.b16 %v142
  %v711 = vunpack.c.l.b16 %v143
  %v712 = vunpack.c.l.b16 %v144
  %v713 = vunpack.c.l.b16 %v145
  %v714 = vunpack.c.l.b16 %v146
  %v715 = vunpack.c.l.b16 %v147
  %v716 = vunpack.c.l.b16 %v148
  %v717 = vunpack.c.l.b16 %v149
  %v718 = vunpack.c.l.b16 %v150
  %v719 = vunpack.c.l.b16 %v151
  %v720 = vunpack.c.l.b16 %v152
  %v721 = vunpack.c.l.b16 %v153
  %v722 = vunpack.c.l.b16 %v154
  %v723 = vunpack.c.l.b16 %v155
  %v724 = vunpack.c.l.b16 %v156
  %v725 = vunpack.c.l.b16 %v157
  %v726 = vunpack.c.l.b16 %v158
  %v727 = vunpack.c.l.b16 %v159
  %v728 = vunpack.c.l.b16 %v160
  %v729 = vunpack.c.l.b16 %v161
  %v730 = vunpack.c.l.b16 %v162
  %v731 = vunpack.c.l.b16 %v163
  %v732 = vunpack.c.l.b16 %v164
  %v733 = vunpack.c.l.b16 %v165
  %v734 = vunpack.c.l.b16 %v166
  %v735 = vunpack.c.l.b16 %v167
  %v736 = vunpack.c.l.b16 %v168
  %v737 = vunpack.c.l.b16 %v169
  %v738 = vunpack.c.l.b16 %v170
  %v739 = vunpack.c.l.b16 %v171
  %v740 = vunpack.c.l.b16 %v172
  %v741 = vunpack.c.l.b16 %v173
  %v742 = vunpack.c.l.b16 %v174
  %v743 = vunpack.c.l.b16 %v175
  %v744 = vunpack.c.l.b16 %v176
  %v745 = vunpack.c.l.b16 %v177
  %v746 = vunpack.c.l.b16 %v178
  %v747 = vunpack.c.l.b16 %v179
  %v748 = vunpack.c.l.b16 %v180
  %v749 = vunpack.c.l.b16 %v181
  %v750 = vunpack.c.l.b16 %v182
  %v751 = vunpack.c.l.b16 %v183
  %v752 = vunpack.c.l.b16 %v184
  %v753 = vunpack.c.l.b16 %v185
  %v754 = vunpack.c.l.b16 %v186
  %v755 = vunpack.c.l.b16 %v187
  %v756 = vunpack.c.l.b16 %v188
  %v757 = vunpack.c.l.b16 %v189
  %v758 = vunpack.c.l.b16 %v190
  %v759 = vunpack.c.l.b16 %v191
  %v760 = vunpack.c.l.b16 %v192
  %v761 = vunpack.c.l.b16 %v193
  %v762 = vunpack.c.l.b16 %v194
  %v763 = vunpack.c.l.b16 %v195
  %v764 = vunpack.c.l.b16 %v196
  %v765 = vunpack.c.l.b16 %v197
  %v766 = vunpack.c.l.b16 %v198
  %v767 = vunpack.c.l.b16 %v199
  %v768 = vunpack.c.l.b16 %v200
  %v769 = vunpack.c.l.b16 %v201
  %v770 = vunpack.c.l.b16 %v202
  %v771 = vunpack.c.l.b16 %v203
  %v772 = vunpack.c.l.b16 %v204
  %v773 = vunpack.c.l.b16 %v205
  %v774 = vunpack.c.l.b16 %v206
  %v775 = vunpack.c.l.b16 %v207
  %v776 = vunpack.c.l.b16 %v208
  %v777 = vunpack.c.l.b16 %v209
  %v778 = vunpack.c.l.b16 %v210
  %v779 = vunpack.c.l.b16 %v211
  %v780 = vunpack.c.l.b16 %v212
  %v781 = vunpack.c.l.b16 %v213
  %v782 = vunpack.c.l.b16 %v214
  %v783 = vunpack.c.l.b16 %v215
  %v784 = vunpack.c.l.b16 %v216
  %v785 = vunpack.c.l.b16 %v217
  %v786 = vunpack.c.l.b16 %v218
  %v787 = vunpack.c.l.b16 %v219
  %v788 = vunpack.c.l.b16 %v220
  %v789 = vunpack.c.l.b16 %v221
  %v790 = vunpack.c.l.b16 %v222
  %v791 = vunpack.c.l.b16 %v223
  %v792 = vunpack.c.l.b16 %v224
  %v793 = vunpack.c.l.b16 %v225
  %v794 = vunpack.c.l.b16 %v226
  %v795 = vunpack.c.l.b16 %v227
  %v796 = vunpack.c.l.b16 %v228
  %v797 = vunpack.c.l.b16 %v229
  %v798 = vunpack.c.l.b16 %v230
  %v799 = vunpack.c.l.b16 %v231
  %v800 = vunpack.c.l.b16 %v232
  %v801 = vunpack.c.l.b16 %v233
  %v802 = vunpack.c.l.b16 %v234
  %v803 = vunpack.c.l.b16 %v235
  %v804 = vunpack.c.l.b16 %v236
  %v805 = vunpack.c.l.b16 %v237
  %v806 = vunpack.c.l.b16 %v238
  %v807 = vunpack.c.l.b16 %v239
  %v808 = vunpack.c.l.b16 %v240
  %v809 = vunpack.c.l.b16 %v241
  %v810 = vunpack.c.l.b16 %v242
  %v811 = vunpack.c.l.b16 %v243
  %v812 = vunpack.c.l.b16 %v244
  %v813 = vunpack.c.l.b16 %v245
  %v814 = vunpack.c.l.b16 %v246
  %v815 = vunpack.c.l.b16 %v247
  %v816 = vunpack.c.l.b16 %v248
  %v817 = vunpack.c.l.b16 %v249
  %v818 = vunpack.c.l.b16 %v250
  %v819 = vunpack.c.l.b16 %v251
  %v820 = vunpack.c.l.b16 %v252
  %v821 = vunpack.c.l.b16 %v253
  %v822 = vunpack.c.l.b16 %v254
  %v823 = vunpack.c.l.b16 %v255
  %v824 = vunpack.c.l.b16 %v256
  %v825 = vunpack.c.l.b16 %v257
  %v826 = vunpack.c.l.b16 %v258
  %v827 = vunpack.c.l.b16 %v259
  %v828 = vunpack.c.l.b16 %v260
  %v829 = vunpack.c.l.b16 %v261
  %v830 = vunpack.c.l.b16 %v262
  %v831 = vunpack.c.l.b16 %v263
  %v832 = vunpack.c.l.b16 %v264
  %v833 = vunpack.c.l.b16 %v265
  %v834 = vunpack.c.l.b16 %v266
  %v835 = vunpack.c.l.b16 %v267
  %v836 = vunpack.c.l.b16 %v268
  %v837 = vunpack.c.l.b16 %v269
  %v838 = vunpack.c.l.b16 %v270
  %v839 = vunpack.c.l.b16 %v271
  %v840 = vunpack.c.l.b16 %v272
  %v841 = vunpack.c.l.b16 %v273
  %v842 = vunpack.c.l.b16 %v274
  %v843 = vunpack.c.l.b16 %v275
  %v844 = vunpack.c.l.b16 %v276
  %v845 = vunpack.c.l.b16 %v277
  %v846 = vunpack.c.l.b16 %v278
  %v847 = vunpack.c.l.b16 %v279
  %v848 = vunpack.c.l.b16 %v280
  %v849 = vpack.c.b16 %v594, %v593
  %v850 = vpack.c.b16 %v596, %v595
  %v851 = vpack.c.b16 %v598, %v597
  %v852 = vpack.c.b16 %v600, %v599
  %v853 = vpack.c.b16 %v602, %v601
  %v854 = vpack.c.b16 %v604, %v603
  %v855 = vpack.c.b16 %v606, %v605
  %v856 = vpack.c.b16 %v608, %v607
  %v857 = vpack.c.b16 %v610, %v609
  %v858 = vpack.c.b16 %v612, %v611
  %v859 = vpack.c.b16 %v614, %v613
  %v860 = vpack.c.b16 %v616, %v615
  %v861 = vpack.c.b16 %v618, %v617
  %v862 = vpack.c.b16 %v620, %v619
  %v863 = vpack.c.b16 %v622, %v621
  %v864 = vpack.c.b16 %v624, %v623
  %v865 = vpack.c.b16 %v626, %v625
  %v866 = vpack.c.b16 %v628, %v627
  %v867 = vpack.c.b16 %v630, %v629
  %v868 = vpack.c.b16 %v632, %v631
  %v869 = vpack.c.b16 %v634, %v633
  %v870 = vpack.c.b16 %v636, %v635
  %v871 = vpack.c.b16 %v638, %v637
  %v872 = vpack.c.b16 %v640, %v639
  %v873 = vpack.c.b16 %v642, %v641
  %v874 = vpack.c.b16 %v644, %v643
  %v875 = vpack.c.b16 %v646, %v645
  %v876 = vpack.c.b16 %v648, %v647
  %v877 = vpack.c.b16 %v650, %v649
  %v878 = vpack.c.b16 %v652, %v651
  %v879 = vpack.c.b16 %v654, %v653
  %v880 = vpack.c.b16 %v656, %v655
  %v881 = vpack.c.b16 %v658, %v657
  %v882 = vpack.c.b16 %v660, %v659
  %v883 = vpack.c.b16 %v662, %v661
  %v884 = vpack.c.b16 %v664, %v663
  %v885 = vpack.c.b16 %v666, %v665
  %v886 = vpack.c.b16 %v668, %v667
  %v887 = vpack.c.b16 %v670, %v669
  %v888 = vpack.c.b16 %v672, %v671
  %v889 = vpack.c.b16 %v674, %v673
  %v890 = vpack.c.b16 %v676, %v675
  %v891 = vpack.c.b16 %v678, %v677
  %v892 = vpack.c.b16 %v680, %v679
  %v893 = vpack.c.b16 %v682, %v681
  %v894 = vpack.c.b16 %v684, %v683
  %v895 = vpack.c.b16 %v686, %v685
  %v896 = vpack.c.b16 %v688, %v687
  %v897 = vpack.c.b16 %v690, %v689
  %v898 = vpack.c.b16 %v692, %v691
  %v899 = vpack.c.b16 %v694, %v693
  %v900 = vpack.c.b16 %v696, %v695
  %v901 = vpack.c.b16 %v698, %v697
  %v902 = vpack.c.b16 %v700, %v699
  %v903 = vpack.c.b16 %v702, %v701
  %v904 = vpack.c.b16 %v704, %v703
  %v905 = vpack.c.b16 %v706, %v705
  %v906 = vpack.c.b16 %v708, %v707
  %v907 = vpack.c.b16 %v710, %v709
  %v908 = vpack.c.b16 %v712, %v711
  %v909 = vpack.c.b16 %v714, %v713
  %v910 = vpack.c.b16 %v716, %v715
  %v911 = vpack.c.b16 %v718, %v717
  %v912 = vpack.c.b16 %v720, %v719
  %v913 = vpack.c.b16 %v722, %v721
  %v914 = vpack.c.b16 %v724, %v723
  %v915 = vpack.c.b16 %v726, %v725
  %v916 = vpack.c.b16 %v728, %v727
  %v917 = vpack.c.b16 %v730, %v729
  %v918 = vpack.c.b16 %v732, %v731
  %v919 = vpack.c.b16 %v734, %v733
  %v920 = vpack.c.b16 %v736, %v735
  %v921 = vpack.c.b16 %v738, %v737
  %v922 = vpack.c.b16 %v740, %v739
  %v923 = vpack.c.b16 %v742, %v741
  %v924 = vpack.c.b16 %v744, %v743
  %v925 = vpack.c.b16 %v746, %v745
  %v926 = vpack.c.b16 %v748, %v747
  %v927 = vpack.c.b16 %v750, %v749
  %v928 = vpack.c.b16 %v752, %v751
  %v929 = vpack.c.b16 %v754, %v753
  %v930 = vpack.c.b16 %v756, %v755
  %v931 = vpack.c.b16 %v758, %v757
  %v932 = vpack.c.b16 %v760, %v759
  %v933 = vpack.c.b16 %v762, %v761
  %v934 = vpack.c.b16 %v764, %v763
  %v935 = vpack.c.b16 %v766, %v765
  %v936 = vpack.c.b16 %v768, %v767
  %v937 = vpack.c.b16 %v770, %v769
  %v938 = vpack.c.b16 %v772, %v771
  %v939 = vpack.c.b16 %v774, %v773
  %v940 = vpack.c.b16 %v776, %v775
  %v941 = vpack.c.b16 %v778, %v777
  %v942 = vpack.c.b16 %v780, %v779
  %v943 = vpack.c.b16 %v782, %v781
  %v944 = vpack.c.b16 %v784, %v783
  %v945 = vpack.c.b16 %v786, %v785
  %v946 = vpack.c.b16 %v788, %v787
  %v947 = vpack.c.b16 %v790, %v789
  %v948 = vpack.c.b16 %v792, %v791
  %v949 = vpack.c.b16 %v794, %v793
  %v950 = vpack.c.b16 %v796, %v795
  %v951 = vpack.c.b16 %v798, %v797
  %v952 = vpack.c.b16 %v800, %v799
  %v953 = vpack.c.b16 %v802, %v801
  %v954 = vpack.c.b16 %v804, %v803
  %v955 = vpack.c.b16 %v806, %v805
  %v956 = vpack.c.b16 %v808, %v807
  %v957 = vpack.c.b16 %v810, %v809
  %v958 = vpack.c.b16 %v812, %v811
  %v959 = vpack.c.b16 %v814, %v813
  %v960 = vpack.c.b16 %v816, %v815
  %v961 = vpack.c.b16 %v818, %v817
  %v962 = vpack.c.b16 %v820, %v819
  %v963 = vpack.c.b16 %v822, %v821
  %v964 = vpack.c.b16 %v824, %v823
  %v965 = vpack.c.b16 %v826, %v825
  %v966 = vpack.c.b16 %v828, %v827
  %v967 = vpack.c.b16 %v830, %v829
  %v968 = vpack.c.b16 %v832, %v831
  %v969 = vpack.c.b16 %v834, %v833
  %v970 = vpack.c.b16 %v836, %v835
  %v971 = vpack.c.b16 %v838, %v837
  %v972 = vpack.c.b16 %v840, %v839
  %v973 = vpack.c.b16 %v842, %v841
  %v974 = vpack.c.b16 %v844, %v843
  %v975 = vpack.c.b16 %v846, %v845
  %v976 = vpack.c.b16 %v848, %v847
  %1105 = vmatpush.bf16.msra.mxu0 %v856
  %1106 = vmatpush.bf16.msra.mxu0 %v855
  %1107 = vmatpush.bf16.msra.mxu0 %v854
  %1108 = vmatpush.bf16.msra.mxu0 %v853
  %1109 = vmatpush.bf16.msra.mxu0 %v852
  %1110 = vmatpush.bf16.msra.mxu0 %v851
  %1111 = vmatpush.bf16.msra.mxu0 %v850
  %1112 = vmatpush.bf16.msra.mxu0 %v849
  %1113 = vmatmul.bf16.gmra.mxu0 %v305
  %v1114 = vpop.f32.mrf.mxu0
  %v1115 = vadd.f32 0.0, %v1114
  %v1116 = vpop.f32.mrf.mxu0
  %1117 = vdwg.mxu0
  %1118 = vmatpush.bf16.msra.mxu0 %v864
  %1119 = vmatpush.bf16.msra.mxu0 %v863
  %1120 = vmatpush.bf16.msra.mxu0 %v862
  %1121 = vmatpush.bf16.msra.mxu0 %v861
  %1122 = vmatpush.bf16.msra.mxu0 %v860
  %1123 = vmatpush.bf16.msra.mxu0 %v859
  %1124 = vmatpush.bf16.msra.mxu0 %v858
  %1125 = vmatpush.bf16.msra.mxu0 %v857
  %1126 = vmatmul.bf16.gmra.mxu0 %v306
  %v1127 = vpop.f32.mrf.mxu0
  %v1128 = vadd.f32 %v1115, %v1127
  %v1129 = vpop.f32.mrf.mxu0
  %1130 = vdwg.mxu0
  %1131 = vmatpush.bf16.msra.mxu0 %v872
  %1132 = vmatpush.bf16.msra.mxu0 %v871
  %1133 = vmatpush.bf16.msra.mxu0 %v870
  %1134 = vmatpush.bf16.msra.mxu0 %v869
  %1135 = vmatpush.bf16.msra.mxu0 %v868
  %1136 = vmatpush.bf16.msra.mxu0 %v867
  %1137 = vmatpush.bf16.msra.mxu0 %v866
  %1138 = vmatpush.bf16.msra.mxu0 %v865
  %1139 = vmatmul.bf16.gmra.mxu0 %v307
  %v1140 = vpop.f32.mrf.mxu0
  %v1141 = vadd.f32 %v1128, %v1140
  %v1142 = vpop.f32.mrf.mxu0
  %1143 = vdwg.mxu0
  %1144 = vmatpush.bf16.msra.mxu0 %v880
  %1145 = vmatpush.bf16.msra.mxu0 %v879
  %1146 = vmatpush.bf16.msra.mxu0 %v878
  %1147 = vmatpush.bf16.msra.mxu0 %v877
  %1148 = vmatpush.bf16.msra.mxu0 %v876
  %1149 = vmatpush.bf16.msra.mxu0 %v875
  %1150 = vmatpush.bf16.msra.mxu0 %v874
  %1151 = vmatpush.bf16.msra.mxu0 %v873
  %1152 = vmatmul.bf16.gmra.mxu0 %v308
  %v1153 = vpop.f32.mrf.mxu0
  %v1154 = vadd.f32 %v1141, %v1153
  %v1155 = vpop.f32.mrf.mxu0
  %1156 = vdwg.mxu0
  %1157 = vmatpush.bf16.msra.mxu0 %v888
  %1158 = vmatpush.bf16.msra.mxu0 %v887
  %1159 = vmatpush.bf16.msra.mxu0 %v886
  %1160 = vmatpush.bf16.msra.mxu0 %v885
  %1161 = vmatpush.bf16.msra.mxu0 %v884
  %1162 = vmatpush.bf16.msra.mxu0 %v883
  %1163 = vmatpush.bf16.msra.mxu0 %v882
  %1164 = vmatpush.bf16.msra.mxu0 %v881
  %1165 = vmatmul.bf16.gmra.mxu0 %v309
  %v1166 = vpop.f32.mrf.mxu0
  %v1167 = vadd.f32 %v1154, %v1166
  %v1168 = vpop.f32.mrf.mxu0
  %1169 = vdwg.mxu0
  %1170 = vmatpush.bf16.msra.mxu0 %v896
  %1171 = vmatpush.bf16.msra.mxu0 %v895
  %1172 = vmatpush.bf16.msra.mxu0 %v894
  %1173 = vmatpush.bf16.msra.mxu0 %v893
  %1174 = vmatpush.bf16.msra.mxu0 %v892
  %1175 = vmatpush.bf16.msra.mxu0 %v891
  %1176 = vmatpush.bf16.msra.mxu0 %v890
  %1177 = vmatpush.bf16.msra.mxu0 %v889
  %1178 = vmatmul.bf16.gmra.mxu0 %v310
  %v1179 = vpop.f32.mrf.mxu0
  %v1180 = vadd.f32 %v1167, %v1179
  %v1181 = vpop.f32.mrf.mxu0
  %1182 = vdwg.mxu0
  %1183 = vmatpush.bf16.msra.mxu0 %v904
  %1184 = vmatpush.bf16.msra.mxu0 %v903
  %1185 = vmatpush.bf16.msra.mxu0 %v902
  %1186 = vmatpush.bf16.msra.mxu0 %v901
  %1187 = vmatpush.bf16.msra.mxu0 %v900
  %1188 = vmatpush.bf16.msra.mxu0 %v899
  %1189 = vmatpush.bf16.msra.mxu0 %v898
  %1190 = vmatpush.bf16.msra.mxu0 %v897
  %1191 = vmatmul.bf16.gmra.mxu0 %v311
  %v1192 = vpop.f32.mrf.mxu0
  %v1193 = vadd.f32 %v1180, %v1192
  %v1194 = vpop.f32.mrf.mxu0
  %1195 = vdwg.mxu0
  %1196 = vmatpush.bf16.msra.mxu0 %v912
  %1197 = vmatpush.bf16.msra.mxu0 %v911
  %1198 = vmatpush.bf16.msra.mxu0 %v910
  %1199 = vmatpush.bf16.msra.mxu0 %v909
  %1200 = vmatpush.bf16.msra.mxu0 %v908
  %1201 = vmatpush.bf16.msra.mxu0 %v907
  %1202 = vmatpush.bf16.msra.mxu0 %v906
  %1203 = vmatpush.bf16.msra.mxu0 %v905
  %1204 = vmatmul.bf16.gmra.mxu0 %v312
  %v1205 = vpop.f32.mrf.mxu0
  %v1206 = vadd.f32 %v1193, %v1205
  %v1207 = vpop.f32.mrf.mxu0
  %1208 = vdwg.mxu0
  %1209 = vmatpush.bf16.msra.mxu0 %v920
  %1210 = vmatpush.bf16.msra.mxu0 %v919
  %1211 = vmatpush.bf16.msra.mxu0 %v918
  %1212 = vmatpush.bf16.msra.mxu0 %v917
  %1213 = vmatpush.bf16.msra.mxu0 %v916
  %1214 = vmatpush.bf16.msra.mxu0 %v915
  %1215 = vmatpush.bf16.msra.mxu0 %v914
  %1216 = vmatpush.bf16.msra.mxu0 %v913
  %1217 = vmatmul.bf16.gmra.mxu0 %v313
  %v1218 = vpop.f32.mrf.mxu0
  %v1219 = vadd.f32 %v1206, %v1218
  %v1220 = vpop.f32.mrf.mxu0
  %1221 = vdwg.mxu0
  %1222 = vmatpush.bf16.msra.mxu0 %v928
  %1223 = vmatpush.bf16.msra.mxu0 %v927
  %1224 = vmatpush.bf16.msra.mxu0 %v926
  %1225 = vmatpush.bf16.msra.mxu0 %v925
  %1226 = vmatpush.bf16.msra.mxu0 %v924
  %1227 = vmatpush.bf16.msra.mxu0 %v923
  %1228 = vmatpush.bf16.msra.mxu0 %v922
  %1229 = vmatpush.bf16.msra.mxu0 %v921
  %1230 = vmatmul.bf16.gmra.mxu0 %v314
  %v1231 = vpop.f32.mrf.mxu0
  %v1232 = vadd.f32 %v1219, %v1231
  %v1233 = vpop.f32.mrf.mxu0
  %1234 = vdwg.mxu0
  %1235 = vmatpush.bf16.msra.mxu0 %v936
  %1236 = vmatpush.bf16.msra.mxu0 %v935
  %1237 = vmatpush.bf16.msra.mxu0 %v934
  %1238 = vmatpush.bf16.msra.mxu0 %v933
  %1239 = vmatpush.bf16.msra.mxu0 %v932
  %1240 = vmatpush.bf16.msra.mxu0 %v931
  %1241 = vmatpush.bf16.msra.mxu0 %v930
  %1242 = vmatpush.bf16.msra.mxu0 %v929
  %1243 = vmatmul.bf16.gmra.mxu0 %v315
  %v1244 = vpop.f32.mrf.mxu0
  %v1245 = vadd.f32 %v1232, %v1244
  %v1246 = vpop.f32.mrf.mxu0
  %1247 = vdwg.mxu0
  %1248 = vmatpush.bf16.msra.mxu0 %v944
  %1249 = vmatpush.bf16.msra.mxu0 %v943
  %1250 = vmatpush.bf16.msra.mxu0 %v942
  %1251 = vmatpush.bf16.msra.mxu0 %v941
  %1252 = vmatpush.bf16.msra.mxu0 %v940
  %1253 = vmatpush.bf16.msra.mxu0 %v939
  %1254 = vmatpush.bf16.msra.mxu0 %v938
  %1255 = vmatpush.bf16.msra.mxu0 %v937
  %1256 = vmatmul.bf16.gmra.mxu0 %v316
  %v1257 = vpop.f32.mrf.mxu0
  %v1258 = vadd.f32 %v1245, %v1257
  %v1259 = vpop.f32.mrf.mxu0
  %1260 = vdwg.mxu0
  %1261 = vmatpush.bf16.msra.mxu0 %v952
  %1262 = vmatpush.bf16.msra.mxu0 %v951
  %1263 = vmatpush.bf16.msra.mxu0 %v950
  %1264 = vmatpush.bf16.msra.mxu0 %v949
  %1265 = vmatpush.bf16.msra.mxu0 %v948
  %1266 = vmatpush.bf16.msra.mxu0 %v947
  %1267 = vmatpush.bf16.msra.mxu0 %v946
  %1268 = vmatpush.bf16.msra.mxu0 %v945
  %1269 = vmatmul.bf16.gmra.mxu0 %v317
  %v1270 = vpop.f32.mrf.mxu0
  %v1271 = vadd.f32 %v1258, %v1270
  %v1272 = vpop.f32.mrf.mxu0
  %1273 = vdwg.mxu0
  %1274 = vmatpush.bf16.msra.mxu0 %v960
  %1275 = vmatpush.bf16.msra.mxu0 %v959
  %1276 = vmatpush.bf16.msra.mxu0 %v958
  %1277 = vmatpush.bf16.msra.mxu0 %v957
  %1278 = vmatpush.bf16.msra.mxu0 %v956
  %1279 = vmatpush.bf16.msra.mxu0 %v955
  %1280 = vmatpush.bf16.msra.mxu0 %v954
  %1281 = vmatpush.bf16.msra.mxu0 %v953
  %1282 = vmatmul.bf16.gmra.mxu0 %v318
  %v1283 = vpop.f32.mrf.mxu0
  %v1284 = vadd.f32 %v1271, %v1283
  %v1285 = vpop.f32.mrf.mxu0
  %1286 = vdwg.mxu0
  %1287 = vmatpush.bf16.msra.mxu0 %v968
  %1288 = vmatpush.bf16.msra.mxu0 %v967
  %1289 = vmatpush.bf16.msra.mxu0 %v966
  %1290 = vmatpush.bf16.msra.mxu0 %v965
  %1291 = vmatpush.bf16.msra.mxu0 %v964
  %1292 = vmatpush.bf16.msra.mxu0 %v963
  %1293 = vmatpush.bf16.msra.mxu0 %v962
  %1294 = vmatpush.bf16.msra.mxu0 %v961
  %1295 = vmatmul.bf16.gmra.mxu0 %v319
  %v1296 = vpop.f32.mrf.mxu0
  %v1297 = vadd.f32 %v1284, %v1296
  %v1298 = vpop.f32.mrf.mxu0
  %1299 = vdwg.mxu0
  %1300 = vmatpush.bf16.msra.mxu0 %v976
  %1301 = vmatpush.bf16.msra.mxu0 %v975
  %1302 = vmatpush.bf16.msra.mxu0 %v974
  %1303 = vmatpush.bf16.msra.mxu0 %v973
  %1304 = vmatpush.bf16.msra.mxu0 %v972
  %1305 = vmatpush.bf16.msra.mxu0 %v971
  %1306 = vmatpush.bf16.msra.mxu0 %v970
  %1307 = vmatpush.bf16.msra.mxu0 %v969
  %1308 = vmatmul.bf16.gmra.mxu0 %v320
  %v1309 = vpop.f32.mrf.mxu0
  %v1310 = vadd.f32 %v1297, %v1309
  %v1311 = vpop.f32.mrf.mxu0
  %1312 = vdwg.mxu0
  %v1313 = vpack.c.bf16 %v1310, %v1310
  %v1314 = vld [vmem:[%s2] sm:$0xf]
  %v1315 = vld [vmem:[%s2 + $0x4] sm:$0xf]
  %v1316 = vld [vmem:[%s2 + $0x8] sm:$0xf]
  %v1317 = vld [vmem:[%s2 + $0xc] sm:$0xf]
  %v1318 = vld [vmem:[%s2 + $0x10] sm:$0xf]
  %v1319 = vld [vmem:[%s2 + $0x14] sm:$0xf]
  %v1320 = vld [vmem:[%s2 + $0x18] sm:$0xf]
  %v1321 = vld [vmem:[%s2 + $0x1c] sm:$0xf]
  %v1322 = vld [vmem:[%s2 + $0x20] sm:$0xf]
  %v1323 = vld [vmem:[%s2 + $0x24] sm:$0xf]
  %v1324 = vld [vmem:[%s2 + $0x28] sm:$0xf]
  %v1325 = vld [vmem:[%s2 + $0x2c] sm:$0xf]
  %v1326 = vld [vmem:[%s2 + $0x30] sm:$0xf]
  %v1327 = vld [vmem:[%s2 + $0x34] sm:$0xf]
  %v1328 = vld [vmem:[%s2 + $0x38] sm:$0xf]
  %v1329 = vld [vmem:[%s2 + $0x3c] sm:$0xf]
  %v1330 = vld [vmem:[%s3] sm:$0x1]
  %v1332 = vperm.slane %v1330, 0
  %v1350 = vunpack.c.l.b16 %v1314
  %v1351 = vunpack.c.l.b16 %v1315
  %v1352 = vunpack.c.l.b16 %v1316
  %v1353 = vunpack.c.l.b16 %v1317
  %v1354 = vunpack.c.l.b16 %v1318
  %v1355 = vunpack.c.l.b16 %v1319
  %v1356 = vunpack.c.l.b16 %v1320
  %v1357 = vunpack.c.l.b16 %v1321
  %v1358 = vunpack.c.l.b16 %v1322
  %v1359 = vunpack.c.l.b16 %v1323
  %v1360 = vunpack.c.l.b16 %v1324
  %v1361 = vunpack.c.l.b16 %v1325
  %v1362 = vunpack.c.l.b16 %v1326
  %v1363 = vunpack.c.l.b16 %v1327
  %v1364 = vunpack.c.l.b16 %v1328
  %v1365 = vunpack.c.l.b16 %v1329
  %v1366 = vpack.c.b16 %v1351, %v1350
  %v1367 = vpack.c.b16 %v1353, %v1352
  %v1368 = vpack.c.b16 %v1355, %v1354
  %v1369 = vpack.c.b16 %v1357, %v1356
  %v1370 = vpack.c.b16 %v1359, %v1358
  %v1371 = vpack.c.b16 %v1361, %v1360
  %v1372 = vpack.c.b16 %v1363, %v1362
  %v1373 = vpack.c.b16 %v1365, %v1364
  %1382 = vmatpush.bf16.msra.mxu0 %v1373
  %1383 = vmatpush.bf16.msra.mxu0 %v1372
  %1384 = vmatpush.bf16.msra.mxu0 %v1371
  %1385 = vmatpush.bf16.msra.mxu0 %v1370
  %1386 = vmatpush.bf16.msra.mxu0 %v1369
  %1387 = vmatpush.bf16.msra.mxu0 %v1368
  %1388 = vmatpush.bf16.msra.mxu0 %v1367
  %1389 = vmatpush.bf16.msra.mxu0 %v1366
  %1390 = vmatmul.bf16.gmra.mxu0 %v1313
  %v1391 = vpop.f32.mrf.mxu0
  %v1392 = vadd.f32 %v1332, %v1391
  %v1393 = vpop.f32.mrf.mxu0
  %1394 = vdwg.mxu0
  %1395 = vst [vmem:[%s4] sm:$0xff] %v1392
  // Predicated region
  $region18: #{discriminator_forward.5} parent=0 // pred_check
    _
  $region19: #{discriminator_forward.5} parent=0 // pred_check_branch
    %1397 = sbr.rel (0) target = $region21
  $region20: #{discriminator_forward.5} parent=0 // pred_region
    _
  $region21: #{discriminator_forward.5} parent=0 // pred_fallthru
    _
  // Predicated region
  $region22: #{discriminator_forward.5} parent=0 // pred_check
    _
  $region23: #{discriminator_forward.5} parent=0 // pred_check_branch
    %1399 = sbr.rel (0) target = $region25
  $region24: #{discriminator_forward.5} parent=0 // pred_region
    _
  $region25: #{discriminator_forward.5} parent=0 // pred_fallthru
    _

</llo_original>
